<compile_context>
chip_gen: v6e
topology: v6e:2x2x1
jax: 0.10.0
libtpu: 0.0.40
codegen_flags: <defaults>
</compile_context>

<pallas_src>
import functools

import jax
import jax.numpy as jnp
from jax.experimental import pallas as pl
from jax.experimental.pallas import tpu as pltpu


def _layer_norm(h, gamma, beta, eps=1e-5):
    mean = jnp.mean(h, axis=-1, keepdims=True)
    var = jnp.mean((h - mean) * (h - mean), axis=-1, keepdims=True)
    return (h - mean) * jax.lax.rsqrt(var + eps) * gamma + beta


# ---------------------------------------------------------------------------
# Pass 1: fused QKV projection (once per layer, lane-dense (H, 3H) matmul).
# Outputs head-major (nh, N, dh) tensors consumed tile-wise by pass 2.
# ---------------------------------------------------------------------------
def qkv_project_kernel(x_ref, wqkv_ref, bqkv_ref, q_ref, k_ref, v_ref,
                       *, n_heads, d_head, hidden):
    f32 = jnp.float32
    qkv = jnp.dot(x_ref[...], wqkv_ref[...],
                  preferred_element_type=f32) + bqkv_ref[...]
    qkv = qkv.astype(q_ref.dtype)                       # (T, 3H) bf16

    def head_major(base):                               # -> (nh, T, dh)
        return jnp.stack(
            [qkv[:, base + hd * d_head: base + (hd + 1) * d_head]
             for hd in range(n_heads)], axis=0)

    q_ref[...] = head_major(0)
    k_ref[...] = head_major(hidden)
    v_ref[...] = head_major(2 * hidden)


def qkv_project(x, wqkv, bqkv, *, n_heads, block_r, vmem_limit):
    n, h = x.shape
    d_head = h // n_heads
    kernel = functools.partial(qkv_project_kernel, n_heads=n_heads,
                               d_head=d_head, hidden=h)
    out = jax.ShapeDtypeStruct((n_heads, n, d_head), jnp.bfloat16)
    out_spec = pl.BlockSpec((n_heads, block_r, d_head), lambda i: (0, i, 0))
    return pl.pallas_call(
        kernel,
        out_shape=(out, out, out),
        grid=(n // block_r,),
        in_specs=[
            pl.BlockSpec((block_r, h), lambda i: (i, 0)),    # node features
            pl.BlockSpec((h, 3 * h), lambda i: (0, 0)),      # fused Wq|Wk|Wv
            pl.BlockSpec((1, 3 * h), lambda i: (0, 0)),      # fused biases
        ],
        out_specs=(out_spec, out_spec, out_spec),
        compiler_params=pltpu.CompilerParams(
            dimension_semantics=("parallel",),
            vmem_limit_bytes=vmem_limit),
    )(x, wqkv, bqkv)


# ---------------------------------------------------------------------------
# Pass 2: edge-masked attention (online softmax over KV tiles, block-sparse
# skipping via scalar-prefetched occupancy), output projection, residual+LN,
# FFN, residual+LN.
# ---------------------------------------------------------------------------
def attn_ffn_kernel(occ_ref,
                    xq_ref, q_ref, k_ref, v_ref, mask_ref,
                    wo_ref, bo_ref, ln1_g_ref, ln1_b_ref,
                    w1_ref, b1_ref, w2_ref, b2_ref,
                    ln2_g_ref, ln2_b_ref,
                    out_ref,
                    m_scr, l_scr, acc_scr,
                    *, n_heads):
    f32 = jnp.float32
    bf16 = jnp.bfloat16
    i = pl.program_id(0)
    j = pl.program_id(1)

    @pl.when(j == 0)
    def _init():
        m_scr[...] = jnp.full_like(m_scr, -jnp.inf)
        l_scr[...] = jnp.zeros_like(l_scr)
        acc_scr[...] = jnp.zeros_like(acc_scr)

    # Skip the whole KV tile if no edge connects this (q-tile, kv-tile) block.
    @pl.when(occ_ref[i, j] > 0)
    def _block():
        # scores: (nh, TQ, TK); 1/sqrt(dh) already folded into wq.
        s = jnp.einsum('hqd,hkd->hqk', q_ref[...], k_ref[...],
                       preferred_element_type=f32)
        # int8 adjacency mask -> additive bias: 1 -> 0, 0 -> -1e9.
        neg = (mask_ref[...].astype(f32) - 1.0) * 1e9        # (TQ, TK)
        s = s + neg[None]

        m_prev = m_scr[...]
        m_new = jnp.maximum(m_prev, jnp.max(s, axis=-1, keepdims=True))
        alpha = jnp.exp(m_prev - m_new)
        p = jnp.exp(s - m_new)
        l_scr[...] = alpha * l_scr[...] + jnp.sum(p, axis=-1, keepdims=True)
        acc_scr[...] = alpha * acc_scr[...] + jnp.einsum(
            'hqk,hkd->hqd', p.astype(bf16), v_ref[...],
            preferred_element_type=f32)
        m_scr[...] = m_new

    @pl.when(j == pl.num_programs(1) - 1)
    def _finalize():
        # attention output, heads concatenated -> single full-depth matmul.
        o3 = acc_scr[...] * pl.reciprocal(l_scr[...], approx=True)  # (nh,TQ,dh)
        o_cat = jnp.concatenate([o3[hd] for hd in range(n_heads)], axis=-1)
        attn = jnp.dot(o_cat.astype(bf16), wo_ref[...],
                       preferred_element_type=f32) + bo_ref[...]

        xq = xq_ref[...].astype(f32)
        h1 = _layer_norm(xq + attn, ln1_g_ref[...], ln1_b_ref[...])

        f = jnp.dot(h1.astype(bf16), w1_ref[...],
                    preferred_element_type=f32) + b1_ref[...]
        f = jnp.maximum(f, 0.0)
        f = jnp.dot(f.astype(bf16), w2_ref[...],
                    preferred_element_type=f32) + b2_ref[...]
        h2 = _layer_norm(h1 + f, ln2_g_ref[...], ln2_b_ref[...])
        out_ref[...] = h2.astype(out_ref.dtype)


def attention_ffn(x, q3, k3, v3, mask, occ, p, *, n_heads, block_q, block_k,
                  vmem_limit):
    n, h = x.shape
    d_head = h // n_heads
    ffn = p["w1"].shape[1]
    nq, nk = n // block_q, n // block_k

    kernel = functools.partial(attn_ffn_kernel, n_heads=n_heads)

    qrow = lambda i, j, o: (i, 0)
    kvblk = lambda i, j, o: (0, j, 0)
    const = lambda i, j, o: (0, 0)

    grid_spec = pltpu.PrefetchScalarGridSpec(
        num_scalar_prefetch=1,                            # occupancy table
        grid=(nq, nk),
        in_specs=[
            pl.BlockSpec((block_q, h), qrow),                          # x rows
            pl.BlockSpec((n_heads, block_q, d_head), lambda i, j, o: (0, i, 0)),
            pl.BlockSpec((n_heads, block_k, d_head), kvblk),           # k tile
            pl.BlockSpec((n_heads, block_k, d_head), kvblk),           # v tile
            pl.BlockSpec((block_q, block_k), lambda i, j, o: (i, j)),  # adj mask
            pl.BlockSpec((h, h), const),                               # wo
            pl.BlockSpec((1, h), const),                               # bo
            pl.BlockSpec((1, h), const),                               # ln1_g
            pl.BlockSpec((1, h), const),                               # ln1_b
            pl.BlockSpec((h, ffn), const),                             # w1
            pl.BlockSpec((1, ffn), const),                             # b1
            pl.BlockSpec((ffn, h), const),                             # w2
            pl.BlockSpec((1, h), const),                               # b2
            pl.BlockSpec((1, h), const),                               # ln2_g
            pl.BlockSpec((1, h), const),                               # ln2_b
        ],
        out_specs=pl.BlockSpec((block_q, h), qrow),
        scratch_shapes=[
            pltpu.VMEM((n_heads, block_q, 1), jnp.float32),       # running max
            pltpu.VMEM((n_heads, block_q, 1), jnp.float32),       # running denom
            pltpu.VMEM((n_heads, block_q, d_head), jnp.float32),  # accumulator
        ],
    )

    return pl.pallas_call(
        kernel,
        out_shape=jax.ShapeDtypeStruct((n, h), jnp.bfloat16),
        grid_spec=grid_spec,
        compiler_params=pltpu.CompilerParams(
            dimension_semantics=("parallel", "arbitrary"),
            vmem_limit_bytes=vmem_limit),
    )(occ, x, q3, k3, v3, mask,
      p["wo"], p["bo"], p["ln1_g"], p["ln1_b"],
      p["w1"], p["b1"], p["w2"], p["b2"], p["ln2_g"], p["ln2_b"])


# ---------------------------------------------------------------------------
# Parameter prep + multi-layer wrapper.
# ---------------------------------------------------------------------------
def _prepare_params(params, n_heads):
    """Cast + fuse weights once (shared by all n_layers)."""
    h = params["wq"].shape[0]
    d_head = h // n_heads
    bf16, f32 = jnp.bfloat16, jnp.float32
    scale = 1.0 / (d_head ** 0.5)       # fold softmax scale into Wq / bq
    wqkv = jnp.concatenate(
        [params["wq"] * scale, params["wk"], params["wv"]], axis=1).astype(bf16)
    bqkv = jnp.concatenate(
        [params["bq"] * scale, params["bk"], params["bv"]], axis=1).astype(f32)
    return {
        "wqkv": wqkv, "bqkv": bqkv,
        "wo": params["wo"].astype(bf16), "bo": params["bo"].astype(f32),
        "ln1_g": params["ln1_g"].astype(f32), "ln1_b": params["ln1_b"].astype(f32),
        "w1": params["w1"].astype(bf16), "b1": params["b1"].astype(f32),
        "w2": params["w2"].astype(bf16), "b2": params["b2"].astype(f32),
        "ln2_g": params["ln2_g"].astype(f32), "ln2_b": params["ln2_b"].astype(f32),
    }


def multi_layer_homo_gt(x, adj, params, *, n_heads, n_layers,
                        block_q=128, block_k=128,
                        vmem_limit_bytes=64 * 1024 * 1024):
    """Applies the (shared, deep-copied) GT layer n_layers times."""
    n, h = x.shape
    assert h % n_heads == 0, "n_hidden must be divisible by n_heads"
    assert n % block_q == 0 and n % block_k == 0
    assert block_q % 8 == 0 and (block_k % 128 == 0 or block_k == n)

    # int8 adjacency mask (1 = edge) + per-block occupancy for block-skipping.
    # Module contract: self-loops present, so every q-row sees >= 1 live block.
    mask = (adj > 0).astype(jnp.int8)
    nq, nk = n // block_q, n // block_k
    occ = (adj.reshape(nq, block_q, nk, block_k).max(axis=(1, 3)) > 0
           ).astype(jnp.int32)

    p = _prepare_params(params, n_heads)

    feats = x.astype(jnp.bfloat16)
    for _ in range(n_layers):
        q3, k3, v3 = qkv_project(feats, p["wqkv"], p["bqkv"],
                                 n_heads=n_heads, block_r=block_q,
                                 vmem_limit=vmem_limit_bytes)
        feats = attention_ffn(feats, q3, k3, v3, mask, occ, p,
                              n_heads=n_heads, block_q=block_q,
                              block_k=block_k, vmem_limit=vmem_limit_bytes)
    return feats.astype(jnp.float32)   # feats for the single homogeneous ntype


def init_params(key, n_hidden, ffn_mult=2):
    ks = jax.random.split(key, 6)
    s = 1.0 / (n_hidden ** 0.5)
    f32 = jnp.float32
    return {
        "wq": jax.random.normal(ks[0], (n_hidden, n_hidden), f32) * s,
        "wk": jax.random.normal(ks[1], (n_hidden, n_hidden), f32) * s,
        "wv": jax.random.normal(ks[2], (n_hidden, n_hidden), f32) * s,
        "wo": jax.random.normal(ks[3], (n_hidden, n_hidden), f32) * s,
        "bq": jnp.zeros((1, n_hidden), f32),
        "bk": jnp.zeros((1, n_hidden), f32),
        "bv": jnp.zeros((1, n_hidden), f32),
        "bo": jnp.zeros((1, n_hidden), f32),
        "ln1_g": jnp.ones((1, n_hidden), f32),
        "ln1_b": jnp.zeros((1, n_hidden), f32),
        "w1": jax.random.normal(ks[4], (n_hidden, ffn_mult * n_hidden), f32) * s,
        "b1": jnp.zeros((1, ffn_mult * n_hidden), f32),
        "w2": jax.random.normal(ks[5], (ffn_mult * n_hidden, n_hidden), f32)
              * (1.0 / (ffn_mult * n_hidden) ** 0.5),
        "b2": jnp.zeros((1, n_hidden), f32),
        "ln2_g": jnp.ones((1, n_hidden), f32),
        "ln2_b": jnp.zeros((1, n_hidden), f32),
    }


if __name__ == "__main__":
    # Small, lane-aligned sizes: 256 nodes, hidden=128, 4 heads, 2 layers.
    # block_q=64 -> 4 q-tiles (even grid for both v7x TensorCores);
    # block_k=128 -> 2 kv-tiles, and the path-graph adjacency leaves some
    # (q-tile, kv-tile) blocks empty so the block-sparse skip path runs.
    n_nodes, n_hidden, n_heads, n_layers = 256, 128, 4, 2
    block_q, block_k = 64, 128

    key = jax.random.PRNGKey(0)
    k_x, k_p = jax.random.split(key)

    # Node features for the single homogeneous node type.
    x = jax.random.normal(k_x, (n_nodes, n_hidden), jnp.float32)

    # Deterministic path-graph adjacency with self loops (tri-diagonal).
    adj = (jnp.eye(n_nodes, dtype=jnp.float32)
           + jnp.eye(n_nodes, k=1, dtype=jnp.float32)
           + jnp.eye(n_nodes, k=-1, dtype=jnp.float32))

    params = init_params(k_p, n_hidden)

    run = jax.jit(functools.partial(
        multi_layer_homo_gt, n_heads=n_heads, n_layers=n_layers,
        block_q=block_q, block_k=block_k))
    out = jax.block_until_ready(run(x, adj, params))

    assert out.shape == (n_nodes, n_hidden)
    assert bool(jnp.all(jnp.isfinite(out)))
    print("KERNEL_OK")
</pallas_src>

<mosaic_0001>
module attributes {stable_mosaic.version = 11 : i64} {
  func.func @qkv_project_kernel(%arg0: i32, %arg1: memref<64x128xbf16, #tpu.memory_space<vmem>>, %arg2: memref<128x384xbf16, #tpu.memory_space<vmem>>, %arg3: memref<1x384xf32, #tpu.memory_space<vmem>>, %arg4: memref<4x64x32xbf16, #tpu.memory_space<vmem>>, %arg5: memref<4x64x32xbf16, #tpu.memory_space<vmem>>, %arg6: memref<4x64x32xbf16, #tpu.memory_space<vmem>>) attributes {dimension_semantics = [#tpu.dimension_semantics<parallel>], iteration_bounds = array<i64: 4>, scalar_prefetch = 0 : i64, scratch_operands = 0 : i64, tpu.core_type = #tpu.core_type<tc>, window_params = [{transform_indices = @transform_0, window_bounds = array<i64: 64, 128>}, {pipeline_mode = #tpu.pipeline_mode<synchronous>, transform_indices = @transform_1, window_bounds = array<i64: 128, 384>}, {pipeline_mode = #tpu.pipeline_mode<synchronous>, transform_indices = @transform_2, window_bounds = array<i64: 1, 384>}, {transform_indices = @transform_3, window_bounds = array<i64: 4, 64, 32>}, {transform_indices = @transform_4, window_bounds = array<i64: 4, 64, 32>}, {transform_indices = @transform_5, window_bounds = array<i64: 4, 64, 32>}]} {
    %c0 = arith.constant 0 : index
    %c0_0 = arith.constant 0 : index
    %0 = vector.load %arg1[%c0, %c0_0] : memref<64x128xbf16, #tpu.memory_space<vmem>>, vector<64x128xbf16>
    %c0_1 = arith.constant 0 : index
    %c0_2 = arith.constant 0 : index
    %1 = vector.load %arg2[%c0_1, %c0_2] : memref<128x384xbf16, #tpu.memory_space<vmem>>, vector<128x384xbf16>
    %cst = arith.constant dense<0.000000e+00> : vector<64x384xf32>
    %2 = tpu.matmul %0, %1, %cst {dimension_numbers = #tpu.dot_dimension_numbers<[1], [0], [0], [1], [0, 0, 1, 1], [], []>} : vector<64x128xbf16>, vector<128x384xbf16>, vector<64x384xf32> -> vector<64x384xf32>
    %c0_3 = arith.constant 0 : index
    %c0_4 = arith.constant 0 : index
    %3 = vector.load %arg3[%c0_3, %c0_4] : memref<1x384xf32, #tpu.memory_space<vmem>>, vector<1x384xf32>
    %4 = vector.broadcast %3 : vector<1x384xf32> to vector<64x384xf32>
    %5 = arith.addf %2, %4 : vector<64x384xf32>
    %6 = arith.truncf %5 : vector<64x384xf32> to vector<64x384xbf16>
    %7 = vector.extract_strided_slice %6 {offsets = [0, 0], sizes = [64, 32], strides = [1, 1]} : vector<64x384xbf16> to vector<64x32xbf16>
    %8 = vector.extract_strided_slice %6 {offsets = [0, 32], sizes = [64, 32], strides = [1, 1]} : vector<64x384xbf16> to vector<64x32xbf16>
    %9 = vector.extract_strided_slice %6 {offsets = [0, 64], sizes = [64, 32], strides = [1, 1]} : vector<64x384xbf16> to vector<64x32xbf16>
    %10 = vector.extract_strided_slice %6 {offsets = [0, 96], sizes = [64, 32], strides = [1, 1]} : vector<64x384xbf16> to vector<64x32xbf16>
    %11 = vector.shape_cast %7 : vector<64x32xbf16> to vector<1x64x32xbf16>
    %12 = vector.shape_cast %8 : vector<64x32xbf16> to vector<1x64x32xbf16>
    %13 = vector.shape_cast %9 : vector<64x32xbf16> to vector<1x64x32xbf16>
    %14 = vector.shape_cast %10 : vector<64x32xbf16> to vector<1x64x32xbf16>
    %15 = tpu.concatenate %11, %12, %13, %14 in 0 : vector<1x64x32xbf16>, vector<1x64x32xbf16>, vector<1x64x32xbf16>, vector<1x64x32xbf16> -> vector<4x64x32xbf16>
    %c0_5 = arith.constant 0 : index
    %c0_6 = arith.constant 0 : index
    %c0_7 = arith.constant 0 : index
    %16 = vector.load %arg4[%c0_5, %c0_6, %c0_7] : memref<4x64x32xbf16, #tpu.memory_space<vmem>>, vector<4x64x32xbf16>
    tpu.vector_store %arg4[%c0_5, %c0_6, %c0_7], %15 {strides = array<i32>} : memref<4x64x32xbf16, #tpu.memory_space<vmem>>, vector<4x64x32xbf16>,
    %17 = vector.extract_strided_slice %6 {offsets = [0, 128], sizes = [64, 32], strides = [1, 1]} : vector<64x384xbf16> to vector<64x32xbf16>
    %18 = vector.extract_strided_slice %6 {offsets = [0, 160], sizes = [64, 32], strides = [1, 1]} : vector<64x384xbf16> to vector<64x32xbf16>
    %19 = vector.extract_strided_slice %6 {offsets = [0, 192], sizes = [64, 32], strides = [1, 1]} : vector<64x384xbf16> to vector<64x32xbf16>
    %20 = vector.extract_strided_slice %6 {offsets = [0, 224], sizes = [64, 32], strides = [1, 1]} : vector<64x384xbf16> to vector<64x32xbf16>
    %21 = vector.shape_cast %17 : vector<64x32xbf16> to vector<1x64x32xbf16>
    %22 = vector.shape_cast %18 : vector<64x32xbf16> to vector<1x64x32xbf16>
    %23 = vector.shape_cast %19 : vector<64x32xbf16> to vector<1x64x32xbf16>
    %24 = vector.shape_cast %20 : vector<64x32xbf16> to vector<1x64x32xbf16>
    %25 = tpu.concatenate %21, %22, %23, %24 in 0 : vector<1x64x32xbf16>, vector<1x64x32xbf16>, vector<1x64x32xbf16>, vector<1x64x32xbf16> -> vector<4x64x32xbf16>
    %c0_8 = arith.constant 0 : index
    %c0_9 = arith.constant 0 : index
    %c0_10 = arith.constant 0 : index
    %26 = vector.load %arg5[%c0_8, %c0_9, %c0_10] : memref<4x64x32xbf16, #tpu.memory_space<vmem>>, vector<4x64x32xbf16>
    tpu.vector_store %arg5[%c0_8, %c0_9, %c0_10], %25 {strides = array<i32>} : memref<4x64x32xbf16, #tpu.memory_space<vmem>>, vector<4x64x32xbf16>,
    %27 = vector.extract_strided_slice %6 {offsets = [0, 256], sizes = [64, 32], strides = [1, 1]} : vector<64x384xbf16> to vector<64x32xbf16>
    %28 = vector.extract_strided_slice %6 {offsets = [0, 288], sizes = [64, 32], strides = [1, 1]} : vector<64x384xbf16> to vector<64x32xbf16>
    %29 = vector.extract_strided_slice %6 {offsets = [0, 320], sizes = [64, 32], strides = [1, 1]} : vector<64x384xbf16> to vector<64x32xbf16>
    %30 = vector.extract_strided_slice %6 {offsets = [0, 352], sizes = [64, 32], strides = [1, 1]} : vector<64x384xbf16> to vector<64x32xbf16>
    %31 = vector.shape_cast %27 : vector<64x32xbf16> to vector<1x64x32xbf16>
    %32 = vector.shape_cast %28 : vector<64x32xbf16> to vector<1x64x32xbf16>
    %33 = vector.shape_cast %29 : vector<64x32xbf16> to vector<1x64x32xbf16>
    %34 = vector.shape_cast %30 : vector<64x32xbf16> to vector<1x64x32xbf16>
    %35 = tpu.concatenate %31, %32, %33, %34 in 0 : vector<1x64x32xbf16>, vector<1x64x32xbf16>, vector<1x64x32xbf16>, vector<1x64x32xbf16> -> vector<4x64x32xbf16>
    %c0_11 = arith.constant 0 : index
    %c0_12 = arith.constant 0 : index
    %c0_13 = arith.constant 0 : index
    %36 = vector.load %arg6[%c0_11, %c0_12, %c0_13] : memref<4x64x32xbf16, #tpu.memory_space<vmem>>, vector<4x64x32xbf16>
    tpu.vector_store %arg6[%c0_11, %c0_12, %c0_13], %35 {strides = array<i32>} : memref<4x64x32xbf16, #tpu.memory_space<vmem>>, vector<4x64x32xbf16>,
    return
  }
  func.func @transform_0(%arg0: i32) -> (i32, i32) {
    %c0_i32 = arith.constant 0 : i32
    %c0_i32_0 = arith.constant 0 : i32
    return %arg0, %c0_i32 : i32, i32
  }
  func.func @transform_1(%arg0: i32) -> (i32, i32) {
    %c0_i32 = arith.constant 0 : i32
    %c0_i32_0 = arith.constant 0 : i32
    %c0_i32_1 = arith.constant 0 : i32
    return %c0_i32, %c0_i32_0 : i32, i32
  }
  func.func @transform_2(%arg0: i32) -> (i32, i32) {
    %c0_i32 = arith.constant 0 : i32
    %c0_i32_0 = arith.constant 0 : i32
    %c0_i32_1 = arith.constant 0 : i32
    return %c0_i32, %c0_i32_0 : i32, i32
  }
  func.func @transform_3(%arg0: i32) -> (i32, i32, i32) {
    %c0_i32 = arith.constant 0 : i32
    %c0_i32_0 = arith.constant 0 : i32
    %c0_i32_1 = arith.constant 0 : i32
    return %c0_i32, %arg0, %c0_i32_0 : i32, i32, i32
  }
  func.func @transform_4(%arg0: i32) -> (i32, i32, i32) {
    %c0_i32 = arith.constant 0 : i32
    %c0_i32_0 = arith.constant 0 : i32
    %c0_i32_1 = arith.constant 0 : i32
    return %c0_i32, %arg0, %c0_i32_0 : i32, i32, i32
  }
  func.func @transform_5(%arg0: i32) -> (i32, i32, i32) {
    %c0_i32 = arith.constant 0 : i32
    %c0_i32_0 = arith.constant 0 : i32
    %c0_i32_1 = arith.constant 0 : i32
    return %c0_i32, %arg0, %c0_i32_0 : i32, i32, i32
  }
}

module attributes {stable_mosaic.version = 11 : i64} {
  func.func @attn_ffn_kernel(%arg0: i32, %arg1: i32, %arg2: memref<4x2xi32, #tpu.memory_space<smem>>, %arg3: memref<64x128xbf16, #tpu.memory_space<vmem>>, %arg4: memref<4x64x32xbf16, #tpu.memory_space<vmem>>, %arg5: memref<4x128x32xbf16, #tpu.memory_space<vmem>>, %arg6: memref<4x128x32xbf16, #tpu.memory_space<vmem>>, %arg7: memref<64x128xi8, #tpu.memory_space<vmem>>, %arg8: memref<128x128xbf16, #tpu.memory_space<vmem>>, %arg9: memref<1x128xf32, #tpu.memory_space<vmem>>, %arg10: memref<1x128xf32, #tpu.memory_space<vmem>>, %arg11: memref<1x128xf32, #tpu.memory_space<vmem>>, %arg12: memref<128x256xbf16, #tpu.memory_space<vmem>>, %arg13: memref<1x256xf32, #tpu.memory_space<vmem>>, %arg14: memref<256x128xbf16, #tpu.memory_space<vmem>>, %arg15: memref<1x128xf32, #tpu.memory_space<vmem>>, %arg16: memref<1x128xf32, #tpu.memory_space<vmem>>, %arg17: memref<1x128xf32, #tpu.memory_space<vmem>>, %arg18: memref<64x128xbf16, #tpu.memory_space<vmem>>, %arg19: memref<4x64x1xf32, #tpu.memory_space<vmem>>, %arg20: memref<4x64x1xf32, #tpu.memory_space<vmem>>, %arg21: memref<4x64x32xf32, #tpu.memory_space<vmem>>) attributes {dimension_semantics = [#tpu.dimension_semantics<parallel>, #tpu.dimension_semantics<arbitrary>], iteration_bounds = array<i64: 4, 2>, scalar_prefetch = 1 : i64, scratch_operands = 3 : i64, tpu.core_type = #tpu.core_type<tc>, window_params = [{transform_indices = @transform_0, window_bounds = array<i64: 64, 128>}, {transform_indices = @transform_1, window_bounds = array<i64: 4, 64, 32>}, {transform_indices = @transform_2, window_bounds = array<i64: 4, 128, 32>}, {transform_indices = @transform_3, window_bounds = array<i64: 4, 128, 32>}, {transform_indices = @transform_4, window_bounds = array<i64: 64, 128>}, {pipeline_mode = #tpu.pipeline_mode<synchronous>, transform_indices = @transform_5, window_bounds = array<i64: 128, 128>}, {pipeline_mode = #tpu.pipeline_mode<synchronous>, transform_indices = @transform_6, window_bounds = array<i64: 1, 128>}, {pipeline_mode = #tpu.pipeline_mode<synchronous>, transform_indices = @transform_7, window_bounds = array<i64: 1, 128>}, {pipeline_mode = #tpu.pipeline_mode<synchronous>, transform_indices = @transform_8, window_bounds = array<i64: 1, 128>}, {pipeline_mode = #tpu.pipeline_mode<synchronous>, transform_indices = @transform_9, window_bounds = array<i64: 128, 256>}, {pipeline_mode = #tpu.pipeline_mode<synchronous>, transform_indices = @transform_10, window_bounds = array<i64: 1, 256>}, {pipeline_mode = #tpu.pipeline_mode<synchronous>, transform_indices = @transform_11, window_bounds = array<i64: 256, 128>}, {pipeline_mode = #tpu.pipeline_mode<synchronous>, transform_indices = @transform_12, window_bounds = array<i64: 1, 128>}, {pipeline_mode = #tpu.pipeline_mode<synchronous>, transform_indices = @transform_13, window_bounds = array<i64: 1, 128>}, {pipeline_mode = #tpu.pipeline_mode<synchronous>, transform_indices = @transform_14, window_bounds = array<i64: 1, 128>}, {transform_indices = @transform_15, window_bounds = array<i64: 64, 128>}]} {
    %c0_i32 = arith.constant 0 : i32
    %0 = arith.cmpi eq, %arg1, %c0_i32 : i32
    %1 = arith.extui %0 : i1 to i32
    %c0_i32_0 = arith.constant 0 : i32
    %2 = arith.cmpi ne, %1, %c0_i32_0 : i32
    scf.if %2 {
      %cst = arith.constant 0xFF800000 : f32
      %12 = vector.broadcast %cst : f32 to vector<4x64x1xf32>
      %c0 = arith.constant 0 : index
      %c0_4 = arith.constant 0 : index
      %c0_5 = arith.constant 0 : index
      %13 = vector.load %arg19[%c0, %c0_4, %c0_5] : memref<4x64x1xf32, #tpu.memory_space<vmem>>, vector<4x64x1xf32>
      tpu.vector_store %arg19[%c0, %c0_4, %c0_5], %12 {strides = array<i32>} : memref<4x64x1xf32, #tpu.memory_space<vmem>>, vector<4x64x1xf32>,
      %cst_6 = arith.constant 0.000000e+00 : f32
      %14 = vector.broadcast %cst_6 : f32 to vector<4x64x1xf32>
      %c0_7 = arith.constant 0 : index
      %c0_8 = arith.constant 0 : index
      %c0_9 = arith.constant 0 : index
      %15 = vector.load %arg20[%c0_7, %c0_8, %c0_9] : memref<4x64x1xf32, #tpu.memory_space<vmem>>, vector<4x64x1xf32>
      tpu.vector_store %arg20[%c0_7, %c0_8, %c0_9], %14 {strides = array<i32>} : memref<4x64x1xf32, #tpu.memory_space<vmem>>, vector<4x64x1xf32>,
      %cst_10 = arith.constant 0.000000e+00 : f32
      %16 = vector.broadcast %cst_10 : f32 to vector<4x64x32xf32>
      %c0_11 = arith.constant 0 : index
      %c0_12 = arith.constant 0 : index
      %c0_13 = arith.constant 0 : index
      %17 = vector.load %arg21[%c0_11, %c0_12, %c0_13] : memref<4x64x32xf32, #tpu.memory_space<vmem>>, vector<4x64x32xf32>
      tpu.vector_store %arg21[%c0_11, %c0_12, %c0_13], %16 {strides = array<i32>} : memref<4x64x32xf32, #tpu.memory_space<vmem>>, vector<4x64x32xf32>,
    } else {
    }
    %3 = arith.index_cast %arg0 : i32 to index
    %4 = arith.index_cast %arg1 : i32 to index
    %5 = memref.load %arg2[%3, %4] : memref<4x2xi32, #tpu.memory_space<smem>>
    %c0_i32_1 = arith.constant 0 : i32
    %6 = arith.cmpi sgt, %5, %c0_i32_1 : i32
    %7 = arith.extui %6 : i1 to i32
    %c0_i32_2 = arith.constant 0 : i32
    %8 = arith.cmpi ne, %7, %c0_i32_2 : i32
    scf.if %8 {
      %c0 = arith.constant 0 : index
      %c0_4 = arith.constant 0 : index
      %c0_5 = arith.constant 0 : index
      %12 = vector.load %arg4[%c0, %c0_4, %c0_5] : memref<4x64x32xbf16, #tpu.memory_space<vmem>>, vector<4x64x32xbf16>
      %c0_6 = arith.constant 0 : index
      %c0_7 = arith.constant 0 : index
      %c0_8 = arith.constant 0 : index
      %13 = vector.load %arg5[%c0_6, %c0_7, %c0_8] : memref<4x128x32xbf16, #tpu.memory_space<vmem>>, vector<4x128x32xbf16>
      "tpu.trace_start"() <{level = 10 : i32, message = "hqd,hkd->hqk"}> : () -> ()
      %cst = arith.constant dense<0.000000e+00> : vector<4x64x128xf32>
      %14 = tpu.matmul %12, %13, %cst {dimension_numbers = #tpu.dot_dimension_numbers<[2], [2], [1], [1], [0, 0, 0, 1, 1, 1], [0], [0]>} : vector<4x64x32xbf16>, vector<4x128x32xbf16>, vector<4x64x128xf32> -> vector<4x64x128xf32>
      "tpu.trace_stop"() : () -> ()
      %c0_9 = arith.constant 0 : index
      %c0_10 = arith.constant 0 : index
      %15 = vector.load %arg7[%c0_9, %c0_10] : memref<64x128xi8, #tpu.memory_space<vmem>>, vector<64x128xi8>
      %16 = arith.sitofp %15 : vector<64x128xi8> to vector<64x128xf32>
      %cst_11 = arith.constant 1.000000e+00 : f32
      %17 = vector.broadcast %cst_11 : f32 to vector<64x128xf32>
      %18 = arith.subf %16, %17 : vector<64x128xf32>
      %cst_12 = arith.constant 1.000000e+09 : f32
      %19 = vector.broadcast %cst_12 : f32 to vector<64x128xf32>
      %20 = arith.mulf %18, %19 : vector<64x128xf32>
      %21 = vector.shape_cast %20 : vector<64x128xf32> to vector<1x64x128xf32>
      %22 = vector.broadcast %21 : vector<1x64x128xf32> to vector<4x64x128xf32>
      %23 = arith.addf %14, %22 : vector<4x64x128xf32>
      %c0_13 = arith.constant 0 : index
      %c0_14 = arith.constant 0 : index
      %c0_15 = arith.constant 0 : index
      %24 = vector.load %arg19[%c0_13, %c0_14, %c0_15] : memref<4x64x1xf32, #tpu.memory_space<vmem>>, vector<4x64x1xf32>
      %cst_16 = arith.constant dense<0xFF800000> : vector<4x64xf32>
      %25 = vector.multi_reduction <maximumf>, %23, %cst_16 [2] : vector<4x64x128xf32> to vector<4x64xf32>
      %26 = vector.shape_cast %25 : vector<4x64xf32> to vector<4x64x1xf32>
      %27 = arith.maximumf %24, %26 : vector<4x64x1xf32>
      %28 = arith.subf %24, %27 : vector<4x64x1xf32>
      %29 = math.exp %28 : vector<4x64x1xf32>
      %30 = vector.broadcast %27 : vector<4x64x1xf32> to vector<4x64x128xf32>
      %31 = arith.subf %23, %30 : vector<4x64x128xf32>
      %32 = math.exp %31 : vector<4x64x128xf32>
      %c0_17 = arith.constant 0 : index
      %c0_18 = arith.constant 0 : index
      %c0_19 = arith.constant 0 : index
      %33 = vector.load %arg20[%c0_17, %c0_18, %c0_19] : memref<4x64x1xf32, #tpu.memory_space<vmem>>, vector<4x64x1xf32>
      %34 = arith.mulf %29, %33 : vector<4x64x1xf32>
      %cst_20 = arith.constant dense<0.000000e+00> : vector<4x64xf32>
      %35 = vector.multi_reduction <add>, %32, %cst_20 [2] : vector<4x64x128xf32> to vector<4x64xf32>
      %36 = vector.shape_cast %35 : vector<4x64xf32> to vector<4x64x1xf32>
      %37 = arith.addf %34, %36 : vector<4x64x1xf32>
      %c0_21 = arith.constant 0 : index
      %c0_22 = arith.constant 0 : index
      %c0_23 = arith.constant 0 : index
      %38 = vector.load %arg20[%c0_21, %c0_22, %c0_23] : memref<4x64x1xf32, #tpu.memory_space<vmem>>, vector<4x64x1xf32>
      tpu.vector_store %arg20[%c0_21, %c0_22, %c0_23], %37 {strides = array<i32>} : memref<4x64x1xf32, #tpu.memory_space<vmem>>, vector<4x64x1xf32>,
      %c0_24 = arith.constant 0 : index
      %c0_25 = arith.constant 0 : index
      %c0_26 = arith.constant 0 : index
      %39 = vector.load %arg21[%c0_24, %c0_25, %c0_26] : memref<4x64x32xf32, #tpu.memory_space<vmem>>, vector<4x64x32xf32>
      %40 = vector.broadcast %29 : vector<4x64x1xf32> to vector<4x64x32xf32>
      %41 = arith.mulf %40, %39 : vector<4x64x32xf32>
      %42 = arith.truncf %32 : vector<4x64x128xf32> to vector<4x64x128xbf16>
      %c0_27 = arith.constant 0 : index
      %c0_28 = arith.constant 0 : index
      %c0_29 = arith.constant 0 : index
      %43 = vector.load %arg6[%c0_27, %c0_28, %c0_29] : memref<4x128x32xbf16, #tpu.memory_space<vmem>>, vector<4x128x32xbf16>
      "tpu.trace_start"() <{level = 10 : i32, message = "hqk,hkd->hqd"}> : () -> ()
      %cst_30 = arith.constant dense<0.000000e+00> : vector<4x64x32xf32>
      %44 = tpu.matmul %42, %43, %cst_30 {dimension_numbers = #tpu.dot_dimension_numbers<[2], [1], [1], [2], [0, 0, 0, 1, 1, 2], [0], [0]>} : vector<4x64x128xbf16>, vector<4x128x32xbf16>, vector<4x64x32xf32> -> vector<4x64x32xf32>
      "tpu.trace_stop"() : () -> ()
      %45 = arith.addf %41, %44 : vector<4x64x32xf32>
      %c0_31 = arith.constant 0 : index
      %c0_32 = arith.constant 0 : index
      %c0_33 = arith.constant 0 : index
      %46 = vector.load %arg21[%c0_31, %c0_32, %c0_33] : memref<4x64x32xf32, #tpu.memory_space<vmem>>, vector<4x64x32xf32>
      tpu.vector_store %arg21[%c0_31, %c0_32, %c0_33], %45 {strides = array<i32>} : memref<4x64x32xf32, #tpu.memory_space<vmem>>, vector<4x64x32xf32>,
      %c0_34 = arith.constant 0 : index
      %c0_35 = arith.constant 0 : index
      %c0_36 = arith.constant 0 : index
      %47 = vector.load %arg19[%c0_34, %c0_35, %c0_36] : memref<4x64x1xf32, #tpu.memory_space<vmem>>, vector<4x64x1xf32>
      tpu.vector_store %arg19[%c0_34, %c0_35, %c0_36], %27 {strides = array<i32>} : memref<4x64x1xf32, #tpu.memory_space<vmem>>, vector<4x64x1xf32>,
    } else {
    }
    %c1_i32 = arith.constant 1 : i32
    %9 = arith.cmpi eq, %arg1, %c1_i32 : i32
    %10 = arith.extui %9 : i1 to i32
    %c0_i32_3 = arith.constant 0 : i32
    %11 = arith.cmpi ne, %10, %c0_i32_3 : i32
    scf.if %11 {
      %c0 = arith.constant 0 : index
      %c0_4 = arith.constant 0 : index
      %c0_5 = arith.constant 0 : index
      %12 = vector.load %arg21[%c0, %c0_4, %c0_5] : memref<4x64x32xf32, #tpu.memory_space<vmem>>, vector<4x64x32xf32>
      %c0_6 = arith.constant 0 : index
      %c0_7 = arith.constant 0 : index
      %c0_8 = arith.constant 0 : index
      %13 = vector.load %arg20[%c0_6, %c0_7, %c0_8] : memref<4x64x1xf32, #tpu.memory_space<vmem>>, vector<4x64x1xf32>
      %14 = tpu.reciprocal %13 {approx = true} : vector<4x64x1xf32> -> vector<4x64x1xf32>
      %15 = vector.broadcast %14 : vector<4x64x1xf32> to vector<4x64x32xf32>
      %16 = arith.mulf %12, %15 : vector<4x64x32xf32>
      %17 = vector.extract_strided_slice %16 {offsets = [0, 0, 0], sizes = [1, 64, 32], strides = [1, 1, 1]} : vector<4x64x32xf32> to vector<1x64x32xf32>
      %18 = vector.shape_cast %17 : vector<1x64x32xf32> to vector<64x32xf32>
      %19 = vector.extract_strided_slice %16 {offsets = [1, 0, 0], sizes = [1, 64, 32], strides = [1, 1, 1]} : vector<4x64x32xf32> to vector<1x64x32xf32>
      %20 = vector.shape_cast %19 : vector<1x64x32xf32> to vector<64x32xf32>
      %21 = vector.extract_strided_slice %16 {offsets = [2, 0, 0], sizes = [1, 64, 32], strides = [1, 1, 1]} : vector<4x64x32xf32> to vector<1x64x32xf32>
      %22 = vector.shape_cast %21 : vector<1x64x32xf32> to vector<64x32xf32>
      %23 = vector.extract_strided_slice %16 {offsets = [3, 0, 0], sizes = [1, 64, 32], strides = [1, 1, 1]} : vector<4x64x32xf32> to vector<1x64x32xf32>
      %24 = vector.shape_cast %23 : vector<1x64x32xf32> to vector<64x32xf32>
      %25 = tpu.concatenate %18, %20, %22, %24 in 1 : vector<64x32xf32>, vector<64x32xf32>, vector<64x32xf32>, vector<64x32xf32> -> vector<64x128xf32>
      %26 = arith.truncf %25 : vector<64x128xf32> to vector<64x128xbf16>
      %c0_9 = arith.constant 0 : index
      %c0_10 = arith.constant 0 : index
      %27 = vector.load %arg8[%c0_9, %c0_10] : memref<128x128xbf16, #tpu.memory_space<vmem>>, vector<128x128xbf16>
      %cst = arith.constant dense<0.000000e+00> : vector<64x128xf32>
      %28 = tpu.matmul %26, %27, %cst {dimension_numbers = #tpu.dot_dimension_numbers<[1], [0], [0], [1], [0, 0, 1, 1], [], []>} : vector<64x128xbf16>, vector<128x128xbf16>, vector<64x128xf32> -> vector<64x128xf32>
      %c0_11 = arith.constant 0 : index
      %c0_12 = arith.constant 0 : index
      %29 = vector.load %arg9[%c0_11, %c0_12] : memref<1x128xf32, #tpu.memory_space<vmem>>, vector<1x128xf32>
      %30 = vector.broadcast %29 : vector<1x128xf32> to vector<64x128xf32>
      %31 = arith.addf %28, %30 : vector<64x128xf32>
      %c0_13 = arith.constant 0 : index
      %c0_14 = arith.constant 0 : index
      %32 = vector.load %arg3[%c0_13, %c0_14] : memref<64x128xbf16, #tpu.memory_space<vmem>>, vector<64x128xbf16>
      %33 = arith.extf %32 : vector<64x128xbf16> to vector<64x128xf32>
      %34 = arith.addf %33, %31 : vector<64x128xf32>
      %c0_15 = arith.constant 0 : index
      %c0_16 = arith.constant 0 : index
      %35 = vector.load %arg10[%c0_15, %c0_16] : memref<1x128xf32, #tpu.memory_space<vmem>>, vector<1x128xf32>
      %c0_17 = arith.constant 0 : index
      %c0_18 = arith.constant 0 : index
      %36 = vector.load %arg11[%c0_17, %c0_18] : memref<1x128xf32, #tpu.memory_space<vmem>>, vector<1x128xf32>
      %cst_19 = arith.constant dense<0.000000e+00> : vector<64xf32>
      %37 = vector.multi_reduction <add>, %34, %cst_19 [1] : vector<64x128xf32> to vector<64xf32>
      %38 = vector.shape_cast %37 : vector<64xf32> to vector<64x1xf32>
      %cst_20 = arith.constant 1.280000e+02 : f32
      %39 = vector.broadcast %cst_20 : f32 to vector<64x1xf32>
      %40 = arith.divf %38, %39 : vector<64x1xf32>
      %41 = vector.broadcast %40 : vector<64x1xf32> to vector<64x128xf32>
      %42 = arith.subf %34, %41 : vector<64x128xf32>
      %43 = vector.broadcast %40 : vector<64x1xf32> to vector<64x128xf32>
      %44 = arith.subf %34, %43 : vector<64x128xf32>
      %45 = arith.mulf %42, %44 : vector<64x128xf32>
      %cst_21 = arith.constant dense<0.000000e+00> : vector<64xf32>
      %46 = vector.multi_reduction <add>, %45, %cst_21 [1] : vector<64x128xf32> to vector<64xf32>
      %47 = vector.shape_cast %46 : vector<64xf32> to vector<64x1xf32>
      %cst_22 = arith.constant 1.280000e+02 : f32
      %48 = vector.broadcast %cst_22 : f32 to vector<64x1xf32>
      %49 = arith.divf %47, %48 : vector<64x1xf32>
      %50 = vector.broadcast %40 : vector<64x1xf32> to vector<64x128xf32>
      %51 = arith.subf %34, %50 : vector<64x128xf32>
      %cst_23 = arith.constant 9.99999974E-6 : f32
      %52 = vector.broadcast %cst_23 : f32 to vector<64x1xf32>
      %53 = arith.addf %49, %52 : vector<64x1xf32>
      %54 = math.rsqrt %53 : vector<64x1xf32>
      %55 = vector.broadcast %54 : vector<64x1xf32> to vector<64x128xf32>
      %56 = arith.mulf %51, %55 : vector<64x128xf32>
      %57 = vector.broadcast %35 : vector<1x128xf32> to vector<64x128xf32>
      %58 = arith.mulf %56, %57 : vector<64x128xf32>
      %59 = vector.broadcast %36 : vector<1x128xf32> to vector<64x128xf32>
      %60 = arith.addf %58, %59 : vector<64x128xf32>
      %61 = arith.truncf %60 : vector<64x128xf32> to vector<64x128xbf16>
      %c0_24 = arith.constant 0 : index
      %c0_25 = arith.constant 0 : index
      %62 = vector.load %arg12[%c0_24, %c0_25] : memref<128x256xbf16, #tpu.memory_space<vmem>>, vector<128x256xbf16>
      %cst_26 = arith.constant dense<0.000000e+00> : vector<64x256xf32>
      %63 = tpu.matmul %61, %62, %cst_26 {dimension_numbers = #tpu.dot_dimension_numbers<[1], [0], [0], [1], [0, 0, 1, 1], [], []>} : vector<64x128xbf16>, vector<128x256xbf16>, vector<64x256xf32> -> vector<64x256xf32>
      %c0_27 = arith.constant 0 : index
      %c0_28 = arith.constant 0 : index
      %64 = vector.load %arg13[%c0_27, %c0_28] : memref<1x256xf32, #tpu.memory_space<vmem>>, vector<1x256xf32>
      %65 = vector.broadcast %64 : vector<1x256xf32> to vector<64x256xf32>
      %66 = arith.addf %63, %65 : vector<64x256xf32>
      %cst_29 = arith.constant 0.000000e+00 : f32
      %67 = vector.broadcast %cst_29 : f32 to vector<64x256xf32>
      %68 = arith.maximumf %66, %67 : vector<64x256xf32>
      %69 = arith.truncf %68 : vector<64x256xf32> to vector<64x256xbf16>
      %c0_30 = arith.constant 0 : index
      %c0_31 = arith.constant 0 : index
      %70 = vector.load %arg14[%c0_30, %c0_31] : memref<256x128xbf16, #tpu.memory_space<vmem>>, vector<256x128xbf16>
      %cst_32 = arith.constant dense<0.000000e+00> : vector<64x128xf32>
      %71 = tpu.matmul %69, %70, %cst_32 {dimension_numbers = #tpu.dot_dimension_numbers<[1], [0], [0], [1], [0, 0, 1, 1], [], []>} : vector<64x256xbf16>, vector<256x128xbf16>, vector<64x128xf32> -> vector<64x128xf32>
      %c0_33 = arith.constant 0 : index
      %c0_34 = arith.constant 0 : index
      %72 = vector.load %arg15[%c0_33, %c0_34] : memref<1x128xf32, #tpu.memory_space<vmem>>, vector<1x128xf32>
      %73 = vector.broadcast %72 : vector<1x128xf32> to vector<64x128xf32>
      %74 = arith.addf %71, %73 : vector<64x128xf32>
      %75 = arith.addf %60, %74 : vector<64x128xf32>
      %c0_35 = arith.constant 0 : index
      %c0_36 = arith.constant 0 : index
      %76 = vector.load %arg16[%c0_35, %c0_36] : memref<1x128xf32, #tpu.memory_space<vmem>>, vector<1x128xf32>
      %c0_37 = arith.constant 0 : index
      %c0_38 = arith.constant 0 : index
      %77 = vector.load %arg17[%c0_37, %c0_38] : memref<1x128xf32, #tpu.memory_space<vmem>>, vector<1x128xf32>
      %cst_39 = arith.constant dense<0.000000e+00> : vector<64xf32>
      %78 = vector.multi_reduction <add>, %75, %cst_39 [1] : vector<64x128xf32> to vector<64xf32>
      %79 = vector.shape_cast %78 : vector<64xf32> to vector<64x1xf32>
      %cst_40 = arith.constant 1.280000e+02 : f32
      %80 = vector.broadcast %cst_40 : f32 to vector<64x1xf32>
      %81 = arith.divf %79, %80 : vector<64x1xf32>
      %82 = vector.broadcast %81 : vector<64x1xf32> to vector<64x128xf32>
      %83 = arith.subf %75, %82 : vector<64x128xf32>
      %84 = vector.broadcast %81 : vector<64x1xf32> to vector<64x128xf32>
      %85 = arith.subf %75, %84 : vector<64x128xf32>
      %86 = arith.mulf %83, %85 : vector<64x128xf32>
      %cst_41 = arith.constant dense<0.000000e+00> : vector<64xf32>
      %87 = vector.multi_reduction <add>, %86, %cst_41 [1] : vector<64x128xf32> to vector<64xf32>
      %88 = vector.shape_cast %87 : vector<64xf32> to vector<64x1xf32>
      %cst_42 = arith.constant 1.280000e+02 : f32
      %89 = vector.broadcast %cst_42 : f32 to vector<64x1xf32>
      %90 = arith.divf %88, %89 : vector<64x1xf32>
      %91 = vector.broadcast %81 : vector<64x1xf32> to vector<64x128xf32>
      %92 = arith.subf %75, %91 : vector<64x128xf32>
      %cst_43 = arith.constant 9.99999974E-6 : f32
      %93 = vector.broadcast %cst_43 : f32 to vector<64x1xf32>
      %94 = arith.addf %90, %93 : vector<64x1xf32>
      %95 = math.rsqrt %94 : vector<64x1xf32>
      %96 = vector.broadcast %95 : vector<64x1xf32> to vector<64x128xf32>
      %97 = arith.mulf %92, %96 : vector<64x128xf32>
      %98 = vector.broadcast %76 : vector<1x128xf32> to vector<64x128xf32>
      %99 = arith.mulf %97, %98 : vector<64x128xf32>
      %100 = vector.broadcast %77 : vector<1x128xf32> to vector<64x128xf32>
      %101 = arith.addf %99, %100 : vector<64x128xf32>
      %102 = arith.truncf %101 : vector<64x128xf32> to vector<64x128xbf16>
      %c0_44 = arith.constant 0 : index
      %c0_45 = arith.constant 0 : index
      %103 = vector.load %arg18[%c0_44, %c0_45] : memref<64x128xbf16, #tpu.memory_space<vmem>>, vector<64x128xbf16>
      tpu.vector_store %arg18[%c0_44, %c0_45], %102 {strides = array<i32>} : memref<64x128xbf16, #tpu.memory_space<vmem>>, vector<64x128xbf16>,
    } else {
    }
    return
  }
  func.func @transform_0(%arg0: i32, %arg1: i32, %arg2: memref<4x2xi32, #tpu.memory_space<smem>>) -> (i32, i32) {
    %c0_i32 = arith.constant 0 : i32
    %c0_i32_0 = arith.constant 0 : i32
    return %arg0, %c0_i32 : i32, i32
  }
  func.func @transform_1(%arg0: i32, %arg1: i32, %arg2: memref<4x2xi32, #tpu.memory_space<smem>>) -> (i32, i32, i32) {
    %c0_i32 = arith.constant 0 : i32
    %c0_i32_0 = arith.constant 0 : i32
    %c0_i32_1 = arith.constant 0 : i32
    return %c0_i32, %arg0, %c0_i32_0 : i32, i32, i32
  }
  func.func @transform_2(%arg0: i32, %arg1: i32, %arg2: memref<4x2xi32, #tpu.memory_space<smem>>) -> (i32, i32, i32) {
    %c0_i32 = arith.constant 0 : i32
    %c0_i32_0 = arith.constant 0 : i32
    %c0_i32_1 = arith.constant 0 : i32
    return %c0_i32, %arg1, %c0_i32_0 : i32, i32, i32
  }
  func.func @transform_3(%arg0: i32, %arg1: i32, %arg2: memref<4x2xi32, #tpu.memory_space<smem>>) -> (i32, i32, i32) {
    %c0_i32 = arith.constant 0 : i32
    %c0_i32_0 = arith.constant 0 : i32
    %c0_i32_1 = arith.constant 0 : i32
    return %c0_i32, %arg1, %c0_i32_0 : i32, i32, i32
  }
  func.func @transform_4(%arg0: i32, %arg1: i32, %arg2: memref<4x2xi32, #tpu.memory_space<smem>>) -> (i32, i32) {
    %c0_i32 = arith.constant 0 : i32
    return %arg0, %arg1 : i32, i32
  }
  func.func @transform_5(%arg0: i32, %arg1: i32, %arg2: memref<4x2xi32, #tpu.memory_space<smem>>) -> (i32, i32) {
    %c0_i32 = arith.constant 0 : i32
    %c0_i32_0 = arith.constant 0 : i32
    %c0_i32_1 = arith.constant 0 : i32
    return %c0_i32, %c0_i32_0 : i32, i32
  }
  func.func @transform_6(%arg0: i32, %arg1: i32, %arg2: memref<4x2xi32, #tpu.memory_space<smem>>) -> (i32, i32) {
    %c0_i32 = arith.constant 0 : i32
    %c0_i32_0 = arith.constant 0 : i32
    %c0_i32_1 = arith.constant 0 : i32
    return %c0_i32, %c0_i32_0 : i32, i32
  }
  func.func @transform_7(%arg0: i32, %arg1: i32, %arg2: memref<4x2xi32, #tpu.memory_space<smem>>) -> (i32, i32) {
    %c0_i32 = arith.constant 0 : i32
    %c0_i32_0 = arith.constant 0 : i32
    %c0_i32_1 = arith.constant 0 : i32
    return %c0_i32, %c0_i32_0 : i32, i32
  }
  func.func @transform_8(%arg0: i32, %arg1: i32, %arg2: memref<4x2xi32, #tpu.memory_space<smem>>) -> (i32, i32) {
    %c0_i32 = arith.constant 0 : i32
    %c0_i32_0 = arith.constant 0 : i32
    %c0_i32_1 = arith.constant 0 : i32
    return %c0_i32, %c0_i32_0 : i32, i32
  }
  func.func @transform_9(%arg0: i32, %arg1: i32, %arg2: memref<4x2xi32, #tpu.memory_space<smem>>) -> (i32, i32) {
    %c0_i32 = arith.constant 0 : i32
    %c0_i32_0 = arith.constant 0 : i32
    %c0_i32_1 = arith.constant 0 : i32
    return %c0_i32, %c0_i32_0 : i32, i32
  }
  func.func @transform_10(%arg0: i32, %arg1: i32, %arg2: memref<4x2xi32, #tpu.memory_space<smem>>) -> (i32, i32) {
    %c0_i32 = arith.constant 0 : i32
    %c0_i32_0 = arith.constant 0 : i32
    %c0_i32_1 = arith.constant 0 : i32
    return %c0_i32, %c0_i32_0 : i32, i32
  }
  func.func @transform_11(%arg0: i32, %arg1: i32, %arg2: memref<4x2xi32, #tpu.memory_space<smem>>) -> (i32, i32) {
    %c0_i32 = arith.constant 0 : i32
    %c0_i32_0 = arith.constant 0 : i32
    %c0_i32_1 = arith.constant 0 : i32
    return %c0_i32, %c0_i32_0 : i32, i32
  }
  func.func @transform_12(%arg0: i32, %arg1: i32, %arg2: memref<4x2xi32, #tpu.memory_space<smem>>) -> (i32, i32) {
    %c0_i32 = arith.constant 0 : i32
    %c0_i32_0 = arith.constant 0 : i32
    %c0_i32_1 = arith.constant 0 : i32
    return %c0_i32, %c0_i32_0 : i32, i32
  }
  func.func @transform_13(%arg0: i32, %arg1: i32, %arg2: memref<4x2xi32, #tpu.memory_space<smem>>) -> (i32, i32) {
    %c0_i32 = arith.constant 0 : i32
    %c0_i32_0 = arith.constant 0 : i32
    %c0_i32_1 = arith.constant 0 : i32
    return %c0_i32, %c0_i32_0 : i32, i32
  }
  func.func @transform_14(%arg0: i32, %arg1: i32, %arg2: memref<4x2xi32, #tpu.memory_space<smem>>) -> (i32, i32) {
    %c0_i32 = arith.constant 0 : i32
    %c0_i32_0 = arith.constant 0 : i32
    %c0_i32_1 = arith.constant 0 : i32
    return %c0_i32, %c0_i32_0 : i32, i32
  }
  func.func @transform_15(%arg0: i32, %arg1: i32, %arg2: memref<4x2xi32, #tpu.memory_space<smem>>) -> (i32, i32) {
    %c0_i32 = arith.constant 0 : i32
    %c0_i32_0 = arith.constant 0 : i32
    return %arg0, %c0_i32 : i32, i32
  }
}

</mosaic_0001>

<llo_original>
// kernel: multi_layer_homo_gt.4
$region0: #{multi_layer_homo_gt.4}
  #allocation0 [shape = 'u32[]', space=smem, size = 0x4, offset = 0x4, fixed_abs, tag = 'smem constant byte address 0x4 - core index']
  #allocation1 [shape = 'u32[144,128]{1,0:T(1,128)}', space=vmem, size = 0x12000, scoped, tag = 'internal scratch']
  %s0 = inlined_call_operand.vmem [shape: bf16[256,128], index: 0, kind: input, shape index: {}]
  %s1 = inlined_call_operand.vmem [shape: bf16[128,384], index: 1, kind: input, shape index: {}]
  %s2 = inlined_call_operand.vmem [shape: f32[1,384], index: 2, kind: input, shape index: {}]
  %s3 = inlined_call_operand.vmem [shape: bf16[4,256,32], index: 3, kind: output, shape index: {0}]
  %s4 = inlined_call_operand.vmem [shape: bf16[4,256,32], index: 4, kind: output, shape index: {1}]
  %s5 = inlined_call_operand.vmem [shape: bf16[4,256,32], index: 5, kind: output, shape index: {2}]
  %6 = xla_tuple %s3, %s4, %s5
  %s7 = sld [smem:[#allocation0]]
  $region172: #{multi_layer_homo_gt.4} parent=0
    _
  %s9 = ssub.s32 1, %s7
  %s10 = scalar_select 0, %s9, %s7
  $region1: #{multi_layer_homo_gt.4} parent=0
    #allocation2 [shape = 'u8[131072]{0}', space=vmem, size = 0x20000, scoped, tag = 'output window, operand 0']
    #allocation3 [shape = 'u8[131072]{0}', space=vmem, size = 0x20000, scoped, tag = 'output window, operand 1']
    #allocation4 [shape = 'u8[131072]{0}', space=vmem, size = 0x20000, scoped, tag = 'output window, operand 2']
    loop: start=0, step=1, limit=6
    $region2: #{multi_layer_homo_gt.4} parent=1 // loop_pre_header
      _
    $region3: #{multi_layer_homo_gt.4} parent=1 // loop_header
      %s12 = sphi 0, %s16
      %p13 = scmp.ge.s32.totalorder %s12, 6
      %s22 = sphi 0, %s24
      %s25 = sphi 0, %s22
      %s26 = sphi 0, %s25
      %s42 = sphi 0, %s26
      %s46 = sphi 0, %s46
      %s48 = sphi 0, %s46
      %s49 = sphi 0, %s48
      %s63 = sphi 0, %s49
      %s67 = sphi 0, %s67
      %s69 = sphi 0, %s67
      %s70 = sphi 0, %s69
      %s84 = sphi 0, %s70
      %s90 = sphi 0, %s92
      %s93 = sphi 0, %s90
      %s94 = sphi 0, %s93
      %s110 = sphi 0, %s94
      %s116 = sphi 0, %s118
      %s119 = sphi 0, %s116
      %s120 = sphi 0, %s119
      %s136 = sphi 0, %s120
      %s142 = sphi 0, %s144
      %s145 = sphi 0, %s142
      %s146 = sphi 0, %s145
      %s162 = sphi 0, %s146
    $region4: #{multi_layer_homo_gt.4} parent=1 // loop_header_branch
      %15 = sbr.rel (%p13) target = $region8
    $region5: #{multi_layer_homo_gt.4} parent=1 // loop_body
      %s17 = ssub.s32 %s12, 1
      %s18 = ssub.s32 %s12, 2
      %s19 = sadd.s32 %s12, 1
      %s20 = ssub.s32 %s12, %s19
      %p21 = scmp.eq.s32.totalorder %s20, 0
      %s23 = sadd.s32 %s22, 1
      %s24 = scalar_select %p21, %s22, %s23
      %p27 = pneg %p21
      %p28 = scmp.eq.s32.totalorder %s12, 3
      %p29 = por %p27, %p28
      %p30 = scmp.ne.s32.totalorder %s22, %s25
      %p31 = scmp.eq.s32.totalorder %s12, 0
      %p32 = por %p30, %p31
      %p33 = scmp.ne.s32.totalorder %s22, %s25
      %p34 = scmp.eq.s32.totalorder %s17, 3
      %p35 = por %p33, %p34
      %p36 = scmp.ne.s32.totalorder %s25, %s26
      %p37 = scmp.eq.s32.totalorder %s17, 0
      %p38 = por %p36, %p37
      %p39 = scmp.ne.s32.totalorder %s25, %s26
      %p40 = scmp.eq.s32.totalorder %s18, 3
      %p41 = por %p39, %p40
      %p43 = scmp.ne.s32.totalorder %s26, %s42
      %p44 = scmp.eq.s32.totalorder %s18, 0
      %p45 = por %p43, %p44
      %s47 = sadd.s32 %s46, 1
      %p50 = scmp.eq.s32.totalorder %s12, 3
      %p51 = scmp.ne.s32.totalorder %s46, %s48
      %p52 = scmp.eq.s32.totalorder %s12, 0
      %p53 = por %p51, %p52
      %p54 = scmp.ne.s32.totalorder %s46, %s48
      %p55 = scmp.eq.s32.totalorder %s17, 3
      %p56 = por %p54, %p55
      %p57 = scmp.ne.s32.totalorder %s48, %s49
      %p58 = scmp.eq.s32.totalorder %s17, 0
      %p59 = por %p57, %p58
      %p60 = scmp.ne.s32.totalorder %s48, %s49
      %p61 = scmp.eq.s32.totalorder %s18, 3
      %p62 = por %p60, %p61
      %p64 = scmp.ne.s32.totalorder %s49, %s63
      %p65 = scmp.eq.s32.totalorder %s18, 0
      %p66 = por %p64, %p65
      %s68 = sadd.s32 %s67, 1
      %p71 = scmp.eq.s32.totalorder %s12, 3
      %p72 = scmp.ne.s32.totalorder %s67, %s69
      %p73 = scmp.eq.s32.totalorder %s12, 0
      %p74 = por %p72, %p73
      %p75 = scmp.ne.s32.totalorder %s67, %s69
      %p76 = scmp.eq.s32.totalorder %s17, 3
      %p77 = por %p75, %p76
      %p78 = scmp.ne.s32.totalorder %s69, %s70
      %p79 = scmp.eq.s32.totalorder %s17, 0
      %p80 = por %p78, %p79
      %p81 = scmp.ne.s32.totalorder %s69, %s70
      %p82 = scmp.eq.s32.totalorder %s18, 3
      %p83 = por %p81, %p82
      %p85 = scmp.ne.s32.totalorder %s70, %s84
      %p86 = scmp.eq.s32.totalorder %s18, 0
      %p87 = por %p85, %p86
      %s88 = ssub.s32 %s12, %s19
      %p89 = scmp.eq.s32.totalorder %s88, 0
      %s91 = sadd.s32 %s90, 1
      %s92 = scalar_select %p89, %s90, %s91
      %p95 = pneg %p89
      %p96 = scmp.eq.s32.totalorder %s12, 3
      %p97 = por %p95, %p96
      %p98 = scmp.ne.s32.totalorder %s90, %s93
      %p99 = scmp.eq.s32.totalorder %s12, 0
      %p100 = por %p98, %p99
      %p101 = scmp.ne.s32.totalorder %s90, %s93
      %p102 = scmp.eq.s32.totalorder %s17, 3
      %p103 = por %p101, %p102
      %p104 = scmp.ne.s32.totalorder %s93, %s94
      %p105 = scmp.eq.s32.totalorder %s17, 0
      %p106 = por %p104, %p105
      %p107 = scmp.ne.s32.totalorder %s93, %s94
      %p108 = scmp.eq.s32.totalorder %s18, 3
      %p109 = por %p107, %p108
      %p111 = scmp.ne.s32.totalorder %s94, %s110
      %p112 = scmp.eq.s32.totalorder %s18, 0
      %p113 = por %p111, %p112
      %s114 = ssub.s32 %s12, %s19
      %p115 = scmp.eq.s32.totalorder %s114, 0
      %s117 = sadd.s32 %s116, 1
      %s118 = scalar_select %p115, %s116, %s117
      %p121 = pneg %p115
      %p122 = scmp.eq.s32.totalorder %s12, 3
      %p123 = por %p121, %p122
      %p124 = scmp.ne.s32.totalorder %s116, %s119
      %p125 = scmp.eq.s32.totalorder %s12, 0
      %p126 = por %p124, %p125
      %p127 = scmp.ne.s32.totalorder %s116, %s119
      %p128 = scmp.eq.s32.totalorder %s17, 3
      %p129 = por %p127, %p128
      %p130 = scmp.ne.s32.totalorder %s119, %s120
      %p131 = scmp.eq.s32.totalorder %s17, 0
      %p132 = por %p130, %p131
      %p133 = scmp.ne.s32.totalorder %s119, %s120
      %p134 = scmp.eq.s32.totalorder %s18, 3
      %p135 = por %p133, %p134
      %p137 = scmp.ne.s32.totalorder %s120, %s136
      %p138 = scmp.eq.s32.totalorder %s18, 0
      %p139 = por %p137, %p138
      %s140 = ssub.s32 %s12, %s19
      %p141 = scmp.eq.s32.totalorder %s140, 0
      %s143 = sadd.s32 %s142, 1
      %s144 = scalar_select %p141, %s142, %s143
      %p147 = pneg %p141
      %p148 = scmp.eq.s32.totalorder %s12, 3
      %p149 = por %p147, %p148
      %p150 = scmp.ne.s32.totalorder %s142, %s145
      %p151 = scmp.eq.s32.totalorder %s12, 0
      %p152 = por %p150, %p151
      %p153 = scmp.ne.s32.totalorder %s142, %s145
      %p154 = scmp.eq.s32.totalorder %s17, 3
      %p155 = por %p153, %p154
      %p156 = scmp.ne.s32.totalorder %s145, %s146
      %p157 = scmp.eq.s32.totalorder %s17, 0
      %p158 = por %p156, %p157
      %p159 = scmp.ne.s32.totalorder %s145, %s146
      %p160 = scmp.eq.s32.totalorder %s18, 3
      %p161 = por %p159, %p160
      %p163 = scmp.ne.s32.totalorder %s146, %s162
      %p164 = scmp.eq.s32.totalorder %s18, 0
      %p165 = por %p163, %p164
      %p166 = scmp.le.s32.totalorder 1, %s12
      %p167 = scmp.lt.s32.totalorder %s12, 5
      %p168 = pnand %p166, %p167
      %p169 = pneg %p168
      // Predicated region
      $region9: #{multi_layer_homo_gt.4} parent=5 // pred_check
        _
      $region10: #{multi_layer_homo_gt.4} parent=5 // pred_check_branch
        %171 = sbr.rel (%p168) target = $region12
      $region11: #{multi_layer_homo_gt.4} parent=5 // pred_region
        %s172 = ssub.s32 %s12, 1
        // Predicated region
        $region13: #{multi_layer_homo_gt.4} parent=11 // pred_check
          %p173 = pneg %p59
        $region14: #{multi_layer_homo_gt.4} parent=11 // pred_check_branch
          %175 = sbr.rel (%p173) target = $region16
        $region15: #{multi_layer_homo_gt.4} parent=11 // pred_region
          _
        $region16: #{multi_layer_homo_gt.4} parent=11 // pred_fallthru
          _
        // Predicated region
        $region17: #{multi_layer_homo_gt.4} parent=11 // pred_check
          %p176 = pneg %p80
        $region18: #{multi_layer_homo_gt.4} parent=11 // pred_check_branch
          %178 = sbr.rel (%p176) target = $region20
        $region19: #{multi_layer_homo_gt.4} parent=11 // pred_region
          _
        $region20: #{multi_layer_homo_gt.4} parent=11 // pred_fallthru
          _
      $region12: #{multi_layer_homo_gt.4} parent=5 // pred_fallthru
        _
      %p179 = scmp.lt.s32.totalorder %s12, 4
      // Predicated region
      $region21: #{multi_layer_homo_gt.4} parent=5 // pred_check
        %p180 = pneg %p179
      $region22: #{multi_layer_homo_gt.4} parent=5 // pred_check_branch
        %182 = sbr.rel (%p180) target = $region24
      $region23: #{multi_layer_homo_gt.4} parent=5 // pred_region
        // Predicated region
        $region25: #{multi_layer_homo_gt.4} parent=23 // pred_check
          %p183 = pneg %p32
        $region26: #{multi_layer_homo_gt.4} parent=23 // pred_check_branch
          %185 = sbr.rel (%p183) target = $region28
        $region27: #{multi_layer_homo_gt.4} parent=23 // pred_region
          %s186 = smul.u32 8, %s12
          %p187 = scmp.lt.s32.totalorder %s186, 31
          %s188 = scalar_select %p187, %s186, 31
          %s189 = smul.addr %s188, 4
          %s190 = scalar_lea.vmem %s0, %s189
          %s191 = smul.u32 8, %s12
        $region28: #{multi_layer_homo_gt.4} parent=23 // pred_fallthru
          _
      $region24: #{multi_layer_homo_gt.4} parent=5 // pred_fallthru
        _
      %p192 = scmp.le.s32.totalorder 1, %s12
      %p193 = scmp.lt.s32.totalorder %s12, 5
      %p194 = pnand %p192, %p193
      %p195 = pneg %p194
      // Predicated region
      $region29: #{multi_layer_homo_gt.4} parent=5 // pred_check
        _
      $region30: #{multi_layer_homo_gt.4} parent=5 // pred_check_branch
        %197 = sbr.rel (%p194) target = $region32
      $region31: #{multi_layer_homo_gt.4} parent=5 // pred_region
        %s198 = ssub.s32 %s12, 1
        %s199 = smul.u32 8, %s17
        %p200 = scmp.lt.s32.totalorder %s199, 31
        %s201 = scalar_select %p200, %s199, 31
        %s202 = smul.addr %s201, 4
        %s203 = scalar_lea.vmem %s0, %s202
        %p204 = pneg %p38
        %p205 = pneg %p35
        %p206 = pneg %p59
        %p207 = pneg %p56
        %p208 = pneg %p80
        %p209 = pneg %p77
        %p210 = pneg %p106
        %p211 = pneg %p103
        %s212 = sand.u32 %s93, 1
        %s213 = sand.u32 %s93, 1
        %s214 = smul.addr %s213, 128
        %s215 = scalar_lea.vmem [#allocation2], %s214
        %p216 = pneg %p132
        %p217 = pneg %p129
        %s218 = sand.u32 %s119, 1
        %s219 = sand.u32 %s119, 1
        %s220 = smul.addr %s219, 128
        %s221 = scalar_lea.vmem [#allocation3], %s220
        %p222 = pneg %p158
        %p223 = pneg %p155
        %s224 = sand.u32 %s145, 1
        %s225 = sand.u32 %s145, 1
        %s226 = smul.addr %s225, 128
        %s227 = scalar_lea.vmem [#allocation4], %s226
        %s228 = smul.u32 8, %s17
        %p229 = scmp.lt.s32.totalorder %s228, 31
        %s230 = scalar_select %p229, %s228, 31
        %s231 = smul.addr %s230, 4
        %s232 = scalar_lea.vmem %s0, %s231
        %s233 = smul.u32 8, %s17
        %s234 = smul.u32 8, %s17
        %s235 = smul.u32 8, %s17
        %s236 = smul.u32 8, %s17
        %v238 = vld [vmem:[%s232] sm:$0xf]
        %v239 = vld [vmem:[%s232 + $0x4] sm:$0xf]
        %v240 = vld [vmem:[%s232 + $0x8] sm:$0xf]
        %v241 = vld [vmem:[%s232 + $0xc] sm:$0xf]
        %v242 = vld [vmem:[%s232 + $0x10] sm:$0xf]
        %v243 = vld [vmem:[%s232 + $0x14] sm:$0xf]
        %v244 = vld [vmem:[%s232 + $0x18] sm:$0xf]
        %v245 = vld [vmem:[%s232 + $0x1c] sm:$0xf]
        %v246 = vld [vmem:[%s1] sm:$0xff]
        %v247 = vld [vmem:[%s1 + $0x8] sm:$0xf]
        %v248 = vld [vmem:[%s1 + $0xc] sm:$0xff]
        %v249 = vld [vmem:[%s1 + $0x14] sm:$0xf]
        %v250 = vld [vmem:[%s1 + $0x18] sm:$0xff]
        %v251 = vld [vmem:[%s1 + $0x20] sm:$0xf]
        %v252 = vld [vmem:[%s1 + $0x24] sm:$0xff]
        %v253 = vld [vmem:[%s1 + $0x2c] sm:$0xf]
        %v254 = vld [vmem:[%s1 + $0x30] sm:$0xff]
        %v255 = vld [vmem:[%s1 + $0x38] sm:$0xf]
        %v256 = vld [vmem:[%s1 + $0x3c] sm:$0xff]
        %v257 = vld [vmem:[%s1 + $0x44] sm:$0xf]
        %v258 = vld [vmem:[%s1 + $0x48] sm:$0xff]
        %v259 = vld [vmem:[%s1 + $0x50] sm:$0xf]
        %v260 = vld [vmem:[%s1 + $0x54] sm:$0xff]
        %v261 = vld [vmem:[%s1 + $0x5c] sm:$0xf]
        %v262 = vld [vmem:[%s1 + $0x60] sm:$0xff]
        %v263 = vld [vmem:[%s1 + $0x68] sm:$0xf]
        %v264 = vld [vmem:[%s1 + $0x6c] sm:$0xff]
        %v265 = vld [vmem:[%s1 + $0x74] sm:$0xf]
        %v266 = vld [vmem:[%s1 + $0x78] sm:$0xff]
        %v267 = vld [vmem:[%s1 + $0x80] sm:$0xf]
        %v268 = vld [vmem:[%s1 + $0x84] sm:$0xff]
        %v269 = vld [vmem:[%s1 + $0x8c] sm:$0xf]
        %v270 = vld [vmem:[%s1 + $0x90] sm:$0xff]
        %v271 = vld [vmem:[%s1 + $0x98] sm:$0xf]
        %v272 = vld [vmem:[%s1 + $0x9c] sm:$0xff]
        %v273 = vld [vmem:[%s1 + $0xa4] sm:$0xf]
        %v274 = vld [vmem:[%s1 + $0xa8] sm:$0xff]
        %v275 = vld [vmem:[%s1 + $0xb0] sm:$0xf]
        %v276 = vld [vmem:[%s1 + $0xb4] sm:$0xff]
        %v277 = vld [vmem:[%s1 + $0xbc] sm:$0xf]
        %v278 = vld [vmem:[%s2] sm:$0x7]
        %v280 = vlaneseq
        %v281 = vshrl.u32 %v280, 7
        %v282 = vsub.s32 0, %v281
        %v283 = vrot.slane %v278, %v282
        %v284 = vlaneseq
        %v285 = vshrl.u32 %v284, 7
        %v286 = vsub.s32 1, %v285
        %v287 = vrot.slane %v278, %v286
        %v288 = vlaneseq
        %v289 = vshrl.u32 %v288, 7
        %v290 = vsub.s32 2, %v289
        %v291 = vrot.slane %v278, %v290
        %v303 = vunpack.c.l.b16 %v238
        %v304 = vunpack.c.l.b16 %v239
        %v305 = vunpack.c.l.b16 %v240
        %v306 = vunpack.c.l.b16 %v241
        %v307 = vunpack.c.l.b16 %v242
        %v308 = vunpack.c.l.b16 %v243
        %v309 = vunpack.c.l.b16 %v244
        %v310 = vunpack.c.l.b16 %v245
        %v311 = vpack.c.b16 %v304, %v303
        %v312 = vpack.c.b16 %v306, %v305
        %v313 = vpack.c.b16 %v308, %v307
        %v314 = vpack.c.b16 %v310, %v309
        %v351 = vunpack.c.l.b16 %v246
        %v352 = vunpack.c.h.b16 %v246
        %v353 = vunpack.c.l.b16 %v247
        %v354 = vunpack.c.l.b16 %v248
        %v355 = vunpack.c.h.b16 %v248
        %v356 = vunpack.c.l.b16 %v249
        %v357 = vunpack.c.l.b16 %v250
        %v358 = vunpack.c.h.b16 %v250
        %v359 = vunpack.c.l.b16 %v251
        %v360 = vunpack.c.l.b16 %v252
        %v361 = vunpack.c.h.b16 %v252
        %v362 = vunpack.c.l.b16 %v253
        %v363 = vunpack.c.l.b16 %v254
        %v364 = vunpack.c.h.b16 %v254
        %v365 = vunpack.c.l.b16 %v255
        %v366 = vunpack.c.l.b16 %v256
        %v367 = vunpack.c.h.b16 %v256
        %v368 = vunpack.c.l.b16 %v257
        %v369 = vunpack.c.l.b16 %v258
        %v370 = vunpack.c.h.b16 %v258
        %v371 = vunpack.c.l.b16 %v259
        %v372 = vunpack.c.l.b16 %v260
        %v373 = vunpack.c.h.b16 %v260
        %v374 = vunpack.c.l.b16 %v261
        %v375 = vunpack.c.l.b16 %v262
        %v376 = vunpack.c.h.b16 %v262
        %v377 = vunpack.c.l.b16 %v263
        %v378 = vunpack.c.l.b16 %v264
        %v379 = vunpack.c.h.b16 %v264
        %v380 = vunpack.c.l.b16 %v265
        %v381 = vunpack.c.l.b16 %v266
        %v382 = vunpack.c.h.b16 %v266
        %v383 = vunpack.c.l.b16 %v267
        %v384 = vunpack.c.l.b16 %v268
        %v385 = vunpack.c.h.b16 %v268
        %v386 = vunpack.c.l.b16 %v269
        %v387 = vunpack.c.l.b16 %v270
        %v388 = vunpack.c.h.b16 %v270
        %v389 = vunpack.c.l.b16 %v271
        %v390 = vunpack.c.l.b16 %v272
        %v391 = vunpack.c.h.b16 %v272
        %v392 = vunpack.c.l.b16 %v273
        %v393 = vunpack.c.l.b16 %v274
        %v394 = vunpack.c.h.b16 %v274
        %v395 = vunpack.c.l.b16 %v275
        %v396 = vunpack.c.l.b16 %v276
        %v397 = vunpack.c.h.b16 %v276
        %v398 = vunpack.c.l.b16 %v277
        %v399 = vpack.c.b16 %v354, %v351
        %v400 = vpack.c.b16 %v355, %v352
        %v401 = vpack.c.b16 %v356, %v353
        %v402 = vpack.c.b16 %v360, %v357
        %v403 = vpack.c.b16 %v361, %v358
        %v404 = vpack.c.b16 %v362, %v359
        %v405 = vpack.c.b16 %v366, %v363
        %v406 = vpack.c.b16 %v367, %v364
        %v407 = vpack.c.b16 %v368, %v365
        %v408 = vpack.c.b16 %v372, %v369
        %v409 = vpack.c.b16 %v373, %v370
        %v410 = vpack.c.b16 %v374, %v371
        %v411 = vpack.c.b16 %v378, %v375
        %v412 = vpack.c.b16 %v379, %v376
        %v413 = vpack.c.b16 %v380, %v377
        %v414 = vpack.c.b16 %v384, %v381
        %v415 = vpack.c.b16 %v385, %v382
        %v416 = vpack.c.b16 %v386, %v383
        %v417 = vpack.c.b16 %v390, %v387
        %v418 = vpack.c.b16 %v391, %v388
        %v419 = vpack.c.b16 %v392, %v389
        %v420 = vpack.c.b16 %v396, %v393
        %v421 = vpack.c.b16 %v397, %v394
        %v422 = vpack.c.b16 %v398, %v395
        %447 = vmatprep.subr.bf16.mxu0 %v421
        %448 = vmatpush1.bf16.msra.mxu0 %v420
        %449 = vmatprep.subr.bf16.mxu0 %v418
        %450 = vmatpush1.bf16.msra.mxu0 %v417
        %451 = vmatprep.subr.bf16.mxu0 %v415
        %452 = vmatpush1.bf16.msra.mxu0 %v414
        %453 = vmatprep.subr.bf16.mxu0 %v412
        %454 = vmatpush1.bf16.msra.mxu0 %v411
        %455 = vmatprep.subr.bf16.mxu0 %v409
        %456 = vmatpush1.bf16.msra.mxu0 %v408
        %457 = vmatprep.subr.bf16.mxu0 %v406
        %458 = vmatpush1.bf16.msra.mxu0 %v405
        %459 = vmatprep.subr.bf16.mxu0 %v403
        %460 = vmatpush1.bf16.msra.mxu0 %v402
        %461 = vmatprep.subr.bf16.mxu0 %v400
        %462 = vmatpush1.bf16.msra.mxu0 %v399
        %463 = vmatprep.subr.bf16.mxu0 0
        %464 = vmatpush2.bf16.msra.mxu0 0
        %465 = vmatprep.subr.bf16.mxu0 0
        %466 = vmatpush2.bf16.msra.mxu0 0
        %467 = vmatprep.subr.bf16.mxu0 0
        %468 = vmatpush2.bf16.msra.mxu0 0
        %469 = vmatprep.subr.bf16.mxu0 0
        %470 = vmatpush2.bf16.msra.mxu0 0
        %471 = vmatprep.subr.bf16.mxu0 0
        %472 = vmatpush2.bf16.msra.mxu0 0
        %473 = vmatprep.subr.bf16.mxu0 0
        %474 = vmatpush2.bf16.msra.mxu0 0
        %475 = vmatprep.subr.bf16.mxu0 0
        %476 = vmatpush2.bf16.msra.mxu0 0
        %477 = vmatprep.subr.bf16.mxu0 0
        %478 = vmatpush2.bf16.msra.mxu0 0
        %479 = vmatprep.mubr.bf16.mxu0 0
        %480 = vmatmul.mubr.bf16.gmra.mxu0 %v311
        %v481 = vpop.f32.mrf.mxu0
        %v482 = vadd.f32 %v283, %v481
        %v483 = vpop.f32.mrf.mxu0
        %v484 = vadd.f32 %v287, %v483
        %v485 = vpop.f32.mrf.mxu0
        %v486 = vadd.f32 %v283, %v485
        %v487 = vpop.f32.mrf.mxu0
        %v488 = vadd.f32 %v287, %v487
        %489 = vmatprep.mubr.bf16.mxu0 0
        %490 = vmatmul.mubr.bf16.gmra.mxu0 %v312
        %v491 = vpop.f32.mrf.mxu0
        %v492 = vadd.f32 %v283, %v491
        %v493 = vpop.f32.mrf.mxu0
        %v494 = vadd.f32 %v287, %v493
        %v495 = vpop.f32.mrf.mxu0
        %v496 = vadd.f32 %v283, %v495
        %v497 = vpop.f32.mrf.mxu0
        %v498 = vadd.f32 %v287, %v497
        %499 = vmatprep.mubr.bf16.mxu0 0
        %500 = vmatmul.mubr.bf16.gmra.mxu0 %v313
        %v501 = vpop.f32.mrf.mxu0
        %v502 = vadd.f32 %v283, %v501
        %v503 = vpop.f32.mrf.mxu0
        %v504 = vadd.f32 %v287, %v503
        %v505 = vpop.f32.mrf.mxu0
        %v506 = vadd.f32 %v283, %v505
        %v507 = vpop.f32.mrf.mxu0
        %v508 = vadd.f32 %v287, %v507
        %509 = vmatprep.mubr.bf16.mxu0 0
        %510 = vmatmul.mubr.bf16.gmra.mxu0 %v314
        %v511 = vpop.f32.mrf.mxu0
        %v512 = vadd.f32 %v283, %v511
        %v513 = vpop.f32.mrf.mxu0
        %v514 = vadd.f32 %v287, %v513
        %v515 = vpop.f32.mrf.mxu0
        %v516 = vadd.f32 %v283, %v515
        %v517 = vpop.f32.mrf.mxu0
        %v518 = vadd.f32 %v287, %v517
        %519 = vdwg.mxu0
        %520 = vmatprep.subr.bf16.mxu0 0
        %521 = vmatpush1.bf16.msra.mxu0 %v422
        %522 = vmatprep.subr.bf16.mxu0 0
        %523 = vmatpush1.bf16.msra.mxu0 %v419
        %524 = vmatprep.subr.bf16.mxu0 0
        %525 = vmatpush1.bf16.msra.mxu0 %v416
        %526 = vmatprep.subr.bf16.mxu0 0
        %527 = vmatpush1.bf16.msra.mxu0 %v413
        %528 = vmatprep.subr.bf16.mxu0 0
        %529 = vmatpush1.bf16.msra.mxu0 %v410
        %530 = vmatprep.subr.bf16.mxu0 0
        %531 = vmatpush1.bf16.msra.mxu0 %v407
        %532 = vmatprep.subr.bf16.mxu0 0
        %533 = vmatpush1.bf16.msra.mxu0 %v404
        %534 = vmatprep.subr.bf16.mxu0 0
        %535 = vmatpush1.bf16.msra.mxu0 %v401
        %536 = vmatprep.subr.bf16.mxu0 0
        %537 = vmatpush2.bf16.msra.mxu0 0
        %538 = vmatprep.subr.bf16.mxu0 0
        %539 = vmatpush2.bf16.msra.mxu0 0
        %540 = vmatprep.subr.bf16.mxu0 0
        %541 = vmatpush2.bf16.msra.mxu0 0
        %542 = vmatprep.subr.bf16.mxu0 0
        %543 = vmatpush2.bf16.msra.mxu0 0
        %544 = vmatprep.subr.bf16.mxu0 0
        %545 = vmatpush2.bf16.msra.mxu0 0
        %546 = vmatprep.subr.bf16.mxu0 0
        %547 = vmatpush2.bf16.msra.mxu0 0
        %548 = vmatprep.subr.bf16.mxu0 0
        %549 = vmatpush2.bf16.msra.mxu0 0
        %550 = vmatprep.subr.bf16.mxu0 0
        %551 = vmatpush2.bf16.msra.mxu0 0
        %552 = vmatprep.mubr.bf16.mxu0 0
        %553 = vmatmul.mubr.bf16.gmra.mxu0 %v311
        %v554 = vpop.f32.mrf.mxu0
        %v555 = vadd.f32 %v291, %v554
        %v556 = vpop.f32.mrf.mxu0
        %v557 = vpop.f32.mrf.mxu0
        %v558 = vadd.f32 %v291, %v557
        %v559 = vpop.f32.mrf.mxu0
        %560 = vmatprep.mubr.bf16.mxu0 0
        %561 = vmatmul.mubr.bf16.gmra.mxu0 %v312
        %v562 = vpop.f32.mrf.mxu0
        %v563 = vadd.f32 %v291, %v562
        %v564 = vpop.f32.mrf.mxu0
        %v565 = vpop.f32.mrf.mxu0
        %v566 = vadd.f32 %v291, %v565
        %v567 = vpop.f32.mrf.mxu0
        %568 = vmatprep.mubr.bf16.mxu0 0
        %569 = vmatmul.mubr.bf16.gmra.mxu0 %v313
        %v570 = vpop.f32.mrf.mxu0
        %v571 = vadd.f32 %v291, %v570
        %v572 = vpop.f32.mrf.mxu0
        %v573 = vpop.f32.mrf.mxu0
        %v574 = vadd.f32 %v291, %v573
        %v575 = vpop.f32.mrf.mxu0
        %576 = vmatprep.mubr.bf16.mxu0 0
        %577 = vmatmul.mubr.bf16.gmra.mxu0 %v314
        %v578 = vpop.f32.mrf.mxu0
        %v579 = vadd.f32 %v291, %v578
        %v580 = vpop.f32.mrf.mxu0
        %v581 = vpop.f32.mrf.mxu0
        %v582 = vadd.f32 %v291, %v581
        %v583 = vpop.f32.mrf.mxu0
        %584 = vdwg.mxu0
        %v585 = vpack.c.bf16 %v486, %v482
        %v586 = vpack.c.bf16 %v488, %v484
        %v587 = vpack.c.bf16 %v558, %v555
        %v588 = vpack.c.bf16 %v496, %v492
        %v589 = vpack.c.bf16 %v498, %v494
        %v590 = vpack.c.bf16 %v566, %v563
        %v591 = vpack.c.bf16 %v506, %v502
        %v592 = vpack.c.bf16 %v508, %v504
        %v593 = vpack.c.bf16 %v574, %v571
        %v594 = vpack.c.bf16 %v516, %v512
        %v595 = vpack.c.bf16 %v518, %v514
        %v596 = vpack.c.bf16 %v582, %v579
        %601 = vrot.lane.b32.xlu0 %v585, 96
        %v602 = vpop.permute.xlu0 %601
        %603 = vrot.lane.b32.xlu0 %v588, 96
        %v604 = vpop.permute.xlu0 %603
        %605 = vrot.lane.b32.xlu0 %v591, 96
        %v606 = vpop.permute.xlu0 %605
        %607 = vrot.lane.b32.xlu0 %v594, 96
        %v608 = vpop.permute.xlu0 %607
        %609 = vrot.lane.b32.xlu0 %v585, 64
        %v610 = vpop.permute.xlu0 %609
        %611 = vrot.lane.b32.xlu0 %v588, 64
        %v612 = vpop.permute.xlu0 %611
        %613 = vrot.lane.b32.xlu0 %v591, 64
        %v614 = vpop.permute.xlu0 %613
        %615 = vrot.lane.b32.xlu0 %v594, 64
        %v616 = vpop.permute.xlu0 %615
        %617 = vrot.lane.b32.xlu0 %v585, 32
        %v618 = vpop.permute.xlu0 %617
        %619 = vrot.lane.b32.xlu0 %v588, 32
        %v620 = vpop.permute.xlu0 %619
        %621 = vrot.lane.b32.xlu0 %v591, 32
        %v622 = vpop.permute.xlu0 %621
        %623 = vrot.lane.b32.xlu0 %v594, 32
        %v624 = vpop.permute.xlu0 %623
        %v625 = vunpack.c.l.b16 %v585
        %v626 = vunpack.c.h.b16 %v585
        %v627 = vunpack.c.l.b16 %v588
        %v628 = vunpack.c.h.b16 %v588
        %v629 = vunpack.c.l.b16 %v591
        %v630 = vunpack.c.h.b16 %v591
        %v631 = vunpack.c.l.b16 %v594
        %v632 = vunpack.c.h.b16 %v594
        %v633 = vunpack.c.l.b16 %v602
        %v634 = vunpack.c.h.b16 %v602
        %v635 = vunpack.c.l.b16 %v604
        %v636 = vunpack.c.h.b16 %v604
        %v637 = vunpack.c.l.b16 %v606
        %v638 = vunpack.c.h.b16 %v606
        %v639 = vunpack.c.l.b16 %v608
        %v640 = vunpack.c.h.b16 %v608
        %v641 = vunpack.c.l.b16 %v610
        %v642 = vunpack.c.h.b16 %v610
        %v643 = vunpack.c.l.b16 %v612
        %v644 = vunpack.c.h.b16 %v612
        %v645 = vunpack.c.l.b16 %v614
        %v646 = vunpack.c.h.b16 %v614
        %v647 = vunpack.c.l.b16 %v616
        %v648 = vunpack.c.h.b16 %v616
        %v649 = vunpack.c.l.b16 %v618
        %v650 = vunpack.c.h.b16 %v618
        %v651 = vunpack.c.l.b16 %v620
        %v652 = vunpack.c.h.b16 %v620
        %v653 = vunpack.c.l.b16 %v622
        %v654 = vunpack.c.h.b16 %v622
        %v655 = vunpack.c.l.b16 %v624
        %v656 = vunpack.c.h.b16 %v624
        %v657 = vpack.c.b16 %v625, %v625
        %v658 = vpack.c.b16 %v626, %v626
        %v659 = vpack.c.b16 %v627, %v627
        %v660 = vpack.c.b16 %v628, %v628
        %v661 = vpack.c.b16 %v629, %v629
        %v662 = vpack.c.b16 %v630, %v630
        %v663 = vpack.c.b16 %v631, %v631
        %v664 = vpack.c.b16 %v632, %v632
        %v665 = vpack.c.b16 %v633, %v633
        %v666 = vpack.c.b16 %v634, %v634
        %v667 = vpack.c.b16 %v635, %v635
        %v668 = vpack.c.b16 %v636, %v636
        %v669 = vpack.c.b16 %v637, %v637
        %v670 = vpack.c.b16 %v638, %v638
        %v671 = vpack.c.b16 %v639, %v639
        %v672 = vpack.c.b16 %v640, %v640
        %v673 = vpack.c.b16 %v641, %v641
        %v674 = vpack.c.b16 %v642, %v642
        %v675 = vpack.c.b16 %v643, %v643
        %v676 = vpack.c.b16 %v644, %v644
        %v677 = vpack.c.b16 %v645, %v645
        %v678 = vpack.c.b16 %v646, %v646
        %v679 = vpack.c.b16 %v647, %v647
        %v680 = vpack.c.b16 %v648, %v648
        %v681 = vpack.c.b16 %v649, %v649
        %v682 = vpack.c.b16 %v650, %v650
        %v683 = vpack.c.b16 %v651, %v651
        %v684 = vpack.c.b16 %v652, %v652
        %v685 = vpack.c.b16 %v653, %v653
        %v686 = vpack.c.b16 %v654, %v654
        %v687 = vpack.c.b16 %v655, %v655
        %v688 = vpack.c.b16 %v656, %v656
        %vm721 = vcmask 257024
        %722 = vst.msk [vmem:[%s215] sm:$0xf] %vm721, %v657
        %723 = vst.msk [vmem:[%s215 + $0x4] sm:$0xf] %vm721, %v658
        %724 = vst.msk [vmem:[%s215 + $0x8] sm:$0xf] %vm721, %v659
        %725 = vst.msk [vmem:[%s215 + $0xc] sm:$0xf] %vm721, %v660
        %726 = vst.msk [vmem:[%s215 + $0x10] sm:$0xf] %vm721, %v661
        %727 = vst.msk [vmem:[%s215 + $0x14] sm:$0xf] %vm721, %v662
        %728 = vst.msk [vmem:[%s215 + $0x18] sm:$0xf] %vm721, %v663
        %729 = vst.msk [vmem:[%s215 + $0x1c] sm:$0xf] %vm721, %v664
        %730 = vst.msk [vmem:[%s215 + $0x20] sm:$0xf] %vm721, %v665
        %731 = vst.msk [vmem:[%s215 + $0x24] sm:$0xf] %vm721, %v666
        %732 = vst.msk [vmem:[%s215 + $0x28] sm:$0xf] %vm721, %v667
        %733 = vst.msk [vmem:[%s215 + $0x2c] sm:$0xf] %vm721, %v668
        %734 = vst.msk [vmem:[%s215 + $0x30] sm:$0xf] %vm721, %v669
        %735 = vst.msk [vmem:[%s215 + $0x34] sm:$0xf] %vm721, %v670
        %736 = vst.msk [vmem:[%s215 + $0x38] sm:$0xf] %vm721, %v671
        %737 = vst.msk [vmem:[%s215 + $0x3c] sm:$0xf] %vm721, %v672
        %738 = vst.msk [vmem:[%s215 + $0x40] sm:$0xf] %vm721, %v673
        %739 = vst.msk [vmem:[%s215 + $0x44] sm:$0xf] %vm721, %v674
        %740 = vst.msk [vmem:[%s215 + $0x48] sm:$0xf] %vm721, %v675
        %741 = vst.msk [vmem:[%s215 + $0x4c] sm:$0xf] %vm721, %v676
        %742 = vst.msk [vmem:[%s215 + $0x50] sm:$0xf] %vm721, %v677
        %743 = vst.msk [vmem:[%s215 + $0x54] sm:$0xf] %vm721, %v678
        %744 = vst.msk [vmem:[%s215 + $0x58] sm:$0xf] %vm721, %v679
        %745 = vst.msk [vmem:[%s215 + $0x5c] sm:$0xf] %vm721, %v680
        %746 = vst.msk [vmem:[%s215 + $0x60] sm:$0xf] %vm721, %v681
        %747 = vst.msk [vmem:[%s215 + $0x64] sm:$0xf] %vm721, %v682
        %748 = vst.msk [vmem:[%s215 + $0x68] sm:$0xf] %vm721, %v683
        %749 = vst.msk [vmem:[%s215 + $0x6c] sm:$0xf] %vm721, %v684
        %750 = vst.msk [vmem:[%s215 + $0x70] sm:$0xf] %vm721, %v685
        %751 = vst.msk [vmem:[%s215 + $0x74] sm:$0xf] %vm721, %v686
        %752 = vst.msk [vmem:[%s215 + $0x78] sm:$0xf] %vm721, %v687
        %753 = vst.msk [vmem:[%s215 + $0x7c] sm:$0xf] %vm721, %v688
        %758 = vrot.lane.b32.xlu0 %v586, 96
        %v759 = vpop.permute.xlu0 %758
        %760 = vrot.lane.b32.xlu0 %v589, 96
        %v761 = vpop.permute.xlu0 %760
        %762 = vrot.lane.b32.xlu0 %v592, 96
        %v763 = vpop.permute.xlu0 %762
        %764 = vrot.lane.b32.xlu0 %v595, 96
        %v765 = vpop.permute.xlu0 %764
        %766 = vrot.lane.b32.xlu0 %v586, 64
        %v767 = vpop.permute.xlu0 %766
        %768 = vrot.lane.b32.xlu0 %v589, 64
        %v769 = vpop.permute.xlu0 %768
        %770 = vrot.lane.b32.xlu0 %v592, 64
        %v771 = vpop.permute.xlu0 %770
        %772 = vrot.lane.b32.xlu0 %v595, 64
        %v773 = vpop.permute.xlu0 %772
        %774 = vrot.lane.b32.xlu0 %v586, 32
        %v775 = vpop.permute.xlu0 %774
        %776 = vrot.lane.b32.xlu0 %v589, 32
        %v777 = vpop.permute.xlu0 %776
        %778 = vrot.lane.b32.xlu0 %v592, 32
        %v779 = vpop.permute.xlu0 %778
        %780 = vrot.lane.b32.xlu0 %v595, 32
        %v781 = vpop.permute.xlu0 %780
        %v782 = vunpack.c.l.b16 %v586
        %v783 = vunpack.c.h.b16 %v586
        %v784 = vunpack.c.l.b16 %v589
        %v785 = vunpack.c.h.b16 %v589
        %v786 = vunpack.c.l.b16 %v592
        %v787 = vunpack.c.h.b16 %v592
        %v788 = vunpack.c.l.b16 %v595
        %v789 = vunpack.c.h.b16 %v595
        %v790 = vunpack.c.l.b16 %v759
        %v791 = vunpack.c.h.b16 %v759
        %v792 = vunpack.c.l.b16 %v761
        %v793 = vunpack.c.h.b16 %v761
        %v794 = vunpack.c.l.b16 %v763
        %v795 = vunpack.c.h.b16 %v763
        %v796 = vunpack.c.l.b16 %v765
        %v797 = vunpack.c.h.b16 %v765
        %v798 = vunpack.c.l.b16 %v767
        %v799 = vunpack.c.h.b16 %v767
        %v800 = vunpack.c.l.b16 %v769
        %v801 = vunpack.c.h.b16 %v769
        %v802 = vunpack.c.l.b16 %v771
        %v803 = vunpack.c.h.b16 %v771
        %v804 = vunpack.c.l.b16 %v773
        %v805 = vunpack.c.h.b16 %v773
        %v806 = vunpack.c.l.b16 %v775
        %v807 = vunpack.c.h.b16 %v775
        %v808 = vunpack.c.l.b16 %v777
        %v809 = vunpack.c.h.b16 %v777
        %v810 = vunpack.c.l.b16 %v779
        %v811 = vunpack.c.h.b16 %v779
        %v812 = vunpack.c.l.b16 %v781
        %v813 = vunpack.c.h.b16 %v781
        %v814 = vpack.c.b16 %v782, %v782
        %v815 = vpack.c.b16 %v783, %v783
        %v816 = vpack.c.b16 %v784, %v784
        %v817 = vpack.c.b16 %v785, %v785
        %v818 = vpack.c.b16 %v786, %v786
        %v819 = vpack.c.b16 %v787, %v787
        %v820 = vpack.c.b16 %v788, %v788
        %v821 = vpack.c.b16 %v789, %v789
        %v822 = vpack.c.b16 %v790, %v790
        %v823 = vpack.c.b16 %v791, %v791
        %v824 = vpack.c.b16 %v792, %v792
        %v825 = vpack.c.b16 %v793, %v793
        %v826 = vpack.c.b16 %v794, %v794
        %v827 = vpack.c.b16 %v795, %v795
        %v828 = vpack.c.b16 %v796, %v796
        %v829 = vpack.c.b16 %v797, %v797
        %v830 = vpack.c.b16 %v798, %v798
        %v831 = vpack.c.b16 %v799, %v799
        %v832 = vpack.c.b16 %v800, %v800
        %v833 = vpack.c.b16 %v801, %v801
        %v834 = vpack.c.b16 %v802, %v802
        %v835 = vpack.c.b16 %v803, %v803
        %v836 = vpack.c.b16 %v804, %v804
        %v837 = vpack.c.b16 %v805, %v805
        %v838 = vpack.c.b16 %v806, %v806
        %v839 = vpack.c.b16 %v807, %v807
        %v840 = vpack.c.b16 %v808, %v808
        %v841 = vpack.c.b16 %v809, %v809
        %v842 = vpack.c.b16 %v810, %v810
        %v843 = vpack.c.b16 %v811, %v811
        %v844 = vpack.c.b16 %v812, %v812
        %v845 = vpack.c.b16 %v813, %v813
        %878 = vst.msk [vmem:[%s221] sm:$0xf] %vm721, %v814
        %879 = vst.msk [vmem:[%s221 + $0x4] sm:$0xf] %vm721, %v815
        %880 = vst.msk [vmem:[%s221 + $0x8] sm:$0xf] %vm721, %v816
        %881 = vst.msk [vmem:[%s221 + $0xc] sm:$0xf] %vm721, %v817
        %882 = vst.msk [vmem:[%s221 + $0x10] sm:$0xf] %vm721, %v818
        %883 = vst.msk [vmem:[%s221 + $0x14] sm:$0xf] %vm721, %v819
        %884 = vst.msk [vmem:[%s221 + $0x18] sm:$0xf] %vm721, %v820
        %885 = vst.msk [vmem:[%s221 + $0x1c] sm:$0xf] %vm721, %v821
        %886 = vst.msk [vmem:[%s221 + $0x20] sm:$0xf] %vm721, %v822
        %887 = vst.msk [vmem:[%s221 + $0x24] sm:$0xf] %vm721, %v823
        %888 = vst.msk [vmem:[%s221 + $0x28] sm:$0xf] %vm721, %v824
        %889 = vst.msk [vmem:[%s221 + $0x2c] sm:$0xf] %vm721, %v825
        %890 = vst.msk [vmem:[%s221 + $0x30] sm:$0xf] %vm721, %v826
        %891 = vst.msk [vmem:[%s221 + $0x34] sm:$0xf] %vm721, %v827
        %892 = vst.msk [vmem:[%s221 + $0x38] sm:$0xf] %vm721, %v828
        %893 = vst.msk [vmem:[%s221 + $0x3c] sm:$0xf] %vm721, %v829
        %894 = vst.msk [vmem:[%s221 + $0x40] sm:$0xf] %vm721, %v830
        %895 = vst.msk [vmem:[%s221 + $0x44] sm:$0xf] %vm721, %v831
        %896 = vst.msk [vmem:[%s221 + $0x48] sm:$0xf] %vm721, %v832
        %897 = vst.msk [vmem:[%s221 + $0x4c] sm:$0xf] %vm721, %v833
        %898 = vst.msk [vmem:[%s221 + $0x50] sm:$0xf] %vm721, %v834
        %899 = vst.msk [vmem:[%s221 + $0x54] sm:$0xf] %vm721, %v835
        %900 = vst.msk [vmem:[%s221 + $0x58] sm:$0xf] %vm721, %v836
        %901 = vst.msk [vmem:[%s221 + $0x5c] sm:$0xf] %vm721, %v837
        %902 = vst.msk [vmem:[%s221 + $0x60] sm:$0xf] %vm721, %v838
        %903 = vst.msk [vmem:[%s221 + $0x64] sm:$0xf] %vm721, %v839
        %904 = vst.msk [vmem:[%s221 + $0x68] sm:$0xf] %vm721, %v840
        %905 = vst.msk [vmem:[%s221 + $0x6c] sm:$0xf] %vm721, %v841
        %906 = vst.msk [vmem:[%s221 + $0x70] sm:$0xf] %vm721, %v842
        %907 = vst.msk [vmem:[%s221 + $0x74] sm:$0xf] %vm721, %v843
        %908 = vst.msk [vmem:[%s221 + $0x78] sm:$0xf] %vm721, %v844
        %909 = vst.msk [vmem:[%s221 + $0x7c] sm:$0xf] %vm721, %v845
        %914 = vrot.lane.b32.xlu0 %v587, 96
        %v915 = vpop.permute.xlu0 %914
        %916 = vrot.lane.b32.xlu0 %v590, 96
        %v917 = vpop.permute.xlu0 %916
        %918 = vrot.lane.b32.xlu0 %v593, 96
        %v919 = vpop.permute.xlu0 %918
        %920 = vrot.lane.b32.xlu0 %v596, 96
        %v921 = vpop.permute.xlu0 %920
        %922 = vrot.lane.b32.xlu0 %v587, 64
        %v923 = vpop.permute.xlu0 %922
        %924 = vrot.lane.b32.xlu0 %v590, 64
        %v925 = vpop.permute.xlu0 %924
        %926 = vrot.lane.b32.xlu0 %v593, 64
        %v927 = vpop.permute.xlu0 %926
        %928 = vrot.lane.b32.xlu0 %v596, 64
        %v929 = vpop.permute.xlu0 %928
        %930 = vrot.lane.b32.xlu0 %v587, 32
        %v931 = vpop.permute.xlu0 %930
        %932 = vrot.lane.b32.xlu0 %v590, 32
        %v933 = vpop.permute.xlu0 %932
        %934 = vrot.lane.b32.xlu0 %v593, 32
        %v935 = vpop.permute.xlu0 %934
        %936 = vrot.lane.b32.xlu0 %v596, 32
        %v937 = vpop.permute.xlu0 %936
        %v938 = vunpack.c.l.b16 %v587
        %v939 = vunpack.c.h.b16 %v587
        %v940 = vunpack.c.l.b16 %v590
        %v941 = vunpack.c.h.b16 %v590
        %v942 = vunpack.c.l.b16 %v593
        %v943 = vunpack.c.h.b16 %v593
        %v944 = vunpack.c.l.b16 %v596
        %v945 = vunpack.c.h.b16 %v596
        %v946 = vunpack.c.l.b16 %v915
        %v947 = vunpack.c.h.b16 %v915
        %v948 = vunpack.c.l.b16 %v917
        %v949 = vunpack.c.h.b16 %v917
        %v950 = vunpack.c.l.b16 %v919
        %v951 = vunpack.c.h.b16 %v919
        %v952 = vunpack.c.l.b16 %v921
        %v953 = vunpack.c.h.b16 %v921
        %v954 = vunpack.c.l.b16 %v923
        %v955 = vunpack.c.h.b16 %v923
        %v956 = vunpack.c.l.b16 %v925
        %v957 = vunpack.c.h.b16 %v925
        %v958 = vunpack.c.l.b16 %v927
        %v959 = vunpack.c.h.b16 %v927
        %v960 = vunpack.c.l.b16 %v929
        %v961 = vunpack.c.h.b16 %v929
        %v962 = vunpack.c.l.b16 %v931
        %v963 = vunpack.c.h.b16 %v931
        %v964 = vunpack.c.l.b16 %v933
        %v965 = vunpack.c.h.b16 %v933
        %v966 = vunpack.c.l.b16 %v935
        %v967 = vunpack.c.h.b16 %v935
        %v968 = vunpack.c.l.b16 %v937
        %v969 = vunpack.c.h.b16 %v937
        %v970 = vpack.c.b16 %v938, %v938
        %v971 = vpack.c.b16 %v939, %v939
        %v972 = vpack.c.b16 %v940, %v940
        %v973 = vpack.c.b16 %v941, %v941
        %v974 = vpack.c.b16 %v942, %v942
        %v975 = vpack.c.b16 %v943, %v943
        %v976 = vpack.c.b16 %v944, %v944
        %v977 = vpack.c.b16 %v945, %v945
        %v978 = vpack.c.b16 %v946, %v946
        %v979 = vpack.c.b16 %v947, %v947
        %v980 = vpack.c.b16 %v948, %v948
        %v981 = vpack.c.b16 %v949, %v949
        %v982 = vpack.c.b16 %v950, %v950
        %v983 = vpack.c.b16 %v951, %v951
        %v984 = vpack.c.b16 %v952, %v952
        %v985 = vpack.c.b16 %v953, %v953
        %v986 = vpack.c.b16 %v954, %v954
        %v987 = vpack.c.b16 %v955, %v955
        %v988 = vpack.c.b16 %v956, %v956
        %v989 = vpack.c.b16 %v957, %v957
        %v990 = vpack.c.b16 %v958, %v958
        %v991 = vpack.c.b16 %v959, %v959
        %v992 = vpack.c.b16 %v960, %v960
        %v993 = vpack.c.b16 %v961, %v961
        %v994 = vpack.c.b16 %v962, %v962
        %v995 = vpack.c.b16 %v963, %v963
        %v996 = vpack.c.b16 %v964, %v964
        %v997 = vpack.c.b16 %v965, %v965
        %v998 = vpack.c.b16 %v966, %v966
        %v999 = vpack.c.b16 %v967, %v967
        %v1000 = vpack.c.b16 %v968, %v968
        %v1001 = vpack.c.b16 %v969, %v969
        %1034 = vst.msk [vmem:[%s227] sm:$0xf] %vm721, %v970
        %1035 = vst.msk [vmem:[%s227 + $0x4] sm:$0xf] %vm721, %v971
        %1036 = vst.msk [vmem:[%s227 + $0x8] sm:$0xf] %vm721, %v972
        %1037 = vst.msk [vmem:[%s227 + $0xc] sm:$0xf] %vm721, %v973
        %1038 = vst.msk [vmem:[%s227 + $0x10] sm:$0xf] %vm721, %v974
        %1039 = vst.msk [vmem:[%s227 + $0x14] sm:$0xf] %vm721, %v975
        %1040 = vst.msk [vmem:[%s227 + $0x18] sm:$0xf] %vm721, %v976
        %1041 = vst.msk [vmem:[%s227 + $0x1c] sm:$0xf] %vm721, %v977
        %1042 = vst.msk [vmem:[%s227 + $0x20] sm:$0xf] %vm721, %v978
        %1043 = vst.msk [vmem:[%s227 + $0x24] sm:$0xf] %vm721, %v979
        %1044 = vst.msk [vmem:[%s227 + $0x28] sm:$0xf] %vm721, %v980
        %1045 = vst.msk [vmem:[%s227 + $0x2c] sm:$0xf] %vm721, %v981
        %1046 = vst.msk [vmem:[%s227 + $0x30] sm:$0xf] %vm721, %v982
        %1047 = vst.msk [vmem:[%s227 + $0x34] sm:$0xf] %vm721, %v983
        %1048 = vst.msk [vmem:[%s227 + $0x38] sm:$0xf] %vm721, %v984
        %1049 = vst.msk [vmem:[%s227 + $0x3c] sm:$0xf] %vm721, %v985
        %1050 = vst.msk [vmem:[%s227 + $0x40] sm:$0xf] %vm721, %v986
        %1051 = vst.msk [vmem:[%s227 + $0x44] sm:$0xf] %vm721, %v987
        %1052 = vst.msk [vmem:[%s227 + $0x48] sm:$0xf] %vm721, %v988
        %1053 = vst.msk [vmem:[%s227 + $0x4c] sm:$0xf] %vm721, %v989
        %1054 = vst.msk [vmem:[%s227 + $0x50] sm:$0xf] %vm721, %v990
        %1055 = vst.msk [vmem:[%s227 + $0x54] sm:$0xf] %vm721, %v991
        %1056 = vst.msk [vmem:[%s227 + $0x58] sm:$0xf] %vm721, %v992
        %1057 = vst.msk [vmem:[%s227 + $0x5c] sm:$0xf] %vm721, %v993
        %1058 = vst.msk [vmem:[%s227 + $0x60] sm:$0xf] %vm721, %v994
        %1059 = vst.msk [vmem:[%s227 + $0x64] sm:$0xf] %vm721, %v995
        %1060 = vst.msk [vmem:[%s227 + $0x68] sm:$0xf] %vm721, %v996
        %1061 = vst.msk [vmem:[%s227 + $0x6c] sm:$0xf] %vm721, %v997
        %1062 = vst.msk [vmem:[%s227 + $0x70] sm:$0xf] %vm721, %v998
        %1063 = vst.msk [vmem:[%s227 + $0x74] sm:$0xf] %vm721, %v999
        %1064 = vst.msk [vmem:[%s227 + $0x78] sm:$0xf] %vm721, %v1000
        %1065 = vst.msk [vmem:[%s227 + $0x7c] sm:$0xf] %vm721, %v1001
        %s1066 = sand.u32 %s93, 1
        %s1067 = sand.u32 %s93, 1
        %s1068 = smul.addr %s1067, 128
        %s1069 = scalar_lea.vmem [#allocation2], %s1068
        %s1070 = sand.u32 %s119, 1
        %s1071 = sand.u32 %s119, 1
        %s1072 = smul.addr %s1071, 128
        %s1073 = scalar_lea.vmem [#allocation3], %s1072
        %s1074 = sand.u32 %s145, 1
        %s1075 = sand.u32 %s145, 1
        %s1076 = smul.addr %s1075, 128
        %s1077 = scalar_lea.vmem [#allocation4], %s1076
        // Predicated region
        $region33: #{multi_layer_homo_gt.4} parent=31 // pred_check
          %p1078 = pneg %p103
        $region34: #{multi_layer_homo_gt.4} parent=31 // pred_check_branch
          %1080 = sbr.rel (%p1078) target = $region36
        $region35: #{multi_layer_homo_gt.4} parent=31 // pred_region
          %s1081 = smul.u32 8, %s17
          %s1082 = smul.addr %s1081, 4
          %s1083 = scalar_lea.vmem %s3, %s1082
          // Predicated region
          $region37: #{multi_layer_homo_gt.4} parent=35 // pred_check
            _
          $region38: #{multi_layer_homo_gt.4} parent=35 // pred_check_branch
            %1085 = sbr.rel (0) target = $region40
          $region39: #{multi_layer_homo_gt.4} parent=35 // pred_region
            // Predicated region
            $region41: #{multi_layer_homo_gt.4} parent=39 // pred_check
              _
            $region42: #{multi_layer_homo_gt.4} parent=39 // pred_check_branch
              %1087 = sbr.rel target = $region44
            $region43: #{multi_layer_homo_gt.4} parent=39 // pred_region
              // Predicated region
              $region56: #{multi_layer_homo_gt.4} parent=43 // pred_check
                _
              $region57: #{multi_layer_homo_gt.4} parent=43 // pred_check_branch
                %1165 = sbr.rel (0) target = $region59
              $region58: #{multi_layer_homo_gt.4} parent=43 // pred_region
                loop: start=0, step=1, limit=1
                $region60: #{multi_layer_homo_gt.4} parent=58 // loop_pre_header
                  _
                $region61: #{multi_layer_homo_gt.4} parent=58 // loop_header
                  %s1167 = sphi 0, %s1171
                  %p1168 = scmp.ge.s32.totalorder %s1167, 1
                  %s1172 = sphi %s1069, %s1069
                  %s1173 = sphi %s1083, %s1083
                $region62: #{multi_layer_homo_gt.4} parent=58 // loop_header_branch
                  %1170 = sbr.rel (%p1168) target = $region66
                $region63: #{multi_layer_homo_gt.4} parent=58 // loop_body
                  _
                $region64: #{multi_layer_homo_gt.4} parent=58 // loop_footer
                  %s1171 = sadd.s32 1, %s1167
                $region65: #{multi_layer_homo_gt.4} parent=58 // loop_footer_branch
                  %1166 = sbr.rel target = $region61
                $region66: #{multi_layer_homo_gt.4} parent=58 // loop_exit
                  _
                %s1175 = ssub.s32 16, 1
                loop: start=0, step=1, limit=1
                $region67: #{multi_layer_homo_gt.4} parent=58 // loop_pre_header
                  _
                $region68: #{multi_layer_homo_gt.4} parent=58 // loop_header
                  %s1177 = sphi 0, %s1181
                  %p1178 = scmp.ge.s32.totalorder %s1177, 1
                  %s1182 = sphi %s1069, %s1069
                  %s1183 = sphi %s1083, %s1083
                $region69: #{multi_layer_homo_gt.4} parent=58 // loop_header_branch
                  %1180 = sbr.rel (%p1178) target = $region73
                $region70: #{multi_layer_homo_gt.4} parent=58 // loop_body
                  %v1184 = vld [vmem:[%s1182] sm:%s1175]
                  %1185 = vst [vmem:[%s1183] sm:%s1175] %v1184
                  %v1186 = vld [vmem:[%s1182 + $0x4] sm:%s1175]
                  %1187 = vst [vmem:[%s1183 + $0x4] sm:%s1175] %v1186
                  %v1188 = vld [vmem:[%s1182 + $0x8] sm:%s1175]
                  %1189 = vst [vmem:[%s1183 + $0x8] sm:%s1175] %v1188
                  %v1190 = vld [vmem:[%s1182 + $0xc] sm:%s1175]
                  %1191 = vst [vmem:[%s1183 + $0xc] sm:%s1175] %v1190
                  %v1192 = vld [vmem:[%s1182 + $0x10] sm:%s1175]
                  %1193 = vst [vmem:[%s1183 + $0x10] sm:%s1175] %v1192
                  %v1194 = vld [vmem:[%s1182 + $0x14] sm:%s1175]
                  %1195 = vst [vmem:[%s1183 + $0x14] sm:%s1175] %v1194
                  %v1196 = vld [vmem:[%s1182 + $0x18] sm:%s1175]
                  %1197 = vst [vmem:[%s1183 + $0x18] sm:%s1175] %v1196
                  %v1198 = vld [vmem:[%s1182 + $0x1c] sm:%s1175]
                  %1199 = vst [vmem:[%s1183 + $0x1c] sm:%s1175] %v1198
                  %v1200 = vld [vmem:[%s1182 + $0x20] sm:%s1175]
                  %1201 = vst [vmem:[%s1183 + $0x80] sm:%s1175] %v1200
                  %v1202 = vld [vmem:[%s1182 + $0x24] sm:%s1175]
                  %1203 = vst [vmem:[%s1183 + $0x84] sm:%s1175] %v1202
                  %v1204 = vld [vmem:[%s1182 + $0x28] sm:%s1175]
                  %1205 = vst [vmem:[%s1183 + $0x88] sm:%s1175] %v1204
                  %v1206 = vld [vmem:[%s1182 + $0x2c] sm:%s1175]
                  %1207 = vst [vmem:[%s1183 + $0x8c] sm:%s1175] %v1206
                  %v1208 = vld [vmem:[%s1182 + $0x30] sm:%s1175]
                  %1209 = vst [vmem:[%s1183 + $0x90] sm:%s1175] %v1208
                  %v1210 = vld [vmem:[%s1182 + $0x34] sm:%s1175]
                  %1211 = vst [vmem:[%s1183 + $0x94] sm:%s1175] %v1210
                  %v1212 = vld [vmem:[%s1182 + $0x38] sm:%s1175]
                  %1213 = vst [vmem:[%s1183 + $0x98] sm:%s1175] %v1212
                  %v1214 = vld [vmem:[%s1182 + $0x3c] sm:%s1175]
                  %1215 = vst [vmem:[%s1183 + $0x9c] sm:%s1175] %v1214
                  %v1216 = vld [vmem:[%s1182 + $0x40] sm:%s1175]
                  %1217 = vst [vmem:[%s1183 + $0x100] sm:%s1175] %v1216
                  %v1218 = vld [vmem:[%s1182 + $0x44] sm:%s1175]
                  %1219 = vst [vmem:[%s1183 + $0x104] sm:%s1175] %v1218
                  %v1220 = vld [vmem:[%s1182 + $0x48] sm:%s1175]
                  %1221 = vst [vmem:[%s1183 + $0x108] sm:%s1175] %v1220
                  %v1222 = vld [vmem:[%s1182 + $0x4c] sm:%s1175]
                  %1223 = vst [vmem:[%s1183 + $0x10c] sm:%s1175] %v1222
                  %v1224 = vld [vmem:[%s1182 + $0x50] sm:%s1175]
                  %1225 = vst [vmem:[%s1183 + $0x110] sm:%s1175] %v1224
                  %v1226 = vld [vmem:[%s1182 + $0x54] sm:%s1175]
                  %1227 = vst [vmem:[%s1183 + $0x114] sm:%s1175] %v1226
                  %v1228 = vld [vmem:[%s1182 + $0x58] sm:%s1175]
                  %1229 = vst [vmem:[%s1183 + $0x118] sm:%s1175] %v1228
                  %v1230 = vld [vmem:[%s1182 + $0x5c] sm:%s1175]
                  %1231 = vst [vmem:[%s1183 + $0x11c] sm:%s1175] %v1230
                  %v1232 = vld [vmem:[%s1182 + $0x60] sm:%s1175]
                  %1233 = vst [vmem:[%s1183 + $0x180] sm:%s1175] %v1232
                  %v1234 = vld [vmem:[%s1182 + $0x64] sm:%s1175]
                  %1235 = vst [vmem:[%s1183 + $0x184] sm:%s1175] %v1234
                  %v1236 = vld [vmem:[%s1182 + $0x68] sm:%s1175]
                  %1237 = vst [vmem:[%s1183 + $0x188] sm:%s1175] %v1236
                  %v1238 = vld [vmem:[%s1182 + $0x6c] sm:%s1175]
                  %1239 = vst [vmem:[%s1183 + $0x18c] sm:%s1175] %v1238
                  %v1240 = vld [vmem:[%s1182 + $0x70] sm:%s1175]
                  %1241 = vst [vmem:[%s1183 + $0x190] sm:%s1175] %v1240
                  %v1242 = vld [vmem:[%s1182 + $0x74] sm:%s1175]
                  %1243 = vst [vmem:[%s1183 + $0x194] sm:%s1175] %v1242
                  %v1244 = vld [vmem:[%s1182 + $0x78] sm:%s1175]
                  %1245 = vst [vmem:[%s1183 + $0x198] sm:%s1175] %v1244
                  %v1246 = vld [vmem:[%s1182 + $0x7c] sm:%s1175]
                  %1247 = vst [vmem:[%s1183 + $0x19c] sm:%s1175] %v1246
                $region71: #{multi_layer_homo_gt.4} parent=58 // loop_footer
                  %s1181 = sadd.s32 1, %s1177
                $region72: #{multi_layer_homo_gt.4} parent=58 // loop_footer_branch
                  %1176 = sbr.rel target = $region68
                $region73: #{multi_layer_homo_gt.4} parent=58 // loop_exit
                  _
              $region59: #{multi_layer_homo_gt.4} parent=43 // pred_fallthru
                _
            $region44: #{multi_layer_homo_gt.4} parent=39 // pred_fallthru
              _
            // Predicated region
            $region45: #{multi_layer_homo_gt.4} parent=39 // pred_check
              _
            $region46: #{multi_layer_homo_gt.4} parent=39 // pred_check_branch
              %1089 = sbr.rel (0) target = $region48
            $region47: #{multi_layer_homo_gt.4} parent=39 // pred_region
              %s1091 = ssub.s32 16, 1
              loop: start=0, step=1, limit=1
              $region49: #{multi_layer_homo_gt.4} parent=47 // loop_pre_header
                _
              $region50: #{multi_layer_homo_gt.4} parent=47 // loop_header
                %s1093 = sphi 0, %s1097
                %p1094 = scmp.ge.s32.totalorder %s1093, 1
                %s1098 = sphi %s1069, %s1069
                %s1099 = sphi %s1083, %s1083
              $region51: #{multi_layer_homo_gt.4} parent=47 // loop_header_branch
                %1096 = sbr.rel (%p1094) target = $region55
              $region52: #{multi_layer_homo_gt.4} parent=47 // loop_body
                %v1100 = vld [vmem:[%s1098] sm:%s1091]
                %1101 = vst [vmem:[%s1099] sm:%s1091] %v1100
                %v1102 = vld [vmem:[%s1098 + $0x4] sm:%s1091]
                %1103 = vst [vmem:[%s1099 + $0x4] sm:%s1091] %v1102
                %v1104 = vld [vmem:[%s1098 + $0x8] sm:%s1091]
                %1105 = vst [vmem:[%s1099 + $0x8] sm:%s1091] %v1104
                %v1106 = vld [vmem:[%s1098 + $0xc] sm:%s1091]
                %1107 = vst [vmem:[%s1099 + $0xc] sm:%s1091] %v1106
                %v1108 = vld [vmem:[%s1098 + $0x10] sm:%s1091]
                %1109 = vst [vmem:[%s1099 + $0x10] sm:%s1091] %v1108
                %v1110 = vld [vmem:[%s1098 + $0x14] sm:%s1091]
                %1111 = vst [vmem:[%s1099 + $0x14] sm:%s1091] %v1110
                %v1112 = vld [vmem:[%s1098 + $0x18] sm:%s1091]
                %1113 = vst [vmem:[%s1099 + $0x18] sm:%s1091] %v1112
                %v1114 = vld [vmem:[%s1098 + $0x1c] sm:%s1091]
                %1115 = vst [vmem:[%s1099 + $0x1c] sm:%s1091] %v1114
                %v1116 = vld [vmem:[%s1098 + $0x20] sm:%s1091]
                %1117 = vst [vmem:[%s1099 + $0x80] sm:%s1091] %v1116
                %v1118 = vld [vmem:[%s1098 + $0x24] sm:%s1091]
                %1119 = vst [vmem:[%s1099 + $0x84] sm:%s1091] %v1118
                %v1120 = vld [vmem:[%s1098 + $0x28] sm:%s1091]
                %1121 = vst [vmem:[%s1099 + $0x88] sm:%s1091] %v1120
                %v1122 = vld [vmem:[%s1098 + $0x2c] sm:%s1091]
                %1123 = vst [vmem:[%s1099 + $0x8c] sm:%s1091] %v1122
                %v1124 = vld [vmem:[%s1098 + $0x30] sm:%s1091]
                %1125 = vst [vmem:[%s1099 + $0x90] sm:%s1091] %v1124
                %v1126 = vld [vmem:[%s1098 + $0x34] sm:%s1091]
                %1127 = vst [vmem:[%s1099 + $0x94] sm:%s1091] %v1126
                %v1128 = vld [vmem:[%s1098 + $0x38] sm:%s1091]
                %1129 = vst [vmem:[%s1099 + $0x98] sm:%s1091] %v1128
                %v1130 = vld [vmem:[%s1098 + $0x3c] sm:%s1091]
                %1131 = vst [vmem:[%s1099 + $0x9c] sm:%s1091] %v1130
                %v1132 = vld [vmem:[%s1098 + $0x40] sm:%s1091]
                %1133 = vst [vmem:[%s1099 + $0x100] sm:%s1091] %v1132
                %v1134 = vld [vmem:[%s1098 + $0x44] sm:%s1091]
                %1135 = vst [vmem:[%s1099 + $0x104] sm:%s1091] %v1134
                %v1136 = vld [vmem:[%s1098 + $0x48] sm:%s1091]
                %1137 = vst [vmem:[%s1099 + $0x108] sm:%s1091] %v1136
                %v1138 = vld [vmem:[%s1098 + $0x4c] sm:%s1091]
                %1139 = vst [vmem:[%s1099 + $0x10c] sm:%s1091] %v1138
                %v1140 = vld [vmem:[%s1098 + $0x50] sm:%s1091]
                %1141 = vst [vmem:[%s1099 + $0x110] sm:%s1091] %v1140
                %v1142 = vld [vmem:[%s1098 + $0x54] sm:%s1091]
                %1143 = vst [vmem:[%s1099 + $0x114] sm:%s1091] %v1142
                %v1144 = vld [vmem:[%s1098 + $0x58] sm:%s1091]
                %1145 = vst [vmem:[%s1099 + $0x118] sm:%s1091] %v1144
                %v1146 = vld [vmem:[%s1098 + $0x5c] sm:%s1091]
                %1147 = vst [vmem:[%s1099 + $0x11c] sm:%s1091] %v1146
                %v1148 = vld [vmem:[%s1098 + $0x60] sm:%s1091]
                %1149 = vst [vmem:[%s1099 + $0x180] sm:%s1091] %v1148
                %v1150 = vld [vmem:[%s1098 + $0x64] sm:%s1091]
                %1151 = vst [vmem:[%s1099 + $0x184] sm:%s1091] %v1150
                %v1152 = vld [vmem:[%s1098 + $0x68] sm:%s1091]
                %1153 = vst [vmem:[%s1099 + $0x188] sm:%s1091] %v1152
                %v1154 = vld [vmem:[%s1098 + $0x6c] sm:%s1091]
                %1155 = vst [vmem:[%s1099 + $0x18c] sm:%s1091] %v1154
                %v1156 = vld [vmem:[%s1098 + $0x70] sm:%s1091]
                %1157 = vst [vmem:[%s1099 + $0x190] sm:%s1091] %v1156
                %v1158 = vld [vmem:[%s1098 + $0x74] sm:%s1091]
                %1159 = vst [vmem:[%s1099 + $0x194] sm:%s1091] %v1158
                %v1160 = vld [vmem:[%s1098 + $0x78] sm:%s1091]
                %1161 = vst [vmem:[%s1099 + $0x198] sm:%s1091] %v1160
                %v1162 = vld [vmem:[%s1098 + $0x7c] sm:%s1091]
                %1163 = vst [vmem:[%s1099 + $0x19c] sm:%s1091] %v1162
              $region53: #{multi_layer_homo_gt.4} parent=47 // loop_footer
                %s1097 = sadd.s32 1, %s1093
              $region54: #{multi_layer_homo_gt.4} parent=47 // loop_footer_branch
                %1092 = sbr.rel target = $region50
              $region55: #{multi_layer_homo_gt.4} parent=47 // loop_exit
                _
            $region48: #{multi_layer_homo_gt.4} parent=39 // pred_fallthru
              _
          $region40: #{multi_layer_homo_gt.4} parent=35 // pred_fallthru
            _
          %1248 = vnop
        $region36: #{multi_layer_homo_gt.4} parent=31 // pred_fallthru
          _
        // Predicated region
        $region74: #{multi_layer_homo_gt.4} parent=31 // pred_check
          %p1249 = pneg %p129
        $region75: #{multi_layer_homo_gt.4} parent=31 // pred_check_branch
          %1251 = sbr.rel (%p1249) target = $region77
        $region76: #{multi_layer_homo_gt.4} parent=31 // pred_region
          %s1252 = smul.u32 8, %s17
          %s1253 = smul.addr %s1252, 4
          %s1254 = scalar_lea.vmem %s4, %s1253
          // Predicated region
          $region78: #{multi_layer_homo_gt.4} parent=76 // pred_check
            _
          $region79: #{multi_layer_homo_gt.4} parent=76 // pred_check_branch
            %1256 = sbr.rel (0) target = $region81
          $region80: #{multi_layer_homo_gt.4} parent=76 // pred_region
            // Predicated region
            $region82: #{multi_layer_homo_gt.4} parent=80 // pred_check
              _
            $region83: #{multi_layer_homo_gt.4} parent=80 // pred_check_branch
              %1258 = sbr.rel target = $region85
            $region84: #{multi_layer_homo_gt.4} parent=80 // pred_region
              // Predicated region
              $region97: #{multi_layer_homo_gt.4} parent=84 // pred_check
                _
              $region98: #{multi_layer_homo_gt.4} parent=84 // pred_check_branch
                %1336 = sbr.rel (0) target = $region100
              $region99: #{multi_layer_homo_gt.4} parent=84 // pred_region
                loop: start=0, step=1, limit=1
                $region101: #{multi_layer_homo_gt.4} parent=99 // loop_pre_header
                  _
                $region102: #{multi_layer_homo_gt.4} parent=99 // loop_header
                  %s1338 = sphi 0, %s1342
                  %p1339 = scmp.ge.s32.totalorder %s1338, 1
                  %s1343 = sphi %s1073, %s1073
                  %s1344 = sphi %s1254, %s1254
                $region103: #{multi_layer_homo_gt.4} parent=99 // loop_header_branch
                  %1341 = sbr.rel (%p1339) target = $region107
                $region104: #{multi_layer_homo_gt.4} parent=99 // loop_body
                  _
                $region105: #{multi_layer_homo_gt.4} parent=99 // loop_footer
                  %s1342 = sadd.s32 1, %s1338
                $region106: #{multi_layer_homo_gt.4} parent=99 // loop_footer_branch
                  %1337 = sbr.rel target = $region102
                $region107: #{multi_layer_homo_gt.4} parent=99 // loop_exit
                  _
                %s1346 = ssub.s32 16, 1
                loop: start=0, step=1, limit=1
                $region108: #{multi_layer_homo_gt.4} parent=99 // loop_pre_header
                  _
                $region109: #{multi_layer_homo_gt.4} parent=99 // loop_header
                  %s1348 = sphi 0, %s1352
                  %p1349 = scmp.ge.s32.totalorder %s1348, 1
                  %s1353 = sphi %s1073, %s1073
                  %s1354 = sphi %s1254, %s1254
                $region110: #{multi_layer_homo_gt.4} parent=99 // loop_header_branch
                  %1351 = sbr.rel (%p1349) target = $region114
                $region111: #{multi_layer_homo_gt.4} parent=99 // loop_body
                  %v1355 = vld [vmem:[%s1353] sm:%s1346]
                  %1356 = vst [vmem:[%s1354] sm:%s1346] %v1355
                  %v1357 = vld [vmem:[%s1353 + $0x4] sm:%s1346]
                  %1358 = vst [vmem:[%s1354 + $0x4] sm:%s1346] %v1357
                  %v1359 = vld [vmem:[%s1353 + $0x8] sm:%s1346]
                  %1360 = vst [vmem:[%s1354 + $0x8] sm:%s1346] %v1359
                  %v1361 = vld [vmem:[%s1353 + $0xc] sm:%s1346]
                  %1362 = vst [vmem:[%s1354 + $0xc] sm:%s1346] %v1361
                  %v1363 = vld [vmem:[%s1353 + $0x10] sm:%s1346]
                  %1364 = vst [vmem:[%s1354 + $0x10] sm:%s1346] %v1363
                  %v1365 = vld [vmem:[%s1353 + $0x14] sm:%s1346]
                  %1366 = vst [vmem:[%s1354 + $0x14] sm:%s1346] %v1365
                  %v1367 = vld [vmem:[%s1353 + $0x18] sm:%s1346]
                  %1368 = vst [vmem:[%s1354 + $0x18] sm:%s1346] %v1367
                  %v1369 = vld [vmem:[%s1353 + $0x1c] sm:%s1346]
                  %1370 = vst [vmem:[%s1354 + $0x1c] sm:%s1346] %v1369
                  %v1371 = vld [vmem:[%s1353 + $0x20] sm:%s1346]
                  %1372 = vst [vmem:[%s1354 + $0x80] sm:%s1346] %v1371
                  %v1373 = vld [vmem:[%s1353 + $0x24] sm:%s1346]
                  %1374 = vst [vmem:[%s1354 + $0x84] sm:%s1346] %v1373
                  %v1375 = vld [vmem:[%s1353 + $0x28] sm:%s1346]
                  %1376 = vst [vmem:[%s1354 + $0x88] sm:%s1346] %v1375
                  %v1377 = vld [vmem:[%s1353 + $0x2c] sm:%s1346]
                  %1378 = vst [vmem:[%s1354 + $0x8c] sm:%s1346] %v1377
                  %v1379 = vld [vmem:[%s1353 + $0x30] sm:%s1346]
                  %1380 = vst [vmem:[%s1354 + $0x90] sm:%s1346] %v1379
                  %v1381 = vld [vmem:[%s1353 + $0x34] sm:%s1346]
                  %1382 = vst [vmem:[%s1354 + $0x94] sm:%s1346] %v1381
                  %v1383 = vld [vmem:[%s1353 + $0x38] sm:%s1346]
                  %1384 = vst [vmem:[%s1354 + $0x98] sm:%s1346] %v1383
                  %v1385 = vld [vmem:[%s1353 + $0x3c] sm:%s1346]
                  %1386 = vst [vmem:[%s1354 + $0x9c] sm:%s1346] %v1385
                  %v1387 = vld [vmem:[%s1353 + $0x40] sm:%s1346]
                  %1388 = vst [vmem:[%s1354 + $0x100] sm:%s1346] %v1387
                  %v1389 = vld [vmem:[%s1353 + $0x44] sm:%s1346]
                  %1390 = vst [vmem:[%s1354 + $0x104] sm:%s1346] %v1389
                  %v1391 = vld [vmem:[%s1353 + $0x48] sm:%s1346]
                  %1392 = vst [vmem:[%s1354 + $0x108] sm:%s1346] %v1391
                  %v1393 = vld [vmem:[%s1353 + $0x4c] sm:%s1346]
                  %1394 = vst [vmem:[%s1354 + $0x10c] sm:%s1346] %v1393
                  %v1395 = vld [vmem:[%s1353 + $0x50] sm:%s1346]
                  %1396 = vst [vmem:[%s1354 + $0x110] sm:%s1346] %v1395
                  %v1397 = vld [vmem:[%s1353 + $0x54] sm:%s1346]
                  %1398 = vst [vmem:[%s1354 + $0x114] sm:%s1346] %v1397
                  %v1399 = vld [vmem:[%s1353 + $0x58] sm:%s1346]
                  %1400 = vst [vmem:[%s1354 + $0x118] sm:%s1346] %v1399
                  %v1401 = vld [vmem:[%s1353 + $0x5c] sm:%s1346]
                  %1402 = vst [vmem:[%s1354 + $0x11c] sm:%s1346] %v1401
                  %v1403 = vld [vmem:[%s1353 + $0x60] sm:%s1346]
                  %1404 = vst [vmem:[%s1354 + $0x180] sm:%s1346] %v1403
                  %v1405 = vld [vmem:[%s1353 + $0x64] sm:%s1346]
                  %1406 = vst [vmem:[%s1354 + $0x184] sm:%s1346] %v1405
                  %v1407 = vld [vmem:[%s1353 + $0x68] sm:%s1346]
                  %1408 = vst [vmem:[%s1354 + $0x188] sm:%s1346] %v1407
                  %v1409 = vld [vmem:[%s1353 + $0x6c] sm:%s1346]
                  %1410 = vst [vmem:[%s1354 + $0x18c] sm:%s1346] %v1409
                  %v1411 = vld [vmem:[%s1353 + $0x70] sm:%s1346]
                  %1412 = vst [vmem:[%s1354 + $0x190] sm:%s1346] %v1411
                  %v1413 = vld [vmem:[%s1353 + $0x74] sm:%s1346]
                  %1414 = vst [vmem:[%s1354 + $0x194] sm:%s1346] %v1413
                  %v1415 = vld [vmem:[%s1353 + $0x78] sm:%s1346]
                  %1416 = vst [vmem:[%s1354 + $0x198] sm:%s1346] %v1415
                  %v1417 = vld [vmem:[%s1353 + $0x7c] sm:%s1346]
                  %1418 = vst [vmem:[%s1354 + $0x19c] sm:%s1346] %v1417
                $region112: #{multi_layer_homo_gt.4} parent=99 // loop_footer
                  %s1352 = sadd.s32 1, %s1348
                $region113: #{multi_layer_homo_gt.4} parent=99 // loop_footer_branch
                  %1347 = sbr.rel target = $region109
                $region114: #{multi_layer_homo_gt.4} parent=99 // loop_exit
                  _
              $region100: #{multi_layer_homo_gt.4} parent=84 // pred_fallthru
                _
            $region85: #{multi_layer_homo_gt.4} parent=80 // pred_fallthru
              _
            // Predicated region
            $region86: #{multi_layer_homo_gt.4} parent=80 // pred_check
              _
            $region87: #{multi_layer_homo_gt.4} parent=80 // pred_check_branch
              %1260 = sbr.rel (0) target = $region89
            $region88: #{multi_layer_homo_gt.4} parent=80 // pred_region
              %s1262 = ssub.s32 16, 1
              loop: start=0, step=1, limit=1
              $region90: #{multi_layer_homo_gt.4} parent=88 // loop_pre_header
                _
              $region91: #{multi_layer_homo_gt.4} parent=88 // loop_header
                %s1264 = sphi 0, %s1268
                %p1265 = scmp.ge.s32.totalorder %s1264, 1
                %s1269 = sphi %s1073, %s1073
                %s1270 = sphi %s1254, %s1254
              $region92: #{multi_layer_homo_gt.4} parent=88 // loop_header_branch
                %1267 = sbr.rel (%p1265) target = $region96
              $region93: #{multi_layer_homo_gt.4} parent=88 // loop_body
                %v1271 = vld [vmem:[%s1269] sm:%s1262]
                %1272 = vst [vmem:[%s1270] sm:%s1262] %v1271
                %v1273 = vld [vmem:[%s1269 + $0x4] sm:%s1262]
                %1274 = vst [vmem:[%s1270 + $0x4] sm:%s1262] %v1273
                %v1275 = vld [vmem:[%s1269 + $0x8] sm:%s1262]
                %1276 = vst [vmem:[%s1270 + $0x8] sm:%s1262] %v1275
                %v1277 = vld [vmem:[%s1269 + $0xc] sm:%s1262]
                %1278 = vst [vmem:[%s1270 + $0xc] sm:%s1262] %v1277
                %v1279 = vld [vmem:[%s1269 + $0x10] sm:%s1262]
                %1280 = vst [vmem:[%s1270 + $0x10] sm:%s1262] %v1279
                %v1281 = vld [vmem:[%s1269 + $0x14] sm:%s1262]
                %1282 = vst [vmem:[%s1270 + $0x14] sm:%s1262] %v1281
                %v1283 = vld [vmem:[%s1269 + $0x18] sm:%s1262]
                %1284 = vst [vmem:[%s1270 + $0x18] sm:%s1262] %v1283
                %v1285 = vld [vmem:[%s1269 + $0x1c] sm:%s1262]
                %1286 = vst [vmem:[%s1270 + $0x1c] sm:%s1262] %v1285
                %v1287 = vld [vmem:[%s1269 + $0x20] sm:%s1262]
                %1288 = vst [vmem:[%s1270 + $0x80] sm:%s1262] %v1287
                %v1289 = vld [vmem:[%s1269 + $0x24] sm:%s1262]
                %1290 = vst [vmem:[%s1270 + $0x84] sm:%s1262] %v1289
                %v1291 = vld [vmem:[%s1269 + $0x28] sm:%s1262]
                %1292 = vst [vmem:[%s1270 + $0x88] sm:%s1262] %v1291
                %v1293 = vld [vmem:[%s1269 + $0x2c] sm:%s1262]
                %1294 = vst [vmem:[%s1270 + $0x8c] sm:%s1262] %v1293
                %v1295 = vld [vmem:[%s1269 + $0x30] sm:%s1262]
                %1296 = vst [vmem:[%s1270 + $0x90] sm:%s1262] %v1295
                %v1297 = vld [vmem:[%s1269 + $0x34] sm:%s1262]
                %1298 = vst [vmem:[%s1270 + $0x94] sm:%s1262] %v1297
                %v1299 = vld [vmem:[%s1269 + $0x38] sm:%s1262]
                %1300 = vst [vmem:[%s1270 + $0x98] sm:%s1262] %v1299
                %v1301 = vld [vmem:[%s1269 + $0x3c] sm:%s1262]
                %1302 = vst [vmem:[%s1270 + $0x9c] sm:%s1262] %v1301
                %v1303 = vld [vmem:[%s1269 + $0x40] sm:%s1262]
                %1304 = vst [vmem:[%s1270 + $0x100] sm:%s1262] %v1303
                %v1305 = vld [vmem:[%s1269 + $0x44] sm:%s1262]
                %1306 = vst [vmem:[%s1270 + $0x104] sm:%s1262] %v1305
                %v1307 = vld [vmem:[%s1269 + $0x48] sm:%s1262]
                %1308 = vst [vmem:[%s1270 + $0x108] sm:%s1262] %v1307
                %v1309 = vld [vmem:[%s1269 + $0x4c] sm:%s1262]
                %1310 = vst [vmem:[%s1270 + $0x10c] sm:%s1262] %v1309
                %v1311 = vld [vmem:[%s1269 + $0x50] sm:%s1262]
                %1312 = vst [vmem:[%s1270 + $0x110] sm:%s1262] %v1311
                %v1313 = vld [vmem:[%s1269 + $0x54] sm:%s1262]
                %1314 = vst [vmem:[%s1270 + $0x114] sm:%s1262] %v1313
                %v1315 = vld [vmem:[%s1269 + $0x58] sm:%s1262]
                %1316 = vst [vmem:[%s1270 + $0x118] sm:%s1262] %v1315
                %v1317 = vld [vmem:[%s1269 + $0x5c] sm:%s1262]
                %1318 = vst [vmem:[%s1270 + $0x11c] sm:%s1262] %v1317
                %v1319 = vld [vmem:[%s1269 + $0x60] sm:%s1262]
                %1320 = vst [vmem:[%s1270 + $0x180] sm:%s1262] %v1319
                %v1321 = vld [vmem:[%s1269 + $0x64] sm:%s1262]
                %1322 = vst [vmem:[%s1270 + $0x184] sm:%s1262] %v1321
                %v1323 = vld [vmem:[%s1269 + $0x68] sm:%s1262]
                %1324 = vst [vmem:[%s1270 + $0x188] sm:%s1262] %v1323
                %v1325 = vld [vmem:[%s1269 + $0x6c] sm:%s1262]
                %1326 = vst [vmem:[%s1270 + $0x18c] sm:%s1262] %v1325
                %v1327 = vld [vmem:[%s1269 + $0x70] sm:%s1262]
                %1328 = vst [vmem:[%s1270 + $0x190] sm:%s1262] %v1327
                %v1329 = vld [vmem:[%s1269 + $0x74] sm:%s1262]
                %1330 = vst [vmem:[%s1270 + $0x194] sm:%s1262] %v1329
                %v1331 = vld [vmem:[%s1269 + $0x78] sm:%s1262]
                %1332 = vst [vmem:[%s1270 + $0x198] sm:%s1262] %v1331
                %v1333 = vld [vmem:[%s1269 + $0x7c] sm:%s1262]
                %1334 = vst [vmem:[%s1270 + $0x19c] sm:%s1262] %v1333
              $region94: #{multi_layer_homo_gt.4} parent=88 // loop_footer
                %s1268 = sadd.s32 1, %s1264
              $region95: #{multi_layer_homo_gt.4} parent=88 // loop_footer_branch
                %1263 = sbr.rel target = $region91
              $region96: #{multi_layer_homo_gt.4} parent=88 // loop_exit
                _
            $region89: #{multi_layer_homo_gt.4} parent=80 // pred_fallthru
              _
          $region81: #{multi_layer_homo_gt.4} parent=76 // pred_fallthru
            _
          %1419 = vnop
        $region77: #{multi_layer_homo_gt.4} parent=31 // pred_fallthru
          _
        // Predicated region
        $region115: #{multi_layer_homo_gt.4} parent=31 // pred_check
          %p1420 = pneg %p155
        $region116: #{multi_layer_homo_gt.4} parent=31 // pred_check_branch
          %1422 = sbr.rel (%p1420) target = $region118
        $region117: #{multi_layer_homo_gt.4} parent=31 // pred_region
          %s1423 = smul.u32 8, %s17
          %s1424 = smul.addr %s1423, 4
          %s1425 = scalar_lea.vmem %s5, %s1424
          // Predicated region
          $region119: #{multi_layer_homo_gt.4} parent=117 // pred_check
            _
          $region120: #{multi_layer_homo_gt.4} parent=117 // pred_check_branch
            %1427 = sbr.rel (0) target = $region122
          $region121: #{multi_layer_homo_gt.4} parent=117 // pred_region
            // Predicated region
            $region123: #{multi_layer_homo_gt.4} parent=121 // pred_check
              _
            $region124: #{multi_layer_homo_gt.4} parent=121 // pred_check_branch
              %1429 = sbr.rel target = $region126
            $region125: #{multi_layer_homo_gt.4} parent=121 // pred_region
              // Predicated region
              $region138: #{multi_layer_homo_gt.4} parent=125 // pred_check
                _
              $region139: #{multi_layer_homo_gt.4} parent=125 // pred_check_branch
                %1507 = sbr.rel (0) target = $region141
              $region140: #{multi_layer_homo_gt.4} parent=125 // pred_region
                loop: start=0, step=1, limit=1
                $region142: #{multi_layer_homo_gt.4} parent=140 // loop_pre_header
                  _
                $region143: #{multi_layer_homo_gt.4} parent=140 // loop_header
                  %s1509 = sphi 0, %s1513
                  %p1510 = scmp.ge.s32.totalorder %s1509, 1
                  %s1514 = sphi %s1077, %s1077
                  %s1515 = sphi %s1425, %s1425
                $region144: #{multi_layer_homo_gt.4} parent=140 // loop_header_branch
                  %1512 = sbr.rel (%p1510) target = $region148
                $region145: #{multi_layer_homo_gt.4} parent=140 // loop_body
                  _
                $region146: #{multi_layer_homo_gt.4} parent=140 // loop_footer
                  %s1513 = sadd.s32 1, %s1509
                $region147: #{multi_layer_homo_gt.4} parent=140 // loop_footer_branch
                  %1508 = sbr.rel target = $region143
                $region148: #{multi_layer_homo_gt.4} parent=140 // loop_exit
                  _
                %s1517 = ssub.s32 16, 1
                loop: start=0, step=1, limit=1
                $region149: #{multi_layer_homo_gt.4} parent=140 // loop_pre_header
                  _
                $region150: #{multi_layer_homo_gt.4} parent=140 // loop_header
                  %s1519 = sphi 0, %s1523
                  %p1520 = scmp.ge.s32.totalorder %s1519, 1
                  %s1524 = sphi %s1077, %s1077
                  %s1525 = sphi %s1425, %s1425
                $region151: #{multi_layer_homo_gt.4} parent=140 // loop_header_branch
                  %1522 = sbr.rel (%p1520) target = $region155
                $region152: #{multi_layer_homo_gt.4} parent=140 // loop_body
                  %v1526 = vld [vmem:[%s1524] sm:%s1517]
                  %1527 = vst [vmem:[%s1525] sm:%s1517] %v1526
                  %v1528 = vld [vmem:[%s1524 + $0x4] sm:%s1517]
                  %1529 = vst [vmem:[%s1525 + $0x4] sm:%s1517] %v1528
                  %v1530 = vld [vmem:[%s1524 + $0x8] sm:%s1517]
                  %1531 = vst [vmem:[%s1525 + $0x8] sm:%s1517] %v1530
                  %v1532 = vld [vmem:[%s1524 + $0xc] sm:%s1517]
                  %1533 = vst [vmem:[%s1525 + $0xc] sm:%s1517] %v1532
                  %v1534 = vld [vmem:[%s1524 + $0x10] sm:%s1517]
                  %1535 = vst [vmem:[%s1525 + $0x10] sm:%s1517] %v1534
                  %v1536 = vld [vmem:[%s1524 + $0x14] sm:%s1517]
                  %1537 = vst [vmem:[%s1525 + $0x14] sm:%s1517] %v1536
                  %v1538 = vld [vmem:[%s1524 + $0x18] sm:%s1517]
                  %1539 = vst [vmem:[%s1525 + $0x18] sm:%s1517] %v1538
                  %v1540 = vld [vmem:[%s1524 + $0x1c] sm:%s1517]
                  %1541 = vst [vmem:[%s1525 + $0x1c] sm:%s1517] %v1540
                  %v1542 = vld [vmem:[%s1524 + $0x20] sm:%s1517]
                  %1543 = vst [vmem:[%s1525 + $0x80] sm:%s1517] %v1542
                  %v1544 = vld [vmem:[%s1524 + $0x24] sm:%s1517]
                  %1545 = vst [vmem:[%s1525 + $0x84] sm:%s1517] %v1544
                  %v1546 = vld [vmem:[%s1524 + $0x28] sm:%s1517]
                  %1547 = vst [vmem:[%s1525 + $0x88] sm:%s1517] %v1546
                  %v1548 = vld [vmem:[%s1524 + $0x2c] sm:%s1517]
                  %1549 = vst [vmem:[%s1525 + $0x8c] sm:%s1517] %v1548
                  %v1550 = vld [vmem:[%s1524 + $0x30] sm:%s1517]
                  %1551 = vst [vmem:[%s1525 + $0x90] sm:%s1517] %v1550
                  %v1552 = vld [vmem:[%s1524 + $0x34] sm:%s1517]
                  %1553 = vst [vmem:[%s1525 + $0x94] sm:%s1517] %v1552
                  %v1554 = vld [vmem:[%s1524 + $0x38] sm:%s1517]
                  %1555 = vst [vmem:[%s1525 + $0x98] sm:%s1517] %v1554
                  %v1556 = vld [vmem:[%s1524 + $0x3c] sm:%s1517]
                  %1557 = vst [vmem:[%s1525 + $0x9c] sm:%s1517] %v1556
                  %v1558 = vld [vmem:[%s1524 + $0x40] sm:%s1517]
                  %1559 = vst [vmem:[%s1525 + $0x100] sm:%s1517] %v1558
                  %v1560 = vld [vmem:[%s1524 + $0x44] sm:%s1517]
                  %1561 = vst [vmem:[%s1525 + $0x104] sm:%s1517] %v1560
                  %v1562 = vld [vmem:[%s1524 + $0x48] sm:%s1517]
                  %1563 = vst [vmem:[%s1525 + $0x108] sm:%s1517] %v1562
                  %v1564 = vld [vmem:[%s1524 + $0x4c] sm:%s1517]
                  %1565 = vst [vmem:[%s1525 + $0x10c] sm:%s1517] %v1564
                  %v1566 = vld [vmem:[%s1524 + $0x50] sm:%s1517]
                  %1567 = vst [vmem:[%s1525 + $0x110] sm:%s1517] %v1566
                  %v1568 = vld [vmem:[%s1524 + $0x54] sm:%s1517]
                  %1569 = vst [vmem:[%s1525 + $0x114] sm:%s1517] %v1568
                  %v1570 = vld [vmem:[%s1524 + $0x58] sm:%s1517]
                  %1571 = vst [vmem:[%s1525 + $0x118] sm:%s1517] %v1570
                  %v1572 = vld [vmem:[%s1524 + $0x5c] sm:%s1517]
                  %1573 = vst [vmem:[%s1525 + $0x11c] sm:%s1517] %v1572
                  %v1574 = vld [vmem:[%s1524 + $0x60] sm:%s1517]
                  %1575 = vst [vmem:[%s1525 + $0x180] sm:%s1517] %v1574
                  %v1576 = vld [vmem:[%s1524 + $0x64] sm:%s1517]
                  %1577 = vst [vmem:[%s1525 + $0x184] sm:%s1517] %v1576
                  %v1578 = vld [vmem:[%s1524 + $0x68] sm:%s1517]
                  %1579 = vst [vmem:[%s1525 + $0x188] sm:%s1517] %v1578
                  %v1580 = vld [vmem:[%s1524 + $0x6c] sm:%s1517]
                  %1581 = vst [vmem:[%s1525 + $0x18c] sm:%s1517] %v1580
                  %v1582 = vld [vmem:[%s1524 + $0x70] sm:%s1517]
                  %1583 = vst [vmem:[%s1525 + $0x190] sm:%s1517] %v1582
                  %v1584 = vld [vmem:[%s1524 + $0x74] sm:%s1517]
                  %1585 = vst [vmem:[%s1525 + $0x194] sm:%s1517] %v1584
                  %v1586 = vld [vmem:[%s1524 + $0x78] sm:%s1517]
                  %1587 = vst [vmem:[%s1525 + $0x198] sm:%s1517] %v1586
                  %v1588 = vld [vmem:[%s1524 + $0x7c] sm:%s1517]
                  %1589 = vst [vmem:[%s1525 + $0x19c] sm:%s1517] %v1588
                $region153: #{multi_layer_homo_gt.4} parent=140 // loop_footer
                  %s1523 = sadd.s32 1, %s1519
                $region154: #{multi_layer_homo_gt.4} parent=140 // loop_footer_branch
                  %1518 = sbr.rel target = $region150
                $region155: #{multi_layer_homo_gt.4} parent=140 // loop_exit
                  _
              $region141: #{multi_layer_homo_gt.4} parent=125 // pred_fallthru
                _
            $region126: #{multi_layer_homo_gt.4} parent=121 // pred_fallthru
              _
            // Predicated region
            $region127: #{multi_layer_homo_gt.4} parent=121 // pred_check
              _
            $region128: #{multi_layer_homo_gt.4} parent=121 // pred_check_branch
              %1431 = sbr.rel (0) target = $region130
            $region129: #{multi_layer_homo_gt.4} parent=121 // pred_region
              %s1433 = ssub.s32 16, 1
              loop: start=0, step=1, limit=1
              $region131: #{multi_layer_homo_gt.4} parent=129 // loop_pre_header
                _
              $region132: #{multi_layer_homo_gt.4} parent=129 // loop_header
                %s1435 = sphi 0, %s1439
                %p1436 = scmp.ge.s32.totalorder %s1435, 1
                %s1440 = sphi %s1077, %s1077
                %s1441 = sphi %s1425, %s1425
              $region133: #{multi_layer_homo_gt.4} parent=129 // loop_header_branch
                %1438 = sbr.rel (%p1436) target = $region137
              $region134: #{multi_layer_homo_gt.4} parent=129 // loop_body
                %v1442 = vld [vmem:[%s1440] sm:%s1433]
                %1443 = vst [vmem:[%s1441] sm:%s1433] %v1442
                %v1444 = vld [vmem:[%s1440 + $0x4] sm:%s1433]
                %1445 = vst [vmem:[%s1441 + $0x4] sm:%s1433] %v1444
                %v1446 = vld [vmem:[%s1440 + $0x8] sm:%s1433]
                %1447 = vst [vmem:[%s1441 + $0x8] sm:%s1433] %v1446
                %v1448 = vld [vmem:[%s1440 + $0xc] sm:%s1433]
                %1449 = vst [vmem:[%s1441 + $0xc] sm:%s1433] %v1448
                %v1450 = vld [vmem:[%s1440 + $0x10] sm:%s1433]
                %1451 = vst [vmem:[%s1441 + $0x10] sm:%s1433] %v1450
                %v1452 = vld [vmem:[%s1440 + $0x14] sm:%s1433]
                %1453 = vst [vmem:[%s1441 + $0x14] sm:%s1433] %v1452
                %v1454 = vld [vmem:[%s1440 + $0x18] sm:%s1433]
                %1455 = vst [vmem:[%s1441 + $0x18] sm:%s1433] %v1454
                %v1456 = vld [vmem:[%s1440 + $0x1c] sm:%s1433]
                %1457 = vst [vmem:[%s1441 + $0x1c] sm:%s1433] %v1456
                %v1458 = vld [vmem:[%s1440 + $0x20] sm:%s1433]
                %1459 = vst [vmem:[%s1441 + $0x80] sm:%s1433] %v1458
                %v1460 = vld [vmem:[%s1440 + $0x24] sm:%s1433]
                %1461 = vst [vmem:[%s1441 + $0x84] sm:%s1433] %v1460
                %v1462 = vld [vmem:[%s1440 + $0x28] sm:%s1433]
                %1463 = vst [vmem:[%s1441 + $0x88] sm:%s1433] %v1462
                %v1464 = vld [vmem:[%s1440 + $0x2c] sm:%s1433]
                %1465 = vst [vmem:[%s1441 + $0x8c] sm:%s1433] %v1464
                %v1466 = vld [vmem:[%s1440 + $0x30] sm:%s1433]
                %1467 = vst [vmem:[%s1441 + $0x90] sm:%s1433] %v1466
                %v1468 = vld [vmem:[%s1440 + $0x34] sm:%s1433]
                %1469 = vst [vmem:[%s1441 + $0x94] sm:%s1433] %v1468
                %v1470 = vld [vmem:[%s1440 + $0x38] sm:%s1433]
                %1471 = vst [vmem:[%s1441 + $0x98] sm:%s1433] %v1470
                %v1472 = vld [vmem:[%s1440 + $0x3c] sm:%s1433]
                %1473 = vst [vmem:[%s1441 + $0x9c] sm:%s1433] %v1472
                %v1474 = vld [vmem:[%s1440 + $0x40] sm:%s1433]
                %1475 = vst [vmem:[%s1441 + $0x100] sm:%s1433] %v1474
                %v1476 = vld [vmem:[%s1440 + $0x44] sm:%s1433]
                %1477 = vst [vmem:[%s1441 + $0x104] sm:%s1433] %v1476
                %v1478 = vld [vmem:[%s1440 + $0x48] sm:%s1433]
                %1479 = vst [vmem:[%s1441 + $0x108] sm:%s1433] %v1478
                %v1480 = vld [vmem:[%s1440 + $0x4c] sm:%s1433]
                %1481 = vst [vmem:[%s1441 + $0x10c] sm:%s1433] %v1480
                %v1482 = vld [vmem:[%s1440 + $0x50] sm:%s1433]
                %1483 = vst [vmem:[%s1441 + $0x110] sm:%s1433] %v1482
                %v1484 = vld [vmem:[%s1440 + $0x54] sm:%s1433]
                %1485 = vst [vmem:[%s1441 + $0x114] sm:%s1433] %v1484
                %v1486 = vld [vmem:[%s1440 + $0x58] sm:%s1433]
                %1487 = vst [vmem:[%s1441 + $0x118] sm:%s1433] %v1486
                %v1488 = vld [vmem:[%s1440 + $0x5c] sm:%s1433]
                %1489 = vst [vmem:[%s1441 + $0x11c] sm:%s1433] %v1488
                %v1490 = vld [vmem:[%s1440 + $0x60] sm:%s1433]
                %1491 = vst [vmem:[%s1441 + $0x180] sm:%s1433] %v1490
                %v1492 = vld [vmem:[%s1440 + $0x64] sm:%s1433]
                %1493 = vst [vmem:[%s1441 + $0x184] sm:%s1433] %v1492
                %v1494 = vld [vmem:[%s1440 + $0x68] sm:%s1433]
                %1495 = vst [vmem:[%s1441 + $0x188] sm:%s1433] %v1494
                %v1496 = vld [vmem:[%s1440 + $0x6c] sm:%s1433]
                %1497 = vst [vmem:[%s1441 + $0x18c] sm:%s1433] %v1496
                %v1498 = vld [vmem:[%s1440 + $0x70] sm:%s1433]
                %1499 = vst [vmem:[%s1441 + $0x190] sm:%s1433] %v1498
                %v1500 = vld [vmem:[%s1440 + $0x74] sm:%s1433]
                %1501 = vst [vmem:[%s1441 + $0x194] sm:%s1433] %v1500
                %v1502 = vld [vmem:[%s1440 + $0x78] sm:%s1433]
                %1503 = vst [vmem:[%s1441 + $0x198] sm:%s1433] %v1502
                %v1504 = vld [vmem:[%s1440 + $0x7c] sm:%s1433]
                %1505 = vst [vmem:[%s1441 + $0x19c] sm:%s1433] %v1504
              $region135: #{multi_layer_homo_gt.4} parent=129 // loop_footer
                %s1439 = sadd.s32 1, %s1435
              $region136: #{multi_layer_homo_gt.4} parent=129 // loop_footer_branch
                %1434 = sbr.rel target = $region132
              $region137: #{multi_layer_homo_gt.4} parent=129 // loop_exit
                _
            $region130: #{multi_layer_homo_gt.4} parent=121 // pred_fallthru
              _
          $region122: #{multi_layer_homo_gt.4} parent=117 // pred_fallthru
            _
          %1590 = vnop
        $region118: #{multi_layer_homo_gt.4} parent=31 // pred_fallthru
          _
      $region32: #{multi_layer_homo_gt.4} parent=5 // pred_fallthru
        _
      %p1591 = scmp.le.s32.totalorder 2, %s12
      // Predicated region
      $region156: #{multi_layer_homo_gt.4} parent=5 // pred_check
        %p1592 = pneg %p1591
      $region157: #{multi_layer_homo_gt.4} parent=5 // pred_check_branch
        %1594 = sbr.rel (%p1592) target = $region159
      $region158: #{multi_layer_homo_gt.4} parent=5 // pred_region
        %s1595 = ssub.s32 %s12, 2
        // Predicated region
        $region160: #{multi_layer_homo_gt.4} parent=158 // pred_check
          %p1596 = pneg %p109
        $region161: #{multi_layer_homo_gt.4} parent=158 // pred_check_branch
          %1598 = sbr.rel (%p1596) target = $region163
        $region162: #{multi_layer_homo_gt.4} parent=158 // pred_region
          %s1599 = sand.u32 %s94, 1
          %s1600 = sand.u32 %s94, 1
          %s1601 = smul.addr %s1600, 128
          %s1602 = scalar_lea.vmem [#allocation2], %s1601
        $region163: #{multi_layer_homo_gt.4} parent=158 // pred_fallthru
          _
        // Predicated region
        $region164: #{multi_layer_homo_gt.4} parent=158 // pred_check
          %p1603 = pneg %p135
        $region165: #{multi_layer_homo_gt.4} parent=158 // pred_check_branch
          %1605 = sbr.rel (%p1603) target = $region167
        $region166: #{multi_layer_homo_gt.4} parent=158 // pred_region
          %s1606 = sand.u32 %s120, 1
          %s1607 = sand.u32 %s120, 1
          %s1608 = smul.addr %s1607, 128
          %s1609 = scalar_lea.vmem [#allocation3], %s1608
        $region167: #{multi_layer_homo_gt.4} parent=158 // pred_fallthru
          _
        // Predicated region
        $region168: #{multi_layer_homo_gt.4} parent=158 // pred_check
          %p1610 = pneg %p161
        $region169: #{multi_layer_homo_gt.4} parent=158 // pred_check_branch
          %1612 = sbr.rel (%p1610) target = $region171
        $region170: #{multi_layer_homo_gt.4} parent=158 // pred_region
          %s1613 = sand.u32 %s146, 1
          %s1614 = sand.u32 %s146, 1
          %s1615 = smul.addr %s1614, 128
          %s1616 = scalar_lea.vmem [#allocation4], %s1615
        $region171: #{multi_layer_homo_gt.4} parent=158 // pred_fallthru
          _
      $region159: #{multi_layer_homo_gt.4} parent=5 // pred_fallthru
        _
    $region6: #{multi_layer_homo_gt.4} parent=1 // loop_footer
      %s16 = sadd.s32 1, %s12
    $region7: #{multi_layer_homo_gt.4} parent=1 // loop_footer_branch
      %11 = sbr.rel target = $region3
    $region8: #{multi_layer_homo_gt.4} parent=1 // loop_exit
      _

// kernel: multi_layer_homo_gt.5
$region0: #{multi_layer_homo_gt.5}
  #allocation0 [shape = 'u32[]', space=smem, size = 0x4, offset = 0x4, fixed_abs, tag = 'smem constant byte address 0x4 - core index']
  #allocation1 [shape = 'u32[144,128]{1,0:T(1,128)}', space=vmem, size = 0x12000, scoped, tag = 'internal scratch']
  #allocation2 [shape = 'f32[4,64,1]{2,1,0:T(8,128)}', space=vmem, size = 0x20000, scoped, tag = 'scratch operand']
  #allocation3 [shape = 'f32[4,64,1]{2,1,0:T(8,128)}', space=vmem, size = 0x20000, scoped, tag = 'scratch operand']
  #allocation4 [shape = 'f32[4,64,32]{2,1,0:T(8,128)}', space=vmem, size = 0x20000, scoped, tag = 'scratch operand']
  #allocation5 [shape = 's32[1]{0}', space=sflag, size = 0x4, scoped, tag = 'scoped memory for multi_layer_homo_gt.5']
  #allocation6 [shape = 'u8[2048]{0}', space=smem, size = 0x800, scoped, tag = 'prefetched SMEM operand 0']
  %s0 = inlined_call_operand.vmem [shape: s32[4,2], index: 0, kind: input, shape index: {}]
  %s1 = inlined_call_operand.vmem [shape: bf16[256,128], index: 1, kind: input, shape index: {}]
  %s2 = inlined_call_operand.vmem [shape: bf16[4,256,32], index: 2, kind: input, shape index: {}]
  %s3 = inlined_call_operand.vmem [shape: bf16[4,256,32], index: 3, kind: input, shape index: {}]
  %s4 = inlined_call_operand.vmem [shape: bf16[4,256,32], index: 4, kind: input, shape index: {}]
  %s5 = inlined_call_operand.vmem [shape: s8[256,256], index: 5, kind: input, shape index: {}]
  %s6 = inlined_call_operand.vmem [shape: bf16[128,128], index: 6, kind: input, shape index: {}]
  %s7 = inlined_call_operand.vmem [shape: f32[1,128], index: 7, kind: input, shape index: {}]
  %s8 = inlined_call_operand.vmem [shape: f32[1,128], index: 8, kind: input, shape index: {}]
  %s9 = inlined_call_operand.vmem [shape: f32[1,128], index: 9, kind: input, shape index: {}]
  %s10 = inlined_call_operand.vmem [shape: bf16[128,256], index: 10, kind: input, shape index: {}]
  %s11 = inlined_call_operand.vmem [shape: f32[1,256], index: 11, kind: input, shape index: {}]
  %s12 = inlined_call_operand.vmem [shape: bf16[256,128], index: 12, kind: input, shape index: {}]
  %s13 = inlined_call_operand.vmem [shape: f32[1,128], index: 13, kind: input, shape index: {}]
  %s14 = inlined_call_operand.vmem [shape: f32[1,128], index: 14, kind: input, shape index: {}]
  %s15 = inlined_call_operand.vmem [shape: f32[1,128], index: 15, kind: input, shape index: {}]
  %s16 = inlined_call_operand.vmem [shape: bf16[256,128], index: 16, kind: output, shape index: {}]
  %s17 = sld [smem:[#allocation0]]
  $region266: #{multi_layer_homo_gt.5} parent=0
    _
  %s19 = ssub.s32 1, %s17
  %s20 = scalar_select 0, %s19, %s17
  %s21 = sshll.u32 %s0, 4
  %s22 = int_to_ptr.vmem [resolvable:$true] %s21
  %24 = dma.vmem_to_smem %s22, 64, [#allocation6], [#allocation5]
  %25 = dma.done [#allocation5], 64
  %26 = sfence
  $region1: #{multi_layer_homo_gt.5} parent=0
    #allocation7 [shape = 'u8[131072]{0}', space=vmem, size = 0x20000, scoped, tag = 'input window, operand 2']
    #allocation8 [shape = 'u8[262144]{0}', space=vmem, size = 0x40000, scoped, tag = 'input window, operand 3']
    #allocation9 [shape = 'u8[262144]{0}', space=vmem, size = 0x40000, scoped, tag = 'input window, operand 4']
    #allocation10 [shape = 'u8[16384]{0}', space=vmem, size = 0x4000, scoped, tag = 'input window, operand 5']
    loop: start=0, step=1, limit=10
    $region2: #{multi_layer_homo_gt.5} parent=1 // loop_pre_header
      _
    $region3: #{multi_layer_homo_gt.5} parent=1 // loop_header
      %s28 = sphi 0, %s32
      %p29 = scmp.ge.s32.totalorder %s28, 10
      %s35 = sphi 0, %s47
      %s36 = sphi 0, %s43
      %s37 = sphi 0, %s35
      %s38 = sphi 0, %s36
      %s39 = sphi 0, %s37
      %s40 = sphi 0, %s38
      %s50 = sphi 0, %s52
      %s53 = sphi 0, %s50
      %s54 = sphi 0, %s53
      %s70 = sphi 0, %s54
      %s76 = sphi 0, %s78
      %s79 = sphi 0, %s76
      %s80 = sphi 0, %s79
      %s96 = sphi 0, %s80
      %s102 = sphi 0, %s104
      %s105 = sphi 0, %s102
      %s106 = sphi 0, %s105
      %s122 = sphi 0, %s106
      %s128 = sphi 0, %s130
      %s131 = sphi 0, %s128
      %s132 = sphi 0, %s131
      %s148 = sphi 0, %s132
      %s156 = sphi 0, %s158
      %s159 = sphi 0, %s156
      %s160 = sphi 0, %s159
      %s176 = sphi 0, %s160
      %s180 = sphi 0, %s180
      %s182 = sphi 0, %s180
      %s183 = sphi 0, %s182
      %s197 = sphi 0, %s183
      %s201 = sphi 0, %s201
      %s203 = sphi 0, %s201
      %s204 = sphi 0, %s203
      %s218 = sphi 0, %s204
      %s222 = sphi 0, %s222
      %s224 = sphi 0, %s222
      %s225 = sphi 0, %s224
      %s239 = sphi 0, %s225
      %s243 = sphi 0, %s243
      %s245 = sphi 0, %s243
      %s246 = sphi 0, %s245
      %s260 = sphi 0, %s246
      %s264 = sphi 0, %s264
      %s266 = sphi 0, %s264
      %s267 = sphi 0, %s266
      %s281 = sphi 0, %s267
      %s285 = sphi 0, %s285
      %s287 = sphi 0, %s285
      %s288 = sphi 0, %s287
      %s302 = sphi 0, %s288
      %s306 = sphi 0, %s306
      %s308 = sphi 0, %s306
      %s309 = sphi 0, %s308
      %s323 = sphi 0, %s309
      %s327 = sphi 0, %s327
      %s329 = sphi 0, %s327
      %s330 = sphi 0, %s329
      %s344 = sphi 0, %s330
      %s348 = sphi 0, %s348
      %s350 = sphi 0, %s348
      %s351 = sphi 0, %s350
      %s365 = sphi 0, %s351
      %s369 = sphi 0, %s369
      %s371 = sphi 0, %s369
      %s372 = sphi 0, %s371
      %s386 = sphi 0, %s372
      %s392 = sphi 0, %s394
      %s395 = sphi 0, %s392
      %s396 = sphi 0, %s395
      %s412 = sphi 0, %s396
    $region4: #{multi_layer_homo_gt.5} parent=1 // loop_header_branch
      %31 = sbr.rel (%p29) target = $region8
    $region5: #{multi_layer_homo_gt.5} parent=1 // loop_body
      %s33 = ssub.s32 %s28, 1
      %s34 = ssub.s32 %s28, 2
      %s41 = sadd.s32 1, %s36
      %p42 = scmp.ge.s32.totalorder %s41, 2
      %s43 = scalar_select %p42, 0, %s41
      %s44 = sadd.s32 1, %s35
      %s45 = scalar_select %p42, %s44, %s35
      %p46 = scmp.ge.s32.totalorder %s45, 4
      %s47 = scalar_select %p46, 0, %s45
      %s48 = ssub.s32 %s35, %s47
      %p49 = scmp.eq.s32.totalorder %s48, 0
      %s51 = sadd.s32 %s50, 1
      %s52 = scalar_select %p49, %s50, %s51
      %p55 = pneg %p49
      %p56 = scmp.eq.s32.totalorder %s28, 7
      %p57 = por %p55, %p56
      %p58 = scmp.ne.s32.totalorder %s50, %s53
      %p59 = scmp.eq.s32.totalorder %s28, 0
      %p60 = por %p58, %p59
      %p61 = scmp.ne.s32.totalorder %s50, %s53
      %p62 = scmp.eq.s32.totalorder %s33, 7
      %p63 = por %p61, %p62
      %p64 = scmp.ne.s32.totalorder %s53, %s54
      %p65 = scmp.eq.s32.totalorder %s33, 0
      %p66 = por %p64, %p65
      %p67 = scmp.ne.s32.totalorder %s53, %s54
      %p68 = scmp.eq.s32.totalorder %s34, 7
      %p69 = por %p67, %p68
      %p71 = scmp.ne.s32.totalorder %s54, %s70
      %p72 = scmp.eq.s32.totalorder %s34, 0
      %p73 = por %p71, %p72
      %s74 = ssub.s32 %s35, %s47
      %p75 = scmp.eq.s32.totalorder %s74, 0
      %s77 = sadd.s32 %s76, 1
      %s78 = scalar_select %p75, %s76, %s77
      %p81 = pneg %p75
      %p82 = scmp.eq.s32.totalorder %s28, 7
      %p83 = por %p81, %p82
      %p84 = scmp.ne.s32.totalorder %s76, %s79
      %p85 = scmp.eq.s32.totalorder %s28, 0
      %p86 = por %p84, %p85
      %p87 = scmp.ne.s32.totalorder %s76, %s79
      %p88 = scmp.eq.s32.totalorder %s33, 7
      %p89 = por %p87, %p88
      %p90 = scmp.ne.s32.totalorder %s79, %s80
      %p91 = scmp.eq.s32.totalorder %s33, 0
      %p92 = por %p90, %p91
      %p93 = scmp.ne.s32.totalorder %s79, %s80
      %p94 = scmp.eq.s32.totalorder %s34, 7
      %p95 = por %p93, %p94
      %p97 = scmp.ne.s32.totalorder %s80, %s96
      %p98 = scmp.eq.s32.totalorder %s34, 0
      %p99 = por %p97, %p98
      %s100 = ssub.s32 %s36, %s43
      %p101 = scmp.eq.s32.totalorder %s100, 0
      %s103 = sadd.s32 %s102, 1
      %s104 = scalar_select %p101, %s102, %s103
      %p107 = pneg %p101
      %p108 = scmp.eq.s32.totalorder %s28, 7
      %p109 = por %p107, %p108
      %p110 = scmp.ne.s32.totalorder %s102, %s105
      %p111 = scmp.eq.s32.totalorder %s28, 0
      %p112 = por %p110, %p111
      %p113 = scmp.ne.s32.totalorder %s102, %s105
      %p114 = scmp.eq.s32.totalorder %s33, 7
      %p115 = por %p113, %p114
      %p116 = scmp.ne.s32.totalorder %s105, %s106
      %p117 = scmp.eq.s32.totalorder %s33, 0
      %p118 = por %p116, %p117
      %p119 = scmp.ne.s32.totalorder %s105, %s106
      %p120 = scmp.eq.s32.totalorder %s34, 7
      %p121 = por %p119, %p120
      %p123 = scmp.ne.s32.totalorder %s106, %s122
      %p124 = scmp.eq.s32.totalorder %s34, 0
      %p125 = por %p123, %p124
      %s126 = ssub.s32 %s36, %s43
      %p127 = scmp.eq.s32.totalorder %s126, 0
      %s129 = sadd.s32 %s128, 1
      %s130 = scalar_select %p127, %s128, %s129
      %p133 = pneg %p127
      %p134 = scmp.eq.s32.totalorder %s28, 7
      %p135 = por %p133, %p134
      %p136 = scmp.ne.s32.totalorder %s128, %s131
      %p137 = scmp.eq.s32.totalorder %s28, 0
      %p138 = por %p136, %p137
      %p139 = scmp.ne.s32.totalorder %s128, %s131
      %p140 = scmp.eq.s32.totalorder %s33, 7
      %p141 = por %p139, %p140
      %p142 = scmp.ne.s32.totalorder %s131, %s132
      %p143 = scmp.eq.s32.totalorder %s33, 0
      %p144 = por %p142, %p143
      %p145 = scmp.ne.s32.totalorder %s131, %s132
      %p146 = scmp.eq.s32.totalorder %s34, 7
      %p147 = por %p145, %p146
      %p149 = scmp.ne.s32.totalorder %s132, %s148
      %p150 = scmp.eq.s32.totalorder %s34, 0
      %p151 = por %p149, %p150
      %s152 = ssub.s32 %s35, %s47
      %s153 = ssub.s32 %s36, %s43
      %s154 = sor.u32 %s152, %s153
      %p155 = scmp.eq.s32.totalorder %s154, 0
      %s157 = sadd.s32 %s156, 1
      %s158 = scalar_select %p155, %s156, %s157
      %p161 = pneg %p155
      %p162 = scmp.eq.s32.totalorder %s28, 7
      %p163 = por %p161, %p162
      %p164 = scmp.ne.s32.totalorder %s156, %s159
      %p165 = scmp.eq.s32.totalorder %s28, 0
      %p166 = por %p164, %p165
      %p167 = scmp.ne.s32.totalorder %s156, %s159
      %p168 = scmp.eq.s32.totalorder %s33, 7
      %p169 = por %p167, %p168
      %p170 = scmp.ne.s32.totalorder %s159, %s160
      %p171 = scmp.eq.s32.totalorder %s33, 0
      %p172 = por %p170, %p171
      %p173 = scmp.ne.s32.totalorder %s159, %s160
      %p174 = scmp.eq.s32.totalorder %s34, 7
      %p175 = por %p173, %p174
      %p177 = scmp.ne.s32.totalorder %s160, %s176
      %p178 = scmp.eq.s32.totalorder %s34, 0
      %p179 = por %p177, %p178
      %s181 = sadd.s32 %s180, 1
      %p184 = scmp.eq.s32.totalorder %s28, 7
      %p185 = scmp.ne.s32.totalorder %s180, %s182
      %p186 = scmp.eq.s32.totalorder %s28, 0
      %p187 = por %p185, %p186
      %p188 = scmp.ne.s32.totalorder %s180, %s182
      %p189 = scmp.eq.s32.totalorder %s33, 7
      %p190 = por %p188, %p189
      %p191 = scmp.ne.s32.totalorder %s182, %s183
      %p192 = scmp.eq.s32.totalorder %s33, 0
      %p193 = por %p191, %p192
      %p194 = scmp.ne.s32.totalorder %s182, %s183
      %p195 = scmp.eq.s32.totalorder %s34, 7
      %p196 = por %p194, %p195
      %p198 = scmp.ne.s32.totalorder %s183, %s197
      %p199 = scmp.eq.s32.totalorder %s34, 0
      %p200 = por %p198, %p199
      %s202 = sadd.s32 %s201, 1
      %p205 = scmp.eq.s32.totalorder %s28, 7
      %p206 = scmp.ne.s32.totalorder %s201, %s203
      %p207 = scmp.eq.s32.totalorder %s28, 0
      %p208 = por %p206, %p207
      %p209 = scmp.ne.s32.totalorder %s201, %s203
      %p210 = scmp.eq.s32.totalorder %s33, 7
      %p211 = por %p209, %p210
      %p212 = scmp.ne.s32.totalorder %s203, %s204
      %p213 = scmp.eq.s32.totalorder %s33, 0
      %p214 = por %p212, %p213
      %p215 = scmp.ne.s32.totalorder %s203, %s204
      %p216 = scmp.eq.s32.totalorder %s34, 7
      %p217 = por %p215, %p216
      %p219 = scmp.ne.s32.totalorder %s204, %s218
      %p220 = scmp.eq.s32.totalorder %s34, 0
      %p221 = por %p219, %p220
      %s223 = sadd.s32 %s222, 1
      %p226 = scmp.eq.s32.totalorder %s28, 7
      %p227 = scmp.ne.s32.totalorder %s222, %s224
      %p228 = scmp.eq.s32.totalorder %s28, 0
      %p229 = por %p227, %p228
      %p230 = scmp.ne.s32.totalorder %s222, %s224
      %p231 = scmp.eq.s32.totalorder %s33, 7
      %p232 = por %p230, %p231
      %p233 = scmp.ne.s32.totalorder %s224, %s225
      %p234 = scmp.eq.s32.totalorder %s33, 0
      %p235 = por %p233, %p234
      %p236 = scmp.ne.s32.totalorder %s224, %s225
      %p237 = scmp.eq.s32.totalorder %s34, 7
      %p238 = por %p236, %p237
      %p240 = scmp.ne.s32.totalorder %s225, %s239
      %p241 = scmp.eq.s32.totalorder %s34, 0
      %p242 = por %p240, %p241
      %s244 = sadd.s32 %s243, 1
      %p247 = scmp.eq.s32.totalorder %s28, 7
      %p248 = scmp.ne.s32.totalorder %s243, %s245
      %p249 = scmp.eq.s32.totalorder %s28, 0
      %p250 = por %p248, %p249
      %p251 = scmp.ne.s32.totalorder %s243, %s245
      %p252 = scmp.eq.s32.totalorder %s33, 7
      %p253 = por %p251, %p252
      %p254 = scmp.ne.s32.totalorder %s245, %s246
      %p255 = scmp.eq.s32.totalorder %s33, 0
      %p256 = por %p254, %p255
      %p257 = scmp.ne.s32.totalorder %s245, %s246
      %p258 = scmp.eq.s32.totalorder %s34, 7
      %p259 = por %p257, %p258
      %p261 = scmp.ne.s32.totalorder %s246, %s260
      %p262 = scmp.eq.s32.totalorder %s34, 0
      %p263 = por %p261, %p262
      %s265 = sadd.s32 %s264, 1
      %p268 = scmp.eq.s32.totalorder %s28, 7
      %p269 = scmp.ne.s32.totalorder %s264, %s266
      %p270 = scmp.eq.s32.totalorder %s28, 0
      %p271 = por %p269, %p270
      %p272 = scmp.ne.s32.totalorder %s264, %s266
      %p273 = scmp.eq.s32.totalorder %s33, 7
      %p274 = por %p272, %p273
      %p275 = scmp.ne.s32.totalorder %s266, %s267
      %p276 = scmp.eq.s32.totalorder %s33, 0
      %p277 = por %p275, %p276
      %p278 = scmp.ne.s32.totalorder %s266, %s267
      %p279 = scmp.eq.s32.totalorder %s34, 7
      %p280 = por %p278, %p279
      %p282 = scmp.ne.s32.totalorder %s267, %s281
      %p283 = scmp.eq.s32.totalorder %s34, 0
      %p284 = por %p282, %p283
      %s286 = sadd.s32 %s285, 1
      %p289 = scmp.eq.s32.totalorder %s28, 7
      %p290 = scmp.ne.s32.totalorder %s285, %s287
      %p291 = scmp.eq.s32.totalorder %s28, 0
      %p292 = por %p290, %p291
      %p293 = scmp.ne.s32.totalorder %s285, %s287
      %p294 = scmp.eq.s32.totalorder %s33, 7
      %p295 = por %p293, %p294
      %p296 = scmp.ne.s32.totalorder %s287, %s288
      %p297 = scmp.eq.s32.totalorder %s33, 0
      %p298 = por %p296, %p297
      %p299 = scmp.ne.s32.totalorder %s287, %s288
      %p300 = scmp.eq.s32.totalorder %s34, 7
      %p301 = por %p299, %p300
      %p303 = scmp.ne.s32.totalorder %s288, %s302
      %p304 = scmp.eq.s32.totalorder %s34, 0
      %p305 = por %p303, %p304
      %s307 = sadd.s32 %s306, 1
      %p310 = scmp.eq.s32.totalorder %s28, 7
      %p311 = scmp.ne.s32.totalorder %s306, %s308
      %p312 = scmp.eq.s32.totalorder %s28, 0
      %p313 = por %p311, %p312
      %p314 = scmp.ne.s32.totalorder %s306, %s308
      %p315 = scmp.eq.s32.totalorder %s33, 7
      %p316 = por %p314, %p315
      %p317 = scmp.ne.s32.totalorder %s308, %s309
      %p318 = scmp.eq.s32.totalorder %s33, 0
      %p319 = por %p317, %p318
      %p320 = scmp.ne.s32.totalorder %s308, %s309
      %p321 = scmp.eq.s32.totalorder %s34, 7
      %p322 = por %p320, %p321
      %p324 = scmp.ne.s32.totalorder %s309, %s323
      %p325 = scmp.eq.s32.totalorder %s34, 0
      %p326 = por %p324, %p325
      %s328 = sadd.s32 %s327, 1
      %p331 = scmp.eq.s32.totalorder %s28, 7
      %p332 = scmp.ne.s32.totalorder %s327, %s329
      %p333 = scmp.eq.s32.totalorder %s28, 0
      %p334 = por %p332, %p333
      %p335 = scmp.ne.s32.totalorder %s327, %s329
      %p336 = scmp.eq.s32.totalorder %s33, 7
      %p337 = por %p335, %p336
      %p338 = scmp.ne.s32.totalorder %s329, %s330
      %p339 = scmp.eq.s32.totalorder %s33, 0
      %p340 = por %p338, %p339
      %p341 = scmp.ne.s32.totalorder %s329, %s330
      %p342 = scmp.eq.s32.totalorder %s34, 7
      %p343 = por %p341, %p342
      %p345 = scmp.ne.s32.totalorder %s330, %s344
      %p346 = scmp.eq.s32.totalorder %s34, 0
      %p347 = por %p345, %p346
      %s349 = sadd.s32 %s348, 1
      %p352 = scmp.eq.s32.totalorder %s28, 7
      %p353 = scmp.ne.s32.totalorder %s348, %s350
      %p354 = scmp.eq.s32.totalorder %s28, 0
      %p355 = por %p353, %p354
      %p356 = scmp.ne.s32.totalorder %s348, %s350
      %p357 = scmp.eq.s32.totalorder %s33, 7
      %p358 = por %p356, %p357
      %p359 = scmp.ne.s32.totalorder %s350, %s351
      %p360 = scmp.eq.s32.totalorder %s33, 0
      %p361 = por %p359, %p360
      %p362 = scmp.ne.s32.totalorder %s350, %s351
      %p363 = scmp.eq.s32.totalorder %s34, 7
      %p364 = por %p362, %p363
      %p366 = scmp.ne.s32.totalorder %s351, %s365
      %p367 = scmp.eq.s32.totalorder %s34, 0
      %p368 = por %p366, %p367
      %s370 = sadd.s32 %s369, 1
      %p373 = scmp.eq.s32.totalorder %s28, 7
      %p374 = scmp.ne.s32.totalorder %s369, %s371
      %p375 = scmp.eq.s32.totalorder %s28, 0
      %p376 = por %p374, %p375
      %p377 = scmp.ne.s32.totalorder %s369, %s371
      %p378 = scmp.eq.s32.totalorder %s33, 7
      %p379 = por %p377, %p378
      %p380 = scmp.ne.s32.totalorder %s371, %s372
      %p381 = scmp.eq.s32.totalorder %s33, 0
      %p382 = por %p380, %p381
      %p383 = scmp.ne.s32.totalorder %s371, %s372
      %p384 = scmp.eq.s32.totalorder %s34, 7
      %p385 = por %p383, %p384
      %p387 = scmp.ne.s32.totalorder %s372, %s386
      %p388 = scmp.eq.s32.totalorder %s34, 0
      %p389 = por %p387, %p388
      %s390 = ssub.s32 %s35, %s47
      %p391 = scmp.eq.s32.totalorder %s390, 0
      %s393 = sadd.s32 %s392, 1
      %s394 = scalar_select %p391, %s392, %s393
      %p397 = pneg %p391
      %p398 = scmp.eq.s32.totalorder %s28, 7
      %p399 = por %p397, %p398
      %p400 = scmp.ne.s32.totalorder %s392, %s395
      %p401 = scmp.eq.s32.totalorder %s28, 0
      %p402 = por %p400, %p401
      %p403 = scmp.ne.s32.totalorder %s392, %s395
      %p404 = scmp.eq.s32.totalorder %s33, 7
      %p405 = por %p403, %p404
      %p406 = scmp.ne.s32.totalorder %s395, %s396
      %p407 = scmp.eq.s32.totalorder %s33, 0
      %p408 = por %p406, %p407
      %p409 = scmp.ne.s32.totalorder %s395, %s396
      %p410 = scmp.eq.s32.totalorder %s34, 7
      %p411 = por %p409, %p410
      %p413 = scmp.ne.s32.totalorder %s396, %s412
      %p414 = scmp.eq.s32.totalorder %s34, 0
      %p415 = por %p413, %p414
      %p416 = scmp.le.s32.totalorder 1, %s28
      %p417 = scmp.lt.s32.totalorder %s28, 9
      %p418 = pnand %p416, %p417
      %p419 = pneg %p418
      // Predicated region
      $region9: #{multi_layer_homo_gt.5} parent=5 // pred_check
        _
      $region10: #{multi_layer_homo_gt.5} parent=5 // pred_check_branch
        %421 = sbr.rel (%p418) target = $region12
      $region11: #{multi_layer_homo_gt.5} parent=5 // pred_region
        %s422 = ssub.s32 %s28, 1
        // Predicated region
        $region13: #{multi_layer_homo_gt.5} parent=11 // pred_check
          %p423 = pneg %p193
        $region14: #{multi_layer_homo_gt.5} parent=11 // pred_check_branch
          %425 = sbr.rel (%p423) target = $region16
        $region15: #{multi_layer_homo_gt.5} parent=11 // pred_region
          _
        $region16: #{multi_layer_homo_gt.5} parent=11 // pred_fallthru
          _
        // Predicated region
        $region17: #{multi_layer_homo_gt.5} parent=11 // pred_check
          %p426 = pneg %p214
        $region18: #{multi_layer_homo_gt.5} parent=11 // pred_check_branch
          %428 = sbr.rel (%p426) target = $region20
        $region19: #{multi_layer_homo_gt.5} parent=11 // pred_region
          _
        $region20: #{multi_layer_homo_gt.5} parent=11 // pred_fallthru
          _
        // Predicated region
        $region21: #{multi_layer_homo_gt.5} parent=11 // pred_check
          %p429 = pneg %p235
        $region22: #{multi_layer_homo_gt.5} parent=11 // pred_check_branch
          %431 = sbr.rel (%p429) target = $region24
        $region23: #{multi_layer_homo_gt.5} parent=11 // pred_region
          _
        $region24: #{multi_layer_homo_gt.5} parent=11 // pred_fallthru
          _
        // Predicated region
        $region25: #{multi_layer_homo_gt.5} parent=11 // pred_check
          %p432 = pneg %p256
        $region26: #{multi_layer_homo_gt.5} parent=11 // pred_check_branch
          %434 = sbr.rel (%p432) target = $region28
        $region27: #{multi_layer_homo_gt.5} parent=11 // pred_region
          _
        $region28: #{multi_layer_homo_gt.5} parent=11 // pred_fallthru
          _
        // Predicated region
        $region29: #{multi_layer_homo_gt.5} parent=11 // pred_check
          %p435 = pneg %p277
        $region30: #{multi_layer_homo_gt.5} parent=11 // pred_check_branch
          %437 = sbr.rel (%p435) target = $region32
        $region31: #{multi_layer_homo_gt.5} parent=11 // pred_region
          _
        $region32: #{multi_layer_homo_gt.5} parent=11 // pred_fallthru
          _
        // Predicated region
        $region33: #{multi_layer_homo_gt.5} parent=11 // pred_check
          %p438 = pneg %p298
        $region34: #{multi_layer_homo_gt.5} parent=11 // pred_check_branch
          %440 = sbr.rel (%p438) target = $region36
        $region35: #{multi_layer_homo_gt.5} parent=11 // pred_region
          _
        $region36: #{multi_layer_homo_gt.5} parent=11 // pred_fallthru
          _
        // Predicated region
        $region37: #{multi_layer_homo_gt.5} parent=11 // pred_check
          %p441 = pneg %p319
        $region38: #{multi_layer_homo_gt.5} parent=11 // pred_check_branch
          %443 = sbr.rel (%p441) target = $region40
        $region39: #{multi_layer_homo_gt.5} parent=11 // pred_region
          _
        $region40: #{multi_layer_homo_gt.5} parent=11 // pred_fallthru
          _
        // Predicated region
        $region41: #{multi_layer_homo_gt.5} parent=11 // pred_check
          %p444 = pneg %p340
        $region42: #{multi_layer_homo_gt.5} parent=11 // pred_check_branch
          %446 = sbr.rel (%p444) target = $region44
        $region43: #{multi_layer_homo_gt.5} parent=11 // pred_region
          _
        $region44: #{multi_layer_homo_gt.5} parent=11 // pred_fallthru
          _
        // Predicated region
        $region45: #{multi_layer_homo_gt.5} parent=11 // pred_check
          %p447 = pneg %p361
        $region46: #{multi_layer_homo_gt.5} parent=11 // pred_check_branch
          %449 = sbr.rel (%p447) target = $region48
        $region47: #{multi_layer_homo_gt.5} parent=11 // pred_region
          _
        $region48: #{multi_layer_homo_gt.5} parent=11 // pred_fallthru
          _
        // Predicated region
        $region49: #{multi_layer_homo_gt.5} parent=11 // pred_check
          %p450 = pneg %p382
        $region50: #{multi_layer_homo_gt.5} parent=11 // pred_check_branch
          %452 = sbr.rel (%p450) target = $region52
        $region51: #{multi_layer_homo_gt.5} parent=11 // pred_region
          _
        $region52: #{multi_layer_homo_gt.5} parent=11 // pred_fallthru
          _
      $region12: #{multi_layer_homo_gt.5} parent=5 // pred_fallthru
        _
      %p453 = scmp.lt.s32.totalorder %s28, 8
      // Predicated region
      $region53: #{multi_layer_homo_gt.5} parent=5 // pred_check
        %p454 = pneg %p453
      $region54: #{multi_layer_homo_gt.5} parent=5 // pred_check_branch
        %456 = sbr.rel (%p454) target = $region56
      $region55: #{multi_layer_homo_gt.5} parent=5 // pred_region
        // Predicated region
        $region57: #{multi_layer_homo_gt.5} parent=55 // pred_check
          %p457 = pneg %p60
        $region58: #{multi_layer_homo_gt.5} parent=55 // pred_check_branch
          %459 = sbr.rel (%p457) target = $region60
        $region59: #{multi_layer_homo_gt.5} parent=55 // pred_region
          %s460 = smul.u32 8, %s35
          %p461 = scmp.lt.s32.totalorder %s460, 31
          %s462 = scalar_select %p461, %s460, 31
          %s463 = smul.addr %s462, 4
          %s464 = scalar_lea.vmem %s1, %s463
          %s465 = smul.u32 8, %s35
        $region60: #{multi_layer_homo_gt.5} parent=55 // pred_fallthru
          _
        // Predicated region
        $region61: #{multi_layer_homo_gt.5} parent=55 // pred_check
          %p466 = pneg %p86
        $region62: #{multi_layer_homo_gt.5} parent=55 // pred_check_branch
          %468 = sbr.rel (%p466) target = $region64
        $region63: #{multi_layer_homo_gt.5} parent=55 // pred_region
          %s469 = sand.u32 %s76, 1
          %s470 = sand.u32 %s76, 1
          %s471 = smul.addr %s470, 128
          %s472 = scalar_lea.vmem [#allocation7], %s471
          %s473 = smul.u32 8, %s35
          %s474 = smul.addr %s473, 4
          %s475 = scalar_lea.vmem %s2, %s474
          // Predicated region
          $region65: #{multi_layer_homo_gt.5} parent=63 // pred_check
            _
          $region66: #{multi_layer_homo_gt.5} parent=63 // pred_check_branch
            %477 = sbr.rel (0) target = $region68
          $region67: #{multi_layer_homo_gt.5} parent=63 // pred_region
            // Predicated region
            $region69: #{multi_layer_homo_gt.5} parent=67 // pred_check
              _
            $region70: #{multi_layer_homo_gt.5} parent=67 // pred_check_branch
              %479 = sbr.rel target = $region72
            $region71: #{multi_layer_homo_gt.5} parent=67 // pred_region
              // Predicated region
              $region84: #{multi_layer_homo_gt.5} parent=71 // pred_check
                _
              $region85: #{multi_layer_homo_gt.5} parent=71 // pred_check_branch
                %557 = sbr.rel (0) target = $region87
              $region86: #{multi_layer_homo_gt.5} parent=71 // pred_region
                loop: start=0, step=1, limit=1
                $region88: #{multi_layer_homo_gt.5} parent=86 // loop_pre_header
                  _
                $region89: #{multi_layer_homo_gt.5} parent=86 // loop_header
                  %s559 = sphi 0, %s563
                  %p560 = scmp.ge.s32.totalorder %s559, 1
                  %s564 = sphi %s475, %s475
                  %s565 = sphi %s472, %s472
                $region90: #{multi_layer_homo_gt.5} parent=86 // loop_header_branch
                  %562 = sbr.rel (%p560) target = $region94
                $region91: #{multi_layer_homo_gt.5} parent=86 // loop_body
                  _
                $region92: #{multi_layer_homo_gt.5} parent=86 // loop_footer
                  %s563 = sadd.s32 1, %s559
                $region93: #{multi_layer_homo_gt.5} parent=86 // loop_footer_branch
                  %558 = sbr.rel target = $region89
                $region94: #{multi_layer_homo_gt.5} parent=86 // loop_exit
                  _
                %s567 = ssub.s32 16, 1
                loop: start=0, step=1, limit=1
                $region95: #{multi_layer_homo_gt.5} parent=86 // loop_pre_header
                  _
                $region96: #{multi_layer_homo_gt.5} parent=86 // loop_header
                  %s569 = sphi 0, %s573
                  %p570 = scmp.ge.s32.totalorder %s569, 1
                  %s574 = sphi %s475, %s475
                  %s575 = sphi %s472, %s472
                $region97: #{multi_layer_homo_gt.5} parent=86 // loop_header_branch
                  %572 = sbr.rel (%p570) target = $region101
                $region98: #{multi_layer_homo_gt.5} parent=86 // loop_body
                  %v576 = vld [vmem:[%s574] sm:%s567]
                  %577 = vst [vmem:[%s575] sm:%s567] %v576
                  %v578 = vld [vmem:[%s574 + $0x4] sm:%s567]
                  %579 = vst [vmem:[%s575 + $0x4] sm:%s567] %v578
                  %v580 = vld [vmem:[%s574 + $0x8] sm:%s567]
                  %581 = vst [vmem:[%s575 + $0x8] sm:%s567] %v580
                  %v582 = vld [vmem:[%s574 + $0xc] sm:%s567]
                  %583 = vst [vmem:[%s575 + $0xc] sm:%s567] %v582
                  %v584 = vld [vmem:[%s574 + $0x10] sm:%s567]
                  %585 = vst [vmem:[%s575 + $0x10] sm:%s567] %v584
                  %v586 = vld [vmem:[%s574 + $0x14] sm:%s567]
                  %587 = vst [vmem:[%s575 + $0x14] sm:%s567] %v586
                  %v588 = vld [vmem:[%s574 + $0x18] sm:%s567]
                  %589 = vst [vmem:[%s575 + $0x18] sm:%s567] %v588
                  %v590 = vld [vmem:[%s574 + $0x1c] sm:%s567]
                  %591 = vst [vmem:[%s575 + $0x1c] sm:%s567] %v590
                  %v592 = vld [vmem:[%s574 + $0x80] sm:%s567]
                  %593 = vst [vmem:[%s575 + $0x20] sm:%s567] %v592
                  %v594 = vld [vmem:[%s574 + $0x84] sm:%s567]
                  %595 = vst [vmem:[%s575 + $0x24] sm:%s567] %v594
                  %v596 = vld [vmem:[%s574 + $0x88] sm:%s567]
                  %597 = vst [vmem:[%s575 + $0x28] sm:%s567] %v596
                  %v598 = vld [vmem:[%s574 + $0x8c] sm:%s567]
                  %599 = vst [vmem:[%s575 + $0x2c] sm:%s567] %v598
                  %v600 = vld [vmem:[%s574 + $0x90] sm:%s567]
                  %601 = vst [vmem:[%s575 + $0x30] sm:%s567] %v600
                  %v602 = vld [vmem:[%s574 + $0x94] sm:%s567]
                  %603 = vst [vmem:[%s575 + $0x34] sm:%s567] %v602
                  %v604 = vld [vmem:[%s574 + $0x98] sm:%s567]
                  %605 = vst [vmem:[%s575 + $0x38] sm:%s567] %v604
                  %v606 = vld [vmem:[%s574 + $0x9c] sm:%s567]
                  %607 = vst [vmem:[%s575 + $0x3c] sm:%s567] %v606
                  %v608 = vld [vmem:[%s574 + $0x100] sm:%s567]
                  %609 = vst [vmem:[%s575 + $0x40] sm:%s567] %v608
                  %v610 = vld [vmem:[%s574 + $0x104] sm:%s567]
                  %611 = vst [vmem:[%s575 + $0x44] sm:%s567] %v610
                  %v612 = vld [vmem:[%s574 + $0x108] sm:%s567]
                  %613 = vst [vmem:[%s575 + $0x48] sm:%s567] %v612
                  %v614 = vld [vmem:[%s574 + $0x10c] sm:%s567]
                  %615 = vst [vmem:[%s575 + $0x4c] sm:%s567] %v614
                  %v616 = vld [vmem:[%s574 + $0x110] sm:%s567]
                  %617 = vst [vmem:[%s575 + $0x50] sm:%s567] %v616
                  %v618 = vld [vmem:[%s574 + $0x114] sm:%s567]
                  %619 = vst [vmem:[%s575 + $0x54] sm:%s567] %v618
                  %v620 = vld [vmem:[%s574 + $0x118] sm:%s567]
                  %621 = vst [vmem:[%s575 + $0x58] sm:%s567] %v620
                  %v622 = vld [vmem:[%s574 + $0x11c] sm:%s567]
                  %623 = vst [vmem:[%s575 + $0x5c] sm:%s567] %v622
                  %v624 = vld [vmem:[%s574 + $0x180] sm:%s567]
                  %625 = vst [vmem:[%s575 + $0x60] sm:%s567] %v624
                  %v626 = vld [vmem:[%s574 + $0x184] sm:%s567]
                  %627 = vst [vmem:[%s575 + $0x64] sm:%s567] %v626
                  %v628 = vld [vmem:[%s574 + $0x188] sm:%s567]
                  %629 = vst [vmem:[%s575 + $0x68] sm:%s567] %v628
                  %v630 = vld [vmem:[%s574 + $0x18c] sm:%s567]
                  %631 = vst [vmem:[%s575 + $0x6c] sm:%s567] %v630
                  %v632 = vld [vmem:[%s574 + $0x190] sm:%s567]
                  %633 = vst [vmem:[%s575 + $0x70] sm:%s567] %v632
                  %v634 = vld [vmem:[%s574 + $0x194] sm:%s567]
                  %635 = vst [vmem:[%s575 + $0x74] sm:%s567] %v634
                  %v636 = vld [vmem:[%s574 + $0x198] sm:%s567]
                  %637 = vst [vmem:[%s575 + $0x78] sm:%s567] %v636
                  %v638 = vld [vmem:[%s574 + $0x19c] sm:%s567]
                  %639 = vst [vmem:[%s575 + $0x7c] sm:%s567] %v638
                $region99: #{multi_layer_homo_gt.5} parent=86 // loop_footer
                  %s573 = sadd.s32 1, %s569
                $region100: #{multi_layer_homo_gt.5} parent=86 // loop_footer_branch
                  %568 = sbr.rel target = $region96
                $region101: #{multi_layer_homo_gt.5} parent=86 // loop_exit
                  _
              $region87: #{multi_layer_homo_gt.5} parent=71 // pred_fallthru
                _
            $region72: #{multi_layer_homo_gt.5} parent=67 // pred_fallthru
              _
            // Predicated region
            $region73: #{multi_layer_homo_gt.5} parent=67 // pred_check
              _
            $region74: #{multi_layer_homo_gt.5} parent=67 // pred_check_branch
              %481 = sbr.rel (0) target = $region76
            $region75: #{multi_layer_homo_gt.5} parent=67 // pred_region
              %s483 = ssub.s32 16, 1
              loop: start=0, step=1, limit=1
              $region77: #{multi_layer_homo_gt.5} parent=75 // loop_pre_header
                _
              $region78: #{multi_layer_homo_gt.5} parent=75 // loop_header
                %s485 = sphi 0, %s489
                %p486 = scmp.ge.s32.totalorder %s485, 1
                %s490 = sphi %s475, %s475
                %s491 = sphi %s472, %s472
              $region79: #{multi_layer_homo_gt.5} parent=75 // loop_header_branch
                %488 = sbr.rel (%p486) target = $region83
              $region80: #{multi_layer_homo_gt.5} parent=75 // loop_body
                %v492 = vld [vmem:[%s490] sm:%s483]
                %493 = vst [vmem:[%s491] sm:%s483] %v492
                %v494 = vld [vmem:[%s490 + $0x4] sm:%s483]
                %495 = vst [vmem:[%s491 + $0x4] sm:%s483] %v494
                %v496 = vld [vmem:[%s490 + $0x8] sm:%s483]
                %497 = vst [vmem:[%s491 + $0x8] sm:%s483] %v496
                %v498 = vld [vmem:[%s490 + $0xc] sm:%s483]
                %499 = vst [vmem:[%s491 + $0xc] sm:%s483] %v498
                %v500 = vld [vmem:[%s490 + $0x10] sm:%s483]
                %501 = vst [vmem:[%s491 + $0x10] sm:%s483] %v500
                %v502 = vld [vmem:[%s490 + $0x14] sm:%s483]
                %503 = vst [vmem:[%s491 + $0x14] sm:%s483] %v502
                %v504 = vld [vmem:[%s490 + $0x18] sm:%s483]
                %505 = vst [vmem:[%s491 + $0x18] sm:%s483] %v504
                %v506 = vld [vmem:[%s490 + $0x1c] sm:%s483]
                %507 = vst [vmem:[%s491 + $0x1c] sm:%s483] %v506
                %v508 = vld [vmem:[%s490 + $0x80] sm:%s483]
                %509 = vst [vmem:[%s491 + $0x20] sm:%s483] %v508
                %v510 = vld [vmem:[%s490 + $0x84] sm:%s483]
                %511 = vst [vmem:[%s491 + $0x24] sm:%s483] %v510
                %v512 = vld [vmem:[%s490 + $0x88] sm:%s483]
                %513 = vst [vmem:[%s491 + $0x28] sm:%s483] %v512
                %v514 = vld [vmem:[%s490 + $0x8c] sm:%s483]
                %515 = vst [vmem:[%s491 + $0x2c] sm:%s483] %v514
                %v516 = vld [vmem:[%s490 + $0x90] sm:%s483]
                %517 = vst [vmem:[%s491 + $0x30] sm:%s483] %v516
                %v518 = vld [vmem:[%s490 + $0x94] sm:%s483]
                %519 = vst [vmem:[%s491 + $0x34] sm:%s483] %v518
                %v520 = vld [vmem:[%s490 + $0x98] sm:%s483]
                %521 = vst [vmem:[%s491 + $0x38] sm:%s483] %v520
                %v522 = vld [vmem:[%s490 + $0x9c] sm:%s483]
                %523 = vst [vmem:[%s491 + $0x3c] sm:%s483] %v522
                %v524 = vld [vmem:[%s490 + $0x100] sm:%s483]
                %525 = vst [vmem:[%s491 + $0x40] sm:%s483] %v524
                %v526 = vld [vmem:[%s490 + $0x104] sm:%s483]
                %527 = vst [vmem:[%s491 + $0x44] sm:%s483] %v526
                %v528 = vld [vmem:[%s490 + $0x108] sm:%s483]
                %529 = vst [vmem:[%s491 + $0x48] sm:%s483] %v528
                %v530 = vld [vmem:[%s490 + $0x10c] sm:%s483]
                %531 = vst [vmem:[%s491 + $0x4c] sm:%s483] %v530
                %v532 = vld [vmem:[%s490 + $0x110] sm:%s483]
                %533 = vst [vmem:[%s491 + $0x50] sm:%s483] %v532
                %v534 = vld [vmem:[%s490 + $0x114] sm:%s483]
                %535 = vst [vmem:[%s491 + $0x54] sm:%s483] %v534
                %v536 = vld [vmem:[%s490 + $0x118] sm:%s483]
                %537 = vst [vmem:[%s491 + $0x58] sm:%s483] %v536
                %v538 = vld [vmem:[%s490 + $0x11c] sm:%s483]
                %539 = vst [vmem:[%s491 + $0x5c] sm:%s483] %v538
                %v540 = vld [vmem:[%s490 + $0x180] sm:%s483]
                %541 = vst [vmem:[%s491 + $0x60] sm:%s483] %v540
                %v542 = vld [vmem:[%s490 + $0x184] sm:%s483]
                %543 = vst [vmem:[%s491 + $0x64] sm:%s483] %v542
                %v544 = vld [vmem:[%s490 + $0x188] sm:%s483]
                %545 = vst [vmem:[%s491 + $0x68] sm:%s483] %v544
                %v546 = vld [vmem:[%s490 + $0x18c] sm:%s483]
                %547 = vst [vmem:[%s491 + $0x6c] sm:%s483] %v546
                %v548 = vld [vmem:[%s490 + $0x190] sm:%s483]
                %549 = vst [vmem:[%s491 + $0x70] sm:%s483] %v548
                %v550 = vld [vmem:[%s490 + $0x194] sm:%s483]
                %551 = vst [vmem:[%s491 + $0x74] sm:%s483] %v550
                %v552 = vld [vmem:[%s490 + $0x198] sm:%s483]
                %553 = vst [vmem:[%s491 + $0x78] sm:%s483] %v552
                %v554 = vld [vmem:[%s490 + $0x19c] sm:%s483]
                %555 = vst [vmem:[%s491 + $0x7c] sm:%s483] %v554
              $region81: #{multi_layer_homo_gt.5} parent=75 // loop_footer
                %s489 = sadd.s32 1, %s485
              $region82: #{multi_layer_homo_gt.5} parent=75 // loop_footer_branch
                %484 = sbr.rel target = $region78
              $region83: #{multi_layer_homo_gt.5} parent=75 // loop_exit
                _
            $region76: #{multi_layer_homo_gt.5} parent=67 // pred_fallthru
              _
          $region68: #{multi_layer_homo_gt.5} parent=63 // pred_fallthru
            _
          %640 = vnop
        $region64: #{multi_layer_homo_gt.5} parent=55 // pred_fallthru
          _
        // Predicated region
        $region102: #{multi_layer_homo_gt.5} parent=55 // pred_check
          %p641 = pneg %p112
        $region103: #{multi_layer_homo_gt.5} parent=55 // pred_check_branch
          %643 = sbr.rel (%p641) target = $region105
        $region104: #{multi_layer_homo_gt.5} parent=55 // pred_region
          %s644 = sand.u32 %s102, 1
          %s645 = sand.u32 %s102, 1
          %s646 = smul.addr %s645, 256
          %s647 = scalar_lea.vmem [#allocation8], %s646
          %s648 = smul.u32 16, %s36
          %s649 = smul.addr %s648, 4
          %s650 = scalar_lea.vmem %s3, %s649
          // Predicated region
          $region106: #{multi_layer_homo_gt.5} parent=104 // pred_check
            _
          $region107: #{multi_layer_homo_gt.5} parent=104 // pred_check_branch
            %652 = sbr.rel (0) target = $region109
          $region108: #{multi_layer_homo_gt.5} parent=104 // pred_region
            // Predicated region
            $region110: #{multi_layer_homo_gt.5} parent=108 // pred_check
              _
            $region111: #{multi_layer_homo_gt.5} parent=108 // pred_check_branch
              %654 = sbr.rel target = $region113
            $region112: #{multi_layer_homo_gt.5} parent=108 // pred_region
              // Predicated region
              $region125: #{multi_layer_homo_gt.5} parent=112 // pred_check
                _
              $region126: #{multi_layer_homo_gt.5} parent=112 // pred_check_branch
                %796 = sbr.rel (0) target = $region128
              $region127: #{multi_layer_homo_gt.5} parent=112 // pred_region
                loop: start=0, step=1, limit=1
                $region129: #{multi_layer_homo_gt.5} parent=127 // loop_pre_header
                  _
                $region130: #{multi_layer_homo_gt.5} parent=127 // loop_header
                  %s798 = sphi 0, %s802
                  %p799 = scmp.ge.s32.totalorder %s798, 1
                  %s803 = sphi %s650, %s650
                  %s804 = sphi %s647, %s647
                $region131: #{multi_layer_homo_gt.5} parent=127 // loop_header_branch
                  %801 = sbr.rel (%p799) target = $region135
                $region132: #{multi_layer_homo_gt.5} parent=127 // loop_body
                  _
                $region133: #{multi_layer_homo_gt.5} parent=127 // loop_footer
                  %s802 = sadd.s32 1, %s798
                $region134: #{multi_layer_homo_gt.5} parent=127 // loop_footer_branch
                  %797 = sbr.rel target = $region130
                $region135: #{multi_layer_homo_gt.5} parent=127 // loop_exit
                  _
                %s806 = ssub.s32 16, 1
                loop: start=0, step=1, limit=1
                $region136: #{multi_layer_homo_gt.5} parent=127 // loop_pre_header
                  _
                $region137: #{multi_layer_homo_gt.5} parent=127 // loop_header
                  %s808 = sphi 0, %s812
                  %p809 = scmp.ge.s32.totalorder %s808, 1
                  %s813 = sphi %s650, %s650
                  %s814 = sphi %s647, %s647
                $region138: #{multi_layer_homo_gt.5} parent=127 // loop_header_branch
                  %811 = sbr.rel (%p809) target = $region142
                $region139: #{multi_layer_homo_gt.5} parent=127 // loop_body
                  %v815 = vld [vmem:[%s813] sm:%s806]
                  %816 = vst [vmem:[%s814] sm:%s806] %v815
                  %v817 = vld [vmem:[%s813 + $0x4] sm:%s806]
                  %818 = vst [vmem:[%s814 + $0x4] sm:%s806] %v817
                  %v819 = vld [vmem:[%s813 + $0x8] sm:%s806]
                  %820 = vst [vmem:[%s814 + $0x8] sm:%s806] %v819
                  %v821 = vld [vmem:[%s813 + $0xc] sm:%s806]
                  %822 = vst [vmem:[%s814 + $0xc] sm:%s806] %v821
                  %v823 = vld [vmem:[%s813 + $0x10] sm:%s806]
                  %824 = vst [vmem:[%s814 + $0x10] sm:%s806] %v823
                  %v825 = vld [vmem:[%s813 + $0x14] sm:%s806]
                  %826 = vst [vmem:[%s814 + $0x14] sm:%s806] %v825
                  %v827 = vld [vmem:[%s813 + $0x18] sm:%s806]
                  %828 = vst [vmem:[%s814 + $0x18] sm:%s806] %v827
                  %v829 = vld [vmem:[%s813 + $0x1c] sm:%s806]
                  %830 = vst [vmem:[%s814 + $0x1c] sm:%s806] %v829
                  %v831 = vld [vmem:[%s813 + $0x20] sm:%s806]
                  %832 = vst [vmem:[%s814 + $0x20] sm:%s806] %v831
                  %v833 = vld [vmem:[%s813 + $0x24] sm:%s806]
                  %834 = vst [vmem:[%s814 + $0x24] sm:%s806] %v833
                  %v835 = vld [vmem:[%s813 + $0x28] sm:%s806]
                  %836 = vst [vmem:[%s814 + $0x28] sm:%s806] %v835
                  %v837 = vld [vmem:[%s813 + $0x2c] sm:%s806]
                  %838 = vst [vmem:[%s814 + $0x2c] sm:%s806] %v837
                  %v839 = vld [vmem:[%s813 + $0x30] sm:%s806]
                  %840 = vst [vmem:[%s814 + $0x30] sm:%s806] %v839
                  %v841 = vld [vmem:[%s813 + $0x34] sm:%s806]
                  %842 = vst [vmem:[%s814 + $0x34] sm:%s806] %v841
                  %v843 = vld [vmem:[%s813 + $0x38] sm:%s806]
                  %844 = vst [vmem:[%s814 + $0x38] sm:%s806] %v843
                  %v845 = vld [vmem:[%s813 + $0x3c] sm:%s806]
                  %846 = vst [vmem:[%s814 + $0x3c] sm:%s806] %v845
                  %v847 = vld [vmem:[%s813 + $0x80] sm:%s806]
                  %848 = vst [vmem:[%s814 + $0x40] sm:%s806] %v847
                  %v849 = vld [vmem:[%s813 + $0x84] sm:%s806]
                  %850 = vst [vmem:[%s814 + $0x44] sm:%s806] %v849
                  %v851 = vld [vmem:[%s813 + $0x88] sm:%s806]
                  %852 = vst [vmem:[%s814 + $0x48] sm:%s806] %v851
                  %v853 = vld [vmem:[%s813 + $0x8c] sm:%s806]
                  %854 = vst [vmem:[%s814 + $0x4c] sm:%s806] %v853
                  %v855 = vld [vmem:[%s813 + $0x90] sm:%s806]
                  %856 = vst [vmem:[%s814 + $0x50] sm:%s806] %v855
                  %v857 = vld [vmem:[%s813 + $0x94] sm:%s806]
                  %858 = vst [vmem:[%s814 + $0x54] sm:%s806] %v857
                  %v859 = vld [vmem:[%s813 + $0x98] sm:%s806]
                  %860 = vst [vmem:[%s814 + $0x58] sm:%s806] %v859
                  %v861 = vld [vmem:[%s813 + $0x9c] sm:%s806]
                  %862 = vst [vmem:[%s814 + $0x5c] sm:%s806] %v861
                  %v863 = vld [vmem:[%s813 + $0xa0] sm:%s806]
                  %864 = vst [vmem:[%s814 + $0x60] sm:%s806] %v863
                  %v865 = vld [vmem:[%s813 + $0xa4] sm:%s806]
                  %866 = vst [vmem:[%s814 + $0x64] sm:%s806] %v865
                  %v867 = vld [vmem:[%s813 + $0xa8] sm:%s806]
                  %868 = vst [vmem:[%s814 + $0x68] sm:%s806] %v867
                  %v869 = vld [vmem:[%s813 + $0xac] sm:%s806]
                  %870 = vst [vmem:[%s814 + $0x6c] sm:%s806] %v869
                  %v871 = vld [vmem:[%s813 + $0xb0] sm:%s806]
                  %872 = vst [vmem:[%s814 + $0x70] sm:%s806] %v871
                  %v873 = vld [vmem:[%s813 + $0xb4] sm:%s806]
                  %874 = vst [vmem:[%s814 + $0x74] sm:%s806] %v873
                  %v875 = vld [vmem:[%s813 + $0xb8] sm:%s806]
                  %876 = vst [vmem:[%s814 + $0x78] sm:%s806] %v875
                  %v877 = vld [vmem:[%s813 + $0xbc] sm:%s806]
                  %878 = vst [vmem:[%s814 + $0x7c] sm:%s806] %v877
                  %v879 = vld [vmem:[%s813 + $0x100] sm:%s806]
                  %880 = vst [vmem:[%s814 + $0x80] sm:%s806] %v879
                  %v881 = vld [vmem:[%s813 + $0x104] sm:%s806]
                  %882 = vst [vmem:[%s814 + $0x84] sm:%s806] %v881
                  %v883 = vld [vmem:[%s813 + $0x108] sm:%s806]
                  %884 = vst [vmem:[%s814 + $0x88] sm:%s806] %v883
                  %v885 = vld [vmem:[%s813 + $0x10c] sm:%s806]
                  %886 = vst [vmem:[%s814 + $0x8c] sm:%s806] %v885
                  %v887 = vld [vmem:[%s813 + $0x110] sm:%s806]
                  %888 = vst [vmem:[%s814 + $0x90] sm:%s806] %v887
                  %v889 = vld [vmem:[%s813 + $0x114] sm:%s806]
                  %890 = vst [vmem:[%s814 + $0x94] sm:%s806] %v889
                  %v891 = vld [vmem:[%s813 + $0x118] sm:%s806]
                  %892 = vst [vmem:[%s814 + $0x98] sm:%s806] %v891
                  %v893 = vld [vmem:[%s813 + $0x11c] sm:%s806]
                  %894 = vst [vmem:[%s814 + $0x9c] sm:%s806] %v893
                  %v895 = vld [vmem:[%s813 + $0x120] sm:%s806]
                  %896 = vst [vmem:[%s814 + $0xa0] sm:%s806] %v895
                  %v897 = vld [vmem:[%s813 + $0x124] sm:%s806]
                  %898 = vst [vmem:[%s814 + $0xa4] sm:%s806] %v897
                  %v899 = vld [vmem:[%s813 + $0x128] sm:%s806]
                  %900 = vst [vmem:[%s814 + $0xa8] sm:%s806] %v899
                  %v901 = vld [vmem:[%s813 + $0x12c] sm:%s806]
                  %902 = vst [vmem:[%s814 + $0xac] sm:%s806] %v901
                  %v903 = vld [vmem:[%s813 + $0x130] sm:%s806]
                  %904 = vst [vmem:[%s814 + $0xb0] sm:%s806] %v903
                  %v905 = vld [vmem:[%s813 + $0x134] sm:%s806]
                  %906 = vst [vmem:[%s814 + $0xb4] sm:%s806] %v905
                  %v907 = vld [vmem:[%s813 + $0x138] sm:%s806]
                  %908 = vst [vmem:[%s814 + $0xb8] sm:%s806] %v907
                  %v909 = vld [vmem:[%s813 + $0x13c] sm:%s806]
                  %910 = vst [vmem:[%s814 + $0xbc] sm:%s806] %v909
                  %v911 = vld [vmem:[%s813 + $0x180] sm:%s806]
                  %912 = vst [vmem:[%s814 + $0xc0] sm:%s806] %v911
                  %v913 = vld [vmem:[%s813 + $0x184] sm:%s806]
                  %914 = vst [vmem:[%s814 + $0xc4] sm:%s806] %v913
                  %v915 = vld [vmem:[%s813 + $0x188] sm:%s806]
                  %916 = vst [vmem:[%s814 + $0xc8] sm:%s806] %v915
                  %v917 = vld [vmem:[%s813 + $0x18c] sm:%s806]
                  %918 = vst [vmem:[%s814 + $0xcc] sm:%s806] %v917
                  %v919 = vld [vmem:[%s813 + $0x190] sm:%s806]
                  %920 = vst [vmem:[%s814 + $0xd0] sm:%s806] %v919
                  %v921 = vld [vmem:[%s813 + $0x194] sm:%s806]
                  %922 = vst [vmem:[%s814 + $0xd4] sm:%s806] %v921
                  %v923 = vld [vmem:[%s813 + $0x198] sm:%s806]
                  %924 = vst [vmem:[%s814 + $0xd8] sm:%s806] %v923
                  %v925 = vld [vmem:[%s813 + $0x19c] sm:%s806]
                  %926 = vst [vmem:[%s814 + $0xdc] sm:%s806] %v925
                  %v927 = vld [vmem:[%s813 + $0x1a0] sm:%s806]
                  %928 = vst [vmem:[%s814 + $0xe0] sm:%s806] %v927
                  %v929 = vld [vmem:[%s813 + $0x1a4] sm:%s806]
                  %930 = vst [vmem:[%s814 + $0xe4] sm:%s806] %v929
                  %v931 = vld [vmem:[%s813 + $0x1a8] sm:%s806]
                  %932 = vst [vmem:[%s814 + $0xe8] sm:%s806] %v931
                  %v933 = vld [vmem:[%s813 + $0x1ac] sm:%s806]
                  %934 = vst [vmem:[%s814 + $0xec] sm:%s806] %v933
                  %v935 = vld [vmem:[%s813 + $0x1b0] sm:%s806]
                  %936 = vst [vmem:[%s814 + $0xf0] sm:%s806] %v935
                  %v937 = vld [vmem:[%s813 + $0x1b4] sm:%s806]
                  %938 = vst [vmem:[%s814 + $0xf4] sm:%s806] %v937
                  %v939 = vld [vmem:[%s813 + $0x1b8] sm:%s806]
                  %940 = vst [vmem:[%s814 + $0xf8] sm:%s806] %v939
                  %v941 = vld [vmem:[%s813 + $0x1bc] sm:%s806]
                  %942 = vst [vmem:[%s814 + $0xfc] sm:%s806] %v941
                $region140: #{multi_layer_homo_gt.5} parent=127 // loop_footer
                  %s812 = sadd.s32 1, %s808
                $region141: #{multi_layer_homo_gt.5} parent=127 // loop_footer_branch
                  %807 = sbr.rel target = $region137
                $region142: #{multi_layer_homo_gt.5} parent=127 // loop_exit
                  _
              $region128: #{multi_layer_homo_gt.5} parent=112 // pred_fallthru
                _
            $region113: #{multi_layer_homo_gt.5} parent=108 // pred_fallthru
              _
            // Predicated region
            $region114: #{multi_layer_homo_gt.5} parent=108 // pred_check
              _
            $region115: #{multi_layer_homo_gt.5} parent=108 // pred_check_branch
              %656 = sbr.rel (0) target = $region117
            $region116: #{multi_layer_homo_gt.5} parent=108 // pred_region
              %s658 = ssub.s32 16, 1
              loop: start=0, step=1, limit=1
              $region118: #{multi_layer_homo_gt.5} parent=116 // loop_pre_header
                _
              $region119: #{multi_layer_homo_gt.5} parent=116 // loop_header
                %s660 = sphi 0, %s664
                %p661 = scmp.ge.s32.totalorder %s660, 1
                %s665 = sphi %s650, %s650
                %s666 = sphi %s647, %s647
              $region120: #{multi_layer_homo_gt.5} parent=116 // loop_header_branch
                %663 = sbr.rel (%p661) target = $region124
              $region121: #{multi_layer_homo_gt.5} parent=116 // loop_body
                %v667 = vld [vmem:[%s665] sm:%s658]
                %668 = vst [vmem:[%s666] sm:%s658] %v667
                %v669 = vld [vmem:[%s665 + $0x4] sm:%s658]
                %670 = vst [vmem:[%s666 + $0x4] sm:%s658] %v669
                %v671 = vld [vmem:[%s665 + $0x8] sm:%s658]
                %672 = vst [vmem:[%s666 + $0x8] sm:%s658] %v671
                %v673 = vld [vmem:[%s665 + $0xc] sm:%s658]
                %674 = vst [vmem:[%s666 + $0xc] sm:%s658] %v673
                %v675 = vld [vmem:[%s665 + $0x10] sm:%s658]
                %676 = vst [vmem:[%s666 + $0x10] sm:%s658] %v675
                %v677 = vld [vmem:[%s665 + $0x14] sm:%s658]
                %678 = vst [vmem:[%s666 + $0x14] sm:%s658] %v677
                %v679 = vld [vmem:[%s665 + $0x18] sm:%s658]
                %680 = vst [vmem:[%s666 + $0x18] sm:%s658] %v679
                %v681 = vld [vmem:[%s665 + $0x1c] sm:%s658]
                %682 = vst [vmem:[%s666 + $0x1c] sm:%s658] %v681
                %v683 = vld [vmem:[%s665 + $0x20] sm:%s658]
                %684 = vst [vmem:[%s666 + $0x20] sm:%s658] %v683
                %v685 = vld [vmem:[%s665 + $0x24] sm:%s658]
                %686 = vst [vmem:[%s666 + $0x24] sm:%s658] %v685
                %v687 = vld [vmem:[%s665 + $0x28] sm:%s658]
                %688 = vst [vmem:[%s666 + $0x28] sm:%s658] %v687
                %v689 = vld [vmem:[%s665 + $0x2c] sm:%s658]
                %690 = vst [vmem:[%s666 + $0x2c] sm:%s658] %v689
                %v691 = vld [vmem:[%s665 + $0x30] sm:%s658]
                %692 = vst [vmem:[%s666 + $0x30] sm:%s658] %v691
                %v693 = vld [vmem:[%s665 + $0x34] sm:%s658]
                %694 = vst [vmem:[%s666 + $0x34] sm:%s658] %v693
                %v695 = vld [vmem:[%s665 + $0x38] sm:%s658]
                %696 = vst [vmem:[%s666 + $0x38] sm:%s658] %v695
                %v697 = vld [vmem:[%s665 + $0x3c] sm:%s658]
                %698 = vst [vmem:[%s666 + $0x3c] sm:%s658] %v697
                %v699 = vld [vmem:[%s665 + $0x80] sm:%s658]
                %700 = vst [vmem:[%s666 + $0x40] sm:%s658] %v699
                %v701 = vld [vmem:[%s665 + $0x84] sm:%s658]
                %702 = vst [vmem:[%s666 + $0x44] sm:%s658] %v701
                %v703 = vld [vmem:[%s665 + $0x88] sm:%s658]
                %704 = vst [vmem:[%s666 + $0x48] sm:%s658] %v703
                %v705 = vld [vmem:[%s665 + $0x8c] sm:%s658]
                %706 = vst [vmem:[%s666 + $0x4c] sm:%s658] %v705
                %v707 = vld [vmem:[%s665 + $0x90] sm:%s658]
                %708 = vst [vmem:[%s666 + $0x50] sm:%s658] %v707
                %v709 = vld [vmem:[%s665 + $0x94] sm:%s658]
                %710 = vst [vmem:[%s666 + $0x54] sm:%s658] %v709
                %v711 = vld [vmem:[%s665 + $0x98] sm:%s658]
                %712 = vst [vmem:[%s666 + $0x58] sm:%s658] %v711
                %v713 = vld [vmem:[%s665 + $0x9c] sm:%s658]
                %714 = vst [vmem:[%s666 + $0x5c] sm:%s658] %v713
                %v715 = vld [vmem:[%s665 + $0xa0] sm:%s658]
                %716 = vst [vmem:[%s666 + $0x60] sm:%s658] %v715
                %v717 = vld [vmem:[%s665 + $0xa4] sm:%s658]
                %718 = vst [vmem:[%s666 + $0x64] sm:%s658] %v717
                %v719 = vld [vmem:[%s665 + $0xa8] sm:%s658]
                %720 = vst [vmem:[%s666 + $0x68] sm:%s658] %v719
                %v721 = vld [vmem:[%s665 + $0xac] sm:%s658]
                %722 = vst [vmem:[%s666 + $0x6c] sm:%s658] %v721
                %v723 = vld [vmem:[%s665 + $0xb0] sm:%s658]
                %724 = vst [vmem:[%s666 + $0x70] sm:%s658] %v723
                %v725 = vld [vmem:[%s665 + $0xb4] sm:%s658]
                %726 = vst [vmem:[%s666 + $0x74] sm:%s658] %v725
                %v727 = vld [vmem:[%s665 + $0xb8] sm:%s658]
                %728 = vst [vmem:[%s666 + $0x78] sm:%s658] %v727
                %v729 = vld [vmem:[%s665 + $0xbc] sm:%s658]
                %730 = vst [vmem:[%s666 + $0x7c] sm:%s658] %v729
                %v731 = vld [vmem:[%s665 + $0x100] sm:%s658]
                %732 = vst [vmem:[%s666 + $0x80] sm:%s658] %v731
                %v733 = vld [vmem:[%s665 + $0x104] sm:%s658]
                %734 = vst [vmem:[%s666 + $0x84] sm:%s658] %v733
                %v735 = vld [vmem:[%s665 + $0x108] sm:%s658]
                %736 = vst [vmem:[%s666 + $0x88] sm:%s658] %v735
                %v737 = vld [vmem:[%s665 + $0x10c] sm:%s658]
                %738 = vst [vmem:[%s666 + $0x8c] sm:%s658] %v737
                %v739 = vld [vmem:[%s665 + $0x110] sm:%s658]
                %740 = vst [vmem:[%s666 + $0x90] sm:%s658] %v739
                %v741 = vld [vmem:[%s665 + $0x114] sm:%s658]
                %742 = vst [vmem:[%s666 + $0x94] sm:%s658] %v741
                %v743 = vld [vmem:[%s665 + $0x118] sm:%s658]
                %744 = vst [vmem:[%s666 + $0x98] sm:%s658] %v743
                %v745 = vld [vmem:[%s665 + $0x11c] sm:%s658]
                %746 = vst [vmem:[%s666 + $0x9c] sm:%s658] %v745
                %v747 = vld [vmem:[%s665 + $0x120] sm:%s658]
                %748 = vst [vmem:[%s666 + $0xa0] sm:%s658] %v747
                %v749 = vld [vmem:[%s665 + $0x124] sm:%s658]
                %750 = vst [vmem:[%s666 + $0xa4] sm:%s658] %v749
                %v751 = vld [vmem:[%s665 + $0x128] sm:%s658]
                %752 = vst [vmem:[%s666 + $0xa8] sm:%s658] %v751
                %v753 = vld [vmem:[%s665 + $0x12c] sm:%s658]
                %754 = vst [vmem:[%s666 + $0xac] sm:%s658] %v753
                %v755 = vld [vmem:[%s665 + $0x130] sm:%s658]
                %756 = vst [vmem:[%s666 + $0xb0] sm:%s658] %v755
                %v757 = vld [vmem:[%s665 + $0x134] sm:%s658]
                %758 = vst [vmem:[%s666 + $0xb4] sm:%s658] %v757
                %v759 = vld [vmem:[%s665 + $0x138] sm:%s658]
                %760 = vst [vmem:[%s666 + $0xb8] sm:%s658] %v759
                %v761 = vld [vmem:[%s665 + $0x13c] sm:%s658]
                %762 = vst [vmem:[%s666 + $0xbc] sm:%s658] %v761
                %v763 = vld [vmem:[%s665 + $0x180] sm:%s658]
                %764 = vst [vmem:[%s666 + $0xc0] sm:%s658] %v763
                %v765 = vld [vmem:[%s665 + $0x184] sm:%s658]
                %766 = vst [vmem:[%s666 + $0xc4] sm:%s658] %v765
                %v767 = vld [vmem:[%s665 + $0x188] sm:%s658]
                %768 = vst [vmem:[%s666 + $0xc8] sm:%s658] %v767
                %v769 = vld [vmem:[%s665 + $0x18c] sm:%s658]
                %770 = vst [vmem:[%s666 + $0xcc] sm:%s658] %v769
                %v771 = vld [vmem:[%s665 + $0x190] sm:%s658]
                %772 = vst [vmem:[%s666 + $0xd0] sm:%s658] %v771
                %v773 = vld [vmem:[%s665 + $0x194] sm:%s658]
                %774 = vst [vmem:[%s666 + $0xd4] sm:%s658] %v773
                %v775 = vld [vmem:[%s665 + $0x198] sm:%s658]
                %776 = vst [vmem:[%s666 + $0xd8] sm:%s658] %v775
                %v777 = vld [vmem:[%s665 + $0x19c] sm:%s658]
                %778 = vst [vmem:[%s666 + $0xdc] sm:%s658] %v777
                %v779 = vld [vmem:[%s665 + $0x1a0] sm:%s658]
                %780 = vst [vmem:[%s666 + $0xe0] sm:%s658] %v779
                %v781 = vld [vmem:[%s665 + $0x1a4] sm:%s658]
                %782 = vst [vmem:[%s666 + $0xe4] sm:%s658] %v781
                %v783 = vld [vmem:[%s665 + $0x1a8] sm:%s658]
                %784 = vst [vmem:[%s666 + $0xe8] sm:%s658] %v783
                %v785 = vld [vmem:[%s665 + $0x1ac] sm:%s658]
                %786 = vst [vmem:[%s666 + $0xec] sm:%s658] %v785
                %v787 = vld [vmem:[%s665 + $0x1b0] sm:%s658]
                %788 = vst [vmem:[%s666 + $0xf0] sm:%s658] %v787
                %v789 = vld [vmem:[%s665 + $0x1b4] sm:%s658]
                %790 = vst [vmem:[%s666 + $0xf4] sm:%s658] %v789
                %v791 = vld [vmem:[%s665 + $0x1b8] sm:%s658]
                %792 = vst [vmem:[%s666 + $0xf8] sm:%s658] %v791
                %v793 = vld [vmem:[%s665 + $0x1bc] sm:%s658]
                %794 = vst [vmem:[%s666 + $0xfc] sm:%s658] %v793
              $region122: #{multi_layer_homo_gt.5} parent=116 // loop_footer
                %s664 = sadd.s32 1, %s660
              $region123: #{multi_layer_homo_gt.5} parent=116 // loop_footer_branch
                %659 = sbr.rel target = $region119
              $region124: #{multi_layer_homo_gt.5} parent=116 // loop_exit
                _
            $region117: #{multi_layer_homo_gt.5} parent=108 // pred_fallthru
              _
          $region109: #{multi_layer_homo_gt.5} parent=104 // pred_fallthru
            _
          %943 = vnop
        $region105: #{multi_layer_homo_gt.5} parent=55 // pred_fallthru
          _
        // Predicated region
        $region143: #{multi_layer_homo_gt.5} parent=55 // pred_check
          %p944 = pneg %p138
        $region144: #{multi_layer_homo_gt.5} parent=55 // pred_check_branch
          %946 = sbr.rel (%p944) target = $region146
        $region145: #{multi_layer_homo_gt.5} parent=55 // pred_region
          %s947 = sand.u32 %s128, 1
          %s948 = sand.u32 %s128, 1
          %s949 = smul.addr %s948, 256
          %s950 = scalar_lea.vmem [#allocation9], %s949
          %s951 = smul.u32 16, %s36
          %s952 = smul.addr %s951, 4
          %s953 = scalar_lea.vmem %s4, %s952
          // Predicated region
          $region147: #{multi_layer_homo_gt.5} parent=145 // pred_check
            _
          $region148: #{multi_layer_homo_gt.5} parent=145 // pred_check_branch
            %955 = sbr.rel (0) target = $region150
          $region149: #{multi_layer_homo_gt.5} parent=145 // pred_region
            // Predicated region
            $region151: #{multi_layer_homo_gt.5} parent=149 // pred_check
              _
            $region152: #{multi_layer_homo_gt.5} parent=149 // pred_check_branch
              %957 = sbr.rel target = $region154
            $region153: #{multi_layer_homo_gt.5} parent=149 // pred_region
              // Predicated region
              $region166: #{multi_layer_homo_gt.5} parent=153 // pred_check
                _
              $region167: #{multi_layer_homo_gt.5} parent=153 // pred_check_branch
                %1099 = sbr.rel (0) target = $region169
              $region168: #{multi_layer_homo_gt.5} parent=153 // pred_region
                loop: start=0, step=1, limit=1
                $region170: #{multi_layer_homo_gt.5} parent=168 // loop_pre_header
                  _
                $region171: #{multi_layer_homo_gt.5} parent=168 // loop_header
                  %s1101 = sphi 0, %s1105
                  %p1102 = scmp.ge.s32.totalorder %s1101, 1
                  %s1106 = sphi %s953, %s953
                  %s1107 = sphi %s950, %s950
                $region172: #{multi_layer_homo_gt.5} parent=168 // loop_header_branch
                  %1104 = sbr.rel (%p1102) target = $region176
                $region173: #{multi_layer_homo_gt.5} parent=168 // loop_body
                  _
                $region174: #{multi_layer_homo_gt.5} parent=168 // loop_footer
                  %s1105 = sadd.s32 1, %s1101
                $region175: #{multi_layer_homo_gt.5} parent=168 // loop_footer_branch
                  %1100 = sbr.rel target = $region171
                $region176: #{multi_layer_homo_gt.5} parent=168 // loop_exit
                  _
                %s1109 = ssub.s32 16, 1
                loop: start=0, step=1, limit=1
                $region177: #{multi_layer_homo_gt.5} parent=168 // loop_pre_header
                  _
                $region178: #{multi_layer_homo_gt.5} parent=168 // loop_header
                  %s1111 = sphi 0, %s1115
                  %p1112 = scmp.ge.s32.totalorder %s1111, 1
                  %s1116 = sphi %s953, %s953
                  %s1117 = sphi %s950, %s950
                $region179: #{multi_layer_homo_gt.5} parent=168 // loop_header_branch
                  %1114 = sbr.rel (%p1112) target = $region183
                $region180: #{multi_layer_homo_gt.5} parent=168 // loop_body
                  %v1118 = vld [vmem:[%s1116] sm:%s1109]
                  %1119 = vst [vmem:[%s1117] sm:%s1109] %v1118
                  %v1120 = vld [vmem:[%s1116 + $0x4] sm:%s1109]
                  %1121 = vst [vmem:[%s1117 + $0x4] sm:%s1109] %v1120
                  %v1122 = vld [vmem:[%s1116 + $0x8] sm:%s1109]
                  %1123 = vst [vmem:[%s1117 + $0x8] sm:%s1109] %v1122
                  %v1124 = vld [vmem:[%s1116 + $0xc] sm:%s1109]
                  %1125 = vst [vmem:[%s1117 + $0xc] sm:%s1109] %v1124
                  %v1126 = vld [vmem:[%s1116 + $0x10] sm:%s1109]
                  %1127 = vst [vmem:[%s1117 + $0x10] sm:%s1109] %v1126
                  %v1128 = vld [vmem:[%s1116 + $0x14] sm:%s1109]
                  %1129 = vst [vmem:[%s1117 + $0x14] sm:%s1109] %v1128
                  %v1130 = vld [vmem:[%s1116 + $0x18] sm:%s1109]
                  %1131 = vst [vmem:[%s1117 + $0x18] sm:%s1109] %v1130
                  %v1132 = vld [vmem:[%s1116 + $0x1c] sm:%s1109]
                  %1133 = vst [vmem:[%s1117 + $0x1c] sm:%s1109] %v1132
                  %v1134 = vld [vmem:[%s1116 + $0x20] sm:%s1109]
                  %1135 = vst [vmem:[%s1117 + $0x20] sm:%s1109] %v1134
                  %v1136 = vld [vmem:[%s1116 + $0x24] sm:%s1109]
                  %1137 = vst [vmem:[%s1117 + $0x24] sm:%s1109] %v1136
                  %v1138 = vld [vmem:[%s1116 + $0x28] sm:%s1109]
                  %1139 = vst [vmem:[%s1117 + $0x28] sm:%s1109] %v1138
                  %v1140 = vld [vmem:[%s1116 + $0x2c] sm:%s1109]
                  %1141 = vst [vmem:[%s1117 + $0x2c] sm:%s1109] %v1140
                  %v1142 = vld [vmem:[%s1116 + $0x30] sm:%s1109]
                  %1143 = vst [vmem:[%s1117 + $0x30] sm:%s1109] %v1142
                  %v1144 = vld [vmem:[%s1116 + $0x34] sm:%s1109]
                  %1145 = vst [vmem:[%s1117 + $0x34] sm:%s1109] %v1144
                  %v1146 = vld [vmem:[%s1116 + $0x38] sm:%s1109]
                  %1147 = vst [vmem:[%s1117 + $0x38] sm:%s1109] %v1146
                  %v1148 = vld [vmem:[%s1116 + $0x3c] sm:%s1109]
                  %1149 = vst [vmem:[%s1117 + $0x3c] sm:%s1109] %v1148
                  %v1150 = vld [vmem:[%s1116 + $0x80] sm:%s1109]
                  %1151 = vst [vmem:[%s1117 + $0x40] sm:%s1109] %v1150
                  %v1152 = vld [vmem:[%s1116 + $0x84] sm:%s1109]
                  %1153 = vst [vmem:[%s1117 + $0x44] sm:%s1109] %v1152
                  %v1154 = vld [vmem:[%s1116 + $0x88] sm:%s1109]
                  %1155 = vst [vmem:[%s1117 + $0x48] sm:%s1109] %v1154
                  %v1156 = vld [vmem:[%s1116 + $0x8c] sm:%s1109]
                  %1157 = vst [vmem:[%s1117 + $0x4c] sm:%s1109] %v1156
                  %v1158 = vld [vmem:[%s1116 + $0x90] sm:%s1109]
                  %1159 = vst [vmem:[%s1117 + $0x50] sm:%s1109] %v1158
                  %v1160 = vld [vmem:[%s1116 + $0x94] sm:%s1109]
                  %1161 = vst [vmem:[%s1117 + $0x54] sm:%s1109] %v1160
                  %v1162 = vld [vmem:[%s1116 + $0x98] sm:%s1109]
                  %1163 = vst [vmem:[%s1117 + $0x58] sm:%s1109] %v1162
                  %v1164 = vld [vmem:[%s1116 + $0x9c] sm:%s1109]
                  %1165 = vst [vmem:[%s1117 + $0x5c] sm:%s1109] %v1164
                  %v1166 = vld [vmem:[%s1116 + $0xa0] sm:%s1109]
                  %1167 = vst [vmem:[%s1117 + $0x60] sm:%s1109] %v1166
                  %v1168 = vld [vmem:[%s1116 + $0xa4] sm:%s1109]
                  %1169 = vst [vmem:[%s1117 + $0x64] sm:%s1109] %v1168
                  %v1170 = vld [vmem:[%s1116 + $0xa8] sm:%s1109]
                  %1171 = vst [vmem:[%s1117 + $0x68] sm:%s1109] %v1170
                  %v1172 = vld [vmem:[%s1116 + $0xac] sm:%s1109]
                  %1173 = vst [vmem:[%s1117 + $0x6c] sm:%s1109] %v1172
                  %v1174 = vld [vmem:[%s1116 + $0xb0] sm:%s1109]
                  %1175 = vst [vmem:[%s1117 + $0x70] sm:%s1109] %v1174
                  %v1176 = vld [vmem:[%s1116 + $0xb4] sm:%s1109]
                  %1177 = vst [vmem:[%s1117 + $0x74] sm:%s1109] %v1176
                  %v1178 = vld [vmem:[%s1116 + $0xb8] sm:%s1109]
                  %1179 = vst [vmem:[%s1117 + $0x78] sm:%s1109] %v1178
                  %v1180 = vld [vmem:[%s1116 + $0xbc] sm:%s1109]
                  %1181 = vst [vmem:[%s1117 + $0x7c] sm:%s1109] %v1180
                  %v1182 = vld [vmem:[%s1116 + $0x100] sm:%s1109]
                  %1183 = vst [vmem:[%s1117 + $0x80] sm:%s1109] %v1182
                  %v1184 = vld [vmem:[%s1116 + $0x104] sm:%s1109]
                  %1185 = vst [vmem:[%s1117 + $0x84] sm:%s1109] %v1184
                  %v1186 = vld [vmem:[%s1116 + $0x108] sm:%s1109]
                  %1187 = vst [vmem:[%s1117 + $0x88] sm:%s1109] %v1186
                  %v1188 = vld [vmem:[%s1116 + $0x10c] sm:%s1109]
                  %1189 = vst [vmem:[%s1117 + $0x8c] sm:%s1109] %v1188
                  %v1190 = vld [vmem:[%s1116 + $0x110] sm:%s1109]
                  %1191 = vst [vmem:[%s1117 + $0x90] sm:%s1109] %v1190
                  %v1192 = vld [vmem:[%s1116 + $0x114] sm:%s1109]
                  %1193 = vst [vmem:[%s1117 + $0x94] sm:%s1109] %v1192
                  %v1194 = vld [vmem:[%s1116 + $0x118] sm:%s1109]
                  %1195 = vst [vmem:[%s1117 + $0x98] sm:%s1109] %v1194
                  %v1196 = vld [vmem:[%s1116 + $0x11c] sm:%s1109]
                  %1197 = vst [vmem:[%s1117 + $0x9c] sm:%s1109] %v1196
                  %v1198 = vld [vmem:[%s1116 + $0x120] sm:%s1109]
                  %1199 = vst [vmem:[%s1117 + $0xa0] sm:%s1109] %v1198
                  %v1200 = vld [vmem:[%s1116 + $0x124] sm:%s1109]
                  %1201 = vst [vmem:[%s1117 + $0xa4] sm:%s1109] %v1200
                  %v1202 = vld [vmem:[%s1116 + $0x128] sm:%s1109]
                  %1203 = vst [vmem:[%s1117 + $0xa8] sm:%s1109] %v1202
                  %v1204 = vld [vmem:[%s1116 + $0x12c] sm:%s1109]
                  %1205 = vst [vmem:[%s1117 + $0xac] sm:%s1109] %v1204
                  %v1206 = vld [vmem:[%s1116 + $0x130] sm:%s1109]
                  %1207 = vst [vmem:[%s1117 + $0xb0] sm:%s1109] %v1206
                  %v1208 = vld [vmem:[%s1116 + $0x134] sm:%s1109]
                  %1209 = vst [vmem:[%s1117 + $0xb4] sm:%s1109] %v1208
                  %v1210 = vld [vmem:[%s1116 + $0x138] sm:%s1109]
                  %1211 = vst [vmem:[%s1117 + $0xb8] sm:%s1109] %v1210
                  %v1212 = vld [vmem:[%s1116 + $0x13c] sm:%s1109]
                  %1213 = vst [vmem:[%s1117 + $0xbc] sm:%s1109] %v1212
                  %v1214 = vld [vmem:[%s1116 + $0x180] sm:%s1109]
                  %1215 = vst [vmem:[%s1117 + $0xc0] sm:%s1109] %v1214
                  %v1216 = vld [vmem:[%s1116 + $0x184] sm:%s1109]
                  %1217 = vst [vmem:[%s1117 + $0xc4] sm:%s1109] %v1216
                  %v1218 = vld [vmem:[%s1116 + $0x188] sm:%s1109]
                  %1219 = vst [vmem:[%s1117 + $0xc8] sm:%s1109] %v1218
                  %v1220 = vld [vmem:[%s1116 + $0x18c] sm:%s1109]
                  %1221 = vst [vmem:[%s1117 + $0xcc] sm:%s1109] %v1220
                  %v1222 = vld [vmem:[%s1116 + $0x190] sm:%s1109]
                  %1223 = vst [vmem:[%s1117 + $0xd0] sm:%s1109] %v1222
                  %v1224 = vld [vmem:[%s1116 + $0x194] sm:%s1109]
                  %1225 = vst [vmem:[%s1117 + $0xd4] sm:%s1109] %v1224
                  %v1226 = vld [vmem:[%s1116 + $0x198] sm:%s1109]
                  %1227 = vst [vmem:[%s1117 + $0xd8] sm:%s1109] %v1226
                  %v1228 = vld [vmem:[%s1116 + $0x19c] sm:%s1109]
                  %1229 = vst [vmem:[%s1117 + $0xdc] sm:%s1109] %v1228
                  %v1230 = vld [vmem:[%s1116 + $0x1a0] sm:%s1109]
                  %1231 = vst [vmem:[%s1117 + $0xe0] sm:%s1109] %v1230
                  %v1232 = vld [vmem:[%s1116 + $0x1a4] sm:%s1109]
                  %1233 = vst [vmem:[%s1117 + $0xe4] sm:%s1109] %v1232
                  %v1234 = vld [vmem:[%s1116 + $0x1a8] sm:%s1109]
                  %1235 = vst [vmem:[%s1117 + $0xe8] sm:%s1109] %v1234
                  %v1236 = vld [vmem:[%s1116 + $0x1ac] sm:%s1109]
                  %1237 = vst [vmem:[%s1117 + $0xec] sm:%s1109] %v1236
                  %v1238 = vld [vmem:[%s1116 + $0x1b0] sm:%s1109]
                  %1239 = vst [vmem:[%s1117 + $0xf0] sm:%s1109] %v1238
                  %v1240 = vld [vmem:[%s1116 + $0x1b4] sm:%s1109]
                  %1241 = vst [vmem:[%s1117 + $0xf4] sm:%s1109] %v1240
                  %v1242 = vld [vmem:[%s1116 + $0x1b8] sm:%s1109]
                  %1243 = vst [vmem:[%s1117 + $0xf8] sm:%s1109] %v1242
                  %v1244 = vld [vmem:[%s1116 + $0x1bc] sm:%s1109]
                  %1245 = vst [vmem:[%s1117 + $0xfc] sm:%s1109] %v1244
                $region181: #{multi_layer_homo_gt.5} parent=168 // loop_footer
                  %s1115 = sadd.s32 1, %s1111
                $region182: #{multi_layer_homo_gt.5} parent=168 // loop_footer_branch
                  %1110 = sbr.rel target = $region178
                $region183: #{multi_layer_homo_gt.5} parent=168 // loop_exit
                  _
              $region169: #{multi_layer_homo_gt.5} parent=153 // pred_fallthru
                _
            $region154: #{multi_layer_homo_gt.5} parent=149 // pred_fallthru
              _
            // Predicated region
            $region155: #{multi_layer_homo_gt.5} parent=149 // pred_check
              _
            $region156: #{multi_layer_homo_gt.5} parent=149 // pred_check_branch
              %959 = sbr.rel (0) target = $region158
            $region157: #{multi_layer_homo_gt.5} parent=149 // pred_region
              %s961 = ssub.s32 16, 1
              loop: start=0, step=1, limit=1
              $region159: #{multi_layer_homo_gt.5} parent=157 // loop_pre_header
                _
              $region160: #{multi_layer_homo_gt.5} parent=157 // loop_header
                %s963 = sphi 0, %s967
                %p964 = scmp.ge.s32.totalorder %s963, 1
                %s968 = sphi %s953, %s953
                %s969 = sphi %s950, %s950
              $region161: #{multi_layer_homo_gt.5} parent=157 // loop_header_branch
                %966 = sbr.rel (%p964) target = $region165
              $region162: #{multi_layer_homo_gt.5} parent=157 // loop_body
                %v970 = vld [vmem:[%s968] sm:%s961]
                %971 = vst [vmem:[%s969] sm:%s961] %v970
                %v972 = vld [vmem:[%s968 + $0x4] sm:%s961]
                %973 = vst [vmem:[%s969 + $0x4] sm:%s961] %v972
                %v974 = vld [vmem:[%s968 + $0x8] sm:%s961]
                %975 = vst [vmem:[%s969 + $0x8] sm:%s961] %v974
                %v976 = vld [vmem:[%s968 + $0xc] sm:%s961]
                %977 = vst [vmem:[%s969 + $0xc] sm:%s961] %v976
                %v978 = vld [vmem:[%s968 + $0x10] sm:%s961]
                %979 = vst [vmem:[%s969 + $0x10] sm:%s961] %v978
                %v980 = vld [vmem:[%s968 + $0x14] sm:%s961]
                %981 = vst [vmem:[%s969 + $0x14] sm:%s961] %v980
                %v982 = vld [vmem:[%s968 + $0x18] sm:%s961]
                %983 = vst [vmem:[%s969 + $0x18] sm:%s961] %v982
                %v984 = vld [vmem:[%s968 + $0x1c] sm:%s961]
                %985 = vst [vmem:[%s969 + $0x1c] sm:%s961] %v984
                %v986 = vld [vmem:[%s968 + $0x20] sm:%s961]
                %987 = vst [vmem:[%s969 + $0x20] sm:%s961] %v986
                %v988 = vld [vmem:[%s968 + $0x24] sm:%s961]
                %989 = vst [vmem:[%s969 + $0x24] sm:%s961] %v988
                %v990 = vld [vmem:[%s968 + $0x28] sm:%s961]
                %991 = vst [vmem:[%s969 + $0x28] sm:%s961] %v990
                %v992 = vld [vmem:[%s968 + $0x2c] sm:%s961]
                %993 = vst [vmem:[%s969 + $0x2c] sm:%s961] %v992
                %v994 = vld [vmem:[%s968 + $0x30] sm:%s961]
                %995 = vst [vmem:[%s969 + $0x30] sm:%s961] %v994
                %v996 = vld [vmem:[%s968 + $0x34] sm:%s961]
                %997 = vst [vmem:[%s969 + $0x34] sm:%s961] %v996
                %v998 = vld [vmem:[%s968 + $0x38] sm:%s961]
                %999 = vst [vmem:[%s969 + $0x38] sm:%s961] %v998
                %v1000 = vld [vmem:[%s968 + $0x3c] sm:%s961]
                %1001 = vst [vmem:[%s969 + $0x3c] sm:%s961] %v1000
                %v1002 = vld [vmem:[%s968 + $0x80] sm:%s961]
                %1003 = vst [vmem:[%s969 + $0x40] sm:%s961] %v1002
                %v1004 = vld [vmem:[%s968 + $0x84] sm:%s961]
                %1005 = vst [vmem:[%s969 + $0x44] sm:%s961] %v1004
                %v1006 = vld [vmem:[%s968 + $0x88] sm:%s961]
                %1007 = vst [vmem:[%s969 + $0x48] sm:%s961] %v1006
                %v1008 = vld [vmem:[%s968 + $0x8c] sm:%s961]
                %1009 = vst [vmem:[%s969 + $0x4c] sm:%s961] %v1008
                %v1010 = vld [vmem:[%s968 + $0x90] sm:%s961]
                %1011 = vst [vmem:[%s969 + $0x50] sm:%s961] %v1010
                %v1012 = vld [vmem:[%s968 + $0x94] sm:%s961]
                %1013 = vst [vmem:[%s969 + $0x54] sm:%s961] %v1012
                %v1014 = vld [vmem:[%s968 + $0x98] sm:%s961]
                %1015 = vst [vmem:[%s969 + $0x58] sm:%s961] %v1014
                %v1016 = vld [vmem:[%s968 + $0x9c] sm:%s961]
                %1017 = vst [vmem:[%s969 + $0x5c] sm:%s961] %v1016
                %v1018 = vld [vmem:[%s968 + $0xa0] sm:%s961]
                %1019 = vst [vmem:[%s969 + $0x60] sm:%s961] %v1018
                %v1020 = vld [vmem:[%s968 + $0xa4] sm:%s961]
                %1021 = vst [vmem:[%s969 + $0x64] sm:%s961] %v1020
                %v1022 = vld [vmem:[%s968 + $0xa8] sm:%s961]
                %1023 = vst [vmem:[%s969 + $0x68] sm:%s961] %v1022
                %v1024 = vld [vmem:[%s968 + $0xac] sm:%s961]
                %1025 = vst [vmem:[%s969 + $0x6c] sm:%s961] %v1024
                %v1026 = vld [vmem:[%s968 + $0xb0] sm:%s961]
                %1027 = vst [vmem:[%s969 + $0x70] sm:%s961] %v1026
                %v1028 = vld [vmem:[%s968 + $0xb4] sm:%s961]
                %1029 = vst [vmem:[%s969 + $0x74] sm:%s961] %v1028
                %v1030 = vld [vmem:[%s968 + $0xb8] sm:%s961]
                %1031 = vst [vmem:[%s969 + $0x78] sm:%s961] %v1030
                %v1032 = vld [vmem:[%s968 + $0xbc] sm:%s961]
                %1033 = vst [vmem:[%s969 + $0x7c] sm:%s961] %v1032
                %v1034 = vld [vmem:[%s968 + $0x100] sm:%s961]
                %1035 = vst [vmem:[%s969 + $0x80] sm:%s961] %v1034
                %v1036 = vld [vmem:[%s968 + $0x104] sm:%s961]
                %1037 = vst [vmem:[%s969 + $0x84] sm:%s961] %v1036
                %v1038 = vld [vmem:[%s968 + $0x108] sm:%s961]
                %1039 = vst [vmem:[%s969 + $0x88] sm:%s961] %v1038
                %v1040 = vld [vmem:[%s968 + $0x10c] sm:%s961]
                %1041 = vst [vmem:[%s969 + $0x8c] sm:%s961] %v1040
                %v1042 = vld [vmem:[%s968 + $0x110] sm:%s961]
                %1043 = vst [vmem:[%s969 + $0x90] sm:%s961] %v1042
                %v1044 = vld [vmem:[%s968 + $0x114] sm:%s961]
                %1045 = vst [vmem:[%s969 + $0x94] sm:%s961] %v1044
                %v1046 = vld [vmem:[%s968 + $0x118] sm:%s961]
                %1047 = vst [vmem:[%s969 + $0x98] sm:%s961] %v1046
                %v1048 = vld [vmem:[%s968 + $0x11c] sm:%s961]
                %1049 = vst [vmem:[%s969 + $0x9c] sm:%s961] %v1048
                %v1050 = vld [vmem:[%s968 + $0x120] sm:%s961]
                %1051 = vst [vmem:[%s969 + $0xa0] sm:%s961] %v1050
                %v1052 = vld [vmem:[%s968 + $0x124] sm:%s961]
                %1053 = vst [vmem:[%s969 + $0xa4] sm:%s961] %v1052
                %v1054 = vld [vmem:[%s968 + $0x128] sm:%s961]
                %1055 = vst [vmem:[%s969 + $0xa8] sm:%s961] %v1054
                %v1056 = vld [vmem:[%s968 + $0x12c] sm:%s961]
                %1057 = vst [vmem:[%s969 + $0xac] sm:%s961] %v1056
                %v1058 = vld [vmem:[%s968 + $0x130] sm:%s961]
                %1059 = vst [vmem:[%s969 + $0xb0] sm:%s961] %v1058
                %v1060 = vld [vmem:[%s968 + $0x134] sm:%s961]
                %1061 = vst [vmem:[%s969 + $0xb4] sm:%s961] %v1060
                %v1062 = vld [vmem:[%s968 + $0x138] sm:%s961]
                %1063 = vst [vmem:[%s969 + $0xb8] sm:%s961] %v1062
                %v1064 = vld [vmem:[%s968 + $0x13c] sm:%s961]
                %1065 = vst [vmem:[%s969 + $0xbc] sm:%s961] %v1064
                %v1066 = vld [vmem:[%s968 + $0x180] sm:%s961]
                %1067 = vst [vmem:[%s969 + $0xc0] sm:%s961] %v1066
                %v1068 = vld [vmem:[%s968 + $0x184] sm:%s961]
                %1069 = vst [vmem:[%s969 + $0xc4] sm:%s961] %v1068
                %v1070 = vld [vmem:[%s968 + $0x188] sm:%s961]
                %1071 = vst [vmem:[%s969 + $0xc8] sm:%s961] %v1070
                %v1072 = vld [vmem:[%s968 + $0x18c] sm:%s961]
                %1073 = vst [vmem:[%s969 + $0xcc] sm:%s961] %v1072
                %v1074 = vld [vmem:[%s968 + $0x190] sm:%s961]
                %1075 = vst [vmem:[%s969 + $0xd0] sm:%s961] %v1074
                %v1076 = vld [vmem:[%s968 + $0x194] sm:%s961]
                %1077 = vst [vmem:[%s969 + $0xd4] sm:%s961] %v1076
                %v1078 = vld [vmem:[%s968 + $0x198] sm:%s961]
                %1079 = vst [vmem:[%s969 + $0xd8] sm:%s961] %v1078
                %v1080 = vld [vmem:[%s968 + $0x19c] sm:%s961]
                %1081 = vst [vmem:[%s969 + $0xdc] sm:%s961] %v1080
                %v1082 = vld [vmem:[%s968 + $0x1a0] sm:%s961]
                %1083 = vst [vmem:[%s969 + $0xe0] sm:%s961] %v1082
                %v1084 = vld [vmem:[%s968 + $0x1a4] sm:%s961]
                %1085 = vst [vmem:[%s969 + $0xe4] sm:%s961] %v1084
                %v1086 = vld [vmem:[%s968 + $0x1a8] sm:%s961]
                %1087 = vst [vmem:[%s969 + $0xe8] sm:%s961] %v1086
                %v1088 = vld [vmem:[%s968 + $0x1ac] sm:%s961]
                %1089 = vst [vmem:[%s969 + $0xec] sm:%s961] %v1088
                %v1090 = vld [vmem:[%s968 + $0x1b0] sm:%s961]
                %1091 = vst [vmem:[%s969 + $0xf0] sm:%s961] %v1090
                %v1092 = vld [vmem:[%s968 + $0x1b4] sm:%s961]
                %1093 = vst [vmem:[%s969 + $0xf4] sm:%s961] %v1092
                %v1094 = vld [vmem:[%s968 + $0x1b8] sm:%s961]
                %1095 = vst [vmem:[%s969 + $0xf8] sm:%s961] %v1094
                %v1096 = vld [vmem:[%s968 + $0x1bc] sm:%s961]
                %1097 = vst [vmem:[%s969 + $0xfc] sm:%s961] %v1096
              $region163: #{multi_layer_homo_gt.5} parent=157 // loop_footer
                %s967 = sadd.s32 1, %s963
              $region164: #{multi_layer_homo_gt.5} parent=157 // loop_footer_branch
                %962 = sbr.rel target = $region160
              $region165: #{multi_layer_homo_gt.5} parent=157 // loop_exit
                _
            $region158: #{multi_layer_homo_gt.5} parent=149 // pred_fallthru
              _
          $region150: #{multi_layer_homo_gt.5} parent=145 // pred_fallthru
            _
          %1246 = vnop
        $region146: #{multi_layer_homo_gt.5} parent=55 // pred_fallthru
          _
        // Predicated region
        $region184: #{multi_layer_homo_gt.5} parent=55 // pred_check
          %p1247 = pneg %p166
        $region185: #{multi_layer_homo_gt.5} parent=55 // pred_check_branch
          %1249 = sbr.rel (%p1247) target = $region187
        $region186: #{multi_layer_homo_gt.5} parent=55 // pred_region
          %s1250 = sand.u32 %s156, 1
          %s1251 = sand.u32 %s156, 1
          %s1252 = smul.addr %s1251, 16
          %s1253 = scalar_lea.vmem [#allocation10], %s1252
          %s1254 = smul.u32 2, %s35
          %s1255 = smul.addr %s1254, 2
          %s1256 = sadd.s32 %s36, %s1255
          %s1257 = smul.addr %s1256, 8
          %s1258 = scalar_lea.vmem %s5, %s1257
          // Predicated region
          $region188: #{multi_layer_homo_gt.5} parent=186 // pred_check
            _
          $region189: #{multi_layer_homo_gt.5} parent=186 // pred_check_branch
            %1260 = sbr.rel (0) target = $region191
          $region190: #{multi_layer_homo_gt.5} parent=186 // pred_region
            // Predicated region
            $region192: #{multi_layer_homo_gt.5} parent=190 // pred_check
              _
            $region193: #{multi_layer_homo_gt.5} parent=190 // pred_check_branch
              %1262 = sbr.rel (0) target = $region195
            $region194: #{multi_layer_homo_gt.5} parent=190 // pred_region
              // Predicated region
              $region207: #{multi_layer_homo_gt.5} parent=194 // pred_check
                _
              $region208: #{multi_layer_homo_gt.5} parent=194 // pred_check_branch
                %1280 = sbr.rel (0) target = $region210
              $region209: #{multi_layer_homo_gt.5} parent=194 // pred_region
                loop: start=0, step=1, limit=1
                $region211: #{multi_layer_homo_gt.5} parent=209 // loop_pre_header
                  _
                $region212: #{multi_layer_homo_gt.5} parent=209 // loop_header
                  %s1282 = sphi 0, %s1286
                  %p1283 = scmp.ge.s32.totalorder %s1282, 1
                  %s1287 = sphi %s1258, %s1258
                  %s1288 = sphi %s1253, %s1253
                $region213: #{multi_layer_homo_gt.5} parent=209 // loop_header_branch
                  %1285 = sbr.rel (%p1283) target = $region217
                $region214: #{multi_layer_homo_gt.5} parent=209 // loop_body
                  %v1289 = vld [vmem:[%s1287] sm:$0xff]
                  %1290 = vst [vmem:[%s1288] sm:$0xff] %v1289
                  %v1291 = vld [vmem:[%s1287 + $0x10] sm:$0xff]
                  %1292 = vst [vmem:[%s1288 + $0x8] sm:$0xff] %v1291
                $region215: #{multi_layer_homo_gt.5} parent=209 // loop_footer
                  %s1286 = sadd.s32 1, %s1282
                $region216: #{multi_layer_homo_gt.5} parent=209 // loop_footer_branch
                  %1281 = sbr.rel target = $region212
                $region217: #{multi_layer_homo_gt.5} parent=209 // loop_exit
                  _
              $region210: #{multi_layer_homo_gt.5} parent=194 // pred_fallthru
                _
              // Predicated region
              $region218: #{multi_layer_homo_gt.5} parent=194 // pred_check
                _
              $region219: #{multi_layer_homo_gt.5} parent=194 // pred_check_branch
                %1294 = sbr.rel target = $region221
              $region220: #{multi_layer_homo_gt.5} parent=194 // pred_region
                _
              $region221: #{multi_layer_homo_gt.5} parent=194 // pred_fallthru
                _
            $region195: #{multi_layer_homo_gt.5} parent=190 // pred_fallthru
              _
            // Predicated region
            $region196: #{multi_layer_homo_gt.5} parent=190 // pred_check
              _
            $region197: #{multi_layer_homo_gt.5} parent=190 // pred_check_branch
              %1264 = sbr.rel target = $region199
            $region198: #{multi_layer_homo_gt.5} parent=190 // pred_region
              %s1266 = ssub.s32 256, 1
              loop: start=0, step=1, limit=1
              $region200: #{multi_layer_homo_gt.5} parent=198 // loop_pre_header
                _
              $region201: #{multi_layer_homo_gt.5} parent=198 // loop_header
                %s1268 = sphi 0, %s1272
                %p1269 = scmp.ge.s32.totalorder %s1268, 1
                %s1273 = sphi %s1258, %s1258
                %s1274 = sphi %s1253, %s1253
              $region202: #{multi_layer_homo_gt.5} parent=198 // loop_header_branch
                %1271 = sbr.rel (%p1269) target = $region206
              $region203: #{multi_layer_homo_gt.5} parent=198 // loop_body
                %v1275 = vld [vmem:[%s1273] sm:%s1266]
                %1276 = vst [vmem:[%s1274] sm:%s1266] %v1275
                %v1277 = vld [vmem:[%s1273 + $0x10] sm:%s1266]
                %1278 = vst [vmem:[%s1274 + $0x8] sm:%s1266] %v1277
              $region204: #{multi_layer_homo_gt.5} parent=198 // loop_footer
                %s1272 = sadd.s32 1, %s1268
              $region205: #{multi_layer_homo_gt.5} parent=198 // loop_footer_branch
                %1267 = sbr.rel target = $region201
              $region206: #{multi_layer_homo_gt.5} parent=198 // loop_exit
                _
            $region199: #{multi_layer_homo_gt.5} parent=190 // pred_fallthru
              _
          $region191: #{multi_layer_homo_gt.5} parent=186 // pred_fallthru
            _
          %1295 = vnop
        $region187: #{multi_layer_homo_gt.5} parent=55 // pred_fallthru
          _
      $region56: #{multi_layer_homo_gt.5} parent=5 // pred_fallthru
        _
      %p1296 = scmp.le.s32.totalorder 1, %s28
      %p1297 = scmp.lt.s32.totalorder %s28, 9
      %p1298 = pnand %p1296, %p1297
      %p1299 = pneg %p1298
      // Predicated region
      $region222: #{multi_layer_homo_gt.5} parent=5 // pred_check
        _
      $region223: #{multi_layer_homo_gt.5} parent=5 // pred_check_branch
        %1301 = sbr.rel (%p1298) target = $region225
      $region224: #{multi_layer_homo_gt.5} parent=5 // pred_region
        %s1302 = ssub.s32 %s28, 1
        %s1303 = sand.u32 %s79, 1
        %s1304 = sand.u32 %s79, 1
        %s1305 = smul.addr %s1304, 128
        %s1306 = scalar_lea.vmem [#allocation7], %s1305
        // Predicated region
        $region226: #{multi_layer_homo_gt.5} parent=224 // pred_check
          %p1307 = pneg %p92
        $region227: #{multi_layer_homo_gt.5} parent=224 // pred_check_branch
          %1309 = sbr.rel (%p1307) target = $region229
        $region228: #{multi_layer_homo_gt.5} parent=224 // pred_region
          _
        $region229: #{multi_layer_homo_gt.5} parent=224 // pred_fallthru
          _
        %s1310 = sand.u32 %s105, 1
        %s1311 = sand.u32 %s105, 1
        %s1312 = smul.addr %s1311, 256
        %s1313 = scalar_lea.vmem [#allocation8], %s1312
        // Predicated region
        $region230: #{multi_layer_homo_gt.5} parent=224 // pred_check
          %p1314 = pneg %p118
        $region231: #{multi_layer_homo_gt.5} parent=224 // pred_check_branch
          %1316 = sbr.rel (%p1314) target = $region233
        $region232: #{multi_layer_homo_gt.5} parent=224 // pred_region
          _
        $region233: #{multi_layer_homo_gt.5} parent=224 // pred_fallthru
          _
        %s1317 = sand.u32 %s131, 1
        %s1318 = sand.u32 %s131, 1
        %s1319 = smul.addr %s1318, 256
        %s1320 = scalar_lea.vmem [#allocation9], %s1319
        // Predicated region
        $region234: #{multi_layer_homo_gt.5} parent=224 // pred_check
          %p1321 = pneg %p144
        $region235: #{multi_layer_homo_gt.5} parent=224 // pred_check_branch
          %1323 = sbr.rel (%p1321) target = $region237
        $region236: #{multi_layer_homo_gt.5} parent=224 // pred_region
          _
        $region237: #{multi_layer_homo_gt.5} parent=224 // pred_fallthru
          _
        %s1324 = sand.u32 %s159, 1
        %s1325 = sand.u32 %s159, 1
        %s1326 = smul.addr %s1325, 16
        %s1327 = scalar_lea.vmem [#allocation10], %s1326
        // Predicated region
        $region238: #{multi_layer_homo_gt.5} parent=224 // pred_check
          %p1328 = pneg %p172
        $region239: #{multi_layer_homo_gt.5} parent=224 // pred_check_branch
          %1330 = sbr.rel (%p1328) target = $region241
        $region240: #{multi_layer_homo_gt.5} parent=224 // pred_region
          _
        $region241: #{multi_layer_homo_gt.5} parent=224 // pred_fallthru
          _
        %s1331 = smul.u32 8, %s37
        %p1332 = scmp.lt.s32.totalorder %s1331, 31
        %s1333 = scalar_select %p1332, %s1331, 31
        %s1334 = smul.addr %s1333, 4
        %s1335 = scalar_lea.vmem %s1, %s1334
        %p1336 = pneg %p66
        %p1337 = pneg %p63
        %s1338 = sand.u32 %s79, 1
        %s1339 = sand.u32 %s79, 1
        %s1340 = smul.addr %s1339, 128
        %s1341 = scalar_lea.vmem [#allocation7], %s1340
        %p1342 = pneg %p92
        %p1343 = pneg %p89
        %s1344 = sand.u32 %s105, 1
        %s1345 = sand.u32 %s105, 1
        %s1346 = smul.addr %s1345, 256
        %s1347 = scalar_lea.vmem [#allocation8], %s1346
        %p1348 = pneg %p118
        %p1349 = pneg %p115
        %s1350 = sand.u32 %s131, 1
        %s1351 = sand.u32 %s131, 1
        %s1352 = smul.addr %s1351, 256
        %s1353 = scalar_lea.vmem [#allocation9], %s1352
        %p1354 = pneg %p144
        %p1355 = pneg %p141
        %s1356 = sand.u32 %s159, 1
        %s1357 = sand.u32 %s159, 1
        %s1358 = smul.addr %s1357, 16
        %s1359 = scalar_lea.vmem [#allocation10], %s1358
        %p1360 = pneg %p172
        %p1361 = pneg %p169
        %p1362 = pneg %p193
        %p1363 = pneg %p190
        %p1364 = pneg %p214
        %p1365 = pneg %p211
        %p1366 = pneg %p235
        %p1367 = pneg %p232
        %p1368 = pneg %p256
        %p1369 = pneg %p253
        %p1370 = pneg %p277
        %p1371 = pneg %p274
        %p1372 = pneg %p298
        %p1373 = pneg %p295
        %p1374 = pneg %p319
        %p1375 = pneg %p316
        %p1376 = pneg %p340
        %p1377 = pneg %p337
        %p1378 = pneg %p361
        %p1379 = pneg %p358
        %p1380 = pneg %p382
        %p1381 = pneg %p379
        %p1382 = pneg %p408
        %p1383 = pneg %p405
        %s1384 = smul.u32 8, %s37
        %p1385 = scmp.lt.s32.totalorder %s1384, 31
        %s1386 = scalar_select %p1385, %s1384, 31
        %s1387 = smul.addr %s1386, 4
        %s1388 = scalar_lea.vmem %s16, %s1387
        %s1389 = smul.u32 8, %s37
        %p1390 = scmp.lt.s32.totalorder %s1389, 31
        %s1391 = scalar_select %p1390, %s1389, 31
        %s1392 = smul.addr %s1391, 4
        %s1393 = scalar_lea.vmem %s1, %s1392
        %s1394 = smul.u32 8, %s37
        %s1395 = smul.u32 8, %s37
        %s1396 = smul.u32 16, %s38
        %s1397 = smul.u32 16, %s38
        %s1398 = smul.u32 2, %s37
        %s1399 = smul.u32 8, %s37
        %p1400 = scmp.lt.s32.totalorder %s1399, 31
        %s1401 = scalar_select %p1400, %s1399, 31
        %s1402 = smul.addr %s1401, 4
        %s1403 = scalar_lea.vmem %s16, %s1402
        %s1404 = smul.u32 8, %s37
        %p1406 = scmp.eq.s32.totalorder %s38, 0
        // Predicated region
        $region242: #{multi_layer_homo_gt.5} parent=224 // pred_check
          %p1407 = pneg %p1406
        $region243: #{multi_layer_homo_gt.5} parent=224 // pred_check_branch
          %1409 = sbr.rel (%p1407) target = $region245
        $region244: #{multi_layer_homo_gt.5} parent=224 // pred_region
          %vm1410 = vcmask 7168
          %1411 = vst.msk [vmem:[#allocation2] sm:$0xff] %vm1410, -inf
          %1412 = vst.msk [vmem:[#allocation2 + $0x8] sm:$0xff] %vm1410, -inf
          %1413 = vst.msk [vmem:[#allocation2 + $0x10] sm:$0xff] %vm1410, -inf
          %1414 = vst.msk [vmem:[#allocation2 + $0x18] sm:$0xff] %vm1410, -inf
          %1415 = vst.msk [vmem:[#allocation2 + $0x20] sm:$0xff] %vm1410, -inf
          %1416 = vst.msk [vmem:[#allocation2 + $0x28] sm:$0xff] %vm1410, -inf
          %1417 = vst.msk [vmem:[#allocation2 + $0x30] sm:$0xff] %vm1410, -inf
          %1418 = vst.msk [vmem:[#allocation2 + $0x38] sm:$0xff] %vm1410, -inf
          %1419 = vst.msk [vmem:[#allocation2 + $0x40] sm:$0xff] %vm1410, -inf
          %1420 = vst.msk [vmem:[#allocation2 + $0x48] sm:$0xff] %vm1410, -inf
          %1421 = vst.msk [vmem:[#allocation2 + $0x50] sm:$0xff] %vm1410, -inf
          %1422 = vst.msk [vmem:[#allocation2 + $0x58] sm:$0xff] %vm1410, -inf
          %1423 = vst.msk [vmem:[#allocation2 + $0x60] sm:$0xff] %vm1410, -inf
          %1424 = vst.msk [vmem:[#allocation2 + $0x68] sm:$0xff] %vm1410, -inf
          %1425 = vst.msk [vmem:[#allocation2 + $0x70] sm:$0xff] %vm1410, -inf
          %1426 = vst.msk [vmem:[#allocation2 + $0x78] sm:$0xff] %vm1410, -inf
          %1427 = vst.msk [vmem:[#allocation2 + $0x80] sm:$0xff] %vm1410, -inf
          %1428 = vst.msk [vmem:[#allocation2 + $0x88] sm:$0xff] %vm1410, -inf
          %1429 = vst.msk [vmem:[#allocation2 + $0x90] sm:$0xff] %vm1410, -inf
          %1430 = vst.msk [vmem:[#allocation2 + $0x98] sm:$0xff] %vm1410, -inf
          %1431 = vst.msk [vmem:[#allocation2 + $0xa0] sm:$0xff] %vm1410, -inf
          %1432 = vst.msk [vmem:[#allocation2 + $0xa8] sm:$0xff] %vm1410, -inf
          %1433 = vst.msk [vmem:[#allocation2 + $0xb0] sm:$0xff] %vm1410, -inf
          %1434 = vst.msk [vmem:[#allocation2 + $0xb8] sm:$0xff] %vm1410, -inf
          %1435 = vst.msk [vmem:[#allocation2 + $0xc0] sm:$0xff] %vm1410, -inf
          %1436 = vst.msk [vmem:[#allocation2 + $0xc8] sm:$0xff] %vm1410, -inf
          %1437 = vst.msk [vmem:[#allocation2 + $0xd0] sm:$0xff] %vm1410, -inf
          %1438 = vst.msk [vmem:[#allocation2 + $0xd8] sm:$0xff] %vm1410, -inf
          %1439 = vst.msk [vmem:[#allocation2 + $0xe0] sm:$0xff] %vm1410, -inf
          %1440 = vst.msk [vmem:[#allocation2 + $0xe8] sm:$0xff] %vm1410, -inf
          %1441 = vst.msk [vmem:[#allocation2 + $0xf0] sm:$0xff] %vm1410, -inf
          %1442 = vst.msk [vmem:[#allocation2 + $0xf8] sm:$0xff] %vm1410, -inf
          %1443 = vst.msk [vmem:[#allocation3] sm:$0xff] %vm1410, 0.0
          %1444 = vst.msk [vmem:[#allocation3 + $0x8] sm:$0xff] %vm1410, 0.0
          %1445 = vst.msk [vmem:[#allocation3 + $0x10] sm:$0xff] %vm1410, 0.0
          %1446 = vst.msk [vmem:[#allocation3 + $0x18] sm:$0xff] %vm1410, 0.0
          %1447 = vst.msk [vmem:[#allocation3 + $0x20] sm:$0xff] %vm1410, 0.0
          %1448 = vst.msk [vmem:[#allocation3 + $0x28] sm:$0xff] %vm1410, 0.0
          %1449 = vst.msk [vmem:[#allocation3 + $0x30] sm:$0xff] %vm1410, 0.0
          %1450 = vst.msk [vmem:[#allocation3 + $0x38] sm:$0xff] %vm1410, 0.0
          %1451 = vst.msk [vmem:[#allocation3 + $0x40] sm:$0xff] %vm1410, 0.0
          %1452 = vst.msk [vmem:[#allocation3 + $0x48] sm:$0xff] %vm1410, 0.0
          %1453 = vst.msk [vmem:[#allocation3 + $0x50] sm:$0xff] %vm1410, 0.0
          %1454 = vst.msk [vmem:[#allocation3 + $0x58] sm:$0xff] %vm1410, 0.0
          %1455 = vst.msk [vmem:[#allocation3 + $0x60] sm:$0xff] %vm1410, 0.0
          %1456 = vst.msk [vmem:[#allocation3 + $0x68] sm:$0xff] %vm1410, 0.0
          %1457 = vst.msk [vmem:[#allocation3 + $0x70] sm:$0xff] %vm1410, 0.0
          %1458 = vst.msk [vmem:[#allocation3 + $0x78] sm:$0xff] %vm1410, 0.0
          %1459 = vst.msk [vmem:[#allocation3 + $0x80] sm:$0xff] %vm1410, 0.0
          %1460 = vst.msk [vmem:[#allocation3 + $0x88] sm:$0xff] %vm1410, 0.0
          %1461 = vst.msk [vmem:[#allocation3 + $0x90] sm:$0xff] %vm1410, 0.0
          %1462 = vst.msk [vmem:[#allocation3 + $0x98] sm:$0xff] %vm1410, 0.0
          %1463 = vst.msk [vmem:[#allocation3 + $0xa0] sm:$0xff] %vm1410, 0.0
          %1464 = vst.msk [vmem:[#allocation3 + $0xa8] sm:$0xff] %vm1410, 0.0
          %1465 = vst.msk [vmem:[#allocation3 + $0xb0] sm:$0xff] %vm1410, 0.0
          %1466 = vst.msk [vmem:[#allocation3 + $0xb8] sm:$0xff] %vm1410, 0.0
          %1467 = vst.msk [vmem:[#allocation3 + $0xc0] sm:$0xff] %vm1410, 0.0
          %1468 = vst.msk [vmem:[#allocation3 + $0xc8] sm:$0xff] %vm1410, 0.0
          %1469 = vst.msk [vmem:[#allocation3 + $0xd0] sm:$0xff] %vm1410, 0.0
          %1470 = vst.msk [vmem:[#allocation3 + $0xd8] sm:$0xff] %vm1410, 0.0
          %1471 = vst.msk [vmem:[#allocation3 + $0xe0] sm:$0xff] %vm1410, 0.0
          %1472 = vst.msk [vmem:[#allocation3 + $0xe8] sm:$0xff] %vm1410, 0.0
          %1473 = vst.msk [vmem:[#allocation3 + $0xf0] sm:$0xff] %vm1410, 0.0
          %1474 = vst.msk [vmem:[#allocation3 + $0xf8] sm:$0xff] %vm1410, 0.0
          %vm1475 = vcmask 261120
          %1476 = vst.msk [vmem:[#allocation4] sm:$0xff] %vm1475, 0.0
          %1477 = vst.msk [vmem:[#allocation4 + $0x8] sm:$0xff] %vm1475, 0.0
          %1478 = vst.msk [vmem:[#allocation4 + $0x10] sm:$0xff] %vm1475, 0.0
          %1479 = vst.msk [vmem:[#allocation4 + $0x18] sm:$0xff] %vm1475, 0.0
          %1480 = vst.msk [vmem:[#allocation4 + $0x20] sm:$0xff] %vm1475, 0.0
          %1481 = vst.msk [vmem:[#allocation4 + $0x28] sm:$0xff] %vm1475, 0.0
          %1482 = vst.msk [vmem:[#allocation4 + $0x30] sm:$0xff] %vm1475, 0.0
          %1483 = vst.msk [vmem:[#allocation4 + $0x38] sm:$0xff] %vm1475, 0.0
          %1484 = vst.msk [vmem:[#allocation4 + $0x40] sm:$0xff] %vm1475, 0.0
          %1485 = vst.msk [vmem:[#allocation4 + $0x48] sm:$0xff] %vm1475, 0.0
          %1486 = vst.msk [vmem:[#allocation4 + $0x50] sm:$0xff] %vm1475, 0.0
          %1487 = vst.msk [vmem:[#allocation4 + $0x58] sm:$0xff] %vm1475, 0.0
          %1488 = vst.msk [vmem:[#allocation4 + $0x60] sm:$0xff] %vm1475, 0.0
          %1489 = vst.msk [vmem:[#allocation4 + $0x68] sm:$0xff] %vm1475, 0.0
          %1490 = vst.msk [vmem:[#allocation4 + $0x70] sm:$0xff] %vm1475, 0.0
          %1491 = vst.msk [vmem:[#allocation4 + $0x78] sm:$0xff] %vm1475, 0.0
          %1492 = vst.msk [vmem:[#allocation4 + $0x80] sm:$0xff] %vm1475, 0.0
          %1493 = vst.msk [vmem:[#allocation4 + $0x88] sm:$0xff] %vm1475, 0.0
          %1494 = vst.msk [vmem:[#allocation4 + $0x90] sm:$0xff] %vm1475, 0.0
          %1495 = vst.msk [vmem:[#allocation4 + $0x98] sm:$0xff] %vm1475, 0.0
          %1496 = vst.msk [vmem:[#allocation4 + $0xa0] sm:$0xff] %vm1475, 0.0
          %1497 = vst.msk [vmem:[#allocation4 + $0xa8] sm:$0xff] %vm1475, 0.0
          %1498 = vst.msk [vmem:[#allocation4 + $0xb0] sm:$0xff] %vm1475, 0.0
          %1499 = vst.msk [vmem:[#allocation4 + $0xb8] sm:$0xff] %vm1475, 0.0
          %1500 = vst.msk [vmem:[#allocation4 + $0xc0] sm:$0xff] %vm1475, 0.0
          %1501 = vst.msk [vmem:[#allocation4 + $0xc8] sm:$0xff] %vm1475, 0.0
          %1502 = vst.msk [vmem:[#allocation4 + $0xd0] sm:$0xff] %vm1475, 0.0
          %1503 = vst.msk [vmem:[#allocation4 + $0xd8] sm:$0xff] %vm1475, 0.0
          %1504 = vst.msk [vmem:[#allocation4 + $0xe0] sm:$0xff] %vm1475, 0.0
          %1505 = vst.msk [vmem:[#allocation4 + $0xe8] sm:$0xff] %vm1475, 0.0
          %1506 = vst.msk [vmem:[#allocation4 + $0xf0] sm:$0xff] %vm1475, 0.0
          %1507 = vst.msk [vmem:[#allocation4 + $0xf8] sm:$0xff] %vm1475, 0.0
        $region245: #{multi_layer_homo_gt.5} parent=224 // pred_fallthru
          _
        %s1508 = sshra.s32 %s38, 7
        %s1509 = sand.u32 %s38, 127
        %s1510 = sadd.s32 %s1508, %s37
        %s1511 = smul.u32 %s1510, 128
        %s1512 = sshra.s32 %s38, 7
        %s1513 = sand.u32 %s38, 127
        %s1514 = sadd.s32 %s1511, %s1513
        %s1515 = sld [smem:[#allocation6 + %s1514]]
        %p1516 = scmp.gt.s32.totalorder %s1515, 0
        // Predicated region
        $region246: #{multi_layer_homo_gt.5} parent=224 // pred_check
          %p1517 = pneg %p1516
        $region247: #{multi_layer_homo_gt.5} parent=224 // pred_check_branch
          %1519 = sbr.rel (%p1517) target = $region249
        $region248: #{multi_layer_homo_gt.5} parent=224 // pred_region
          %v1520 = vld [vmem:[%s1306] sm:$0xf]
          %v1521 = vld [vmem:[%s1306 + $0x4] sm:$0xf]
          %v1522 = vld [vmem:[%s1306 + $0x8] sm:$0xf]
          %v1523 = vld [vmem:[%s1306 + $0xc] sm:$0xf]
          %v1524 = vld [vmem:[%s1306 + $0x10] sm:$0xf]
          %v1525 = vld [vmem:[%s1306 + $0x14] sm:$0xf]
          %v1526 = vld [vmem:[%s1306 + $0x18] sm:$0xf]
          %v1527 = vld [vmem:[%s1306 + $0x1c] sm:$0xf]
          %v1528 = vld [vmem:[%s1306 + $0x20] sm:$0xf]
          %v1529 = vld [vmem:[%s1306 + $0x24] sm:$0xf]
          %v1530 = vld [vmem:[%s1306 + $0x28] sm:$0xf]
          %v1531 = vld [vmem:[%s1306 + $0x2c] sm:$0xf]
          %v1532 = vld [vmem:[%s1306 + $0x30] sm:$0xf]
          %v1533 = vld [vmem:[%s1306 + $0x34] sm:$0xf]
          %v1534 = vld [vmem:[%s1306 + $0x38] sm:$0xf]
          %v1535 = vld [vmem:[%s1306 + $0x3c] sm:$0xf]
          %v1536 = vld [vmem:[%s1306 + $0x40] sm:$0xf]
          %v1537 = vld [vmem:[%s1306 + $0x44] sm:$0xf]
          %v1538 = vld [vmem:[%s1306 + $0x48] sm:$0xf]
          %v1539 = vld [vmem:[%s1306 + $0x4c] sm:$0xf]
          %v1540 = vld [vmem:[%s1306 + $0x50] sm:$0xf]
          %v1541 = vld [vmem:[%s1306 + $0x54] sm:$0xf]
          %v1542 = vld [vmem:[%s1306 + $0x58] sm:$0xf]
          %v1543 = vld [vmem:[%s1306 + $0x5c] sm:$0xf]
          %v1544 = vld [vmem:[%s1306 + $0x60] sm:$0xf]
          %v1545 = vld [vmem:[%s1306 + $0x64] sm:$0xf]
          %v1546 = vld [vmem:[%s1306 + $0x68] sm:$0xf]
          %v1547 = vld [vmem:[%s1306 + $0x6c] sm:$0xf]
          %v1548 = vld [vmem:[%s1306 + $0x70] sm:$0xf]
          %v1549 = vld [vmem:[%s1306 + $0x74] sm:$0xf]
          %v1550 = vld [vmem:[%s1306 + $0x78] sm:$0xf]
          %v1551 = vld [vmem:[%s1306 + $0x7c] sm:$0xf]
          %v1552 = vld [vmem:[%s1313] sm:$0xf]
          %v1553 = vld [vmem:[%s1313 + $0x4] sm:$0xf]
          %v1554 = vld [vmem:[%s1313 + $0x8] sm:$0xf]
          %v1555 = vld [vmem:[%s1313 + $0xc] sm:$0xf]
          %v1556 = vld [vmem:[%s1313 + $0x10] sm:$0xf]
          %v1557 = vld [vmem:[%s1313 + $0x14] sm:$0xf]
          %v1558 = vld [vmem:[%s1313 + $0x18] sm:$0xf]
          %v1559 = vld [vmem:[%s1313 + $0x1c] sm:$0xf]
          %v1560 = vld [vmem:[%s1313 + $0x20] sm:$0xf]
          %v1561 = vld [vmem:[%s1313 + $0x24] sm:$0xf]
          %v1562 = vld [vmem:[%s1313 + $0x28] sm:$0xf]
          %v1563 = vld [vmem:[%s1313 + $0x2c] sm:$0xf]
          %v1564 = vld [vmem:[%s1313 + $0x30] sm:$0xf]
          %v1565 = vld [vmem:[%s1313 + $0x34] sm:$0xf]
          %v1566 = vld [vmem:[%s1313 + $0x38] sm:$0xf]
          %v1567 = vld [vmem:[%s1313 + $0x3c] sm:$0xf]
          %v1568 = vld [vmem:[%s1313 + $0x40] sm:$0xf]
          %v1569 = vld [vmem:[%s1313 + $0x44] sm:$0xf]
          %v1570 = vld [vmem:[%s1313 + $0x48] sm:$0xf]
          %v1571 = vld [vmem:[%s1313 + $0x4c] sm:$0xf]
          %v1572 = vld [vmem:[%s1313 + $0x50] sm:$0xf]
          %v1573 = vld [vmem:[%s1313 + $0x54] sm:$0xf]
          %v1574 = vld [vmem:[%s1313 + $0x58] sm:$0xf]
          %v1575 = vld [vmem:[%s1313 + $0x5c] sm:$0xf]
          %v1576 = vld [vmem:[%s1313 + $0x60] sm:$0xf]
          %v1577 = vld [vmem:[%s1313 + $0x64] sm:$0xf]
          %v1578 = vld [vmem:[%s1313 + $0x68] sm:$0xf]
          %v1579 = vld [vmem:[%s1313 + $0x6c] sm:$0xf]
          %v1580 = vld [vmem:[%s1313 + $0x70] sm:$0xf]
          %v1581 = vld [vmem:[%s1313 + $0x74] sm:$0xf]
          %v1582 = vld [vmem:[%s1313 + $0x78] sm:$0xf]
          %v1583 = vld [vmem:[%s1313 + $0x7c] sm:$0xf]
          %v1584 = vld [vmem:[%s1313 + $0x80] sm:$0xf]
          %v1585 = vld [vmem:[%s1313 + $0x84] sm:$0xf]
          %v1586 = vld [vmem:[%s1313 + $0x88] sm:$0xf]
          %v1587 = vld [vmem:[%s1313 + $0x8c] sm:$0xf]
          %v1588 = vld [vmem:[%s1313 + $0x90] sm:$0xf]
          %v1589 = vld [vmem:[%s1313 + $0x94] sm:$0xf]
          %v1590 = vld [vmem:[%s1313 + $0x98] sm:$0xf]
          %v1591 = vld [vmem:[%s1313 + $0x9c] sm:$0xf]
          %v1592 = vld [vmem:[%s1313 + $0xa0] sm:$0xf]
          %v1593 = vld [vmem:[%s1313 + $0xa4] sm:$0xf]
          %v1594 = vld [vmem:[%s1313 + $0xa8] sm:$0xf]
          %v1595 = vld [vmem:[%s1313 + $0xac] sm:$0xf]
          %v1596 = vld [vmem:[%s1313 + $0xb0] sm:$0xf]
          %v1597 = vld [vmem:[%s1313 + $0xb4] sm:$0xf]
          %v1598 = vld [vmem:[%s1313 + $0xb8] sm:$0xf]
          %v1599 = vld [vmem:[%s1313 + $0xbc] sm:$0xf]
          %v1600 = vld [vmem:[%s1313 + $0xc0] sm:$0xf]
          %v1601 = vld [vmem:[%s1313 + $0xc4] sm:$0xf]
          %v1602 = vld [vmem:[%s1313 + $0xc8] sm:$0xf]
          %v1603 = vld [vmem:[%s1313 + $0xcc] sm:$0xf]
          %v1604 = vld [vmem:[%s1313 + $0xd0] sm:$0xf]
          %v1605 = vld [vmem:[%s1313 + $0xd4] sm:$0xf]
          %v1606 = vld [vmem:[%s1313 + $0xd8] sm:$0xf]
          %v1607 = vld [vmem:[%s1313 + $0xdc] sm:$0xf]
          %v1608 = vld [vmem:[%s1313 + $0xe0] sm:$0xf]
          %v1609 = vld [vmem:[%s1313 + $0xe4] sm:$0xf]
          %v1610 = vld [vmem:[%s1313 + $0xe8] sm:$0xf]
          %v1611 = vld [vmem:[%s1313 + $0xec] sm:$0xf]
          %v1612 = vld [vmem:[%s1313 + $0xf0] sm:$0xf]
          %v1613 = vld [vmem:[%s1313 + $0xf4] sm:$0xf]
          %v1614 = vld [vmem:[%s1313 + $0xf8] sm:$0xf]
          %v1615 = vld [vmem:[%s1313 + $0xfc] sm:$0xf]
          %v1616 = vld [vmem:[%s1327] sm:$0xff]
          %v1617 = vld [vmem:[%s1327 + $0x8] sm:$0xff]
          %v1618 = vunpack.c.0.s8 %v1616
          %v1619 = vunpack.c.1.s8 %v1616
          %v1620 = vunpack.c.2.s8 %v1616
          %v1621 = vunpack.c.3.s8 %v1616
          %v1622 = vunpack.c.0.s8 %v1617
          %v1623 = vunpack.c.1.s8 %v1617
          %v1624 = vunpack.c.2.s8 %v1617
          %v1625 = vunpack.c.3.s8 %v1617
          %v1626 = vcvt.s32.f32 %v1618
          %v1627 = vcvt.s32.f32 %v1619
          %v1628 = vcvt.s32.f32 %v1620
          %v1629 = vcvt.s32.f32 %v1621
          %v1630 = vcvt.s32.f32 %v1622
          %v1631 = vcvt.s32.f32 %v1623
          %v1632 = vcvt.s32.f32 %v1624
          %v1633 = vcvt.s32.f32 %v1625
          %v1634 = vsub.f32 %v1626, 1.0
          %v1635 = vsub.f32 %v1627, 1.0
          %v1636 = vsub.f32 %v1628, 1.0
          %v1637 = vsub.f32 %v1629, 1.0
          %v1638 = vsub.f32 %v1630, 1.0
          %v1639 = vsub.f32 %v1631, 1.0
          %v1640 = vsub.f32 %v1632, 1.0
          %v1641 = vsub.f32 %v1633, 1.0
          %v1642 = vmul.f32 %v1634, 1e+09
          %v1643 = vmul.f32 %v1635, 1e+09
          %v1644 = vmul.f32 %v1636, 1e+09
          %v1645 = vmul.f32 %v1637, 1e+09
          %v1646 = vmul.f32 %v1638, 1e+09
          %v1647 = vmul.f32 %v1639, 1e+09
          %v1648 = vmul.f32 %v1640, 1e+09
          %v1649 = vmul.f32 %v1641, 1e+09
          %v1658 = vunpack.c.l.b16 %v1520
          %v1659 = vunpack.c.l.b16 %v1521
          %v1660 = vunpack.c.l.b16 %v1522
          %v1661 = vunpack.c.l.b16 %v1523
          %v1662 = vunpack.c.l.b16 %v1524
          %v1663 = vunpack.c.l.b16 %v1525
          %v1664 = vunpack.c.l.b16 %v1526
          %v1665 = vunpack.c.l.b16 %v1527
          %v1666 = vpack.c.b16 %v1659, %v1658
          %v1667 = vpack.c.b16 %v1661, %v1660
          %v1668 = vpack.c.b16 %v1663, %v1662
          %v1669 = vpack.c.b16 %v1665, %v1664
          %v1686 = vunpack.c.l.b16 %v1552
          %v1687 = vunpack.c.l.b16 %v1553
          %v1688 = vunpack.c.l.b16 %v1554
          %v1689 = vunpack.c.l.b16 %v1555
          %v1690 = vunpack.c.l.b16 %v1556
          %v1691 = vunpack.c.l.b16 %v1557
          %v1692 = vunpack.c.l.b16 %v1558
          %v1693 = vunpack.c.l.b16 %v1559
          %v1694 = vunpack.c.l.b16 %v1560
          %v1695 = vunpack.c.l.b16 %v1561
          %v1696 = vunpack.c.l.b16 %v1562
          %v1697 = vunpack.c.l.b16 %v1563
          %v1698 = vunpack.c.l.b16 %v1564
          %v1699 = vunpack.c.l.b16 %v1565
          %v1700 = vunpack.c.l.b16 %v1566
          %v1701 = vunpack.c.l.b16 %v1567
          %v1702 = vpack.c.b16 %v1687, %v1686
          %v1703 = vpack.c.b16 %v1689, %v1688
          %v1704 = vpack.c.b16 %v1691, %v1690
          %v1705 = vpack.c.b16 %v1693, %v1692
          %v1706 = vpack.c.b16 %v1695, %v1694
          %v1707 = vpack.c.b16 %v1697, %v1696
          %v1708 = vpack.c.b16 %v1699, %v1698
          %v1709 = vpack.c.b16 %v1701, %v1700
          %vm1710 = vcmask 261120
          %v1712 = vsel %vm1710, %v1666, 0
          %v1715 = vsel %vm1710, %v1667, 0
          %v1718 = vsel %vm1710, %v1668, 0
          %v1721 = vsel %vm1710, %v1669, 0
          %v1724 = vsel %vm1710, %v1702, 0
          %v1727 = vsel %vm1710, %v1703, 0
          %v1730 = vsel %vm1710, %v1704, 0
          %v1733 = vsel %vm1710, %v1705, 0
          %v1736 = vsel %vm1710, %v1706, 0
          %v1739 = vsel %vm1710, %v1707, 0
          %v1742 = vsel %vm1710, %v1708, 0
          %v1745 = vsel %vm1710, %v1709, 0
          %1747 = vmatprep.subr.bf16.mxu0 0
          %1748 = vmatpush1.bf16.xpose.msra.mxu0 %v1745
          %1749 = vmatprep.subr.bf16.mxu0 0
          %1750 = vmatpush1.bf16.xpose.msra.mxu0 %v1742
          %1751 = vmatprep.subr.bf16.mxu0 0
          %1752 = vmatpush1.bf16.xpose.msra.mxu0 %v1739
          %1753 = vmatprep.subr.bf16.mxu0 0
          %1754 = vmatpush1.bf16.xpose.msra.mxu0 %v1736
          %1755 = vmatprep.subr.bf16.mxu0 0
          %1756 = vmatpush1.bf16.xpose.msra.mxu0 %v1733
          %1757 = vmatprep.subr.bf16.mxu0 0
          %1758 = vmatpush1.bf16.xpose.msra.mxu0 %v1730
          %1759 = vmatprep.subr.bf16.mxu0 0
          %1760 = vmatpush1.bf16.xpose.msra.mxu0 %v1727
          %1761 = vmatprep.subr.bf16.mxu0 0
          %1762 = vmatpush1.bf16.xpose.msra.mxu0 %v1724
          %1763 = vmatprep.subr.bf16.mxu0 0
          %1764 = vmatpush2.bf16.xpose.msra.mxu0 0
          %1765 = vmatprep.subr.bf16.mxu0 0
          %1766 = vmatpush2.bf16.xpose.msra.mxu0 0
          %1767 = vmatprep.subr.bf16.mxu0 0
          %1768 = vmatpush2.bf16.xpose.msra.mxu0 0
          %1769 = vmatprep.subr.bf16.mxu0 0
          %1770 = vmatpush2.bf16.xpose.msra.mxu0 0
          %1771 = vmatprep.subr.bf16.mxu0 0
          %1772 = vmatpush2.bf16.xpose.msra.mxu0 0
          %1773 = vmatprep.subr.bf16.mxu0 0
          %1774 = vmatpush2.bf16.xpose.msra.mxu0 0
          %1775 = vmatprep.subr.bf16.mxu0 0
          %1776 = vmatpush2.bf16.xpose.msra.mxu0 0
          %1777 = vmatprep.subr.bf16.mxu0 0
          %1778 = vmatpush2.bf16.xpose.msra.mxu0 0
          %1779 = vmatprep.mubr.bf16.mxu0 0
          %1780 = vmatmul.mubr.bf16.gmra.mxu0 %v1712
          %v1781 = vpop.f32.mrf.mxu0
          %v1782 = vadd.f32 %v1642, %v1781
          %v1783 = vpop.f32.mrf.mxu0
          %v1784 = vpop.f32.mrf.mxu0
          %v1785 = vadd.f32 %v1643, %v1784
          %v1786 = vpop.f32.mrf.mxu0
          %1787 = vmatprep.mubr.bf16.mxu0 0
          %1788 = vmatmul.mubr.bf16.gmra.mxu0 %v1715
          %v1789 = vpop.f32.mrf.mxu0
          %v1790 = vadd.f32 %v1644, %v1789
          %v1791 = vpop.f32.mrf.mxu0
          %v1792 = vpop.f32.mrf.mxu0
          %v1793 = vadd.f32 %v1645, %v1792
          %v1794 = vpop.f32.mrf.mxu0
          %1795 = vmatprep.mubr.bf16.mxu0 0
          %1796 = vmatmul.mubr.bf16.gmra.mxu0 %v1718
          %v1797 = vpop.f32.mrf.mxu0
          %v1798 = vadd.f32 %v1646, %v1797
          %v1799 = vpop.f32.mrf.mxu0
          %v1800 = vpop.f32.mrf.mxu0
          %v1801 = vadd.f32 %v1647, %v1800
          %v1802 = vpop.f32.mrf.mxu0
          %1803 = vmatprep.mubr.bf16.mxu0 0
          %1804 = vmatmul.mubr.bf16.gmra.mxu0 %v1721
          %v1805 = vpop.f32.mrf.mxu0
          %v1806 = vadd.f32 %v1648, %v1805
          %v1807 = vpop.f32.mrf.mxu0
          %v1808 = vpop.f32.mrf.mxu0
          %v1809 = vadd.f32 %v1649, %v1808
          %v1810 = vpop.f32.mrf.mxu0
          %1811 = vdwg.mxu0
          %v1820 = vunpack.c.l.b16 %v1528
          %v1821 = vunpack.c.l.b16 %v1529
          %v1822 = vunpack.c.l.b16 %v1530
          %v1823 = vunpack.c.l.b16 %v1531
          %v1824 = vunpack.c.l.b16 %v1532
          %v1825 = vunpack.c.l.b16 %v1533
          %v1826 = vunpack.c.l.b16 %v1534
          %v1827 = vunpack.c.l.b16 %v1535
          %v1828 = vpack.c.b16 %v1821, %v1820
          %v1829 = vpack.c.b16 %v1823, %v1822
          %v1830 = vpack.c.b16 %v1825, %v1824
          %v1831 = vpack.c.b16 %v1827, %v1826
          %v1848 = vunpack.c.l.b16 %v1568
          %v1849 = vunpack.c.l.b16 %v1569
          %v1850 = vunpack.c.l.b16 %v1570
          %v1851 = vunpack.c.l.b16 %v1571
          %v1852 = vunpack.c.l.b16 %v1572
          %v1853 = vunpack.c.l.b16 %v1573
          %v1854 = vunpack.c.l.b16 %v1574
          %v1855 = vunpack.c.l.b16 %v1575
          %v1856 = vunpack.c.l.b16 %v1576
          %v1857 = vunpack.c.l.b16 %v1577
          %v1858 = vunpack.c.l.b16 %v1578
          %v1859 = vunpack.c.l.b16 %v1579
          %v1860 = vunpack.c.l.b16 %v1580
          %v1861 = vunpack.c.l.b16 %v1581
          %v1862 = vunpack.c.l.b16 %v1582
          %v1863 = vunpack.c.l.b16 %v1583
          %v1864 = vpack.c.b16 %v1849, %v1848
          %v1865 = vpack.c.b16 %v1851, %v1850
          %v1866 = vpack.c.b16 %v1853, %v1852
          %v1867 = vpack.c.b16 %v1855, %v1854
          %v1868 = vpack.c.b16 %v1857, %v1856
          %v1869 = vpack.c.b16 %v1859, %v1858
          %v1870 = vpack.c.b16 %v1861, %v1860
          %v1871 = vpack.c.b16 %v1863, %v1862
          %v1873 = vsel %vm1710, %v1828, 0
          %v1876 = vsel %vm1710, %v1829, 0
          %v1879 = vsel %vm1710, %v1830, 0
          %v1882 = vsel %vm1710, %v1831, 0
          %v1885 = vsel %vm1710, %v1864, 0
          %v1888 = vsel %vm1710, %v1865, 0
          %v1891 = vsel %vm1710, %v1866, 0
          %v1894 = vsel %vm1710, %v1867, 0
          %v1897 = vsel %vm1710, %v1868, 0
          %v1900 = vsel %vm1710, %v1869, 0
          %v1903 = vsel %vm1710, %v1870, 0
          %v1906 = vsel %vm1710, %v1871, 0
          %1908 = vmatprep.subr.bf16.mxu0 0
          %1909 = vmatpush1.bf16.xpose.msra.mxu0 %v1906
          %1910 = vmatprep.subr.bf16.mxu0 0
          %1911 = vmatpush1.bf16.xpose.msra.mxu0 %v1903
          %1912 = vmatprep.subr.bf16.mxu0 0
          %1913 = vmatpush1.bf16.xpose.msra.mxu0 %v1900
          %1914 = vmatprep.subr.bf16.mxu0 0
          %1915 = vmatpush1.bf16.xpose.msra.mxu0 %v1897
          %1916 = vmatprep.subr.bf16.mxu0 0
          %1917 = vmatpush1.bf16.xpose.msra.mxu0 %v1894
          %1918 = vmatprep.subr.bf16.mxu0 0
          %1919 = vmatpush1.bf16.xpose.msra.mxu0 %v1891
          %1920 = vmatprep.subr.bf16.mxu0 0
          %1921 = vmatpush1.bf16.xpose.msra.mxu0 %v1888
          %1922 = vmatprep.subr.bf16.mxu0 0
          %1923 = vmatpush1.bf16.xpose.msra.mxu0 %v1885
          %1924 = vmatprep.subr.bf16.mxu0 0
          %1925 = vmatpush2.bf16.xpose.msra.mxu0 0
          %1926 = vmatprep.subr.bf16.mxu0 0
          %1927 = vmatpush2.bf16.xpose.msra.mxu0 0
          %1928 = vmatprep.subr.bf16.mxu0 0
          %1929 = vmatpush2.bf16.xpose.msra.mxu0 0
          %1930 = vmatprep.subr.bf16.mxu0 0
          %1931 = vmatpush2.bf16.xpose.msra.mxu0 0
          %1932 = vmatprep.subr.bf16.mxu0 0
          %1933 = vmatpush2.bf16.xpose.msra.mxu0 0
          %1934 = vmatprep.subr.bf16.mxu0 0
          %1935 = vmatpush2.bf16.xpose.msra.mxu0 0
          %1936 = vmatprep.subr.bf16.mxu0 0
          %1937 = vmatpush2.bf16.xpose.msra.mxu0 0
          %1938 = vmatprep.subr.bf16.mxu0 0
          %1939 = vmatpush2.bf16.xpose.msra.mxu0 0
          %1940 = vmatprep.mubr.bf16.mxu0 0
          %1941 = vmatmul.mubr.bf16.gmra.mxu0 %v1873
          %v1942 = vpop.f32.mrf.mxu0
          %v1943 = vadd.f32 %v1642, %v1942
          %v1944 = vpop.f32.mrf.mxu0
          %v1945 = vpop.f32.mrf.mxu0
          %v1946 = vadd.f32 %v1643, %v1945
          %v1947 = vpop.f32.mrf.mxu0
          %1948 = vmatprep.mubr.bf16.mxu0 0
          %1949 = vmatmul.mubr.bf16.gmra.mxu0 %v1876
          %v1950 = vpop.f32.mrf.mxu0
          %v1951 = vadd.f32 %v1644, %v1950
          %v1952 = vpop.f32.mrf.mxu0
          %v1953 = vpop.f32.mrf.mxu0
          %v1954 = vadd.f32 %v1645, %v1953
          %v1955 = vpop.f32.mrf.mxu0
          %1956 = vmatprep.mubr.bf16.mxu0 0
          %1957 = vmatmul.mubr.bf16.gmra.mxu0 %v1879
          %v1958 = vpop.f32.mrf.mxu0
          %v1959 = vadd.f32 %v1646, %v1958
          %v1960 = vpop.f32.mrf.mxu0
          %v1961 = vpop.f32.mrf.mxu0
          %v1962 = vadd.f32 %v1647, %v1961
          %v1963 = vpop.f32.mrf.mxu0
          %1964 = vmatprep.mubr.bf16.mxu0 0
          %1965 = vmatmul.mubr.bf16.gmra.mxu0 %v1882
          %v1966 = vpop.f32.mrf.mxu0
          %v1967 = vadd.f32 %v1648, %v1966
          %v1968 = vpop.f32.mrf.mxu0
          %v1969 = vpop.f32.mrf.mxu0
          %v1970 = vadd.f32 %v1649, %v1969
          %v1971 = vpop.f32.mrf.mxu0
          %1972 = vdwg.mxu0
          %v1981 = vunpack.c.l.b16 %v1536
          %v1982 = vunpack.c.l.b16 %v1537
          %v1983 = vunpack.c.l.b16 %v1538
          %v1984 = vunpack.c.l.b16 %v1539
          %v1985 = vunpack.c.l.b16 %v1540
          %v1986 = vunpack.c.l.b16 %v1541
          %v1987 = vunpack.c.l.b16 %v1542
          %v1988 = vunpack.c.l.b16 %v1543
          %v1989 = vpack.c.b16 %v1982, %v1981
          %v1990 = vpack.c.b16 %v1984, %v1983
          %v1991 = vpack.c.b16 %v1986, %v1985
          %v1992 = vpack.c.b16 %v1988, %v1987
          %v2009 = vunpack.c.l.b16 %v1584
          %v2010 = vunpack.c.l.b16 %v1585
          %v2011 = vunpack.c.l.b16 %v1586
          %v2012 = vunpack.c.l.b16 %v1587
          %v2013 = vunpack.c.l.b16 %v1588
          %v2014 = vunpack.c.l.b16 %v1589
          %v2015 = vunpack.c.l.b16 %v1590
          %v2016 = vunpack.c.l.b16 %v1591
          %v2017 = vunpack.c.l.b16 %v1592
          %v2018 = vunpack.c.l.b16 %v1593
          %v2019 = vunpack.c.l.b16 %v1594
          %v2020 = vunpack.c.l.b16 %v1595
          %v2021 = vunpack.c.l.b16 %v1596
          %v2022 = vunpack.c.l.b16 %v1597
          %v2023 = vunpack.c.l.b16 %v1598
          %v2024 = vunpack.c.l.b16 %v1599
          %v2025 = vpack.c.b16 %v2010, %v2009
          %v2026 = vpack.c.b16 %v2012, %v2011
          %v2027 = vpack.c.b16 %v2014, %v2013
          %v2028 = vpack.c.b16 %v2016, %v2015
          %v2029 = vpack.c.b16 %v2018, %v2017
          %v2030 = vpack.c.b16 %v2020, %v2019
          %v2031 = vpack.c.b16 %v2022, %v2021
          %v2032 = vpack.c.b16 %v2024, %v2023
          %v2034 = vsel %vm1710, %v1989, 0
          %v2037 = vsel %vm1710, %v1990, 0
          %v2040 = vsel %vm1710, %v1991, 0
          %v2043 = vsel %vm1710, %v1992, 0
          %v2046 = vsel %vm1710, %v2025, 0
          %v2049 = vsel %vm1710, %v2026, 0
          %v2052 = vsel %vm1710, %v2027, 0
          %v2055 = vsel %vm1710, %v2028, 0
          %v2058 = vsel %vm1710, %v2029, 0
          %v2061 = vsel %vm1710, %v2030, 0
          %v2064 = vsel %vm1710, %v2031, 0
          %v2067 = vsel %vm1710, %v2032, 0
          %2069 = vmatprep.subr.bf16.mxu0 0
          %2070 = vmatpush1.bf16.xpose.msra.mxu0 %v2067
          %2071 = vmatprep.subr.bf16.mxu0 0
          %2072 = vmatpush1.bf16.xpose.msra.mxu0 %v2064
          %2073 = vmatprep.subr.bf16.mxu0 0
          %2074 = vmatpush1.bf16.xpose.msra.mxu0 %v2061
          %2075 = vmatprep.subr.bf16.mxu0 0
          %2076 = vmatpush1.bf16.xpose.msra.mxu0 %v2058
          %2077 = vmatprep.subr.bf16.mxu0 0
          %2078 = vmatpush1.bf16.xpose.msra.mxu0 %v2055
          %2079 = vmatprep.subr.bf16.mxu0 0
          %2080 = vmatpush1.bf16.xpose.msra.mxu0 %v2052
          %2081 = vmatprep.subr.bf16.mxu0 0
          %2082 = vmatpush1.bf16.xpose.msra.mxu0 %v2049
          %2083 = vmatprep.subr.bf16.mxu0 0
          %2084 = vmatpush1.bf16.xpose.msra.mxu0 %v2046
          %2085 = vmatprep.subr.bf16.mxu0 0
          %2086 = vmatpush2.bf16.xpose.msra.mxu0 0
          %2087 = vmatprep.subr.bf16.mxu0 0
          %2088 = vmatpush2.bf16.xpose.msra.mxu0 0
          %2089 = vmatprep.subr.bf16.mxu0 0
          %2090 = vmatpush2.bf16.xpose.msra.mxu0 0
          %2091 = vmatprep.subr.bf16.mxu0 0
          %2092 = vmatpush2.bf16.xpose.msra.mxu0 0
          %2093 = vmatprep.subr.bf16.mxu0 0
          %2094 = vmatpush2.bf16.xpose.msra.mxu0 0
          %2095 = vmatprep.subr.bf16.mxu0 0
          %2096 = vmatpush2.bf16.xpose.msra.mxu0 0
          %2097 = vmatprep.subr.bf16.mxu0 0
          %2098 = vmatpush2.bf16.xpose.msra.mxu0 0
          %2099 = vmatprep.subr.bf16.mxu0 0
          %2100 = vmatpush2.bf16.xpose.msra.mxu0 0
          %2101 = vmatprep.mubr.bf16.mxu0 0
          %2102 = vmatmul.mubr.bf16.gmra.mxu0 %v2034
          %v2103 = vpop.f32.mrf.mxu0
          %v2104 = vadd.f32 %v1642, %v2103
          %v2105 = vpop.f32.mrf.mxu0
          %v2106 = vpop.f32.mrf.mxu0
          %v2107 = vadd.f32 %v1643, %v2106
          %v2108 = vpop.f32.mrf.mxu0
          %2109 = vmatprep.mubr.bf16.mxu0 0
          %2110 = vmatmul.mubr.bf16.gmra.mxu0 %v2037
          %v2111 = vpop.f32.mrf.mxu0
          %v2112 = vadd.f32 %v1644, %v2111
          %v2113 = vpop.f32.mrf.mxu0
          %v2114 = vpop.f32.mrf.mxu0
          %v2115 = vadd.f32 %v1645, %v2114
          %v2116 = vpop.f32.mrf.mxu0
          %2117 = vmatprep.mubr.bf16.mxu0 0
          %2118 = vmatmul.mubr.bf16.gmra.mxu0 %v2040
          %v2119 = vpop.f32.mrf.mxu0
          %v2120 = vadd.f32 %v1646, %v2119
          %v2121 = vpop.f32.mrf.mxu0
          %v2122 = vpop.f32.mrf.mxu0
          %v2123 = vadd.f32 %v1647, %v2122
          %v2124 = vpop.f32.mrf.mxu0
          %2125 = vmatprep.mubr.bf16.mxu0 0
          %2126 = vmatmul.mubr.bf16.gmra.mxu0 %v2043
          %v2127 = vpop.f32.mrf.mxu0
          %v2128 = vadd.f32 %v1648, %v2127
          %v2129 = vpop.f32.mrf.mxu0
          %v2130 = vpop.f32.mrf.mxu0
          %v2131 = vadd.f32 %v1649, %v2130
          %v2132 = vpop.f32.mrf.mxu0
          %2133 = vdwg.mxu0
          %v2142 = vunpack.c.l.b16 %v1544
          %v2143 = vunpack.c.l.b16 %v1545
          %v2144 = vunpack.c.l.b16 %v1546
          %v2145 = vunpack.c.l.b16 %v1547
          %v2146 = vunpack.c.l.b16 %v1548
          %v2147 = vunpack.c.l.b16 %v1549
          %v2148 = vunpack.c.l.b16 %v1550
          %v2149 = vunpack.c.l.b16 %v1551
          %v2150 = vpack.c.b16 %v2143, %v2142
          %v2151 = vpack.c.b16 %v2145, %v2144
          %v2152 = vpack.c.b16 %v2147, %v2146
          %v2153 = vpack.c.b16 %v2149, %v2148
          %v2170 = vunpack.c.l.b16 %v1600
          %v2171 = vunpack.c.l.b16 %v1601
          %v2172 = vunpack.c.l.b16 %v1602
          %v2173 = vunpack.c.l.b16 %v1603
          %v2174 = vunpack.c.l.b16 %v1604
          %v2175 = vunpack.c.l.b16 %v1605
          %v2176 = vunpack.c.l.b16 %v1606
          %v2177 = vunpack.c.l.b16 %v1607
          %v2178 = vunpack.c.l.b16 %v1608
          %v2179 = vunpack.c.l.b16 %v1609
          %v2180 = vunpack.c.l.b16 %v1610
          %v2181 = vunpack.c.l.b16 %v1611
          %v2182 = vunpack.c.l.b16 %v1612
          %v2183 = vunpack.c.l.b16 %v1613
          %v2184 = vunpack.c.l.b16 %v1614
          %v2185 = vunpack.c.l.b16 %v1615
          %v2186 = vpack.c.b16 %v2171, %v2170
          %v2187 = vpack.c.b16 %v2173, %v2172
          %v2188 = vpack.c.b16 %v2175, %v2174
          %v2189 = vpack.c.b16 %v2177, %v2176
          %v2190 = vpack.c.b16 %v2179, %v2178
          %v2191 = vpack.c.b16 %v2181, %v2180
          %v2192 = vpack.c.b16 %v2183, %v2182
          %v2193 = vpack.c.b16 %v2185, %v2184
          %v2195 = vsel %vm1710, %v2150, 0
          %v2198 = vsel %vm1710, %v2151, 0
          %v2201 = vsel %vm1710, %v2152, 0
          %v2204 = vsel %vm1710, %v2153, 0
          %v2207 = vsel %vm1710, %v2186, 0
          %v2210 = vsel %vm1710, %v2187, 0
          %v2213 = vsel %vm1710, %v2188, 0
          %v2216 = vsel %vm1710, %v2189, 0
          %v2219 = vsel %vm1710, %v2190, 0
          %v2222 = vsel %vm1710, %v2191, 0
          %v2225 = vsel %vm1710, %v2192, 0
          %v2228 = vsel %vm1710, %v2193, 0
          %2230 = vmatprep.subr.bf16.mxu0 0
          %2231 = vmatpush1.bf16.xpose.msra.mxu0 %v2228
          %2232 = vmatprep.subr.bf16.mxu0 0
          %2233 = vmatpush1.bf16.xpose.msra.mxu0 %v2225
          %2234 = vmatprep.subr.bf16.mxu0 0
          %2235 = vmatpush1.bf16.xpose.msra.mxu0 %v2222
          %2236 = vmatprep.subr.bf16.mxu0 0
          %2237 = vmatpush1.bf16.xpose.msra.mxu0 %v2219
          %2238 = vmatprep.subr.bf16.mxu0 0
          %2239 = vmatpush1.bf16.xpose.msra.mxu0 %v2216
          %2240 = vmatprep.subr.bf16.mxu0 0
          %2241 = vmatpush1.bf16.xpose.msra.mxu0 %v2213
          %2242 = vmatprep.subr.bf16.mxu0 0
          %2243 = vmatpush1.bf16.xpose.msra.mxu0 %v2210
          %2244 = vmatprep.subr.bf16.mxu0 0
          %2245 = vmatpush1.bf16.xpose.msra.mxu0 %v2207
          %2246 = vmatprep.subr.bf16.mxu0 0
          %2247 = vmatpush2.bf16.xpose.msra.mxu0 0
          %2248 = vmatprep.subr.bf16.mxu0 0
          %2249 = vmatpush2.bf16.xpose.msra.mxu0 0
          %2250 = vmatprep.subr.bf16.mxu0 0
          %2251 = vmatpush2.bf16.xpose.msra.mxu0 0
          %2252 = vmatprep.subr.bf16.mxu0 0
          %2253 = vmatpush2.bf16.xpose.msra.mxu0 0
          %2254 = vmatprep.subr.bf16.mxu0 0
          %2255 = vmatpush2.bf16.xpose.msra.mxu0 0
          %2256 = vmatprep.subr.bf16.mxu0 0
          %2257 = vmatpush2.bf16.xpose.msra.mxu0 0
          %2258 = vmatprep.subr.bf16.mxu0 0
          %2259 = vmatpush2.bf16.xpose.msra.mxu0 0
          %2260 = vmatprep.subr.bf16.mxu0 0
          %2261 = vmatpush2.bf16.xpose.msra.mxu0 0
          %2262 = vmatprep.mubr.bf16.mxu0 0
          %2263 = vmatmul.mubr.bf16.gmra.mxu0 %v2195
          %v2264 = vpop.f32.mrf.mxu0
          %v2265 = vadd.f32 %v1642, %v2264
          %v2266 = vpop.f32.mrf.mxu0
          %v2267 = vpop.f32.mrf.mxu0
          %v2268 = vadd.f32 %v1643, %v2267
          %v2269 = vpop.f32.mrf.mxu0
          %2270 = vmatprep.mubr.bf16.mxu0 0
          %2271 = vmatmul.mubr.bf16.gmra.mxu0 %v2198
          %v2272 = vpop.f32.mrf.mxu0
          %v2273 = vadd.f32 %v1644, %v2272
          %v2274 = vpop.f32.mrf.mxu0
          %v2275 = vpop.f32.mrf.mxu0
          %v2276 = vadd.f32 %v1645, %v2275
          %v2277 = vpop.f32.mrf.mxu0
          %2278 = vmatprep.mubr.bf16.mxu0 0
          %2279 = vmatmul.mubr.bf16.gmra.mxu0 %v2201
          %v2280 = vpop.f32.mrf.mxu0
          %v2281 = vadd.f32 %v1646, %v2280
          %v2282 = vpop.f32.mrf.mxu0
          %v2283 = vpop.f32.mrf.mxu0
          %v2284 = vadd.f32 %v1647, %v2283
          %v2285 = vpop.f32.mrf.mxu0
          %2286 = vmatprep.mubr.bf16.mxu0 0
          %2287 = vmatmul.mubr.bf16.gmra.mxu0 %v2204
          %v2288 = vpop.f32.mrf.mxu0
          %v2289 = vadd.f32 %v1648, %v2288
          %v2290 = vpop.f32.mrf.mxu0
          %v2291 = vpop.f32.mrf.mxu0
          %v2292 = vadd.f32 %v1649, %v2291
          %v2293 = vpop.f32.mrf.mxu0
          %2294 = vdwg.mxu0
          %v2295 = vld [vmem:[#allocation2] sm:$0xff]
          %v2296 = vld [vmem:[#allocation2 + $0x8] sm:$0xff]
          %v2297 = vld [vmem:[#allocation2 + $0x10] sm:$0xff]
          %v2298 = vld [vmem:[#allocation2 + $0x18] sm:$0xff]
          %v2299 = vld [vmem:[#allocation2 + $0x20] sm:$0xff]
          %v2300 = vld [vmem:[#allocation2 + $0x28] sm:$0xff]
          %v2301 = vld [vmem:[#allocation2 + $0x30] sm:$0xff]
          %v2302 = vld [vmem:[#allocation2 + $0x38] sm:$0xff]
          %v2303 = vld [vmem:[#allocation2 + $0x40] sm:$0xff]
          %v2304 = vld [vmem:[#allocation2 + $0x48] sm:$0xff]
          %v2305 = vld [vmem:[#allocation2 + $0x50] sm:$0xff]
          %v2306 = vld [vmem:[#allocation2 + $0x58] sm:$0xff]
          %v2307 = vld [vmem:[#allocation2 + $0x60] sm:$0xff]
          %v2308 = vld [vmem:[#allocation2 + $0x68] sm:$0xff]
          %v2309 = vld [vmem:[#allocation2 + $0x70] sm:$0xff]
          %v2310 = vld [vmem:[#allocation2 + $0x78] sm:$0xff]
          %v2311 = vld [vmem:[#allocation2 + $0x80] sm:$0xff]
          %v2312 = vld [vmem:[#allocation2 + $0x88] sm:$0xff]
          %v2313 = vld [vmem:[#allocation2 + $0x90] sm:$0xff]
          %v2314 = vld [vmem:[#allocation2 + $0x98] sm:$0xff]
          %v2315 = vld [vmem:[#allocation2 + $0xa0] sm:$0xff]
          %v2316 = vld [vmem:[#allocation2 + $0xa8] sm:$0xff]
          %v2317 = vld [vmem:[#allocation2 + $0xb0] sm:$0xff]
          %v2318 = vld [vmem:[#allocation2 + $0xb8] sm:$0xff]
          %v2319 = vld [vmem:[#allocation2 + $0xc0] sm:$0xff]
          %v2320 = vld [vmem:[#allocation2 + $0xc8] sm:$0xff]
          %v2321 = vld [vmem:[#allocation2 + $0xd0] sm:$0xff]
          %v2322 = vld [vmem:[#allocation2 + $0xd8] sm:$0xff]
          %v2323 = vld [vmem:[#allocation2 + $0xe0] sm:$0xff]
          %v2324 = vld [vmem:[#allocation2 + $0xe8] sm:$0xff]
          %v2325 = vld [vmem:[#allocation2 + $0xf0] sm:$0xff]
          %v2326 = vld [vmem:[#allocation2 + $0xf8] sm:$0xff]
          %2327 = vmax.xlane.f32.xlu0 %v1782
          %v2328 = vpop.xlane.xlu0 %2327
          %2329 = vmax.xlane.f32.xlu0 %v1785
          %v2330 = vpop.xlane.xlu0 %2329
          %2331 = vmax.xlane.f32.xlu0 %v1790
          %v2332 = vpop.xlane.xlu0 %2331
          %2333 = vmax.xlane.f32.xlu0 %v1793
          %v2334 = vpop.xlane.xlu0 %2333
          %2335 = vmax.xlane.f32.xlu0 %v1798
          %v2336 = vpop.xlane.xlu0 %2335
          %2337 = vmax.xlane.f32.xlu0 %v1801
          %v2338 = vpop.xlane.xlu0 %2337
          %2339 = vmax.xlane.f32.xlu0 %v1806
          %v2340 = vpop.xlane.xlu0 %2339
          %2341 = vmax.xlane.f32.xlu0 %v1809
          %v2342 = vpop.xlane.xlu0 %2341
          %2343 = vmax.xlane.f32.xlu0 %v1943
          %v2344 = vpop.xlane.xlu0 %2343
          %2345 = vmax.xlane.f32.xlu0 %v1946
          %v2346 = vpop.xlane.xlu0 %2345
          %2347 = vmax.xlane.f32.xlu0 %v1951
          %v2348 = vpop.xlane.xlu0 %2347
          %2349 = vmax.xlane.f32.xlu0 %v1954
          %v2350 = vpop.xlane.xlu0 %2349
          %2351 = vmax.xlane.f32.xlu0 %v1959
          %v2352 = vpop.xlane.xlu0 %2351
          %2353 = vmax.xlane.f32.xlu0 %v1962
          %v2354 = vpop.xlane.xlu0 %2353
          %2355 = vmax.xlane.f32.xlu0 %v1967
          %v2356 = vpop.xlane.xlu0 %2355
          %2357 = vmax.xlane.f32.xlu0 %v1970
          %v2358 = vpop.xlane.xlu0 %2357
          %2359 = vmax.xlane.f32.xlu0 %v2104
          %v2360 = vpop.xlane.xlu0 %2359
          %2361 = vmax.xlane.f32.xlu0 %v2107
          %v2362 = vpop.xlane.xlu0 %2361
          %2363 = vmax.xlane.f32.xlu0 %v2112
          %v2364 = vpop.xlane.xlu0 %2363
          %2365 = vmax.xlane.f32.xlu0 %v2115
          %v2366 = vpop.xlane.xlu0 %2365
          %2367 = vmax.xlane.f32.xlu0 %v2120
          %v2368 = vpop.xlane.xlu0 %2367
          %2369 = vmax.xlane.f32.xlu0 %v2123
          %v2370 = vpop.xlane.xlu0 %2369
          %2371 = vmax.xlane.f32.xlu0 %v2128
          %v2372 = vpop.xlane.xlu0 %2371
          %2373 = vmax.xlane.f32.xlu0 %v2131
          %v2374 = vpop.xlane.xlu0 %2373
          %2375 = vmax.xlane.f32.xlu0 %v2265
          %v2376 = vpop.xlane.xlu0 %2375
          %2377 = vmax.xlane.f32.xlu0 %v2268
          %v2378 = vpop.xlane.xlu0 %2377
          %2379 = vmax.xlane.f32.xlu0 %v2273
          %v2380 = vpop.xlane.xlu0 %2379
          %2381 = vmax.xlane.f32.xlu0 %v2276
          %v2382 = vpop.xlane.xlu0 %2381
          %2383 = vmax.xlane.f32.xlu0 %v2281
          %v2384 = vpop.xlane.xlu0 %2383
          %2385 = vmax.xlane.f32.xlu0 %v2284
          %v2386 = vpop.xlane.xlu0 %2385
          %2387 = vmax.xlane.f32.xlu0 %v2289
          %v2388 = vpop.xlane.xlu0 %2387
          %2389 = vmax.xlane.f32.xlu0 %v2292
          %v2390 = vpop.xlane.xlu0 %2389
          %v2391 = vmax.f32 %v2295, %v2328
          %v2392 = vmax.f32 %v2296, %v2330
          %v2393 = vmax.f32 %v2297, %v2332
          %v2394 = vmax.f32 %v2298, %v2334
          %v2395 = vmax.f32 %v2299, %v2336
          %v2396 = vmax.f32 %v2300, %v2338
          %v2397 = vmax.f32 %v2301, %v2340
          %v2398 = vmax.f32 %v2302, %v2342
          %v2399 = vmax.f32 %v2303, %v2344
          %v2400 = vmax.f32 %v2304, %v2346
          %v2401 = vmax.f32 %v2305, %v2348
          %v2402 = vmax.f32 %v2306, %v2350
          %v2403 = vmax.f32 %v2307, %v2352
          %v2404 = vmax.f32 %v2308, %v2354
          %v2405 = vmax.f32 %v2309, %v2356
          %v2406 = vmax.f32 %v2310, %v2358
          %v2407 = vmax.f32 %v2311, %v2360
          %v2408 = vmax.f32 %v2312, %v2362
          %v2409 = vmax.f32 %v2313, %v2364
          %v2410 = vmax.f32 %v2314, %v2366
          %v2411 = vmax.f32 %v2315, %v2368
          %v2412 = vmax.f32 %v2316, %v2370
          %v2413 = vmax.f32 %v2317, %v2372
          %v2414 = vmax.f32 %v2318, %v2374
          %v2415 = vmax.f32 %v2319, %v2376
          %v2416 = vmax.f32 %v2320, %v2378
          %v2417 = vmax.f32 %v2321, %v2380
          %v2418 = vmax.f32 %v2322, %v2382
          %v2419 = vmax.f32 %v2323, %v2384
          %v2420 = vmax.f32 %v2324, %v2386
          %v2421 = vmax.f32 %v2325, %v2388
          %v2422 = vmax.f32 %v2326, %v2390
          %v2423 = vsub.f32 %v2295, %v2391
          %v2424 = vsub.f32 %v2296, %v2392
          %v2425 = vsub.f32 %v2297, %v2393
          %v2426 = vsub.f32 %v2298, %v2394
          %v2427 = vsub.f32 %v2299, %v2395
          %v2428 = vsub.f32 %v2300, %v2396
          %v2429 = vsub.f32 %v2301, %v2397
          %v2430 = vsub.f32 %v2302, %v2398
          %v2431 = vsub.f32 %v2303, %v2399
          %v2432 = vsub.f32 %v2304, %v2400
          %v2433 = vsub.f32 %v2305, %v2401
          %v2434 = vsub.f32 %v2306, %v2402
          %v2435 = vsub.f32 %v2307, %v2403
          %v2436 = vsub.f32 %v2308, %v2404
          %v2437 = vsub.f32 %v2309, %v2405
          %v2438 = vsub.f32 %v2310, %v2406
          %v2439 = vsub.f32 %v2311, %v2407
          %v2440 = vsub.f32 %v2312, %v2408
          %v2441 = vsub.f32 %v2313, %v2409
          %v2442 = vsub.f32 %v2314, %v2410
          %v2443 = vsub.f32 %v2315, %v2411
          %v2444 = vsub.f32 %v2316, %v2412
          %v2445 = vsub.f32 %v2317, %v2413
          %v2446 = vsub.f32 %v2318, %v2414
          %v2447 = vsub.f32 %v2319, %v2415
          %v2448 = vsub.f32 %v2320, %v2416
          %v2449 = vsub.f32 %v2321, %v2417
          %v2450 = vsub.f32 %v2322, %v2418
          %v2451 = vsub.f32 %v2323, %v2419
          %v2452 = vsub.f32 %v2324, %v2420
          %v2453 = vsub.f32 %v2325, %v2421
          %v2454 = vsub.f32 %v2326, %v2422
          %v2455 = vmul.f32 %v2423, 1.442695
          %v2456 = vpow.pop %v2455
          %v2457 = vmul.f32 %v2424, 1.442695
          %v2458 = vpow.pop %v2457
          %v2459 = vmul.f32 %v2425, 1.442695
          %v2460 = vpow.pop %v2459
          %v2461 = vmul.f32 %v2426, 1.442695
          %v2462 = vpow.pop %v2461
          %v2463 = vmul.f32 %v2427, 1.442695
          %v2464 = vpow.pop %v2463
          %v2465 = vmul.f32 %v2428, 1.442695
          %v2466 = vpow.pop %v2465
          %v2467 = vmul.f32 %v2429, 1.442695
          %v2468 = vpow.pop %v2467
          %v2469 = vmul.f32 %v2430, 1.442695
          %v2470 = vpow.pop %v2469
          %v2471 = vmul.f32 %v2431, 1.442695
          %v2472 = vpow.pop %v2471
          %v2473 = vmul.f32 %v2432, 1.442695
          %v2474 = vpow.pop %v2473
          %v2475 = vmul.f32 %v2433, 1.442695
          %v2476 = vpow.pop %v2475
          %v2477 = vmul.f32 %v2434, 1.442695
          %v2478 = vpow.pop %v2477
          %v2479 = vmul.f32 %v2435, 1.442695
          %v2480 = vpow.pop %v2479
          %v2481 = vmul.f32 %v2436, 1.442695
          %v2482 = vpow.pop %v2481
          %v2483 = vmul.f32 %v2437, 1.442695
          %v2484 = vpow.pop %v2483
          %v2485 = vmul.f32 %v2438, 1.442695
          %v2486 = vpow.pop %v2485
          %v2487 = vmul.f32 %v2439, 1.442695
          %v2488 = vpow.pop %v2487
          %v2489 = vmul.f32 %v2440, 1.442695
          %v2490 = vpow.pop %v2489
          %v2491 = vmul.f32 %v2441, 1.442695
          %v2492 = vpow.pop %v2491
          %v2493 = vmul.f32 %v2442, 1.442695
          %v2494 = vpow.pop %v2493
          %v2495 = vmul.f32 %v2443, 1.442695
          %v2496 = vpow.pop %v2495
          %v2497 = vmul.f32 %v2444, 1.442695
          %v2498 = vpow.pop %v2497
          %v2499 = vmul.f32 %v2445, 1.442695
          %v2500 = vpow.pop %v2499
          %v2501 = vmul.f32 %v2446, 1.442695
          %v2502 = vpow.pop %v2501
          %v2503 = vmul.f32 %v2447, 1.442695
          %v2504 = vpow.pop %v2503
          %v2505 = vmul.f32 %v2448, 1.442695
          %v2506 = vpow.pop %v2505
          %v2507 = vmul.f32 %v2449, 1.442695
          %v2508 = vpow.pop %v2507
          %v2509 = vmul.f32 %v2450, 1.442695
          %v2510 = vpow.pop %v2509
          %v2511 = vmul.f32 %v2451, 1.442695
          %v2512 = vpow.pop %v2511
          %v2513 = vmul.f32 %v2452, 1.442695
          %v2514 = vpow.pop %v2513
          %v2515 = vmul.f32 %v2453, 1.442695
          %v2516 = vpow.pop %v2515
          %v2517 = vmul.f32 %v2454, 1.442695
          %v2518 = vpow.pop %v2517
          %2520 = vset.pattern.permute.xlu0 0
          %2521 = vperm.xlu0 %2520, %v2391
          %v2522 = vpop.permute.xlu0 %2521
          %2525 = vset.pattern.permute.xlu0 0
          %2526 = vperm.xlu0 %2525, %v2392
          %v2527 = vpop.permute.xlu0 %2526
          %2530 = vset.pattern.permute.xlu0 0
          %2531 = vperm.xlu0 %2530, %v2393
          %v2532 = vpop.permute.xlu0 %2531
          %2535 = vset.pattern.permute.xlu0 0
          %2536 = vperm.xlu0 %2535, %v2394
          %v2537 = vpop.permute.xlu0 %2536
          %2540 = vset.pattern.permute.xlu0 0
          %2541 = vperm.xlu0 %2540, %v2395
          %v2542 = vpop.permute.xlu0 %2541
          %2545 = vset.pattern.permute.xlu0 0
          %2546 = vperm.xlu0 %2545, %v2396
          %v2547 = vpop.permute.xlu0 %2546
          %2550 = vset.pattern.permute.xlu0 0
          %2551 = vperm.xlu0 %2550, %v2397
          %v2552 = vpop.permute.xlu0 %2551
          %2555 = vset.pattern.permute.xlu0 0
          %2556 = vperm.xlu0 %2555, %v2398
          %v2557 = vpop.permute.xlu0 %2556
          %2560 = vset.pattern.permute.xlu0 0
          %2561 = vperm.xlu0 %2560, %v2399
          %v2562 = vpop.permute.xlu0 %2561
          %2565 = vset.pattern.permute.xlu0 0
          %2566 = vperm.xlu0 %2565, %v2400
          %v2567 = vpop.permute.xlu0 %2566
          %2570 = vset.pattern.permute.xlu0 0
          %2571 = vperm.xlu0 %2570, %v2401
          %v2572 = vpop.permute.xlu0 %2571
          %2575 = vset.pattern.permute.xlu0 0
          %2576 = vperm.xlu0 %2575, %v2402
          %v2577 = vpop.permute.xlu0 %2576
          %2580 = vset.pattern.permute.xlu0 0
          %2581 = vperm.xlu0 %2580, %v2403
          %v2582 = vpop.permute.xlu0 %2581
          %2585 = vset.pattern.permute.xlu0 0
          %2586 = vperm.xlu0 %2585, %v2404
          %v2587 = vpop.permute.xlu0 %2586
          %2590 = vset.pattern.permute.xlu0 0
          %2591 = vperm.xlu0 %2590, %v2405
          %v2592 = vpop.permute.xlu0 %2591
          %2595 = vset.pattern.permute.xlu0 0
          %2596 = vperm.xlu0 %2595, %v2406
          %v2597 = vpop.permute.xlu0 %2596
          %2600 = vset.pattern.permute.xlu0 0
          %2601 = vperm.xlu0 %2600, %v2407
          %v2602 = vpop.permute.xlu0 %2601
          %2605 = vset.pattern.permute.xlu0 0
          %2606 = vperm.xlu0 %2605, %v2408
          %v2607 = vpop.permute.xlu0 %2606
          %2610 = vset.pattern.permute.xlu0 0
          %2611 = vperm.xlu0 %2610, %v2409
          %v2612 = vpop.permute.xlu0 %2611
          %2615 = vset.pattern.permute.xlu0 0
          %2616 = vperm.xlu0 %2615, %v2410
          %v2617 = vpop.permute.xlu0 %2616
          %2620 = vset.pattern.permute.xlu0 0
          %2621 = vperm.xlu0 %2620, %v2411
          %v2622 = vpop.permute.xlu0 %2621
          %2625 = vset.pattern.permute.xlu0 0
          %2626 = vperm.xlu0 %2625, %v2412
          %v2627 = vpop.permute.xlu0 %2626
          %2630 = vset.pattern.permute.xlu0 0
          %2631 = vperm.xlu0 %2630, %v2413
          %v2632 = vpop.permute.xlu0 %2631
          %2635 = vset.pattern.permute.xlu0 0
          %2636 = vperm.xlu0 %2635, %v2414
          %v2637 = vpop.permute.xlu0 %2636
          %2640 = vset.pattern.permute.xlu0 0
          %2641 = vperm.xlu0 %2640, %v2415
          %v2642 = vpop.permute.xlu0 %2641
          %2645 = vset.pattern.permute.xlu0 0
          %2646 = vperm.xlu0 %2645, %v2416
          %v2647 = vpop.permute.xlu0 %2646
          %2650 = vset.pattern.permute.xlu0 0
          %2651 = vperm.xlu0 %2650, %v2417
          %v2652 = vpop.permute.xlu0 %2651
          %2655 = vset.pattern.permute.xlu0 0
          %2656 = vperm.xlu0 %2655, %v2418
          %v2657 = vpop.permute.xlu0 %2656
          %2660 = vset.pattern.permute.xlu0 0
          %2661 = vperm.xlu0 %2660, %v2419
          %v2662 = vpop.permute.xlu0 %2661
          %2665 = vset.pattern.permute.xlu0 0
          %2666 = vperm.xlu0 %2665, %v2420
          %v2667 = vpop.permute.xlu0 %2666
          %2670 = vset.pattern.permute.xlu0 0
          %2671 = vperm.xlu0 %2670, %v2421
          %v2672 = vpop.permute.xlu0 %2671
          %2675 = vset.pattern.permute.xlu0 0
          %2676 = vperm.xlu0 %2675, %v2422
          %v2677 = vpop.permute.xlu0 %2676
          %v2679 = vsub.f32 %v1782, %v2522
          %v2680 = vsub.f32 %v1785, %v2527
          %v2681 = vsub.f32 %v1790, %v2532
          %v2682 = vsub.f32 %v1793, %v2537
          %v2683 = vsub.f32 %v1798, %v2542
          %v2684 = vsub.f32 %v1801, %v2547
          %v2685 = vsub.f32 %v1806, %v2552
          %v2686 = vsub.f32 %v1809, %v2557
          %v2687 = vsub.f32 %v1943, %v2562
          %v2688 = vsub.f32 %v1946, %v2567
          %v2689 = vsub.f32 %v1951, %v2572
          %v2690 = vsub.f32 %v1954, %v2577
          %v2691 = vsub.f32 %v1959, %v2582
          %v2692 = vsub.f32 %v1962, %v2587
          %v2693 = vsub.f32 %v1967, %v2592
          %v2694 = vsub.f32 %v1970, %v2597
          %v2695 = vsub.f32 %v2104, %v2602
          %v2696 = vsub.f32 %v2107, %v2607
          %v2697 = vsub.f32 %v2112, %v2612
          %v2698 = vsub.f32 %v2115, %v2617
          %v2699 = vsub.f32 %v2120, %v2622
          %v2700 = vsub.f32 %v2123, %v2627
          %v2701 = vsub.f32 %v2128, %v2632
          %v2702 = vsub.f32 %v2131, %v2637
          %v2703 = vsub.f32 %v2265, %v2642
          %v2704 = vsub.f32 %v2268, %v2647
          %v2705 = vsub.f32 %v2273, %v2652
          %v2706 = vsub.f32 %v2276, %v2657
          %v2707 = vsub.f32 %v2281, %v2662
          %v2708 = vsub.f32 %v2284, %v2667
          %v2709 = vsub.f32 %v2289, %v2672
          %v2710 = vsub.f32 %v2292, %v2677
          %v2711 = vmul.f32 %v2679, 1.442695
          %v2712 = vpow.pop %v2711
          %v2713 = vmul.f32 %v2680, 1.442695
          %v2714 = vpow.pop %v2713
          %v2715 = vmul.f32 %v2681, 1.442695
          %v2716 = vpow.pop %v2715
          %v2717 = vmul.f32 %v2682, 1.442695
          %v2718 = vpow.pop %v2717
          %v2719 = vmul.f32 %v2683, 1.442695
          %v2720 = vpow.pop %v2719
          %v2721 = vmul.f32 %v2684, 1.442695
          %v2722 = vpow.pop %v2721
          %v2723 = vmul.f32 %v2685, 1.442695
          %v2724 = vpow.pop %v2723
          %v2725 = vmul.f32 %v2686, 1.442695
          %v2726 = vpow.pop %v2725
          %v2727 = vmul.f32 %v2687, 1.442695
          %v2728 = vpow.pop %v2727
          %v2729 = vmul.f32 %v2688, 1.442695
          %v2730 = vpow.pop %v2729
          %v2731 = vmul.f32 %v2689, 1.442695
          %v2732 = vpow.pop %v2731
          %v2733 = vmul.f32 %v2690, 1.442695
          %v2734 = vpow.pop %v2733
          %v2735 = vmul.f32 %v2691, 1.442695
          %v2736 = vpow.pop %v2735
          %v2737 = vmul.f32 %v2692, 1.442695
          %v2738 = vpow.pop %v2737
          %v2739 = vmul.f32 %v2693, 1.442695
          %v2740 = vpow.pop %v2739
          %v2741 = vmul.f32 %v2694, 1.442695
          %v2742 = vpow.pop %v2741
          %v2743 = vmul.f32 %v2695, 1.442695
          %v2744 = vpow.pop %v2743
          %v2745 = vmul.f32 %v2696, 1.442695
          %v2746 = vpow.pop %v2745
          %v2747 = vmul.f32 %v2697, 1.442695
          %v2748 = vpow.pop %v2747
          %v2749 = vmul.f32 %v2698, 1.442695
          %v2750 = vpow.pop %v2749
          %v2751 = vmul.f32 %v2699, 1.442695
          %v2752 = vpow.pop %v2751
          %v2753 = vmul.f32 %v2700, 1.442695
          %v2754 = vpow.pop %v2753
          %v2755 = vmul.f32 %v2701, 1.442695
          %v2756 = vpow.pop %v2755
          %v2757 = vmul.f32 %v2702, 1.442695
          %v2758 = vpow.pop %v2757
          %v2759 = vmul.f32 %v2703, 1.442695
          %v2760 = vpow.pop %v2759
          %v2761 = vmul.f32 %v2704, 1.442695
          %v2762 = vpow.pop %v2761
          %v2763 = vmul.f32 %v2705, 1.442695
          %v2764 = vpow.pop %v2763
          %v2765 = vmul.f32 %v2706, 1.442695
          %v2766 = vpow.pop %v2765
          %v2767 = vmul.f32 %v2707, 1.442695
          %v2768 = vpow.pop %v2767
          %v2769 = vmul.f32 %v2708, 1.442695
          %v2770 = vpow.pop %v2769
          %v2771 = vmul.f32 %v2709, 1.442695
          %v2772 = vpow.pop %v2771
          %v2773 = vmul.f32 %v2710, 1.442695
          %v2774 = vpow.pop %v2773
          %v2775 = vld [vmem:[#allocation3] sm:$0xff]
          %v2776 = vld [vmem:[#allocation3 + $0x8] sm:$0xff]
          %v2777 = vld [vmem:[#allocation3 + $0x10] sm:$0xff]
          %v2778 = vld [vmem:[#allocation3 + $0x18] sm:$0xff]
          %v2779 = vld [vmem:[#allocation3 + $0x20] sm:$0xff]
          %v2780 = vld [vmem:[#allocation3 + $0x28] sm:$0xff]
          %v2781 = vld [vmem:[#allocation3 + $0x30] sm:$0xff]
          %v2782 = vld [vmem:[#allocation3 + $0x38] sm:$0xff]
          %v2783 = vld [vmem:[#allocation3 + $0x40] sm:$0xff]
          %v2784 = vld [vmem:[#allocation3 + $0x48] sm:$0xff]
          %v2785 = vld [vmem:[#allocation3 + $0x50] sm:$0xff]
          %v2786 = vld [vmem:[#allocation3 + $0x58] sm:$0xff]
          %v2787 = vld [vmem:[#allocation3 + $0x60] sm:$0xff]
          %v2788 = vld [vmem:[#allocation3 + $0x68] sm:$0xff]
          %v2789 = vld [vmem:[#allocation3 + $0x70] sm:$0xff]
          %v2790 = vld [vmem:[#allocation3 + $0x78] sm:$0xff]
          %v2791 = vld [vmem:[#allocation3 + $0x80] sm:$0xff]
          %v2792 = vld [vmem:[#allocation3 + $0x88] sm:$0xff]
          %v2793 = vld [vmem:[#allocation3 + $0x90] sm:$0xff]
          %v2794 = vld [vmem:[#allocation3 + $0x98] sm:$0xff]
          %v2795 = vld [vmem:[#allocation3 + $0xa0] sm:$0xff]
          %v2796 = vld [vmem:[#allocation3 + $0xa8] sm:$0xff]
          %v2797 = vld [vmem:[#allocation3 + $0xb0] sm:$0xff]
          %v2798 = vld [vmem:[#allocation3 + $0xb8] sm:$0xff]
          %v2799 = vld [vmem:[#allocation3 + $0xc0] sm:$0xff]
          %v2800 = vld [vmem:[#allocation3 + $0xc8] sm:$0xff]
          %v2801 = vld [vmem:[#allocation3 + $0xd0] sm:$0xff]
          %v2802 = vld [vmem:[#allocation3 + $0xd8] sm:$0xff]
          %v2803 = vld [vmem:[#allocation3 + $0xe0] sm:$0xff]
          %v2804 = vld [vmem:[#allocation3 + $0xe8] sm:$0xff]
          %v2805 = vld [vmem:[#allocation3 + $0xf0] sm:$0xff]
          %v2806 = vld [vmem:[#allocation3 + $0xf8] sm:$0xff]
          %v2807 = vmul.f32 %v2456, %v2775
          %v2808 = vmul.f32 %v2458, %v2776
          %v2809 = vmul.f32 %v2460, %v2777
          %v2810 = vmul.f32 %v2462, %v2778
          %v2811 = vmul.f32 %v2464, %v2779
          %v2812 = vmul.f32 %v2466, %v2780
          %v2813 = vmul.f32 %v2468, %v2781
          %v2814 = vmul.f32 %v2470, %v2782
          %v2815 = vmul.f32 %v2472, %v2783
          %v2816 = vmul.f32 %v2474, %v2784
          %v2817 = vmul.f32 %v2476, %v2785
          %v2818 = vmul.f32 %v2478, %v2786
          %v2819 = vmul.f32 %v2480, %v2787
          %v2820 = vmul.f32 %v2482, %v2788
          %v2821 = vmul.f32 %v2484, %v2789
          %v2822 = vmul.f32 %v2486, %v2790
          %v2823 = vmul.f32 %v2488, %v2791
          %v2824 = vmul.f32 %v2490, %v2792
          %v2825 = vmul.f32 %v2492, %v2793
          %v2826 = vmul.f32 %v2494, %v2794
          %v2827 = vmul.f32 %v2496, %v2795
          %v2828 = vmul.f32 %v2498, %v2796
          %v2829 = vmul.f32 %v2500, %v2797
          %v2830 = vmul.f32 %v2502, %v2798
          %v2831 = vmul.f32 %v2504, %v2799
          %v2832 = vmul.f32 %v2506, %v2800
          %v2833 = vmul.f32 %v2508, %v2801
          %v2834 = vmul.f32 %v2510, %v2802
          %v2835 = vmul.f32 %v2512, %v2803
          %v2836 = vmul.f32 %v2514, %v2804
          %v2837 = vmul.f32 %v2516, %v2805
          %v2838 = vmul.f32 %v2518, %v2806
          %2839 = vadd.xlane.f32.xlu0 %v2712
          %v2840 = vpop.xlane.xlu0 %2839
          %2841 = vadd.xlane.f32.xlu0 %v2714
          %v2842 = vpop.xlane.xlu0 %2841
          %2843 = vadd.xlane.f32.xlu0 %v2716
          %v2844 = vpop.xlane.xlu0 %2843
          %2845 = vadd.xlane.f32.xlu0 %v2718
          %v2846 = vpop.xlane.xlu0 %2845
          %2847 = vadd.xlane.f32.xlu0 %v2720
          %v2848 = vpop.xlane.xlu0 %2847
          %2849 = vadd.xlane.f32.xlu0 %v2722
          %v2850 = vpop.xlane.xlu0 %2849
          %2851 = vadd.xlane.f32.xlu0 %v2724
          %v2852 = vpop.xlane.xlu0 %2851
          %2853 = vadd.xlane.f32.xlu0 %v2726
          %v2854 = vpop.xlane.xlu0 %2853
          %2855 = vadd.xlane.f32.xlu0 %v2728
          %v2856 = vpop.xlane.xlu0 %2855
          %2857 = vadd.xlane.f32.xlu0 %v2730
          %v2858 = vpop.xlane.xlu0 %2857
          %2859 = vadd.xlane.f32.xlu0 %v2732
          %v2860 = vpop.xlane.xlu0 %2859
          %2861 = vadd.xlane.f32.xlu0 %v2734
          %v2862 = vpop.xlane.xlu0 %2861
          %2863 = vadd.xlane.f32.xlu0 %v2736
          %v2864 = vpop.xlane.xlu0 %2863
          %2865 = vadd.xlane.f32.xlu0 %v2738
          %v2866 = vpop.xlane.xlu0 %2865
          %2867 = vadd.xlane.f32.xlu0 %v2740
          %v2868 = vpop.xlane.xlu0 %2867
          %2869 = vadd.xlane.f32.xlu0 %v2742
          %v2870 = vpop.xlane.xlu0 %2869
          %2871 = vadd.xlane.f32.xlu0 %v2744
          %v2872 = vpop.xlane.xlu0 %2871
          %2873 = vadd.xlane.f32.xlu0 %v2746
          %v2874 = vpop.xlane.xlu0 %2873
          %2875 = vadd.xlane.f32.xlu0 %v2748
          %v2876 = vpop.xlane.xlu0 %2875
          %2877 = vadd.xlane.f32.xlu0 %v2750
          %v2878 = vpop.xlane.xlu0 %2877
          %2879 = vadd.xlane.f32.xlu0 %v2752
          %v2880 = vpop.xlane.xlu0 %2879
          %2881 = vadd.xlane.f32.xlu0 %v2754
          %v2882 = vpop.xlane.xlu0 %2881
          %2883 = vadd.xlane.f32.xlu0 %v2756
          %v2884 = vpop.xlane.xlu0 %2883
          %2885 = vadd.xlane.f32.xlu0 %v2758
          %v2886 = vpop.xlane.xlu0 %2885
          %2887 = vadd.xlane.f32.xlu0 %v2760
          %v2888 = vpop.xlane.xlu0 %2887
          %2889 = vadd.xlane.f32.xlu0 %v2762
          %v2890 = vpop.xlane.xlu0 %2889
          %2891 = vadd.xlane.f32.xlu0 %v2764
          %v2892 = vpop.xlane.xlu0 %2891
          %2893 = vadd.xlane.f32.xlu0 %v2766
          %v2894 = vpop.xlane.xlu0 %2893
          %2895 = vadd.xlane.f32.xlu0 %v2768
          %v2896 = vpop.xlane.xlu0 %2895
          %2897 = vadd.xlane.f32.xlu0 %v2770
          %v2898 = vpop.xlane.xlu0 %2897
          %2899 = vadd.xlane.f32.xlu0 %v2772
          %v2900 = vpop.xlane.xlu0 %2899
          %2901 = vadd.xlane.f32.xlu0 %v2774
          %v2902 = vpop.xlane.xlu0 %2901
          %v2903 = vadd.f32 %v2807, %v2840
          %v2904 = vadd.f32 %v2808, %v2842
          %v2905 = vadd.f32 %v2809, %v2844
          %v2906 = vadd.f32 %v2810, %v2846
          %v2907 = vadd.f32 %v2811, %v2848
          %v2908 = vadd.f32 %v2812, %v2850
          %v2909 = vadd.f32 %v2813, %v2852
          %v2910 = vadd.f32 %v2814, %v2854
          %v2911 = vadd.f32 %v2815, %v2856
          %v2912 = vadd.f32 %v2816, %v2858
          %v2913 = vadd.f32 %v2817, %v2860
          %v2914 = vadd.f32 %v2818, %v2862
          %v2915 = vadd.f32 %v2819, %v2864
          %v2916 = vadd.f32 %v2820, %v2866
          %v2917 = vadd.f32 %v2821, %v2868
          %v2918 = vadd.f32 %v2822, %v2870
          %v2919 = vadd.f32 %v2823, %v2872
          %v2920 = vadd.f32 %v2824, %v2874
          %v2921 = vadd.f32 %v2825, %v2876
          %v2922 = vadd.f32 %v2826, %v2878
          %v2923 = vadd.f32 %v2827, %v2880
          %v2924 = vadd.f32 %v2828, %v2882
          %v2925 = vadd.f32 %v2829, %v2884
          %v2926 = vadd.f32 %v2830, %v2886
          %v2927 = vadd.f32 %v2831, %v2888
          %v2928 = vadd.f32 %v2832, %v2890
          %v2929 = vadd.f32 %v2833, %v2892
          %v2930 = vadd.f32 %v2834, %v2894
          %v2931 = vadd.f32 %v2835, %v2896
          %v2932 = vadd.f32 %v2836, %v2898
          %v2933 = vadd.f32 %v2837, %v2900
          %v2934 = vadd.f32 %v2838, %v2902
          %vm2935 = vcmask 7168
          %2936 = vst.msk [vmem:[#allocation3] sm:$0xff] %vm2935, %v2903
          %2937 = vst.msk [vmem:[#allocation3 + $0x8] sm:$0xff] %vm2935, %v2904
          %2938 = vst.msk [vmem:[#allocation3 + $0x10] sm:$0xff] %vm2935, %v2905
          %2939 = vst.msk [vmem:[#allocation3 + $0x18] sm:$0xff] %vm2935, %v2906
          %2940 = vst.msk [vmem:[#allocation3 + $0x20] sm:$0xff] %vm2935, %v2907
          %2941 = vst.msk [vmem:[#allocation3 + $0x28] sm:$0xff] %vm2935, %v2908
          %2942 = vst.msk [vmem:[#allocation3 + $0x30] sm:$0xff] %vm2935, %v2909
          %2943 = vst.msk [vmem:[#allocation3 + $0x38] sm:$0xff] %vm2935, %v2910
          %2944 = vst.msk [vmem:[#allocation3 + $0x40] sm:$0xff] %vm2935, %v2911
          %2945 = vst.msk [vmem:[#allocation3 + $0x48] sm:$0xff] %vm2935, %v2912
          %2946 = vst.msk [vmem:[#allocation3 + $0x50] sm:$0xff] %vm2935, %v2913
          %2947 = vst.msk [vmem:[#allocation3 + $0x58] sm:$0xff] %vm2935, %v2914
          %2948 = vst.msk [vmem:[#allocation3 + $0x60] sm:$0xff] %vm2935, %v2915
          %2949 = vst.msk [vmem:[#allocation3 + $0x68] sm:$0xff] %vm2935, %v2916
          %2950 = vst.msk [vmem:[#allocation3 + $0x70] sm:$0xff] %vm2935, %v2917
          %2951 = vst.msk [vmem:[#allocation3 + $0x78] sm:$0xff] %vm2935, %v2918
          %2952 = vst.msk [vmem:[#allocation3 + $0x80] sm:$0xff] %vm2935, %v2919
          %2953 = vst.msk [vmem:[#allocation3 + $0x88] sm:$0xff] %vm2935, %v2920
          %2954 = vst.msk [vmem:[#allocation3 + $0x90] sm:$0xff] %vm2935, %v2921
          %2955 = vst.msk [vmem:[#allocation3 + $0x98] sm:$0xff] %vm2935, %v2922
          %2956 = vst.msk [vmem:[#allocation3 + $0xa0] sm:$0xff] %vm2935, %v2923
          %2957 = vst.msk [vmem:[#allocation3 + $0xa8] sm:$0xff] %vm2935, %v2924
          %2958 = vst.msk [vmem:[#allocation3 + $0xb0] sm:$0xff] %vm2935, %v2925
          %2959 = vst.msk [vmem:[#allocation3 + $0xb8] sm:$0xff] %vm2935, %v2926
          %2960 = vst.msk [vmem:[#allocation3 + $0xc0] sm:$0xff] %vm2935, %v2927
          %2961 = vst.msk [vmem:[#allocation3 + $0xc8] sm:$0xff] %vm2935, %v2928
          %2962 = vst.msk [vmem:[#allocation3 + $0xd0] sm:$0xff] %vm2935, %v2929
          %2963 = vst.msk [vmem:[#allocation3 + $0xd8] sm:$0xff] %vm2935, %v2930
          %2964 = vst.msk [vmem:[#allocation3 + $0xe0] sm:$0xff] %vm2935, %v2931
          %2965 = vst.msk [vmem:[#allocation3 + $0xe8] sm:$0xff] %vm2935, %v2932
          %2966 = vst.msk [vmem:[#allocation3 + $0xf0] sm:$0xff] %vm2935, %v2933
          %2967 = vst.msk [vmem:[#allocation3 + $0xf8] sm:$0xff] %vm2935, %v2934
          %v2968 = vld [vmem:[#allocation4] sm:$0xff]
          %v2969 = vld [vmem:[#allocation4 + $0x8] sm:$0xff]
          %v2970 = vld [vmem:[#allocation4 + $0x10] sm:$0xff]
          %v2971 = vld [vmem:[#allocation4 + $0x18] sm:$0xff]
          %v2972 = vld [vmem:[#allocation4 + $0x20] sm:$0xff]
          %v2973 = vld [vmem:[#allocation4 + $0x28] sm:$0xff]
          %v2974 = vld [vmem:[#allocation4 + $0x30] sm:$0xff]
          %v2975 = vld [vmem:[#allocation4 + $0x38] sm:$0xff]
          %v2976 = vld [vmem:[#allocation4 + $0x40] sm:$0xff]
          %v2977 = vld [vmem:[#allocation4 + $0x48] sm:$0xff]
          %v2978 = vld [vmem:[#allocation4 + $0x50] sm:$0xff]
          %v2979 = vld [vmem:[#allocation4 + $0x58] sm:$0xff]
          %v2980 = vld [vmem:[#allocation4 + $0x60] sm:$0xff]
          %v2981 = vld [vmem:[#allocation4 + $0x68] sm:$0xff]
          %v2982 = vld [vmem:[#allocation4 + $0x70] sm:$0xff]
          %v2983 = vld [vmem:[#allocation4 + $0x78] sm:$0xff]
          %v2984 = vld [vmem:[#allocation4 + $0x80] sm:$0xff]
          %v2985 = vld [vmem:[#allocation4 + $0x88] sm:$0xff]
          %v2986 = vld [vmem:[#allocation4 + $0x90] sm:$0xff]
          %v2987 = vld [vmem:[#allocation4 + $0x98] sm:$0xff]
          %v2988 = vld [vmem:[#allocation4 + $0xa0] sm:$0xff]
          %v2989 = vld [vmem:[#allocation4 + $0xa8] sm:$0xff]
          %v2990 = vld [vmem:[#allocation4 + $0xb0] sm:$0xff]
          %v2991 = vld [vmem:[#allocation4 + $0xb8] sm:$0xff]
          %v2992 = vld [vmem:[#allocation4 + $0xc0] sm:$0xff]
          %v2993 = vld [vmem:[#allocation4 + $0xc8] sm:$0xff]
          %v2994 = vld [vmem:[#allocation4 + $0xd0] sm:$0xff]
          %v2995 = vld [vmem:[#allocation4 + $0xd8] sm:$0xff]
          %v2996 = vld [vmem:[#allocation4 + $0xe0] sm:$0xff]
          %v2997 = vld [vmem:[#allocation4 + $0xe8] sm:$0xff]
          %v2998 = vld [vmem:[#allocation4 + $0xf0] sm:$0xff]
          %v2999 = vld [vmem:[#allocation4 + $0xf8] sm:$0xff]
          %3001 = vset.pattern.permute.xlu0 0
          %3002 = vperm.xlu0 %3001, %v2456
          %v3003 = vpop.permute.xlu0 %3002
          %3006 = vset.pattern.permute.xlu0 0
          %3007 = vperm.xlu0 %3006, %v2458
          %v3008 = vpop.permute.xlu0 %3007
          %3011 = vset.pattern.permute.xlu0 0
          %3012 = vperm.xlu0 %3011, %v2460
          %v3013 = vpop.permute.xlu0 %3012
          %3016 = vset.pattern.permute.xlu0 0
          %3017 = vperm.xlu0 %3016, %v2462
          %v3018 = vpop.permute.xlu0 %3017
          %3021 = vset.pattern.permute.xlu0 0
          %3022 = vperm.xlu0 %3021, %v2464
          %v3023 = vpop.permute.xlu0 %3022
          %3026 = vset.pattern.permute.xlu0 0
          %3027 = vperm.xlu0 %3026, %v2466
          %v3028 = vpop.permute.xlu0 %3027
          %3031 = vset.pattern.permute.xlu0 0
          %3032 = vperm.xlu0 %3031, %v2468
          %v3033 = vpop.permute.xlu0 %3032
          %3036 = vset.pattern.permute.xlu0 0
          %3037 = vperm.xlu0 %3036, %v2470
          %v3038 = vpop.permute.xlu0 %3037
          %3041 = vset.pattern.permute.xlu0 0
          %3042 = vperm.xlu0 %3041, %v2472
          %v3043 = vpop.permute.xlu0 %3042
          %3046 = vset.pattern.permute.xlu0 0
          %3047 = vperm.xlu0 %3046, %v2474
          %v3048 = vpop.permute.xlu0 %3047
          %3051 = vset.pattern.permute.xlu0 0
          %3052 = vperm.xlu0 %3051, %v2476
          %v3053 = vpop.permute.xlu0 %3052
          %3056 = vset.pattern.permute.xlu0 0
          %3057 = vperm.xlu0 %3056, %v2478
          %v3058 = vpop.permute.xlu0 %3057
          %3061 = vset.pattern.permute.xlu0 0
          %3062 = vperm.xlu0 %3061, %v2480
          %v3063 = vpop.permute.xlu0 %3062
          %3066 = vset.pattern.permute.xlu0 0
          %3067 = vperm.xlu0 %3066, %v2482
          %v3068 = vpop.permute.xlu0 %3067
          %3071 = vset.pattern.permute.xlu0 0
          %3072 = vperm.xlu0 %3071, %v2484
          %v3073 = vpop.permute.xlu0 %3072
          %3076 = vset.pattern.permute.xlu0 0
          %3077 = vperm.xlu0 %3076, %v2486
          %v3078 = vpop.permute.xlu0 %3077
          %3081 = vset.pattern.permute.xlu0 0
          %3082 = vperm.xlu0 %3081, %v2488
          %v3083 = vpop.permute.xlu0 %3082
          %3086 = vset.pattern.permute.xlu0 0
          %3087 = vperm.xlu0 %3086, %v2490
          %v3088 = vpop.permute.xlu0 %3087
          %3091 = vset.pattern.permute.xlu0 0
          %3092 = vperm.xlu0 %3091, %v2492
          %v3093 = vpop.permute.xlu0 %3092
          %3096 = vset.pattern.permute.xlu0 0
          %3097 = vperm.xlu0 %3096, %v2494
          %v3098 = vpop.permute.xlu0 %3097
          %3101 = vset.pattern.permute.xlu0 0
          %3102 = vperm.xlu0 %3101, %v2496
          %v3103 = vpop.permute.xlu0 %3102
          %3106 = vset.pattern.permute.xlu0 0
          %3107 = vperm.xlu0 %3106, %v2498
          %v3108 = vpop.permute.xlu0 %3107
          %3111 = vset.pattern.permute.xlu0 0
          %3112 = vperm.xlu0 %3111, %v2500
          %v3113 = vpop.permute.xlu0 %3112
          %3116 = vset.pattern.permute.xlu0 0
          %3117 = vperm.xlu0 %3116, %v2502
          %v3118 = vpop.permute.xlu0 %3117
          %3121 = vset.pattern.permute.xlu0 0
          %3122 = vperm.xlu0 %3121, %v2504
          %v3123 = vpop.permute.xlu0 %3122
          %3126 = vset.pattern.permute.xlu0 0
          %3127 = vperm.xlu0 %3126, %v2506
          %v3128 = vpop.permute.xlu0 %3127
          %3131 = vset.pattern.permute.xlu0 0
          %3132 = vperm.xlu0 %3131, %v2508
          %v3133 = vpop.permute.xlu0 %3132
          %3136 = vset.pattern.permute.xlu0 0
          %3137 = vperm.xlu0 %3136, %v2510
          %v3138 = vpop.permute.xlu0 %3137
          %3141 = vset.pattern.permute.xlu0 0
          %3142 = vperm.xlu0 %3141, %v2512
          %v3143 = vpop.permute.xlu0 %3142
          %3146 = vset.pattern.permute.xlu0 0
          %3147 = vperm.xlu0 %3146, %v2514
          %v3148 = vpop.permute.xlu0 %3147
          %3151 = vset.pattern.permute.xlu0 0
          %3152 = vperm.xlu0 %3151, %v2516
          %v3153 = vpop.permute.xlu0 %3152
          %3156 = vset.pattern.permute.xlu0 0
          %3157 = vperm.xlu0 %3156, %v2518
          %v3158 = vpop.permute.xlu0 %3157
          %v3160 = vmul.f32 %v3003, %v2968
          %v3161 = vmul.f32 %v3008, %v2969
          %v3162 = vmul.f32 %v3013, %v2970
          %v3163 = vmul.f32 %v3018, %v2971
          %v3164 = vmul.f32 %v3023, %v2972
          %v3165 = vmul.f32 %v3028, %v2973
          %v3166 = vmul.f32 %v3033, %v2974
          %v3167 = vmul.f32 %v3038, %v2975
          %v3168 = vmul.f32 %v3043, %v2976
          %v3169 = vmul.f32 %v3048, %v2977
          %v3170 = vmul.f32 %v3053, %v2978
          %v3171 = vmul.f32 %v3058, %v2979
          %v3172 = vmul.f32 %v3063, %v2980
          %v3173 = vmul.f32 %v3068, %v2981
          %v3174 = vmul.f32 %v3073, %v2982
          %v3175 = vmul.f32 %v3078, %v2983
          %v3176 = vmul.f32 %v3083, %v2984
          %v3177 = vmul.f32 %v3088, %v2985
          %v3178 = vmul.f32 %v3093, %v2986
          %v3179 = vmul.f32 %v3098, %v2987
          %v3180 = vmul.f32 %v3103, %v2988
          %v3181 = vmul.f32 %v3108, %v2989
          %v3182 = vmul.f32 %v3113, %v2990
          %v3183 = vmul.f32 %v3118, %v2991
          %v3184 = vmul.f32 %v3123, %v2992
          %v3185 = vmul.f32 %v3128, %v2993
          %v3186 = vmul.f32 %v3133, %v2994
          %v3187 = vmul.f32 %v3138, %v2995
          %v3188 = vmul.f32 %v3143, %v2996
          %v3189 = vmul.f32 %v3148, %v2997
          %v3190 = vmul.f32 %v3153, %v2998
          %v3191 = vmul.f32 %v3158, %v2999
          %v3192 = vpack.c.bf16 %v2714, %v2712
          %v3193 = vpack.c.bf16 %v2718, %v2716
          %v3194 = vpack.c.bf16 %v2722, %v2720
          %v3195 = vpack.c.bf16 %v2726, %v2724
          %v3196 = vpack.c.bf16 %v2730, %v2728
          %v3197 = vpack.c.bf16 %v2734, %v2732
          %v3198 = vpack.c.bf16 %v2738, %v2736
          %v3199 = vpack.c.bf16 %v2742, %v2740
          %v3200 = vpack.c.bf16 %v2746, %v2744
          %v3201 = vpack.c.bf16 %v2750, %v2748
          %v3202 = vpack.c.bf16 %v2754, %v2752
          %v3203 = vpack.c.bf16 %v2758, %v2756
          %v3204 = vpack.c.bf16 %v2762, %v2760
          %v3205 = vpack.c.bf16 %v2766, %v2764
          %v3206 = vpack.c.bf16 %v2770, %v2768
          %v3207 = vpack.c.bf16 %v2774, %v2772
          %v3208 = vld [vmem:[%s1320] sm:$0xf]
          %v3209 = vld [vmem:[%s1320 + $0x4] sm:$0xf]
          %v3210 = vld [vmem:[%s1320 + $0x8] sm:$0xf]
          %v3211 = vld [vmem:[%s1320 + $0xc] sm:$0xf]
          %v3212 = vld [vmem:[%s1320 + $0x10] sm:$0xf]
          %v3213 = vld [vmem:[%s1320 + $0x14] sm:$0xf]
          %v3214 = vld [vmem:[%s1320 + $0x18] sm:$0xf]
          %v3215 = vld [vmem:[%s1320 + $0x1c] sm:$0xf]
          %v3216 = vld [vmem:[%s1320 + $0x20] sm:$0xf]
          %v3217 = vld [vmem:[%s1320 + $0x24] sm:$0xf]
          %v3218 = vld [vmem:[%s1320 + $0x28] sm:$0xf]
          %v3219 = vld [vmem:[%s1320 + $0x2c] sm:$0xf]
          %v3220 = vld [vmem:[%s1320 + $0x30] sm:$0xf]
          %v3221 = vld [vmem:[%s1320 + $0x34] sm:$0xf]
          %v3222 = vld [vmem:[%s1320 + $0x38] sm:$0xf]
          %v3223 = vld [vmem:[%s1320 + $0x3c] sm:$0xf]
          %v3224 = vld [vmem:[%s1320 + $0x40] sm:$0xf]
          %v3225 = vld [vmem:[%s1320 + $0x44] sm:$0xf]
          %v3226 = vld [vmem:[%s1320 + $0x48] sm:$0xf]
          %v3227 = vld [vmem:[%s1320 + $0x4c] sm:$0xf]
          %v3228 = vld [vmem:[%s1320 + $0x50] sm:$0xf]
          %v3229 = vld [vmem:[%s1320 + $0x54] sm:$0xf]
          %v3230 = vld [vmem:[%s1320 + $0x58] sm:$0xf]
          %v3231 = vld [vmem:[%s1320 + $0x5c] sm:$0xf]
          %v3232 = vld [vmem:[%s1320 + $0x60] sm:$0xf]
          %v3233 = vld [vmem:[%s1320 + $0x64] sm:$0xf]
          %v3234 = vld [vmem:[%s1320 + $0x68] sm:$0xf]
          %v3235 = vld [vmem:[%s1320 + $0x6c] sm:$0xf]
          %v3236 = vld [vmem:[%s1320 + $0x70] sm:$0xf]
          %v3237 = vld [vmem:[%s1320 + $0x74] sm:$0xf]
          %v3238 = vld [vmem:[%s1320 + $0x78] sm:$0xf]
          %v3239 = vld [vmem:[%s1320 + $0x7c] sm:$0xf]
          %v3240 = vld [vmem:[%s1320 + $0x80] sm:$0xf]
          %v3241 = vld [vmem:[%s1320 + $0x84] sm:$0xf]
          %v3242 = vld [vmem:[%s1320 + $0x88] sm:$0xf]
          %v3243 = vld [vmem:[%s1320 + $0x8c] sm:$0xf]
          %v3244 = vld [vmem:[%s1320 + $0x90] sm:$0xf]
          %v3245 = vld [vmem:[%s1320 + $0x94] sm:$0xf]
          %v3246 = vld [vmem:[%s1320 + $0x98] sm:$0xf]
          %v3247 = vld [vmem:[%s1320 + $0x9c] sm:$0xf]
          %v3248 = vld [vmem:[%s1320 + $0xa0] sm:$0xf]
          %v3249 = vld [vmem:[%s1320 + $0xa4] sm:$0xf]
          %v3250 = vld [vmem:[%s1320 + $0xa8] sm:$0xf]
          %v3251 = vld [vmem:[%s1320 + $0xac] sm:$0xf]
          %v3252 = vld [vmem:[%s1320 + $0xb0] sm:$0xf]
          %v3253 = vld [vmem:[%s1320 + $0xb4] sm:$0xf]
          %v3254 = vld [vmem:[%s1320 + $0xb8] sm:$0xf]
          %v3255 = vld [vmem:[%s1320 + $0xbc] sm:$0xf]
          %v3256 = vld [vmem:[%s1320 + $0xc0] sm:$0xf]
          %v3257 = vld [vmem:[%s1320 + $0xc4] sm:$0xf]
          %v3258 = vld [vmem:[%s1320 + $0xc8] sm:$0xf]
          %v3259 = vld [vmem:[%s1320 + $0xcc] sm:$0xf]
          %v3260 = vld [vmem:[%s1320 + $0xd0] sm:$0xf]
          %v3261 = vld [vmem:[%s1320 + $0xd4] sm:$0xf]
          %v3262 = vld [vmem:[%s1320 + $0xd8] sm:$0xf]
          %v3263 = vld [vmem:[%s1320 + $0xdc] sm:$0xf]
          %v3264 = vld [vmem:[%s1320 + $0xe0] sm:$0xf]
          %v3265 = vld [vmem:[%s1320 + $0xe4] sm:$0xf]
          %v3266 = vld [vmem:[%s1320 + $0xe8] sm:$0xf]
          %v3267 = vld [vmem:[%s1320 + $0xec] sm:$0xf]
          %v3268 = vld [vmem:[%s1320 + $0xf0] sm:$0xf]
          %v3269 = vld [vmem:[%s1320 + $0xf4] sm:$0xf]
          %v3270 = vld [vmem:[%s1320 + $0xf8] sm:$0xf]
          %v3271 = vld [vmem:[%s1320 + $0xfc] sm:$0xf]
          %v3288 = vunpack.c.l.b16 %v3208
          %v3289 = vunpack.c.l.b16 %v3209
          %v3290 = vunpack.c.l.b16 %v3210
          %v3291 = vunpack.c.l.b16 %v3211
          %v3292 = vunpack.c.l.b16 %v3212
          %v3293 = vunpack.c.l.b16 %v3213
          %v3294 = vunpack.c.l.b16 %v3214
          %v3295 = vunpack.c.l.b16 %v3215
          %v3296 = vunpack.c.l.b16 %v3216
          %v3297 = vunpack.c.l.b16 %v3217
          %v3298 = vunpack.c.l.b16 %v3218
          %v3299 = vunpack.c.l.b16 %v3219
          %v3300 = vunpack.c.l.b16 %v3220
          %v3301 = vunpack.c.l.b16 %v3221
          %v3302 = vunpack.c.l.b16 %v3222
          %v3303 = vunpack.c.l.b16 %v3223
          %v3304 = vpack.c.b16 %v3289, %v3288
          %v3305 = vpack.c.b16 %v3291, %v3290
          %v3306 = vpack.c.b16 %v3293, %v3292
          %v3307 = vpack.c.b16 %v3295, %v3294
          %v3308 = vpack.c.b16 %v3297, %v3296
          %v3309 = vpack.c.b16 %v3299, %v3298
          %v3310 = vpack.c.b16 %v3301, %v3300
          %v3311 = vpack.c.b16 %v3303, %v3302
          %3320 = vmatprep.subr.bf16.mxu0 0
          %3321 = vmatpush1.bf16.msra.mxu0 %v3311
          %3322 = vmatprep.subr.bf16.mxu0 0
          %3323 = vmatpush1.bf16.msra.mxu0 %v3310
          %3324 = vmatprep.subr.bf16.mxu0 0
          %3325 = vmatpush1.bf16.msra.mxu0 %v3309
          %3326 = vmatprep.subr.bf16.mxu0 0
          %3327 = vmatpush1.bf16.msra.mxu0 %v3308
          %3328 = vmatprep.subr.bf16.mxu0 0
          %3329 = vmatpush1.bf16.msra.mxu0 %v3307
          %3330 = vmatprep.subr.bf16.mxu0 0
          %3331 = vmatpush1.bf16.msra.mxu0 %v3306
          %3332 = vmatprep.subr.bf16.mxu0 0
          %3333 = vmatpush1.bf16.msra.mxu0 %v3305
          %3334 = vmatprep.subr.bf16.mxu0 0
          %3335 = vmatpush1.bf16.msra.mxu0 %v3304
          %3336 = vmatprep.subr.bf16.mxu0 0
          %3337 = vmatpush2.bf16.msra.mxu0 0
          %3338 = vmatprep.subr.bf16.mxu0 0
          %3339 = vmatpush2.bf16.msra.mxu0 0
          %3340 = vmatprep.subr.bf16.mxu0 0
          %3341 = vmatpush2.bf16.msra.mxu0 0
          %3342 = vmatprep.subr.bf16.mxu0 0
          %3343 = vmatpush2.bf16.msra.mxu0 0
          %3344 = vmatprep.subr.bf16.mxu0 0
          %3345 = vmatpush2.bf16.msra.mxu0 0
          %3346 = vmatprep.subr.bf16.mxu0 0
          %3347 = vmatpush2.bf16.msra.mxu0 0
          %3348 = vmatprep.subr.bf16.mxu0 0
          %3349 = vmatpush2.bf16.msra.mxu0 0
          %3350 = vmatprep.subr.bf16.mxu0 0
          %3351 = vmatpush2.bf16.msra.mxu0 0
          %3352 = vmatprep.mubr.bf16.mxu0 0
          %3353 = vmatmul.mubr.bf16.gmra.mxu0 %v3192
          %v3354 = vpop.f32.mrf.mxu0
          %v3355 = vadd.f32 0.0, %v3354
          %v3356 = vpop.f32.mrf.mxu0
          %v3357 = vpop.f32.mrf.mxu0
          %v3358 = vadd.f32 0.0, %v3357
          %v3359 = vpop.f32.mrf.mxu0
          %3360 = vmatprep.mubr.bf16.mxu0 0
          %3361 = vmatmul.mubr.bf16.gmra.mxu0 %v3193
          %v3362 = vpop.f32.mrf.mxu0
          %v3363 = vadd.f32 0.0, %v3362
          %v3364 = vpop.f32.mrf.mxu0
          %v3365 = vpop.f32.mrf.mxu0
          %v3366 = vadd.f32 0.0, %v3365
          %v3367 = vpop.f32.mrf.mxu0
          %3368 = vmatprep.mubr.bf16.mxu0 0
          %3369 = vmatmul.mubr.bf16.gmra.mxu0 %v3194
          %v3370 = vpop.f32.mrf.mxu0
          %v3371 = vadd.f32 0.0, %v3370
          %v3372 = vpop.f32.mrf.mxu0
          %v3373 = vpop.f32.mrf.mxu0
          %v3374 = vadd.f32 0.0, %v3373
          %v3375 = vpop.f32.mrf.mxu0
          %3376 = vmatprep.mubr.bf16.mxu0 0
          %3377 = vmatmul.mubr.bf16.gmra.mxu0 %v3195
          %v3378 = vpop.f32.mrf.mxu0
          %v3379 = vadd.f32 0.0, %v3378
          %v3380 = vpop.f32.mrf.mxu0
          %v3381 = vpop.f32.mrf.mxu0
          %v3382 = vadd.f32 0.0, %v3381
          %v3383 = vpop.f32.mrf.mxu0
          %3384 = vdwg.mxu0
          %v3401 = vunpack.c.l.b16 %v3224
          %v3402 = vunpack.c.l.b16 %v3225
          %v3403 = vunpack.c.l.b16 %v3226
          %v3404 = vunpack.c.l.b16 %v3227
          %v3405 = vunpack.c.l.b16 %v3228
          %v3406 = vunpack.c.l.b16 %v3229
          %v3407 = vunpack.c.l.b16 %v3230
          %v3408 = vunpack.c.l.b16 %v3231
          %v3409 = vunpack.c.l.b16 %v3232
          %v3410 = vunpack.c.l.b16 %v3233
          %v3411 = vunpack.c.l.b16 %v3234
          %v3412 = vunpack.c.l.b16 %v3235
          %v3413 = vunpack.c.l.b16 %v3236
          %v3414 = vunpack.c.l.b16 %v3237
          %v3415 = vunpack.c.l.b16 %v3238
          %v3416 = vunpack.c.l.b16 %v3239
          %v3417 = vpack.c.b16 %v3402, %v3401
          %v3418 = vpack.c.b16 %v3404, %v3403
          %v3419 = vpack.c.b16 %v3406, %v3405
          %v3420 = vpack.c.b16 %v3408, %v3407
          %v3421 = vpack.c.b16 %v3410, %v3409
          %v3422 = vpack.c.b16 %v3412, %v3411
          %v3423 = vpack.c.b16 %v3414, %v3413
          %v3424 = vpack.c.b16 %v3416, %v3415
          %3433 = vmatprep.subr.bf16.mxu0 0
          %3434 = vmatpush1.bf16.msra.mxu0 %v3424
          %3435 = vmatprep.subr.bf16.mxu0 0
          %3436 = vmatpush1.bf16.msra.mxu0 %v3423
          %3437 = vmatprep.subr.bf16.mxu0 0
          %3438 = vmatpush1.bf16.msra.mxu0 %v3422
          %3439 = vmatprep.subr.bf16.mxu0 0
          %3440 = vmatpush1.bf16.msra.mxu0 %v3421
          %3441 = vmatprep.subr.bf16.mxu0 0
          %3442 = vmatpush1.bf16.msra.mxu0 %v3420
          %3443 = vmatprep.subr.bf16.mxu0 0
          %3444 = vmatpush1.bf16.msra.mxu0 %v3419
          %3445 = vmatprep.subr.bf16.mxu0 0
          %3446 = vmatpush1.bf16.msra.mxu0 %v3418
          %3447 = vmatprep.subr.bf16.mxu0 0
          %3448 = vmatpush1.bf16.msra.mxu0 %v3417
          %3449 = vmatprep.subr.bf16.mxu0 0
          %3450 = vmatpush2.bf16.msra.mxu0 0
          %3451 = vmatprep.subr.bf16.mxu0 0
          %3452 = vmatpush2.bf16.msra.mxu0 0
          %3453 = vmatprep.subr.bf16.mxu0 0
          %3454 = vmatpush2.bf16.msra.mxu0 0
          %3455 = vmatprep.subr.bf16.mxu0 0
          %3456 = vmatpush2.bf16.msra.mxu0 0
          %3457 = vmatprep.subr.bf16.mxu0 0
          %3458 = vmatpush2.bf16.msra.mxu0 0
          %3459 = vmatprep.subr.bf16.mxu0 0
          %3460 = vmatpush2.bf16.msra.mxu0 0
          %3461 = vmatprep.subr.bf16.mxu0 0
          %3462 = vmatpush2.bf16.msra.mxu0 0
          %3463 = vmatprep.subr.bf16.mxu0 0
          %3464 = vmatpush2.bf16.msra.mxu0 0
          %3465 = vmatprep.mubr.bf16.mxu0 0
          %3466 = vmatmul.mubr.bf16.gmra.mxu0 %v3196
          %v3467 = vpop.f32.mrf.mxu0
          %v3468 = vadd.f32 0.0, %v3467
          %v3469 = vpop.f32.mrf.mxu0
          %v3470 = vpop.f32.mrf.mxu0
          %v3471 = vadd.f32 0.0, %v3470
          %v3472 = vpop.f32.mrf.mxu0
          %3473 = vmatprep.mubr.bf16.mxu0 0
          %3474 = vmatmul.mubr.bf16.gmra.mxu0 %v3197
          %v3475 = vpop.f32.mrf.mxu0
          %v3476 = vadd.f32 0.0, %v3475
          %v3477 = vpop.f32.mrf.mxu0
          %v3478 = vpop.f32.mrf.mxu0
          %v3479 = vadd.f32 0.0, %v3478
          %v3480 = vpop.f32.mrf.mxu0
          %3481 = vmatprep.mubr.bf16.mxu0 0
          %3482 = vmatmul.mubr.bf16.gmra.mxu0 %v3198
          %v3483 = vpop.f32.mrf.mxu0
          %v3484 = vadd.f32 0.0, %v3483
          %v3485 = vpop.f32.mrf.mxu0
          %v3486 = vpop.f32.mrf.mxu0
          %v3487 = vadd.f32 0.0, %v3486
          %v3488 = vpop.f32.mrf.mxu0
          %3489 = vmatprep.mubr.bf16.mxu0 0
          %3490 = vmatmul.mubr.bf16.gmra.mxu0 %v3199
          %v3491 = vpop.f32.mrf.mxu0
          %v3492 = vadd.f32 0.0, %v3491
          %v3493 = vpop.f32.mrf.mxu0
          %v3494 = vpop.f32.mrf.mxu0
          %v3495 = vadd.f32 0.0, %v3494
          %v3496 = vpop.f32.mrf.mxu0
          %3497 = vdwg.mxu0
          %v3514 = vunpack.c.l.b16 %v3240
          %v3515 = vunpack.c.l.b16 %v3241
          %v3516 = vunpack.c.l.b16 %v3242
          %v3517 = vunpack.c.l.b16 %v3243
          %v3518 = vunpack.c.l.b16 %v3244
          %v3519 = vunpack.c.l.b16 %v3245
          %v3520 = vunpack.c.l.b16 %v3246
          %v3521 = vunpack.c.l.b16 %v3247
          %v3522 = vunpack.c.l.b16 %v3248
          %v3523 = vunpack.c.l.b16 %v3249
          %v3524 = vunpack.c.l.b16 %v3250
          %v3525 = vunpack.c.l.b16 %v3251
          %v3526 = vunpack.c.l.b16 %v3252
          %v3527 = vunpack.c.l.b16 %v3253
          %v3528 = vunpack.c.l.b16 %v3254
          %v3529 = vunpack.c.l.b16 %v3255
          %v3530 = vpack.c.b16 %v3515, %v3514
          %v3531 = vpack.c.b16 %v3517, %v3516
          %v3532 = vpack.c.b16 %v3519, %v3518
          %v3533 = vpack.c.b16 %v3521, %v3520
          %v3534 = vpack.c.b16 %v3523, %v3522
          %v3535 = vpack.c.b16 %v3525, %v3524
          %v3536 = vpack.c.b16 %v3527, %v3526
          %v3537 = vpack.c.b16 %v3529, %v3528
          %3546 = vmatprep.subr.bf16.mxu0 0
          %3547 = vmatpush1.bf16.msra.mxu0 %v3537
          %3548 = vmatprep.subr.bf16.mxu0 0
          %3549 = vmatpush1.bf16.msra.mxu0 %v3536
          %3550 = vmatprep.subr.bf16.mxu0 0
          %3551 = vmatpush1.bf16.msra.mxu0 %v3535
          %3552 = vmatprep.subr.bf16.mxu0 0
          %3553 = vmatpush1.bf16.msra.mxu0 %v3534
          %3554 = vmatprep.subr.bf16.mxu0 0
          %3555 = vmatpush1.bf16.msra.mxu0 %v3533
          %3556 = vmatprep.subr.bf16.mxu0 0
          %3557 = vmatpush1.bf16.msra.mxu0 %v3532
          %3558 = vmatprep.subr.bf16.mxu0 0
          %3559 = vmatpush1.bf16.msra.mxu0 %v3531
          %3560 = vmatprep.subr.bf16.mxu0 0
          %3561 = vmatpush1.bf16.msra.mxu0 %v3530
          %3562 = vmatprep.subr.bf16.mxu0 0
          %3563 = vmatpush2.bf16.msra.mxu0 0
          %3564 = vmatprep.subr.bf16.mxu0 0
          %3565 = vmatpush2.bf16.msra.mxu0 0
          %3566 = vmatprep.subr.bf16.mxu0 0
          %3567 = vmatpush2.bf16.msra.mxu0 0
          %3568 = vmatprep.subr.bf16.mxu0 0
          %3569 = vmatpush2.bf16.msra.mxu0 0
          %3570 = vmatprep.subr.bf16.mxu0 0
          %3571 = vmatpush2.bf16.msra.mxu0 0
          %3572 = vmatprep.subr.bf16.mxu0 0
          %3573 = vmatpush2.bf16.msra.mxu0 0
          %3574 = vmatprep.subr.bf16.mxu0 0
          %3575 = vmatpush2.bf16.msra.mxu0 0
          %3576 = vmatprep.subr.bf16.mxu0 0
          %3577 = vmatpush2.bf16.msra.mxu0 0
          %3578 = vmatprep.mubr.bf16.mxu0 0
          %3579 = vmatmul.mubr.bf16.gmra.mxu0 %v3200
          %v3580 = vpop.f32.mrf.mxu0
          %v3581 = vadd.f32 0.0, %v3580
          %v3582 = vpop.f32.mrf.mxu0
          %v3583 = vpop.f32.mrf.mxu0
          %v3584 = vadd.f32 0.0, %v3583
          %v3585 = vpop.f32.mrf.mxu0
          %3586 = vmatprep.mubr.bf16.mxu0 0
          %3587 = vmatmul.mubr.bf16.gmra.mxu0 %v3201
          %v3588 = vpop.f32.mrf.mxu0
          %v3589 = vadd.f32 0.0, %v3588
          %v3590 = vpop.f32.mrf.mxu0
          %v3591 = vpop.f32.mrf.mxu0
          %v3592 = vadd.f32 0.0, %v3591
          %v3593 = vpop.f32.mrf.mxu0
          %3594 = vmatprep.mubr.bf16.mxu0 0
          %3595 = vmatmul.mubr.bf16.gmra.mxu0 %v3202
          %v3596 = vpop.f32.mrf.mxu0
          %v3597 = vadd.f32 0.0, %v3596
          %v3598 = vpop.f32.mrf.mxu0
          %v3599 = vpop.f32.mrf.mxu0
          %v3600 = vadd.f32 0.0, %v3599
          %v3601 = vpop.f32.mrf.mxu0
          %3602 = vmatprep.mubr.bf16.mxu0 0
          %3603 = vmatmul.mubr.bf16.gmra.mxu0 %v3203
          %v3604 = vpop.f32.mrf.mxu0
          %v3605 = vadd.f32 0.0, %v3604
          %v3606 = vpop.f32.mrf.mxu0
          %v3607 = vpop.f32.mrf.mxu0
          %v3608 = vadd.f32 0.0, %v3607
          %v3609 = vpop.f32.mrf.mxu0
          %3610 = vdwg.mxu0
          %v3627 = vunpack.c.l.b16 %v3256
          %v3628 = vunpack.c.l.b16 %v3257
          %v3629 = vunpack.c.l.b16 %v3258
          %v3630 = vunpack.c.l.b16 %v3259
          %v3631 = vunpack.c.l.b16 %v3260
          %v3632 = vunpack.c.l.b16 %v3261
          %v3633 = vunpack.c.l.b16 %v3262
          %v3634 = vunpack.c.l.b16 %v3263
          %v3635 = vunpack.c.l.b16 %v3264
          %v3636 = vunpack.c.l.b16 %v3265
          %v3637 = vunpack.c.l.b16 %v3266
          %v3638 = vunpack.c.l.b16 %v3267
          %v3639 = vunpack.c.l.b16 %v3268
          %v3640 = vunpack.c.l.b16 %v3269
          %v3641 = vunpack.c.l.b16 %v3270
          %v3642 = vunpack.c.l.b16 %v3271
          %v3643 = vpack.c.b16 %v3628, %v3627
          %v3644 = vpack.c.b16 %v3630, %v3629
          %v3645 = vpack.c.b16 %v3632, %v3631
          %v3646 = vpack.c.b16 %v3634, %v3633
          %v3647 = vpack.c.b16 %v3636, %v3635
          %v3648 = vpack.c.b16 %v3638, %v3637
          %v3649 = vpack.c.b16 %v3640, %v3639
          %v3650 = vpack.c.b16 %v3642, %v3641
          %3659 = vmatprep.subr.bf16.mxu0 0
          %3660 = vmatpush1.bf16.msra.mxu0 %v3650
          %3661 = vmatprep.subr.bf16.mxu0 0
          %3662 = vmatpush1.bf16.msra.mxu0 %v3649
          %3663 = vmatprep.subr.bf16.mxu0 0
          %3664 = vmatpush1.bf16.msra.mxu0 %v3648
          %3665 = vmatprep.subr.bf16.mxu0 0
          %3666 = vmatpush1.bf16.msra.mxu0 %v3647
          %3667 = vmatprep.subr.bf16.mxu0 0
          %3668 = vmatpush1.bf16.msra.mxu0 %v3646
          %3669 = vmatprep.subr.bf16.mxu0 0
          %3670 = vmatpush1.bf16.msra.mxu0 %v3645
          %3671 = vmatprep.subr.bf16.mxu0 0
          %3672 = vmatpush1.bf16.msra.mxu0 %v3644
          %3673 = vmatprep.subr.bf16.mxu0 0
          %3674 = vmatpush1.bf16.msra.mxu0 %v3643
          %3675 = vmatprep.subr.bf16.mxu0 0
          %3676 = vmatpush2.bf16.msra.mxu0 0
          %3677 = vmatprep.subr.bf16.mxu0 0
          %3678 = vmatpush2.bf16.msra.mxu0 0
          %3679 = vmatprep.subr.bf16.mxu0 0
          %3680 = vmatpush2.bf16.msra.mxu0 0
          %3681 = vmatprep.subr.bf16.mxu0 0
          %3682 = vmatpush2.bf16.msra.mxu0 0
          %3683 = vmatprep.subr.bf16.mxu0 0
          %3684 = vmatpush2.bf16.msra.mxu0 0
          %3685 = vmatprep.subr.bf16.mxu0 0
          %3686 = vmatpush2.bf16.msra.mxu0 0
          %3687 = vmatprep.subr.bf16.mxu0 0
          %3688 = vmatpush2.bf16.msra.mxu0 0
          %3689 = vmatprep.subr.bf16.mxu0 0
          %3690 = vmatpush2.bf16.msra.mxu0 0
          %3691 = vmatprep.mubr.bf16.mxu0 0
          %3692 = vmatmul.mubr.bf16.gmra.mxu0 %v3204
          %v3693 = vpop.f32.mrf.mxu0
          %v3694 = vadd.f32 0.0, %v3693
          %v3695 = vpop.f32.mrf.mxu0
          %v3696 = vpop.f32.mrf.mxu0
          %v3697 = vadd.f32 0.0, %v3696
          %v3698 = vpop.f32.mrf.mxu0
          %3699 = vmatprep.mubr.bf16.mxu0 0
          %3700 = vmatmul.mubr.bf16.gmra.mxu0 %v3205
          %v3701 = vpop.f32.mrf.mxu0
          %v3702 = vadd.f32 0.0, %v3701
          %v3703 = vpop.f32.mrf.mxu0
          %v3704 = vpop.f32.mrf.mxu0
          %v3705 = vadd.f32 0.0, %v3704
          %v3706 = vpop.f32.mrf.mxu0
          %3707 = vmatprep.mubr.bf16.mxu0 0
          %3708 = vmatmul.mubr.bf16.gmra.mxu0 %v3206
          %v3709 = vpop.f32.mrf.mxu0
          %v3710 = vadd.f32 0.0, %v3709
          %v3711 = vpop.f32.mrf.mxu0
          %v3712 = vpop.f32.mrf.mxu0
          %v3713 = vadd.f32 0.0, %v3712
          %v3714 = vpop.f32.mrf.mxu0
          %3715 = vmatprep.mubr.bf16.mxu0 0
          %3716 = vmatmul.mubr.bf16.gmra.mxu0 %v3207
          %v3717 = vpop.f32.mrf.mxu0
          %v3718 = vadd.f32 0.0, %v3717
          %v3719 = vpop.f32.mrf.mxu0
          %v3720 = vpop.f32.mrf.mxu0
          %v3721 = vadd.f32 0.0, %v3720
          %v3722 = vpop.f32.mrf.mxu0
          %3723 = vdwg.mxu0
          %v3724 = vadd.f32 %v3160, %v3355
          %v3725 = vadd.f32 %v3161, %v3358
          %v3726 = vadd.f32 %v3162, %v3363
          %v3727 = vadd.f32 %v3163, %v3366
          %v3728 = vadd.f32 %v3164, %v3371
          %v3729 = vadd.f32 %v3165, %v3374
          %v3730 = vadd.f32 %v3166, %v3379
          %v3731 = vadd.f32 %v3167, %v3382
          %v3732 = vadd.f32 %v3168, %v3468
          %v3733 = vadd.f32 %v3169, %v3471
          %v3734 = vadd.f32 %v3170, %v3476
          %v3735 = vadd.f32 %v3171, %v3479
          %v3736 = vadd.f32 %v3172, %v3484
          %v3737 = vadd.f32 %v3173, %v3487
          %v3738 = vadd.f32 %v3174, %v3492
          %v3739 = vadd.f32 %v3175, %v3495
          %v3740 = vadd.f32 %v3176, %v3581
          %v3741 = vadd.f32 %v3177, %v3584
          %v3742 = vadd.f32 %v3178, %v3589
          %v3743 = vadd.f32 %v3179, %v3592
          %v3744 = vadd.f32 %v3180, %v3597
          %v3745 = vadd.f32 %v3181, %v3600
          %v3746 = vadd.f32 %v3182, %v3605
          %v3747 = vadd.f32 %v3183, %v3608
          %v3748 = vadd.f32 %v3184, %v3694
          %v3749 = vadd.f32 %v3185, %v3697
          %v3750 = vadd.f32 %v3186, %v3702
          %v3751 = vadd.f32 %v3187, %v3705
          %v3752 = vadd.f32 %v3188, %v3710
          %v3753 = vadd.f32 %v3189, %v3713
          %v3754 = vadd.f32 %v3190, %v3718
          %v3755 = vadd.f32 %v3191, %v3721
          %3756 = vst.msk [vmem:[#allocation4] sm:$0xff] %vm1710, %v3724
          %3757 = vst.msk [vmem:[#allocation4 + $0x8] sm:$0xff] %vm1710, %v3725
          %3758 = vst.msk [vmem:[#allocation4 + $0x10] sm:$0xff] %vm1710, %v3726
          %3759 = vst.msk [vmem:[#allocation4 + $0x18] sm:$0xff] %vm1710, %v3727
          %3760 = vst.msk [vmem:[#allocation4 + $0x20] sm:$0xff] %vm1710, %v3728
          %3761 = vst.msk [vmem:[#allocation4 + $0x28] sm:$0xff] %vm1710, %v3729
          %3762 = vst.msk [vmem:[#allocation4 + $0x30] sm:$0xff] %vm1710, %v3730
          %3763 = vst.msk [vmem:[#allocation4 + $0x38] sm:$0xff] %vm1710, %v3731
          %3764 = vst.msk [vmem:[#allocation4 + $0x40] sm:$0xff] %vm1710, %v3732
          %3765 = vst.msk [vmem:[#allocation4 + $0x48] sm:$0xff] %vm1710, %v3733
          %3766 = vst.msk [vmem:[#allocation4 + $0x50] sm:$0xff] %vm1710, %v3734
          %3767 = vst.msk [vmem:[#allocation4 + $0x58] sm:$0xff] %vm1710, %v3735
          %3768 = vst.msk [vmem:[#allocation4 + $0x60] sm:$0xff] %vm1710, %v3736
          %3769 = vst.msk [vmem:[#allocation4 + $0x68] sm:$0xff] %vm1710, %v3737
          %3770 = vst.msk [vmem:[#allocation4 + $0x70] sm:$0xff] %vm1710, %v3738
          %3771 = vst.msk [vmem:[#allocation4 + $0x78] sm:$0xff] %vm1710, %v3739
          %3772 = vst.msk [vmem:[#allocation4 + $0x80] sm:$0xff] %vm1710, %v3740
          %3773 = vst.msk [vmem:[#allocation4 + $0x88] sm:$0xff] %vm1710, %v3741
          %3774 = vst.msk [vmem:[#allocation4 + $0x90] sm:$0xff] %vm1710, %v3742
          %3775 = vst.msk [vmem:[#allocation4 + $0x98] sm:$0xff] %vm1710, %v3743
          %3776 = vst.msk [vmem:[#allocation4 + $0xa0] sm:$0xff] %vm1710, %v3744
          %3777 = vst.msk [vmem:[#allocation4 + $0xa8] sm:$0xff] %vm1710, %v3745
          %3778 = vst.msk [vmem:[#allocation4 + $0xb0] sm:$0xff] %vm1710, %v3746
          %3779 = vst.msk [vmem:[#allocation4 + $0xb8] sm:$0xff] %vm1710, %v3747
          %3780 = vst.msk [vmem:[#allocation4 + $0xc0] sm:$0xff] %vm1710, %v3748
          %3781 = vst.msk [vmem:[#allocation4 + $0xc8] sm:$0xff] %vm1710, %v3749
          %3782 = vst.msk [vmem:[#allocation4 + $0xd0] sm:$0xff] %vm1710, %v3750
          %3783 = vst.msk [vmem:[#allocation4 + $0xd8] sm:$0xff] %vm1710, %v3751
          %3784 = vst.msk [vmem:[#allocation4 + $0xe0] sm:$0xff] %vm1710, %v3752
          %3785 = vst.msk [vmem:[#allocation4 + $0xe8] sm:$0xff] %vm1710, %v3753
          %3786 = vst.msk [vmem:[#allocation4 + $0xf0] sm:$0xff] %vm1710, %v3754
          %3787 = vst.msk [vmem:[#allocation4 + $0xf8] sm:$0xff] %vm1710, %v3755
          %3788 = vst.msk [vmem:[#allocation2] sm:$0xff] %vm2935, %v2391
          %3789 = vst.msk [vmem:[#allocation2 + $0x8] sm:$0xff] %vm2935, %v2392
          %3790 = vst.msk [vmem:[#allocation2 + $0x10] sm:$0xff] %vm2935, %v2393
          %3791 = vst.msk [vmem:[#allocation2 + $0x18] sm:$0xff] %vm2935, %v2394
          %3792 = vst.msk [vmem:[#allocation2 + $0x20] sm:$0xff] %vm2935, %v2395
          %3793 = vst.msk [vmem:[#allocation2 + $0x28] sm:$0xff] %vm2935, %v2396
          %3794 = vst.msk [vmem:[#allocation2 + $0x30] sm:$0xff] %vm2935, %v2397
          %3795 = vst.msk [vmem:[#allocation2 + $0x38] sm:$0xff] %vm2935, %v2398
          %3796 = vst.msk [vmem:[#allocation2 + $0x40] sm:$0xff] %vm2935, %v2399
          %3797 = vst.msk [vmem:[#allocation2 + $0x48] sm:$0xff] %vm2935, %v2400
          %3798 = vst.msk [vmem:[#allocation2 + $0x50] sm:$0xff] %vm2935, %v2401
          %3799 = vst.msk [vmem:[#allocation2 + $0x58] sm:$0xff] %vm2935, %v2402
          %3800 = vst.msk [vmem:[#allocation2 + $0x60] sm:$0xff] %vm2935, %v2403
          %3801 = vst.msk [vmem:[#allocation2 + $0x68] sm:$0xff] %vm2935, %v2404
          %3802 = vst.msk [vmem:[#allocation2 + $0x70] sm:$0xff] %vm2935, %v2405
          %3803 = vst.msk [vmem:[#allocation2 + $0x78] sm:$0xff] %vm2935, %v2406
          %3804 = vst.msk [vmem:[#allocation2 + $0x80] sm:$0xff] %vm2935, %v2407
          %3805 = vst.msk [vmem:[#allocation2 + $0x88] sm:$0xff] %vm2935, %v2408
          %3806 = vst.msk [vmem:[#allocation2 + $0x90] sm:$0xff] %vm2935, %v2409
          %3807 = vst.msk [vmem:[#allocation2 + $0x98] sm:$0xff] %vm2935, %v2410
          %3808 = vst.msk [vmem:[#allocation2 + $0xa0] sm:$0xff] %vm2935, %v2411
          %3809 = vst.msk [vmem:[#allocation2 + $0xa8] sm:$0xff] %vm2935, %v2412
          %3810 = vst.msk [vmem:[#allocation2 + $0xb0] sm:$0xff] %vm2935, %v2413
          %3811 = vst.msk [vmem:[#allocation2 + $0xb8] sm:$0xff] %vm2935, %v2414
          %3812 = vst.msk [vmem:[#allocation2 + $0xc0] sm:$0xff] %vm2935, %v2415
          %3813 = vst.msk [vmem:[#allocation2 + $0xc8] sm:$0xff] %vm2935, %v2416
          %3814 = vst.msk [vmem:[#allocation2 + $0xd0] sm:$0xff] %vm2935, %v2417
          %3815 = vst.msk [vmem:[#allocation2 + $0xd8] sm:$0xff] %vm2935, %v2418
          %3816 = vst.msk [vmem:[#allocation2 + $0xe0] sm:$0xff] %vm2935, %v2419
          %3817 = vst.msk [vmem:[#allocation2 + $0xe8] sm:$0xff] %vm2935, %v2420
          %3818 = vst.msk [vmem:[#allocation2 + $0xf0] sm:$0xff] %vm2935, %v2421
          %3819 = vst.msk [vmem:[#allocation2 + $0xf8] sm:$0xff] %vm2935, %v2422
        $region249: #{multi_layer_homo_gt.5} parent=224 // pred_fallthru
          _
        %p3820 = scmp.eq.s32.totalorder %s38, 1
        // Predicated region
        $region250: #{multi_layer_homo_gt.5} parent=224 // pred_check
          %p3821 = pneg %p3820
        $region251: #{multi_layer_homo_gt.5} parent=224 // pred_check_branch
          %3823 = sbr.rel (%p3821) target = $region253
        $region252: #{multi_layer_homo_gt.5} parent=224 // pred_region
          %v3824 = vld [vmem:[#allocation4] sm:$0xff]
          %v3825 = vld [vmem:[#allocation4 + $0x8] sm:$0xff]
          %v3826 = vld [vmem:[#allocation4 + $0x10] sm:$0xff]
          %v3827 = vld [vmem:[#allocation4 + $0x18] sm:$0xff]
          %v3828 = vld [vmem:[#allocation4 + $0x20] sm:$0xff]
          %v3829 = vld [vmem:[#allocation4 + $0x28] sm:$0xff]
          %v3830 = vld [vmem:[#allocation4 + $0x30] sm:$0xff]
          %v3831 = vld [vmem:[#allocation4 + $0x38] sm:$0xff]
          %v3832 = vld [vmem:[#allocation4 + $0x40] sm:$0xff]
          %v3833 = vld [vmem:[#allocation4 + $0x48] sm:$0xff]
          %v3834 = vld [vmem:[#allocation4 + $0x50] sm:$0xff]
          %v3835 = vld [vmem:[#allocation4 + $0x58] sm:$0xff]
          %v3836 = vld [vmem:[#allocation4 + $0x60] sm:$0xff]
          %v3837 = vld [vmem:[#allocation4 + $0x68] sm:$0xff]
          %v3838 = vld [vmem:[#allocation4 + $0x70] sm:$0xff]
          %v3839 = vld [vmem:[#allocation4 + $0x78] sm:$0xff]
          %v3840 = vld [vmem:[#allocation4 + $0x80] sm:$0xff]
          %v3841 = vld [vmem:[#allocation4 + $0x88] sm:$0xff]
          %v3842 = vld [vmem:[#allocation4 + $0x90] sm:$0xff]
          %v3843 = vld [vmem:[#allocation4 + $0x98] sm:$0xff]
          %v3844 = vld [vmem:[#allocation4 + $0xa0] sm:$0xff]
          %v3845 = vld [vmem:[#allocation4 + $0xa8] sm:$0xff]
          %v3846 = vld [vmem:[#allocation4 + $0xb0] sm:$0xff]
          %v3847 = vld [vmem:[#allocation4 + $0xb8] sm:$0xff]
          %v3848 = vld [vmem:[#allocation4 + $0xc0] sm:$0xff]
          %v3849 = vld [vmem:[#allocation4 + $0xc8] sm:$0xff]
          %v3850 = vld [vmem:[#allocation4 + $0xd0] sm:$0xff]
          %v3851 = vld [vmem:[#allocation4 + $0xd8] sm:$0xff]
          %v3852 = vld [vmem:[#allocation4 + $0xe0] sm:$0xff]
          %v3853 = vld [vmem:[#allocation4 + $0xe8] sm:$0xff]
          %v3854 = vld [vmem:[#allocation4 + $0xf0] sm:$0xff]
          %v3855 = vld [vmem:[#allocation4 + $0xf8] sm:$0xff]
          %v3856 = vld [vmem:[#allocation3] sm:$0xff]
          %v3857 = vld [vmem:[#allocation3 + $0x8] sm:$0xff]
          %v3858 = vld [vmem:[#allocation3 + $0x10] sm:$0xff]
          %v3859 = vld [vmem:[#allocation3 + $0x18] sm:$0xff]
          %v3860 = vld [vmem:[#allocation3 + $0x20] sm:$0xff]
          %v3861 = vld [vmem:[#allocation3 + $0x28] sm:$0xff]
          %v3862 = vld [vmem:[#allocation3 + $0x30] sm:$0xff]
          %v3863 = vld [vmem:[#allocation3 + $0x38] sm:$0xff]
          %v3864 = vld [vmem:[#allocation3 + $0x40] sm:$0xff]
          %v3865 = vld [vmem:[#allocation3 + $0x48] sm:$0xff]
          %v3866 = vld [vmem:[#allocation3 + $0x50] sm:$0xff]
          %v3867 = vld [vmem:[#allocation3 + $0x58] sm:$0xff]
          %v3868 = vld [vmem:[#allocation3 + $0x60] sm:$0xff]
          %v3869 = vld [vmem:[#allocation3 + $0x68] sm:$0xff]
          %v3870 = vld [vmem:[#allocation3 + $0x70] sm:$0xff]
          %v3871 = vld [vmem:[#allocation3 + $0x78] sm:$0xff]
          %v3872 = vld [vmem:[#allocation3 + $0x80] sm:$0xff]
          %v3873 = vld [vmem:[#allocation3 + $0x88] sm:$0xff]
          %v3874 = vld [vmem:[#allocation3 + $0x90] sm:$0xff]
          %v3875 = vld [vmem:[#allocation3 + $0x98] sm:$0xff]
          %v3876 = vld [vmem:[#allocation3 + $0xa0] sm:$0xff]
          %v3877 = vld [vmem:[#allocation3 + $0xa8] sm:$0xff]
          %v3878 = vld [vmem:[#allocation3 + $0xb0] sm:$0xff]
          %v3879 = vld [vmem:[#allocation3 + $0xb8] sm:$0xff]
          %v3880 = vld [vmem:[#allocation3 + $0xc0] sm:$0xff]
          %v3881 = vld [vmem:[#allocation3 + $0xc8] sm:$0xff]
          %v3882 = vld [vmem:[#allocation3 + $0xd0] sm:$0xff]
          %v3883 = vld [vmem:[#allocation3 + $0xd8] sm:$0xff]
          %v3884 = vld [vmem:[#allocation3 + $0xe0] sm:$0xff]
          %v3885 = vld [vmem:[#allocation3 + $0xe8] sm:$0xff]
          %v3886 = vld [vmem:[#allocation3 + $0xf0] sm:$0xff]
          %v3887 = vld [vmem:[#allocation3 + $0xf8] sm:$0xff]
          %v3888 = vrcp.pop %v3856
          %v3889 = vrcp.pop %v3857
          %v3890 = vrcp.pop %v3858
          %v3891 = vrcp.pop %v3859
          %v3892 = vrcp.pop %v3860
          %v3893 = vrcp.pop %v3861
          %v3894 = vrcp.pop %v3862
          %v3895 = vrcp.pop %v3863
          %v3896 = vrcp.pop %v3864
          %v3897 = vrcp.pop %v3865
          %v3898 = vrcp.pop %v3866
          %v3899 = vrcp.pop %v3867
          %v3900 = vrcp.pop %v3868
          %v3901 = vrcp.pop %v3869
          %v3902 = vrcp.pop %v3870
          %v3903 = vrcp.pop %v3871
          %v3904 = vrcp.pop %v3872
          %v3905 = vrcp.pop %v3873
          %v3906 = vrcp.pop %v3874
          %v3907 = vrcp.pop %v3875
          %v3908 = vrcp.pop %v3876
          %v3909 = vrcp.pop %v3877
          %v3910 = vrcp.pop %v3878
          %v3911 = vrcp.pop %v3879
          %v3912 = vrcp.pop %v3880
          %v3913 = vrcp.pop %v3881
          %v3914 = vrcp.pop %v3882
          %v3915 = vrcp.pop %v3883
          %v3916 = vrcp.pop %v3884
          %v3917 = vrcp.pop %v3885
          %v3918 = vrcp.pop %v3886
          %v3919 = vrcp.pop %v3887
          %3921 = vset.pattern.permute.xlu0 0
          %3922 = vperm.xlu0 %3921, %v3888
          %v3923 = vpop.permute.xlu0 %3922
          %3926 = vset.pattern.permute.xlu0 0
          %3927 = vperm.xlu0 %3926, %v3889
          %v3928 = vpop.permute.xlu0 %3927
          %3931 = vset.pattern.permute.xlu0 0
          %3932 = vperm.xlu0 %3931, %v3890
          %v3933 = vpop.permute.xlu0 %3932
          %3936 = vset.pattern.permute.xlu0 0
          %3937 = vperm.xlu0 %3936, %v3891
          %v3938 = vpop.permute.xlu0 %3937
          %3941 = vset.pattern.permute.xlu0 0
          %3942 = vperm.xlu0 %3941, %v3892
          %v3943 = vpop.permute.xlu0 %3942
          %3946 = vset.pattern.permute.xlu0 0
          %3947 = vperm.xlu0 %3946, %v3893
          %v3948 = vpop.permute.xlu0 %3947
          %3951 = vset.pattern.permute.xlu0 0
          %3952 = vperm.xlu0 %3951, %v3894
          %v3953 = vpop.permute.xlu0 %3952
          %3956 = vset.pattern.permute.xlu0 0
          %3957 = vperm.xlu0 %3956, %v3895
          %v3958 = vpop.permute.xlu0 %3957
          %3961 = vset.pattern.permute.xlu0 0
          %3962 = vperm.xlu0 %3961, %v3896
          %v3963 = vpop.permute.xlu0 %3962
          %3966 = vset.pattern.permute.xlu0 0
          %3967 = vperm.xlu0 %3966, %v3897
          %v3968 = vpop.permute.xlu0 %3967
          %3971 = vset.pattern.permute.xlu0 0
          %3972 = vperm.xlu0 %3971, %v3898
          %v3973 = vpop.permute.xlu0 %3972
          %3976 = vset.pattern.permute.xlu0 0
          %3977 = vperm.xlu0 %3976, %v3899
          %v3978 = vpop.permute.xlu0 %3977
          %3981 = vset.pattern.permute.xlu0 0
          %3982 = vperm.xlu0 %3981, %v3900
          %v3983 = vpop.permute.xlu0 %3982
          %3986 = vset.pattern.permute.xlu0 0
          %3987 = vperm.xlu0 %3986, %v3901
          %v3988 = vpop.permute.xlu0 %3987
          %3991 = vset.pattern.permute.xlu0 0
          %3992 = vperm.xlu0 %3991, %v3902
          %v3993 = vpop.permute.xlu0 %3992
          %3996 = vset.pattern.permute.xlu0 0
          %3997 = vperm.xlu0 %3996, %v3903
          %v3998 = vpop.permute.xlu0 %3997
          %4001 = vset.pattern.permute.xlu0 0
          %4002 = vperm.xlu0 %4001, %v3904
          %v4003 = vpop.permute.xlu0 %4002
          %4006 = vset.pattern.permute.xlu0 0
          %4007 = vperm.xlu0 %4006, %v3905
          %v4008 = vpop.permute.xlu0 %4007
          %4011 = vset.pattern.permute.xlu0 0
          %4012 = vperm.xlu0 %4011, %v3906
          %v4013 = vpop.permute.xlu0 %4012
          %4016 = vset.pattern.permute.xlu0 0
          %4017 = vperm.xlu0 %4016, %v3907
          %v4018 = vpop.permute.xlu0 %4017
          %4021 = vset.pattern.permute.xlu0 0
          %4022 = vperm.xlu0 %4021, %v3908
          %v4023 = vpop.permute.xlu0 %4022
          %4026 = vset.pattern.permute.xlu0 0
          %4027 = vperm.xlu0 %4026, %v3909
          %v4028 = vpop.permute.xlu0 %4027
          %4031 = vset.pattern.permute.xlu0 0
          %4032 = vperm.xlu0 %4031, %v3910
          %v4033 = vpop.permute.xlu0 %4032
          %4036 = vset.pattern.permute.xlu0 0
          %4037 = vperm.xlu0 %4036, %v3911
          %v4038 = vpop.permute.xlu0 %4037
          %4041 = vset.pattern.permute.xlu0 0
          %4042 = vperm.xlu0 %4041, %v3912
          %v4043 = vpop.permute.xlu0 %4042
          %4046 = vset.pattern.permute.xlu0 0
          %4047 = vperm.xlu0 %4046, %v3913
          %v4048 = vpop.permute.xlu0 %4047
          %4051 = vset.pattern.permute.xlu0 0
          %4052 = vperm.xlu0 %4051, %v3914
          %v4053 = vpop.permute.xlu0 %4052
          %4056 = vset.pattern.permute.xlu0 0
          %4057 = vperm.xlu0 %4056, %v3915
          %v4058 = vpop.permute.xlu0 %4057
          %4061 = vset.pattern.permute.xlu0 0
          %4062 = vperm.xlu0 %4061, %v3916
          %v4063 = vpop.permute.xlu0 %4062
          %4066 = vset.pattern.permute.xlu0 0
          %4067 = vperm.xlu0 %4066, %v3917
          %v4068 = vpop.permute.xlu0 %4067
          %4071 = vset.pattern.permute.xlu0 0
          %4072 = vperm.xlu0 %4071, %v3918
          %v4073 = vpop.permute.xlu0 %4072
          %4076 = vset.pattern.permute.xlu0 0
          %4077 = vperm.xlu0 %4076, %v3919
          %v4078 = vpop.permute.xlu0 %4077
          %v4080 = vmul.f32 %v3824, %v3923
          %v4081 = vmul.f32 %v3825, %v3928
          %v4082 = vmul.f32 %v3826, %v3933
          %v4083 = vmul.f32 %v3827, %v3938
          %v4084 = vmul.f32 %v3828, %v3943
          %v4085 = vmul.f32 %v3829, %v3948
          %v4086 = vmul.f32 %v3830, %v3953
          %v4087 = vmul.f32 %v3831, %v3958
          %v4088 = vmul.f32 %v3832, %v3963
          %v4089 = vmul.f32 %v3833, %v3968
          %v4090 = vmul.f32 %v3834, %v3973
          %v4091 = vmul.f32 %v3835, %v3978
          %v4092 = vmul.f32 %v3836, %v3983
          %v4093 = vmul.f32 %v3837, %v3988
          %v4094 = vmul.f32 %v3838, %v3993
          %v4095 = vmul.f32 %v3839, %v3998
          %v4096 = vmul.f32 %v3840, %v4003
          %v4097 = vmul.f32 %v3841, %v4008
          %v4098 = vmul.f32 %v3842, %v4013
          %v4099 = vmul.f32 %v3843, %v4018
          %v4100 = vmul.f32 %v3844, %v4023
          %v4101 = vmul.f32 %v3845, %v4028
          %v4102 = vmul.f32 %v3846, %v4033
          %v4103 = vmul.f32 %v3847, %v4038
          %v4104 = vmul.f32 %v3848, %v4043
          %v4105 = vmul.f32 %v3849, %v4048
          %v4106 = vmul.f32 %v3850, %v4053
          %v4107 = vmul.f32 %v3851, %v4058
          %v4108 = vmul.f32 %v3852, %v4063
          %v4109 = vmul.f32 %v3853, %v4068
          %v4110 = vmul.f32 %v3854, %v4073
          %v4111 = vmul.f32 %v3855, %v4078
          %4120 = vrot.lane.b32.xlu0 %v4088, 32
          %v4121 = vpop.permute.xlu0 %4120
          %4122 = vrot.lane.b32.xlu0 %v4089, 32
          %v4123 = vpop.permute.xlu0 %4122
          %4124 = vrot.lane.b32.xlu0 %v4090, 32
          %v4125 = vpop.permute.xlu0 %4124
          %4126 = vrot.lane.b32.xlu0 %v4091, 32
          %v4127 = vpop.permute.xlu0 %4126
          %4128 = vrot.lane.b32.xlu0 %v4092, 32
          %v4129 = vpop.permute.xlu0 %4128
          %4130 = vrot.lane.b32.xlu0 %v4093, 32
          %v4131 = vpop.permute.xlu0 %4130
          %4132 = vrot.lane.b32.xlu0 %v4094, 32
          %v4133 = vpop.permute.xlu0 %4132
          %4134 = vrot.lane.b32.xlu0 %v4095, 32
          %v4135 = vpop.permute.xlu0 %4134
          %4152 = vrot.lane.b32.xlu0 %v4096, 64
          %v4153 = vpop.permute.xlu0 %4152
          %4154 = vrot.lane.b32.xlu0 %v4097, 64
          %v4155 = vpop.permute.xlu0 %4154
          %4156 = vrot.lane.b32.xlu0 %v4098, 64
          %v4157 = vpop.permute.xlu0 %4156
          %4158 = vrot.lane.b32.xlu0 %v4099, 64
          %v4159 = vpop.permute.xlu0 %4158
          %4160 = vrot.lane.b32.xlu0 %v4100, 64
          %v4161 = vpop.permute.xlu0 %4160
          %4162 = vrot.lane.b32.xlu0 %v4101, 64
          %v4163 = vpop.permute.xlu0 %4162
          %4164 = vrot.lane.b32.xlu0 %v4102, 64
          %v4165 = vpop.permute.xlu0 %4164
          %4166 = vrot.lane.b32.xlu0 %v4103, 64
          %v4167 = vpop.permute.xlu0 %4166
          %4184 = vrot.lane.b32.xlu0 %v4104, 96
          %v4185 = vpop.permute.xlu0 %4184
          %4186 = vrot.lane.b32.xlu0 %v4105, 96
          %v4187 = vpop.permute.xlu0 %4186
          %4188 = vrot.lane.b32.xlu0 %v4106, 96
          %v4189 = vpop.permute.xlu0 %4188
          %4190 = vrot.lane.b32.xlu0 %v4107, 96
          %v4191 = vpop.permute.xlu0 %4190
          %4192 = vrot.lane.b32.xlu0 %v4108, 96
          %v4193 = vpop.permute.xlu0 %4192
          %4194 = vrot.lane.b32.xlu0 %v4109, 96
          %v4195 = vpop.permute.xlu0 %4194
          %4196 = vrot.lane.b32.xlu0 %v4110, 96
          %v4197 = vpop.permute.xlu0 %4196
          %4198 = vrot.lane.b32.xlu0 %v4111, 96
          %v4199 = vpop.permute.xlu0 %4198
          %vm4208 = vcmask 261120
          %v4209 = vsel %vm4208, %v4080, %v4121
          %v4210 = vsel %vm4208, %v4081, %v4123
          %v4211 = vsel %vm4208, %v4082, %v4125
          %v4212 = vsel %vm4208, %v4083, %v4127
          %v4213 = vsel %vm4208, %v4084, %v4129
          %v4214 = vsel %vm4208, %v4085, %v4131
          %v4215 = vsel %vm4208, %v4086, %v4133
          %v4216 = vsel %vm4208, %v4087, %v4135
          %vm4217 = vcmask 523264
          %v4218 = vsel %vm4217, %v4209, %v4153
          %v4219 = vsel %vm4217, %v4210, %v4155
          %v4220 = vsel %vm4217, %v4211, %v4157
          %v4221 = vsel %vm4217, %v4212, %v4159
          %v4222 = vsel %vm4217, %v4213, %v4161
          %v4223 = vsel %vm4217, %v4214, %v4163
          %v4224 = vsel %vm4217, %v4215, %v4165
          %v4225 = vsel %vm4217, %v4216, %v4167
          %vm4226 = vcmask 785408
          %v4227 = vsel %vm4226, %v4218, %v4185
          %v4228 = vsel %vm4226, %v4219, %v4187
          %v4229 = vsel %vm4226, %v4220, %v4189
          %v4230 = vsel %vm4226, %v4221, %v4191
          %v4231 = vsel %vm4226, %v4222, %v4193
          %v4232 = vsel %vm4226, %v4223, %v4195
          %v4233 = vsel %vm4226, %v4224, %v4197
          %v4234 = vsel %vm4226, %v4225, %v4199
          %v4235 = vpack.c.bf16 %v4228, %v4227
          %v4236 = vpack.c.bf16 %v4230, %v4229
          %v4237 = vpack.c.bf16 %v4232, %v4231
          %v4238 = vpack.c.bf16 %v4234, %v4233
          %v4239 = vld [vmem:[%s6] sm:$0xf]
          %v4240 = vld [vmem:[%s6 + $0x4] sm:$0xf]
          %v4241 = vld [vmem:[%s6 + $0x8] sm:$0xf]
          %v4242 = vld [vmem:[%s6 + $0xc] sm:$0xf]
          %v4243 = vld [vmem:[%s6 + $0x10] sm:$0xf]
          %v4244 = vld [vmem:[%s6 + $0x14] sm:$0xf]
          %v4245 = vld [vmem:[%s6 + $0x18] sm:$0xf]
          %v4246 = vld [vmem:[%s6 + $0x1c] sm:$0xf]
          %v4247 = vld [vmem:[%s6 + $0x20] sm:$0xf]
          %v4248 = vld [vmem:[%s6 + $0x24] sm:$0xf]
          %v4249 = vld [vmem:[%s6 + $0x28] sm:$0xf]
          %v4250 = vld [vmem:[%s6 + $0x2c] sm:$0xf]
          %v4251 = vld [vmem:[%s6 + $0x30] sm:$0xf]
          %v4252 = vld [vmem:[%s6 + $0x34] sm:$0xf]
          %v4253 = vld [vmem:[%s6 + $0x38] sm:$0xf]
          %v4254 = vld [vmem:[%s6 + $0x3c] sm:$0xf]
          %v4255 = vld [vmem:[%s7] sm:$0x1]
          %v4257 = vlaneseq
          %v4258 = vshrl.u32 %v4257, 7
          %v4259 = vsub.s32 0, %v4258
          %v4260 = vrot.slane %v4255, %v4259
          %v4278 = vunpack.c.l.b16 %v4239
          %v4279 = vunpack.c.l.b16 %v4240
          %v4280 = vunpack.c.l.b16 %v4241
          %v4281 = vunpack.c.l.b16 %v4242
          %v4282 = vunpack.c.l.b16 %v4243
          %v4283 = vunpack.c.l.b16 %v4244
          %v4284 = vunpack.c.l.b16 %v4245
          %v4285 = vunpack.c.l.b16 %v4246
          %v4286 = vunpack.c.l.b16 %v4247
          %v4287 = vunpack.c.l.b16 %v4248
          %v4288 = vunpack.c.l.b16 %v4249
          %v4289 = vunpack.c.l.b16 %v4250
          %v4290 = vunpack.c.l.b16 %v4251
          %v4291 = vunpack.c.l.b16 %v4252
          %v4292 = vunpack.c.l.b16 %v4253
          %v4293 = vunpack.c.l.b16 %v4254
          %v4294 = vpack.c.b16 %v4279, %v4278
          %v4295 = vpack.c.b16 %v4281, %v4280
          %v4296 = vpack.c.b16 %v4283, %v4282
          %v4297 = vpack.c.b16 %v4285, %v4284
          %v4298 = vpack.c.b16 %v4287, %v4286
          %v4299 = vpack.c.b16 %v4289, %v4288
          %v4300 = vpack.c.b16 %v4291, %v4290
          %v4301 = vpack.c.b16 %v4293, %v4292
          %4310 = vmatprep.subr.bf16.mxu0 0
          %4311 = vmatpush1.bf16.msra.mxu0 %v4301
          %4312 = vmatprep.subr.bf16.mxu0 0
          %4313 = vmatpush1.bf16.msra.mxu0 %v4300
          %4314 = vmatprep.subr.bf16.mxu0 0
          %4315 = vmatpush1.bf16.msra.mxu0 %v4299
          %4316 = vmatprep.subr.bf16.mxu0 0
          %4317 = vmatpush1.bf16.msra.mxu0 %v4298
          %4318 = vmatprep.subr.bf16.mxu0 0
          %4319 = vmatpush1.bf16.msra.mxu0 %v4297
          %4320 = vmatprep.subr.bf16.mxu0 0
          %4321 = vmatpush1.bf16.msra.mxu0 %v4296
          %4322 = vmatprep.subr.bf16.mxu0 0
          %4323 = vmatpush1.bf16.msra.mxu0 %v4295
          %4324 = vmatprep.subr.bf16.mxu0 0
          %4325 = vmatpush1.bf16.msra.mxu0 %v4294
          %4326 = vmatprep.subr.bf16.mxu0 0
          %4327 = vmatpush2.bf16.msra.mxu0 0
          %4328 = vmatprep.subr.bf16.mxu0 0
          %4329 = vmatpush2.bf16.msra.mxu0 0
          %4330 = vmatprep.subr.bf16.mxu0 0
          %4331 = vmatpush2.bf16.msra.mxu0 0
          %4332 = vmatprep.subr.bf16.mxu0 0
          %4333 = vmatpush2.bf16.msra.mxu0 0
          %4334 = vmatprep.subr.bf16.mxu0 0
          %4335 = vmatpush2.bf16.msra.mxu0 0
          %4336 = vmatprep.subr.bf16.mxu0 0
          %4337 = vmatpush2.bf16.msra.mxu0 0
          %4338 = vmatprep.subr.bf16.mxu0 0
          %4339 = vmatpush2.bf16.msra.mxu0 0
          %4340 = vmatprep.subr.bf16.mxu0 0
          %4341 = vmatpush2.bf16.msra.mxu0 0
          %4342 = vmatprep.mubr.bf16.mxu0 0
          %4343 = vmatmul.mubr.bf16.gmra.mxu0 %v4235
          %v4344 = vpop.f32.mrf.mxu0
          %v4345 = vadd.f32 %v4260, %v4344
          %v4346 = vpop.f32.mrf.mxu0
          %v4347 = vpop.f32.mrf.mxu0
          %v4348 = vadd.f32 %v4260, %v4347
          %v4349 = vpop.f32.mrf.mxu0
          %4350 = vmatprep.mubr.bf16.mxu0 0
          %4351 = vmatmul.mubr.bf16.gmra.mxu0 %v4236
          %v4352 = vpop.f32.mrf.mxu0
          %v4353 = vadd.f32 %v4260, %v4352
          %v4354 = vpop.f32.mrf.mxu0
          %v4355 = vpop.f32.mrf.mxu0
          %v4356 = vadd.f32 %v4260, %v4355
          %v4357 = vpop.f32.mrf.mxu0
          %4358 = vmatprep.mubr.bf16.mxu0 0
          %4359 = vmatmul.mubr.bf16.gmra.mxu0 %v4237
          %v4360 = vpop.f32.mrf.mxu0
          %v4361 = vadd.f32 %v4260, %v4360
          %v4362 = vpop.f32.mrf.mxu0
          %v4363 = vpop.f32.mrf.mxu0
          %v4364 = vadd.f32 %v4260, %v4363
          %v4365 = vpop.f32.mrf.mxu0
          %4366 = vmatprep.mubr.bf16.mxu0 0
          %4367 = vmatmul.mubr.bf16.gmra.mxu0 %v4238
          %v4368 = vpop.f32.mrf.mxu0
          %v4369 = vadd.f32 %v4260, %v4368
          %v4370 = vpop.f32.mrf.mxu0
          %v4371 = vpop.f32.mrf.mxu0
          %v4372 = vadd.f32 %v4260, %v4371
          %v4373 = vpop.f32.mrf.mxu0
          %4374 = vdwg.mxu0
          %v4375 = vld [vmem:[%s1393] sm:$0xf]
          %v4376 = vld [vmem:[%s1393 + $0x4] sm:$0xf]
          %v4377 = vld [vmem:[%s1393 + $0x8] sm:$0xf]
          %v4378 = vld [vmem:[%s1393 + $0xc] sm:$0xf]
          %v4379 = vld [vmem:[%s1393 + $0x10] sm:$0xf]
          %v4380 = vld [vmem:[%s1393 + $0x14] sm:$0xf]
          %v4381 = vld [vmem:[%s1393 + $0x18] sm:$0xf]
          %v4382 = vld [vmem:[%s1393 + $0x1c] sm:$0xf]
          %v4383 = vunpack.c.l.bf16 %v4375
          %v4384 = vunpack.c.l.bf16 %v4376
          %v4385 = vunpack.c.l.bf16 %v4377
          %v4386 = vunpack.c.l.bf16 %v4378
          %v4387 = vunpack.c.l.bf16 %v4379
          %v4388 = vunpack.c.l.bf16 %v4380
          %v4389 = vunpack.c.l.bf16 %v4381
          %v4390 = vunpack.c.l.bf16 %v4382
          %v4391 = vadd.f32 %v4383, %v4345
          %v4392 = vadd.f32 %v4384, %v4348
          %v4393 = vadd.f32 %v4385, %v4353
          %v4394 = vadd.f32 %v4386, %v4356
          %v4395 = vadd.f32 %v4387, %v4361
          %v4396 = vadd.f32 %v4388, %v4364
          %v4397 = vadd.f32 %v4389, %v4369
          %v4398 = vadd.f32 %v4390, %v4372
          %v4399 = vld [vmem:[%s8] sm:$0x1]
          %v4400 = vld [vmem:[%s9] sm:$0x1]
          %4401 = vadd.xlane.f32.xlu0 %v4391
          %v4402 = vpop.xlane.xlu0 %4401
          %4403 = vadd.xlane.f32.xlu0 %v4392
          %v4404 = vpop.xlane.xlu0 %4403
          %4405 = vadd.xlane.f32.xlu0 %v4393
          %v4406 = vpop.xlane.xlu0 %4405
          %4407 = vadd.xlane.f32.xlu0 %v4394
          %v4408 = vpop.xlane.xlu0 %4407
          %4409 = vadd.xlane.f32.xlu0 %v4395
          %v4410 = vpop.xlane.xlu0 %4409
          %4411 = vadd.xlane.f32.xlu0 %v4396
          %v4412 = vpop.xlane.xlu0 %4411
          %4413 = vadd.xlane.f32.xlu0 %v4397
          %v4414 = vpop.xlane.xlu0 %4413
          %4415 = vadd.xlane.f32.xlu0 %v4398
          %v4416 = vpop.xlane.xlu0 %4415
          %v4417 = vrcp.pop 128.0
          %v4418 = vmul.f32 %v4402, %v4417
          %v4419 = vmul.f32 %v4404, %v4417
          %v4420 = vmul.f32 %v4406, %v4417
          %v4421 = vmul.f32 %v4408, %v4417
          %v4422 = vmul.f32 %v4410, %v4417
          %v4423 = vmul.f32 %v4412, %v4417
          %v4424 = vmul.f32 %v4414, %v4417
          %v4425 = vmul.f32 %v4416, %v4417
          %v4426 = vsub.f32 %v4391, %v4418
          %v4427 = vsub.f32 %v4392, %v4419
          %v4428 = vsub.f32 %v4393, %v4420
          %v4429 = vsub.f32 %v4394, %v4421
          %v4430 = vsub.f32 %v4395, %v4422
          %v4431 = vsub.f32 %v4396, %v4423
          %v4432 = vsub.f32 %v4397, %v4424
          %v4433 = vsub.f32 %v4398, %v4425
          %v4434 = vmul.f32 %v4426, %v4426
          %v4435 = vmul.f32 %v4427, %v4427
          %v4436 = vmul.f32 %v4428, %v4428
          %v4437 = vmul.f32 %v4429, %v4429
          %v4438 = vmul.f32 %v4430, %v4430
          %v4439 = vmul.f32 %v4431, %v4431
          %v4440 = vmul.f32 %v4432, %v4432
          %v4441 = vmul.f32 %v4433, %v4433
          %4442 = vadd.xlane.f32.xlu0 %v4434
          %v4443 = vpop.xlane.xlu0 %4442
          %4444 = vadd.xlane.f32.xlu0 %v4435
          %v4445 = vpop.xlane.xlu0 %4444
          %4446 = vadd.xlane.f32.xlu0 %v4436
          %v4447 = vpop.xlane.xlu0 %4446
          %4448 = vadd.xlane.f32.xlu0 %v4437
          %v4449 = vpop.xlane.xlu0 %4448
          %4450 = vadd.xlane.f32.xlu0 %v4438
          %v4451 = vpop.xlane.xlu0 %4450
          %4452 = vadd.xlane.f32.xlu0 %v4439
          %v4453 = vpop.xlane.xlu0 %4452
          %4454 = vadd.xlane.f32.xlu0 %v4440
          %v4455 = vpop.xlane.xlu0 %4454
          %4456 = vadd.xlane.f32.xlu0 %v4441
          %v4457 = vpop.xlane.xlu0 %4456
          %v4458 = vmul.f32 %v4443, %v4417
          %v4459 = vmul.f32 %v4445, %v4417
          %v4460 = vmul.f32 %v4447, %v4417
          %v4461 = vmul.f32 %v4449, %v4417
          %v4462 = vmul.f32 %v4451, %v4417
          %v4463 = vmul.f32 %v4453, %v4417
          %v4464 = vmul.f32 %v4455, %v4417
          %v4465 = vmul.f32 %v4457, %v4417
          %v4466 = vadd.f32 %v4458, 1e-05
          %v4467 = vadd.f32 %v4459, 1e-05
          %v4468 = vadd.f32 %v4460, 1e-05
          %v4469 = vadd.f32 %v4461, 1e-05
          %v4470 = vadd.f32 %v4462, 1e-05
          %v4471 = vadd.f32 %v4463, 1e-05
          %v4472 = vadd.f32 %v4464, 1e-05
          %v4473 = vadd.f32 %v4465, 1e-05
          %v4474 = vrsqrt.pop %v4466
          %v4475 = vrsqrt.pop %v4467
          %v4476 = vrsqrt.pop %v4468
          %v4477 = vrsqrt.pop %v4469
          %v4478 = vrsqrt.pop %v4470
          %v4479 = vrsqrt.pop %v4471
          %v4480 = vrsqrt.pop %v4472
          %v4481 = vrsqrt.pop %v4473
          %v4482 = vmul.f32 %v4426, %v4474
          %v4483 = vmul.f32 %v4427, %v4475
          %v4484 = vmul.f32 %v4428, %v4476
          %v4485 = vmul.f32 %v4429, %v4477
          %v4486 = vmul.f32 %v4430, %v4478
          %v4487 = vmul.f32 %v4431, %v4479
          %v4488 = vmul.f32 %v4432, %v4480
          %v4489 = vmul.f32 %v4433, %v4481
          %v4491 = vlaneseq
          %v4492 = vshrl.u32 %v4491, 7
          %v4493 = vsub.s32 0, %v4492
          %v4494 = vrot.slane %v4399, %v4493
          %v4496 = vmul.f32 %v4482, %v4494
          %v4497 = vmul.f32 %v4483, %v4494
          %v4498 = vmul.f32 %v4484, %v4494
          %v4499 = vmul.f32 %v4485, %v4494
          %v4500 = vmul.f32 %v4486, %v4494
          %v4501 = vmul.f32 %v4487, %v4494
          %v4502 = vmul.f32 %v4488, %v4494
          %v4503 = vmul.f32 %v4489, %v4494
          %v4505 = vlaneseq
          %v4506 = vshrl.u32 %v4505, 7
          %v4507 = vsub.s32 0, %v4506
          %v4508 = vrot.slane %v4400, %v4507
          %v4510 = vadd.f32 %v4496, %v4508
          %v4511 = vadd.f32 %v4497, %v4508
          %v4512 = vadd.f32 %v4498, %v4508
          %v4513 = vadd.f32 %v4499, %v4508
          %v4514 = vadd.f32 %v4500, %v4508
          %v4515 = vadd.f32 %v4501, %v4508
          %v4516 = vadd.f32 %v4502, %v4508
          %v4517 = vadd.f32 %v4503, %v4508
          %v4518 = vpack.c.bf16 %v4511, %v4510
          %v4519 = vpack.c.bf16 %v4513, %v4512
          %v4520 = vpack.c.bf16 %v4515, %v4514
          %v4521 = vpack.c.bf16 %v4517, %v4516
          %v4522 = vld [vmem:[%s10] sm:$0xff]
          %v4523 = vld [vmem:[%s10 + $0x8] sm:$0xff]
          %v4524 = vld [vmem:[%s10 + $0x10] sm:$0xff]
          %v4525 = vld [vmem:[%s10 + $0x18] sm:$0xff]
          %v4526 = vld [vmem:[%s10 + $0x20] sm:$0xff]
          %v4527 = vld [vmem:[%s10 + $0x28] sm:$0xff]
          %v4528 = vld [vmem:[%s10 + $0x30] sm:$0xff]
          %v4529 = vld [vmem:[%s10 + $0x38] sm:$0xff]
          %v4530 = vld [vmem:[%s10 + $0x40] sm:$0xff]
          %v4531 = vld [vmem:[%s10 + $0x48] sm:$0xff]
          %v4532 = vld [vmem:[%s10 + $0x50] sm:$0xff]
          %v4533 = vld [vmem:[%s10 + $0x58] sm:$0xff]
          %v4534 = vld [vmem:[%s10 + $0x60] sm:$0xff]
          %v4535 = vld [vmem:[%s10 + $0x68] sm:$0xff]
          %v4536 = vld [vmem:[%s10 + $0x70] sm:$0xff]
          %v4537 = vld [vmem:[%s10 + $0x78] sm:$0xff]
          %v4538 = vld [vmem:[%s11] sm:$0x3]
          %v4540 = vlaneseq
          %v4541 = vshrl.u32 %v4540, 7
          %v4542 = vsub.s32 0, %v4541
          %v4543 = vrot.slane %v4538, %v4542
          %v4544 = vlaneseq
          %v4545 = vshrl.u32 %v4544, 7
          %v4546 = vsub.s32 1, %v4545
          %v4547 = vrot.slane %v4538, %v4546
          %v4566 = vunpack.c.l.b16 %v4522
          %v4567 = vunpack.c.h.b16 %v4522
          %v4568 = vunpack.c.l.b16 %v4523
          %v4569 = vunpack.c.h.b16 %v4523
          %v4570 = vunpack.c.l.b16 %v4524
          %v4571 = vunpack.c.h.b16 %v4524
          %v4572 = vunpack.c.l.b16 %v4525
          %v4573 = vunpack.c.h.b16 %v4525
          %v4574 = vunpack.c.l.b16 %v4526
          %v4575 = vunpack.c.h.b16 %v4526
          %v4576 = vunpack.c.l.b16 %v4527
          %v4577 = vunpack.c.h.b16 %v4527
          %v4578 = vunpack.c.l.b16 %v4528
          %v4579 = vunpack.c.h.b16 %v4528
          %v4580 = vunpack.c.l.b16 %v4529
          %v4581 = vunpack.c.h.b16 %v4529
          %v4582 = vunpack.c.l.b16 %v4530
          %v4583 = vunpack.c.h.b16 %v4530
          %v4584 = vunpack.c.l.b16 %v4531
          %v4585 = vunpack.c.h.b16 %v4531
          %v4586 = vunpack.c.l.b16 %v4532
          %v4587 = vunpack.c.h.b16 %v4532
          %v4588 = vunpack.c.l.b16 %v4533
          %v4589 = vunpack.c.h.b16 %v4533
          %v4590 = vunpack.c.l.b16 %v4534
          %v4591 = vunpack.c.h.b16 %v4534
          %v4592 = vunpack.c.l.b16 %v4535
          %v4593 = vunpack.c.h.b16 %v4535
          %v4594 = vunpack.c.l.b16 %v4536
          %v4595 = vunpack.c.h.b16 %v4536
          %v4596 = vunpack.c.l.b16 %v4537
          %v4597 = vunpack.c.h.b16 %v4537
          %v4598 = vpack.c.b16 %v4568, %v4566
          %v4599 = vpack.c.b16 %v4569, %v4567
          %v4600 = vpack.c.b16 %v4572, %v4570
          %v4601 = vpack.c.b16 %v4573, %v4571
          %v4602 = vpack.c.b16 %v4576, %v4574
          %v4603 = vpack.c.b16 %v4577, %v4575
          %v4604 = vpack.c.b16 %v4580, %v4578
          %v4605 = vpack.c.b16 %v4581, %v4579
          %v4606 = vpack.c.b16 %v4584, %v4582
          %v4607 = vpack.c.b16 %v4585, %v4583
          %v4608 = vpack.c.b16 %v4588, %v4586
          %v4609 = vpack.c.b16 %v4589, %v4587
          %v4610 = vpack.c.b16 %v4592, %v4590
          %v4611 = vpack.c.b16 %v4593, %v4591
          %v4612 = vpack.c.b16 %v4596, %v4594
          %v4613 = vpack.c.b16 %v4597, %v4595
          %4630 = vmatprep.subr.bf16.mxu0 %v4613
          %4631 = vmatpush1.bf16.msra.mxu0 %v4612
          %4632 = vmatprep.subr.bf16.mxu0 %v4611
          %4633 = vmatpush1.bf16.msra.mxu0 %v4610
          %4634 = vmatprep.subr.bf16.mxu0 %v4609
          %4635 = vmatpush1.bf16.msra.mxu0 %v4608
          %4636 = vmatprep.subr.bf16.mxu0 %v4607
          %4637 = vmatpush1.bf16.msra.mxu0 %v4606
          %4638 = vmatprep.subr.bf16.mxu0 %v4605
          %4639 = vmatpush1.bf16.msra.mxu0 %v4604
          %4640 = vmatprep.subr.bf16.mxu0 %v4603
          %4641 = vmatpush1.bf16.msra.mxu0 %v4602
          %4642 = vmatprep.subr.bf16.mxu0 %v4601
          %4643 = vmatpush1.bf16.msra.mxu0 %v4600
          %4644 = vmatprep.subr.bf16.mxu0 %v4599
          %4645 = vmatpush1.bf16.msra.mxu0 %v4598
          %4646 = vmatprep.subr.bf16.mxu0 0
          %4647 = vmatpush2.bf16.msra.mxu0 0
          %4648 = vmatprep.subr.bf16.mxu0 0
          %4649 = vmatpush2.bf16.msra.mxu0 0
          %4650 = vmatprep.subr.bf16.mxu0 0
          %4651 = vmatpush2.bf16.msra.mxu0 0
          %4652 = vmatprep.subr.bf16.mxu0 0
          %4653 = vmatpush2.bf16.msra.mxu0 0
          %4654 = vmatprep.subr.bf16.mxu0 0
          %4655 = vmatpush2.bf16.msra.mxu0 0
          %4656 = vmatprep.subr.bf16.mxu0 0
          %4657 = vmatpush2.bf16.msra.mxu0 0
          %4658 = vmatprep.subr.bf16.mxu0 0
          %4659 = vmatpush2.bf16.msra.mxu0 0
          %4660 = vmatprep.subr.bf16.mxu0 0
          %4661 = vmatpush2.bf16.msra.mxu0 0
          %4662 = vmatprep.mubr.bf16.mxu0 0
          %4663 = vmatmul.mubr.bf16.gmra.mxu0 %v4518
          %v4664 = vpop.f32.mrf.mxu0
          %v4665 = vadd.f32 %v4543, %v4664
          %v4666 = vpop.f32.mrf.mxu0
          %v4667 = vadd.f32 %v4547, %v4666
          %v4668 = vpop.f32.mrf.mxu0
          %v4669 = vadd.f32 %v4543, %v4668
          %v4670 = vpop.f32.mrf.mxu0
          %v4671 = vadd.f32 %v4547, %v4670
          %4672 = vmatprep.mubr.bf16.mxu0 0
          %4673 = vmatmul.mubr.bf16.gmra.mxu0 %v4519
          %v4674 = vpop.f32.mrf.mxu0
          %v4675 = vadd.f32 %v4543, %v4674
          %v4676 = vpop.f32.mrf.mxu0
          %v4677 = vadd.f32 %v4547, %v4676
          %v4678 = vpop.f32.mrf.mxu0
          %v4679 = vadd.f32 %v4543, %v4678
          %v4680 = vpop.f32.mrf.mxu0
          %v4681 = vadd.f32 %v4547, %v4680
          %4682 = vmatprep.mubr.bf16.mxu0 0
          %4683 = vmatmul.mubr.bf16.gmra.mxu0 %v4520
          %v4684 = vpop.f32.mrf.mxu0
          %v4685 = vadd.f32 %v4543, %v4684
          %v4686 = vpop.f32.mrf.mxu0
          %v4687 = vadd.f32 %v4547, %v4686
          %v4688 = vpop.f32.mrf.mxu0
          %v4689 = vadd.f32 %v4543, %v4688
          %v4690 = vpop.f32.mrf.mxu0
          %v4691 = vadd.f32 %v4547, %v4690
          %4692 = vmatprep.mubr.bf16.mxu0 0
          %4693 = vmatmul.mubr.bf16.gmra.mxu0 %v4521
          %v4694 = vpop.f32.mrf.mxu0
          %v4695 = vadd.f32 %v4543, %v4694
          %v4696 = vpop.f32.mrf.mxu0
          %v4697 = vadd.f32 %v4547, %v4696
          %v4698 = vpop.f32.mrf.mxu0
          %v4699 = vadd.f32 %v4543, %v4698
          %v4700 = vpop.f32.mrf.mxu0
          %v4701 = vadd.f32 %v4547, %v4700
          %4702 = vdwg.mxu0
          %v4703 = vmax.f32 %v4665, 0.0
          %v4704 = vmax.f32 %v4667, 0.0
          %v4705 = vmax.f32 %v4669, 0.0
          %v4706 = vmax.f32 %v4671, 0.0
          %v4707 = vmax.f32 %v4675, 0.0
          %v4708 = vmax.f32 %v4677, 0.0
          %v4709 = vmax.f32 %v4679, 0.0
          %v4710 = vmax.f32 %v4681, 0.0
          %v4711 = vmax.f32 %v4685, 0.0
          %v4712 = vmax.f32 %v4687, 0.0
          %v4713 = vmax.f32 %v4689, 0.0
          %v4714 = vmax.f32 %v4691, 0.0
          %v4715 = vmax.f32 %v4695, 0.0
          %v4716 = vmax.f32 %v4697, 0.0
          %v4717 = vmax.f32 %v4699, 0.0
          %v4718 = vmax.f32 %v4701, 0.0
          %v4719 = vpack.c.bf16 %v4705, %v4703
          %v4720 = vpack.c.bf16 %v4706, %v4704
          %v4721 = vpack.c.bf16 %v4709, %v4707
          %v4722 = vpack.c.bf16 %v4710, %v4708
          %v4723 = vpack.c.bf16 %v4713, %v4711
          %v4724 = vpack.c.bf16 %v4714, %v4712
          %v4725 = vpack.c.bf16 %v4717, %v4715
          %v4726 = vpack.c.bf16 %v4718, %v4716
          %v4727 = vld [vmem:[%s12] sm:$0xf]
          %v4728 = vld [vmem:[%s12 + $0x4] sm:$0xf]
          %v4729 = vld [vmem:[%s12 + $0x8] sm:$0xf]
          %v4730 = vld [vmem:[%s12 + $0xc] sm:$0xf]
          %v4731 = vld [vmem:[%s12 + $0x10] sm:$0xf]
          %v4732 = vld [vmem:[%s12 + $0x14] sm:$0xf]
          %v4733 = vld [vmem:[%s12 + $0x18] sm:$0xf]
          %v4734 = vld [vmem:[%s12 + $0x1c] sm:$0xf]
          %v4735 = vld [vmem:[%s12 + $0x20] sm:$0xf]
          %v4736 = vld [vmem:[%s12 + $0x24] sm:$0xf]
          %v4737 = vld [vmem:[%s12 + $0x28] sm:$0xf]
          %v4738 = vld [vmem:[%s12 + $0x2c] sm:$0xf]
          %v4739 = vld [vmem:[%s12 + $0x30] sm:$0xf]
          %v4740 = vld [vmem:[%s12 + $0x34] sm:$0xf]
          %v4741 = vld [vmem:[%s12 + $0x38] sm:$0xf]
          %v4742 = vld [vmem:[%s12 + $0x3c] sm:$0xf]
          %v4743 = vld [vmem:[%s12 + $0x40] sm:$0xf]
          %v4744 = vld [vmem:[%s12 + $0x44] sm:$0xf]
          %v4745 = vld [vmem:[%s12 + $0x48] sm:$0xf]
          %v4746 = vld [vmem:[%s12 + $0x4c] sm:$0xf]
          %v4747 = vld [vmem:[%s12 + $0x50] sm:$0xf]
          %v4748 = vld [vmem:[%s12 + $0x54] sm:$0xf]
          %v4749 = vld [vmem:[%s12 + $0x58] sm:$0xf]
          %v4750 = vld [vmem:[%s12 + $0x5c] sm:$0xf]
          %v4751 = vld [vmem:[%s12 + $0x60] sm:$0xf]
          %v4752 = vld [vmem:[%s12 + $0x64] sm:$0xf]
          %v4753 = vld [vmem:[%s12 + $0x68] sm:$0xf]
          %v4754 = vld [vmem:[%s12 + $0x6c] sm:$0xf]
          %v4755 = vld [vmem:[%s12 + $0x70] sm:$0xf]
          %v4756 = vld [vmem:[%s12 + $0x74] sm:$0xf]
          %v4757 = vld [vmem:[%s12 + $0x78] sm:$0xf]
          %v4758 = vld [vmem:[%s12 + $0x7c] sm:$0xf]
          %v4759 = vld [vmem:[%s13] sm:$0x1]
          %v4761 = vlaneseq
          %v4762 = vshrl.u32 %v4761, 7
          %v4763 = vsub.s32 0, %v4762
          %v4764 = vrot.slane %v4759, %v4763
          %v4798 = vunpack.c.l.b16 %v4727
          %v4799 = vunpack.c.l.b16 %v4728
          %v4800 = vunpack.c.l.b16 %v4729
          %v4801 = vunpack.c.l.b16 %v4730
          %v4802 = vunpack.c.l.b16 %v4731
          %v4803 = vunpack.c.l.b16 %v4732
          %v4804 = vunpack.c.l.b16 %v4733
          %v4805 = vunpack.c.l.b16 %v4734
          %v4806 = vunpack.c.l.b16 %v4735
          %v4807 = vunpack.c.l.b16 %v4736
          %v4808 = vunpack.c.l.b16 %v4737
          %v4809 = vunpack.c.l.b16 %v4738
          %v4810 = vunpack.c.l.b16 %v4739
          %v4811 = vunpack.c.l.b16 %v4740
          %v4812 = vunpack.c.l.b16 %v4741
          %v4813 = vunpack.c.l.b16 %v4742
          %v4814 = vunpack.c.l.b16 %v4743
          %v4815 = vunpack.c.l.b16 %v4744
          %v4816 = vunpack.c.l.b16 %v4745
          %v4817 = vunpack.c.l.b16 %v4746
          %v4818 = vunpack.c.l.b16 %v4747
          %v4819 = vunpack.c.l.b16 %v4748
          %v4820 = vunpack.c.l.b16 %v4749
          %v4821 = vunpack.c.l.b16 %v4750
          %v4822 = vunpack.c.l.b16 %v4751
          %v4823 = vunpack.c.l.b16 %v4752
          %v4824 = vunpack.c.l.b16 %v4753
          %v4825 = vunpack.c.l.b16 %v4754
          %v4826 = vunpack.c.l.b16 %v4755
          %v4827 = vunpack.c.l.b16 %v4756
          %v4828 = vunpack.c.l.b16 %v4757
          %v4829 = vunpack.c.l.b16 %v4758
          %v4830 = vpack.c.b16 %v4799, %v4798
          %v4831 = vpack.c.b16 %v4801, %v4800
          %v4832 = vpack.c.b16 %v4803, %v4802
          %v4833 = vpack.c.b16 %v4805, %v4804
          %v4834 = vpack.c.b16 %v4807, %v4806
          %v4835 = vpack.c.b16 %v4809, %v4808
          %v4836 = vpack.c.b16 %v4811, %v4810
          %v4837 = vpack.c.b16 %v4813, %v4812
          %v4838 = vpack.c.b16 %v4815, %v4814
          %v4839 = vpack.c.b16 %v4817, %v4816
          %v4840 = vpack.c.b16 %v4819, %v4818
          %v4841 = vpack.c.b16 %v4821, %v4820
          %v4842 = vpack.c.b16 %v4823, %v4822
          %v4843 = vpack.c.b16 %v4825, %v4824
          %v4844 = vpack.c.b16 %v4827, %v4826
          %v4845 = vpack.c.b16 %v4829, %v4828
          %4862 = vmatprep.subr.bf16.mxu0 0
          %4863 = vmatpush1.bf16.msra.mxu0 %v4837
          %4864 = vmatprep.subr.bf16.mxu0 0
          %4865 = vmatpush1.bf16.msra.mxu0 %v4836
          %4866 = vmatprep.subr.bf16.mxu0 0
          %4867 = vmatpush1.bf16.msra.mxu0 %v4835
          %4868 = vmatprep.subr.bf16.mxu0 0
          %4869 = vmatpush1.bf16.msra.mxu0 %v4834
          %4870 = vmatprep.subr.bf16.mxu0 0
          %4871 = vmatpush1.bf16.msra.mxu0 %v4833
          %4872 = vmatprep.subr.bf16.mxu0 0
          %4873 = vmatpush1.bf16.msra.mxu0 %v4832
          %4874 = vmatprep.subr.bf16.mxu0 0
          %4875 = vmatpush1.bf16.msra.mxu0 %v4831
          %4876 = vmatprep.subr.bf16.mxu0 0
          %4877 = vmatpush1.bf16.msra.mxu0 %v4830
          %4878 = vmatprep.subr.bf16.mxu0 0
          %4879 = vmatpush2.bf16.msra.mxu0 %v4845
          %4880 = vmatprep.subr.bf16.mxu0 0
          %4881 = vmatpush2.bf16.msra.mxu0 %v4844
          %4882 = vmatprep.subr.bf16.mxu0 0
          %4883 = vmatpush2.bf16.msra.mxu0 %v4843
          %4884 = vmatprep.subr.bf16.mxu0 0
          %4885 = vmatpush2.bf16.msra.mxu0 %v4842
          %4886 = vmatprep.subr.bf16.mxu0 0
          %4887 = vmatpush2.bf16.msra.mxu0 %v4841
          %4888 = vmatprep.subr.bf16.mxu0 0
          %4889 = vmatpush2.bf16.msra.mxu0 %v4840
          %4890 = vmatprep.subr.bf16.mxu0 0
          %4891 = vmatpush2.bf16.msra.mxu0 %v4839
          %4892 = vmatprep.subr.bf16.mxu0 0
          %4893 = vmatpush2.bf16.msra.mxu0 %v4838
          %4894 = vmatprep.mubr.bf16.mxu0 %v4720
          %4895 = vmatmul.mubr.bf16.gmra.mxu0 %v4719
          %v4896 = vpop.f32.mrf.mxu0
          %v4897 = vadd.f32 %v4764, %v4896
          %v4898 = vpop.f32.mrf.mxu0
          %v4899 = vpop.f32.mrf.mxu0
          %v4900 = vadd.f32 %v4764, %v4899
          %v4901 = vpop.f32.mrf.mxu0
          %4902 = vmatprep.mubr.bf16.mxu0 %v4722
          %4903 = vmatmul.mubr.bf16.gmra.mxu0 %v4721
          %v4904 = vpop.f32.mrf.mxu0
          %v4905 = vadd.f32 %v4764, %v4904
          %v4906 = vpop.f32.mrf.mxu0
          %v4907 = vpop.f32.mrf.mxu0
          %v4908 = vadd.f32 %v4764, %v4907
          %v4909 = vpop.f32.mrf.mxu0
          %4910 = vmatprep.mubr.bf16.mxu0 %v4724
          %4911 = vmatmul.mubr.bf16.gmra.mxu0 %v4723
          %v4912 = vpop.f32.mrf.mxu0
          %v4913 = vadd.f32 %v4764, %v4912
          %v4914 = vpop.f32.mrf.mxu0
          %v4915 = vpop.f32.mrf.mxu0
          %v4916 = vadd.f32 %v4764, %v4915
          %v4917 = vpop.f32.mrf.mxu0
          %4918 = vmatprep.mubr.bf16.mxu0 %v4726
          %4919 = vmatmul.mubr.bf16.gmra.mxu0 %v4725
          %v4920 = vpop.f32.mrf.mxu0
          %v4921 = vadd.f32 %v4764, %v4920
          %v4922 = vpop.f32.mrf.mxu0
          %v4923 = vpop.f32.mrf.mxu0
          %v4924 = vadd.f32 %v4764, %v4923
          %v4925 = vpop.f32.mrf.mxu0
          %4926 = vdwg.mxu0
          %v4927 = vadd.f32 %v4510, %v4897
          %v4928 = vadd.f32 %v4511, %v4900
          %v4929 = vadd.f32 %v4512, %v4905
          %v4930 = vadd.f32 %v4513, %v4908
          %v4931 = vadd.f32 %v4514, %v4913
          %v4932 = vadd.f32 %v4515, %v4916
          %v4933 = vadd.f32 %v4516, %v4921
          %v4934 = vadd.f32 %v4517, %v4924
          %v4935 = vld [vmem:[%s14] sm:$0x1]
          %v4936 = vld [vmem:[%s15] sm:$0x1]
          %4937 = vadd.xlane.f32.xlu0 %v4927
          %v4938 = vpop.xlane.xlu0 %4937
          %4939 = vadd.xlane.f32.xlu0 %v4928
          %v4940 = vpop.xlane.xlu0 %4939
          %4941 = vadd.xlane.f32.xlu0 %v4929
          %v4942 = vpop.xlane.xlu0 %4941
          %4943 = vadd.xlane.f32.xlu0 %v4930
          %v4944 = vpop.xlane.xlu0 %4943
          %4945 = vadd.xlane.f32.xlu0 %v4931
          %v4946 = vpop.xlane.xlu0 %4945
          %4947 = vadd.xlane.f32.xlu0 %v4932
          %v4948 = vpop.xlane.xlu0 %4947
          %4949 = vadd.xlane.f32.xlu0 %v4933
          %v4950 = vpop.xlane.xlu0 %4949
          %4951 = vadd.xlane.f32.xlu0 %v4934
          %v4952 = vpop.xlane.xlu0 %4951
          %v4953 = vmul.f32 %v4938, %v4417
          %v4954 = vmul.f32 %v4940, %v4417
          %v4955 = vmul.f32 %v4942, %v4417
          %v4956 = vmul.f32 %v4944, %v4417
          %v4957 = vmul.f32 %v4946, %v4417
          %v4958 = vmul.f32 %v4948, %v4417
          %v4959 = vmul.f32 %v4950, %v4417
          %v4960 = vmul.f32 %v4952, %v4417
          %v4961 = vsub.f32 %v4927, %v4953
          %v4962 = vsub.f32 %v4928, %v4954
          %v4963 = vsub.f32 %v4929, %v4955
          %v4964 = vsub.f32 %v4930, %v4956
          %v4965 = vsub.f32 %v4931, %v4957
          %v4966 = vsub.f32 %v4932, %v4958
          %v4967 = vsub.f32 %v4933, %v4959
          %v4968 = vsub.f32 %v4934, %v4960
          %v4969 = vmul.f32 %v4961, %v4961
          %v4970 = vmul.f32 %v4962, %v4962
          %v4971 = vmul.f32 %v4963, %v4963
          %v4972 = vmul.f32 %v4964, %v4964
          %v4973 = vmul.f32 %v4965, %v4965
          %v4974 = vmul.f32 %v4966, %v4966
          %v4975 = vmul.f32 %v4967, %v4967
          %v4976 = vmul.f32 %v4968, %v4968
          %4977 = vadd.xlane.f32.xlu0 %v4969
          %v4978 = vpop.xlane.xlu0 %4977
          %4979 = vadd.xlane.f32.xlu0 %v4970
          %v4980 = vpop.xlane.xlu0 %4979
          %4981 = vadd.xlane.f32.xlu0 %v4971
          %v4982 = vpop.xlane.xlu0 %4981
          %4983 = vadd.xlane.f32.xlu0 %v4972
          %v4984 = vpop.xlane.xlu0 %4983
          %4985 = vadd.xlane.f32.xlu0 %v4973
          %v4986 = vpop.xlane.xlu0 %4985
          %4987 = vadd.xlane.f32.xlu0 %v4974
          %v4988 = vpop.xlane.xlu0 %4987
          %4989 = vadd.xlane.f32.xlu0 %v4975
          %v4990 = vpop.xlane.xlu0 %4989
          %4991 = vadd.xlane.f32.xlu0 %v4976
          %v4992 = vpop.xlane.xlu0 %4991
          %v4993 = vmul.f32 %v4978, %v4417
          %v4994 = vmul.f32 %v4980, %v4417
          %v4995 = vmul.f32 %v4982, %v4417
          %v4996 = vmul.f32 %v4984, %v4417
          %v4997 = vmul.f32 %v4986, %v4417
          %v4998 = vmul.f32 %v4988, %v4417
          %v4999 = vmul.f32 %v4990, %v4417
          %v5000 = vmul.f32 %v4992, %v4417
          %v5001 = vadd.f32 %v4993, 1e-05
          %v5002 = vadd.f32 %v4994, 1e-05
          %v5003 = vadd.f32 %v4995, 1e-05
          %v5004 = vadd.f32 %v4996, 1e-05
          %v5005 = vadd.f32 %v4997, 1e-05
          %v5006 = vadd.f32 %v4998, 1e-05
          %v5007 = vadd.f32 %v4999, 1e-05
          %v5008 = vadd.f32 %v5000, 1e-05
          %v5009 = vrsqrt.pop %v5001
          %v5010 = vrsqrt.pop %v5002
          %v5011 = vrsqrt.pop %v5003
          %v5012 = vrsqrt.pop %v5004
          %v5013 = vrsqrt.pop %v5005
          %v5014 = vrsqrt.pop %v5006
          %v5015 = vrsqrt.pop %v5007
          %v5016 = vrsqrt.pop %v5008
          %v5017 = vmul.f32 %v4961, %v5009
          %v5018 = vmul.f32 %v4962, %v5010
          %v5019 = vmul.f32 %v4963, %v5011
          %v5020 = vmul.f32 %v4964, %v5012
          %v5021 = vmul.f32 %v4965, %v5013
          %v5022 = vmul.f32 %v4966, %v5014
          %v5023 = vmul.f32 %v4967, %v5015
          %v5024 = vmul.f32 %v4968, %v5016
          %v5026 = vlaneseq
          %v5027 = vshrl.u32 %v5026, 7
          %v5028 = vsub.s32 0, %v5027
          %v5029 = vrot.slane %v4935, %v5028
          %v5031 = vmul.f32 %v5017, %v5029
          %v5032 = vmul.f32 %v5018, %v5029
          %v5033 = vmul.f32 %v5019, %v5029
          %v5034 = vmul.f32 %v5020, %v5029
          %v5035 = vmul.f32 %v5021, %v5029
          %v5036 = vmul.f32 %v5022, %v5029
          %v5037 = vmul.f32 %v5023, %v5029
          %v5038 = vmul.f32 %v5024, %v5029
          %v5040 = vlaneseq
          %v5041 = vshrl.u32 %v5040, 7
          %v5042 = vsub.s32 0, %v5041
          %v5043 = vrot.slane %v4936, %v5042
          %v5045 = vadd.f32 %v5031, %v5043
          %v5046 = vadd.f32 %v5032, %v5043
          %v5047 = vadd.f32 %v5033, %v5043
          %v5048 = vadd.f32 %v5034, %v5043
          %v5049 = vadd.f32 %v5035, %v5043
          %v5050 = vadd.f32 %v5036, %v5043
          %v5051 = vadd.f32 %v5037, %v5043
          %v5052 = vadd.f32 %v5038, %v5043
          %v5053 = vpack.c.bf16 %v5046, %v5045
          %v5054 = vpack.c.bf16 %v5048, %v5047
          %v5055 = vpack.c.bf16 %v5050, %v5049
          %v5056 = vpack.c.bf16 %v5052, %v5051
          %v5061 = vunpack.c.l.b16 %v5053
          %v5062 = vunpack.c.h.b16 %v5053
          %v5063 = vunpack.c.l.b16 %v5054
          %v5064 = vunpack.c.h.b16 %v5054
          %v5065 = vunpack.c.l.b16 %v5055
          %v5066 = vunpack.c.h.b16 %v5055
          %v5067 = vunpack.c.l.b16 %v5056
          %v5068 = vunpack.c.h.b16 %v5056
          %v5069 = vpack.c.b16 %v5061, %v5061
          %v5070 = vpack.c.b16 %v5062, %v5062
          %v5071 = vpack.c.b16 %v5063, %v5063
          %v5072 = vpack.c.b16 %v5064, %v5064
          %v5073 = vpack.c.b16 %v5065, %v5065
          %v5074 = vpack.c.b16 %v5066, %v5066
          %v5075 = vpack.c.b16 %v5067, %v5067
          %v5076 = vpack.c.b16 %v5068, %v5068
          %5085 = vst [vmem:[%s1403] sm:$0xf] %v5069
          %5086 = vst [vmem:[%s1403 + $0x4] sm:$0xf] %v5070
          %5087 = vst [vmem:[%s1403 + $0x8] sm:$0xf] %v5071
          %5088 = vst [vmem:[%s1403 + $0xc] sm:$0xf] %v5072
          %5089 = vst [vmem:[%s1403 + $0x10] sm:$0xf] %v5073
          %5090 = vst [vmem:[%s1403 + $0x14] sm:$0xf] %v5074
          %5091 = vst [vmem:[%s1403 + $0x18] sm:$0xf] %v5075
          %5092 = vst [vmem:[%s1403 + $0x1c] sm:$0xf] %v5076
        $region253: #{multi_layer_homo_gt.5} parent=224 // pred_fallthru
          _
        %s5093 = smul.u32 8, %s37
        %p5094 = scmp.lt.s32.totalorder %s5093, 31
        %s5095 = scalar_select %p5094, %s5093, 31
        %s5096 = smul.addr %s5095, 4
        %s5097 = scalar_lea.vmem %s16, %s5096
        // Predicated region
        $region254: #{multi_layer_homo_gt.5} parent=224 // pred_check
          %p5098 = pneg %p405
        $region255: #{multi_layer_homo_gt.5} parent=224 // pred_check_branch
          %5100 = sbr.rel (%p5098) target = $region257
        $region256: #{multi_layer_homo_gt.5} parent=224 // pred_region
          %s5101 = smul.u32 8, %s37
        $region257: #{multi_layer_homo_gt.5} parent=224 // pred_fallthru
          _
      $region225: #{multi_layer_homo_gt.5} parent=5 // pred_fallthru
        _
      %p5102 = scmp.le.s32.totalorder 2, %s28
      // Predicated region
      $region258: #{multi_layer_homo_gt.5} parent=5 // pred_check
        %p5103 = pneg %p5102
      $region259: #{multi_layer_homo_gt.5} parent=5 // pred_check_branch
        %5105 = sbr.rel (%p5103) target = $region261
      $region260: #{multi_layer_homo_gt.5} parent=5 // pred_region
        %s5106 = ssub.s32 %s28, 2
        // Predicated region
        $region262: #{multi_layer_homo_gt.5} parent=260 // pred_check
          %p5107 = pneg %p411
        $region263: #{multi_layer_homo_gt.5} parent=260 // pred_check_branch
          %5109 = sbr.rel (%p5107) target = $region265
        $region264: #{multi_layer_homo_gt.5} parent=260 // pred_region
          %s5110 = smul.u32 8, %s39
          %p5111 = scmp.lt.s32.totalorder %s5110, 31
          %s5112 = scalar_select %p5111, %s5110, 31
          %s5113 = smul.addr %s5112, 4
          %s5114 = scalar_lea.vmem %s16, %s5113
        $region265: #{multi_layer_homo_gt.5} parent=260 // pred_fallthru
          _
      $region261: #{multi_layer_homo_gt.5} parent=5 // pred_fallthru
        _
    $region6: #{multi_layer_homo_gt.5} parent=1 // loop_footer
      %s32 = sadd.s32 1, %s28
    $region7: #{multi_layer_homo_gt.5} parent=1 // loop_footer_branch
      %27 = sbr.rel target = $region3
    $region8: #{multi_layer_homo_gt.5} parent=1 // loop_exit
      _

</llo_original>
